<compile_context>
chip_gen: v6e
topology: v6e:2x2x1
jax: 0.10.0
libtpu: 0.0.40
codegen_flags: <defaults>
</compile_context>

<pallas_src>
import numpy as np
import jax
import jax.numpy as jnp
from jax.experimental import pallas as pl
from jax.experimental.pallas import tpu as pltpu


# ---------------------------------------------------------------------------
# Fused Schur-complement kernel:  G = Sigma - diff @ invSigma @ diff
# ---------------------------------------------------------------------------
def _fused_schur_kernel(dif_rows_ref, inv_col_ref, dif_tile_ref, sig_ref,
                        o_ref, tmp_ref):
    """Grid (i, j, k): i = output row block (parallel), j = output col block,
    k = contraction block (innermost).

      dif_rows_ref : (t, pp)   diff row panel for row-block i      (resident per i)
      inv_col_ref  : (pp, t)   invSigma column panel for block k   (streamed only while j == 0)
      dif_tile_ref : (t, t)    diff[k, j] tile for the 2nd product
      sig_ref      : (t, t)    Sigma[i, j] tile (epilogue)
      o_ref        : (t, t)    output tile, doubles as the f32 accumulator (resident across k)
      tmp_ref      : (n, t, t) VMEM cache of tmp[i, k] = diff[i, :] @ invSigma[:, k]
    """
    j = pl.program_id(1)
    k = pl.program_id(2)

    # First product: computed once per (i, k) while j == 0, cached for all later j.
    @pl.when(j == 0)
    def _():
        tmp_ref[k] = jnp.dot(dif_rows_ref[...], inv_col_ref[...],
                             preferred_element_type=jnp.float32
                             ).astype(tmp_ref.dtype)

    # Second product: consume the cached tmp[i, k] block.
    contrib = jnp.dot(tmp_ref[k], dif_tile_ref[...],
                      preferred_element_type=jnp.float32)

    # k == 0: initialize the resident output tile directly (no zero-init VPU pass,
    # Sigma subtraction rides along as a free VPU epilogue).
    @pl.when(k == 0)
    def _():
        o_ref[...] = sig_ref[...] - contrib

    @pl.when(k > 0)
    def _():
        o_ref[...] = o_ref[...] - contrib


# ---------------------------------------------------------------------------
# Tiling / VMEM budgeting
# ---------------------------------------------------------------------------
def _vmem_bytes_estimate(t, pp, mxu_bytes):
    n = pp // t
    b = 0
    b += 2 * t * pp * mxu_bytes      # diff row panel   (double buffered)
    b += 2 * pp * t * mxu_bytes      # invSigma column panel (double buffered)
    b += n * t * t * mxu_bytes       # tmp panel scratch (single buffer)
    b += 2 * t * t * mxu_bytes       # diff (k, j) tile
    b += 2 * t * t * 4               # Sigma tile
    b += 2 * t * t * 4               # output tile
    return b


_VMEM_BUDGET = 24 * 1024 * 1024      # sized against v5e/v7x scoped VMEM, never v6e's 128 MiB


def _pick_tile(p, mxu_bytes):
    if p <= 128:
        return p                     # whole-matrix block (full dims always legal, even unaligned)
    if p <= 512:
        return 128                   # keeps >= 2 row blocks for v7x's 2 TensorCores (megacore)
    for t in (256, 128):             # 256 matches the v6e/v7x MXU; 128 is the v5e-native tile
        pp = -(-p // t) * t
        if _vmem_bytes_estimate(t, pp, mxu_bytes) <= _VMEM_BUDGET:
            return t
    # TODO(synk): for very large p the (t, p) row/column panels outgrow the VMEM budget; a
    # panel-splitting or two-pass fallback would be needed there.
    return 128


def compute_g_schur(Sigma, invSigma, diff, *, tile=None, use_bf16=False):
    """G = Sigma - diff @ invSigma @ diff in ONE fused Pallas kernel (no HBM intermediate)."""
    p = Sigma.shape[0]
    mxu_dtype = jnp.bfloat16 if use_bf16 else jnp.float32
    mxu_bytes = 2 if use_bf16 else 4
    t = _pick_tile(p, mxu_bytes) if tile is None else int(tile)
    pp = -(-p // t) * t
    n = pp // t

    def pad(x):
        x = x.astype(jnp.float32)
        if pp == p:
            return x                 # common case: no padding copies at all (incl. Sigma)
        # zero K-padding is exact for the contractions; padded output rows/cols are sliced off
        return jnp.pad(x, ((0, pp - p), (0, pp - p)))

    sig = pad(Sigma)                          # stays f32 (epilogue only, never contracted)
    dif = pad(diff).astype(mxu_dtype)
    inv = pad(invSigma).astype(mxu_dtype)

    # invSigma column panel is only needed while j == 0 (tmp-panel build); for j > 0 the index is
    # pinned to (0, n-1) so consecutive steps keep the same block and the re-DMA is elided
    # -> invSigma is read once per row-block i, as in a plain tiled matmul.
    def inv_index(i, j, k):
        return (0, jnp.where(j == 0, k, n - 1))

    est = _vmem_bytes_estimate(t, pp, mxu_bytes)
    vmem_limit = int(min(max(2 * est, 32 << 20), 48 << 20))   # stays under v7x's 64 MiB physical

    G = pl.pallas_call(
        _fused_schur_kernel,
        out_shape=jax.ShapeDtypeStruct((pp, pp), jnp.float32),
        grid_spec=pltpu.PrefetchScalarGridSpec(
            num_scalar_prefetch=0,
            grid=(n, n, n),
            in_specs=[
                pl.BlockSpec((t, pp), lambda i, j, k: (i, 0)),   # diff row panel (resident per i)
                pl.BlockSpec((pp, t), inv_index),                # invSigma column panel
                pl.BlockSpec((t, t), lambda i, j, k: (k, j)),    # diff tile, 2nd product
                pl.BlockSpec((t, t), lambda i, j, k: (i, j)),    # Sigma tile (epilogue)
            ],
            out_specs=pl.BlockSpec((t, t), lambda i, j, k: (i, j)),
            scratch_shapes=[pltpu.VMEM((n, t, t), mxu_dtype)],
        ),
        compiler_params=pltpu.CompilerParams(
            dimension_semantics=("parallel", "arbitrary", "arbitrary"),
            vmem_limit_bytes=vmem_limit),
    )(dif, inv, dif, sig)

    if pp != p:
        G = G[:p, :p]
    return G


# ---------------------------------------------------------------------------
# Forward pass
# ---------------------------------------------------------------------------
def _build_S(blocks, p):
    """S = sqrt_S^T @ sqrt_S for block-diagonal sqrt_S, computed block-wise (no dense p^3 pass)."""
    hp = jax.lax.Precision.HIGHEST
    shapes = {tuple(b.shape) for b in blocks}
    if len(shapes) == 1:
        # Uniform group size: one batched einsum + one scatter (no per-group HLO chain).
        g = blocks[0].shape[0]
        B = jnp.stack([jnp.asarray(b, jnp.float32) for b in blocks])     # (ng, g, g)
        bt = jnp.einsum('nki,nkj->nij', B, B, precision=hp)              # per-group b^T @ b
        ng = B.shape[0]
        offs = jnp.arange(ng) * g
        rows = jnp.broadcast_to(
            offs[:, None, None] + jnp.arange(g)[None, :, None], (ng, g, g))
        cols = jnp.broadcast_to(
            offs[:, None, None] + jnp.arange(g)[None, None, :], (ng, g, g))
        return jnp.zeros((p, p), jnp.float32).at[rows, cols].set(bt)
    # Ragged group sizes: fallback loop (still block-wise, no dense matmul).
    S = jnp.zeros((p, p), jnp.float32)
    off = 0
    for b in blocks:
        g = b.shape[0]
        b = jnp.asarray(b, jnp.float32)
        S = jax.lax.dynamic_update_slice(S, jnp.dot(b.T, b, precision=hp), (off, off))
        off += g
    return S


def mvr_loss_forward(blocks, Sigma, invSigma, rec_prop=0.0, smoothing=0.01,
                     method="mvr", tile=None, use_bf16=False):
    """Forward pass of MVRLoss. `blocks` are the per-group Cholesky parameters (sorted groups)."""
    p = Sigma.shape[0]
    Sigma = Sigma.astype(jnp.float32)
    invSigma = invSigma.astype(jnp.float32)

    S = _build_S(blocks, p)
    diff = Sigma - (1.0 - rec_prop) * S

    G = compute_g_schur(Sigma, invSigma, diff, tile=tile, use_bf16=use_bf16)

    # torch.linalg.eigvalsh(G, UPLO='U'): G is symmetric up to rounding and jnp.linalg.eigvalsh
    # symmetrizes its input, so the explicit triu mirror is dropped (saves O(p^2) passes).
    # TODO(synk): symmetric eigendecomposition has no clean Pallas equivalent; done in XLA.
    eigvals = jnp.linalg.eigvalsh(G)

    if method == "mvr":
        return jnp.sum(1.0 / (smoothing + eigvals))
    # 'maxent' / 'mmi'
    return jnp.sum(jnp.log(1.0 / jnp.maximum(smoothing + eigvals, smoothing)))


if __name__ == "__main__":
    p = 256
    group_size = 2
    rec_prop = 0.0
    smoothing = 0.01
    method = "mvr"

    # Deterministic, well-conditioned Sigma (correlation-like covariance).
    key = jax.random.PRNGKey(0)
    W = jax.random.normal(key, (p, p), dtype=jnp.float32)
    C = W @ W.T / p
    d = jnp.sqrt(jnp.diag(C))
    C = C / jnp.outer(d, d)
    Sigma = (0.7 * jnp.eye(p, dtype=jnp.float32) + 0.3 * C).astype(jnp.float32)
    invSigma = jnp.linalg.inv(Sigma).astype(jnp.float32)

    # Sorted groups: p/2 groups of size 2.
    groups = np.repeat(np.arange(1, p // group_size + 1), group_size)
    group_sizes = [int(np.sum(groups == g)) for g in np.unique(groups)]
    n_groups = len(group_sizes)

    # Parameter init mirroring __init__: init_S = min(1, 2*mineig(Sigma)) * I, parameters are the
    # per-group Cholesky factors (slightly scaled + perturbed so the test is non-trivial).
    # TODO(synk): the gamma grid-search and scale_until_PSD rescaling in __init__ are init-time
    # parameter refinements only; they do not change forward-pass semantics.
    mineig = float(jnp.linalg.eigvalsh(Sigma)[0])
    scale = min(1.0, 2.0 * mineig)
    pert = 0.02 * np.tril(np.asarray(
        jax.random.normal(jax.random.PRNGKey(1),
                          (n_groups, group_size, group_size), dtype=jnp.float32)))
    blocks = []
    for gi, gsz in enumerate(group_sizes):
        b = 0.9 * np.linalg.cholesky(scale * np.eye(gsz)).astype(np.float32)
        b = b + pert[gi, :gsz, :gsz]
        blocks.append(jnp.asarray(b, jnp.float32))
    blocks = tuple(blocks)

    loss_fn = jax.jit(mvr_loss_forward,
                      static_argnames=("method", "tile", "use_bf16"))
    loss = jax.block_until_ready(
        loss_fn(blocks, Sigma, invSigma, rec_prop=rec_prop,
                smoothing=smoothing, method=method))

    # Pure-JAX reference of the exact same forward math (correctness check, HIGHEST precision).
    hp = jax.lax.Precision.HIGHEST
    sqrt_S_np = np.zeros((p, p), dtype=np.float32)
    r = 0
    for b in blocks:
        g = int(b.shape[0])
        sqrt_S_np[r:r + g, r:r + g] = np.asarray(b)
        r += g
    sqrt_S = jnp.asarray(sqrt_S_np)
    S_ref = (1.0 - rec_prop) * jnp.dot(sqrt_S.T, sqrt_S, precision=hp)
    diff_ref = Sigma - S_ref
    G_ref = Sigma - jnp.dot(jnp.dot(diff_ref, invSigma, precision=hp), diff_ref, precision=hp)
    Gu = jnp.triu(G_ref)                      # torch UPLO='U' semantics
    G_sym = Gu + Gu.T - jnp.diag(jnp.diag(G_ref))
    eigs_ref = jnp.linalg.eigvalsh(G_sym)
    loss_ref = jnp.sum(1.0 / (smoothing + eigs_ref))

    np.testing.assert_allclose(float(loss), float(loss_ref), rtol=5e-3, atol=1e-1)

    print("KERNEL_OK")
</pallas_src>

<mosaic_0001>
module attributes {stable_mosaic.version = 11 : i64} {
  func.func @_fused_schur_kernel(%arg0: i32, %arg1: i32, %arg2: i32, %arg3: memref<128x256xf32, #tpu.memory_space<vmem>>, %arg4: memref<256x128xf32, #tpu.memory_space<vmem>>, %arg5: memref<128x128xf32, #tpu.memory_space<vmem>>, %arg6: memref<128x128xf32, #tpu.memory_space<vmem>>, %arg7: memref<128x128xf32, #tpu.memory_space<vmem>>, %arg8: memref<2x128x128xf32, #tpu.memory_space<vmem>>) attributes {dimension_semantics = [#tpu.dimension_semantics<parallel>, #tpu.dimension_semantics<arbitrary>, #tpu.dimension_semantics<arbitrary>], iteration_bounds = array<i64: 2, 2, 2>, scalar_prefetch = 0 : i64, scratch_operands = 1 : i64, tpu.core_type = #tpu.core_type<tc>, window_params = [{transform_indices = @transform_0, window_bounds = array<i64: 128, 256>}, {transform_indices = @transform_1, window_bounds = array<i64: 256, 128>}, {transform_indices = @transform_2, window_bounds = array<i64: 128, 128>}, {transform_indices = @transform_3, window_bounds = array<i64: 128, 128>}, {transform_indices = @transform_4, window_bounds = array<i64: 128, 128>}]} {
    %c0_i32 = arith.constant 0 : i32
    %0 = arith.cmpi eq, %arg1, %c0_i32 : i32
    %1 = arith.extui %0 : i1 to i32
    %c0_i32_0 = arith.constant 0 : i32
    %2 = arith.cmpi ne, %1, %c0_i32_0 : i32
    scf.if %2 {
      %c0_8 = arith.constant 0 : index
      %c0_9 = arith.constant 0 : index
      %14 = vector.load %arg3[%c0_8, %c0_9] : memref<128x256xf32, #tpu.memory_space<vmem>>, vector<128x256xf32>
      %c0_10 = arith.constant 0 : index
      %c0_11 = arith.constant 0 : index
      %15 = vector.load %arg4[%c0_10, %c0_11] : memref<256x128xf32, #tpu.memory_space<vmem>>, vector<256x128xf32>
      %cst_12 = arith.constant dense<0.000000e+00> : vector<128x128xf32>
      %16 = tpu.matmul %14, %15, %cst_12 {dimension_numbers = #tpu.dot_dimension_numbers<[1], [0], [0], [1], [0, 0, 1, 1], [], []>} : vector<128x256xf32>, vector<256x128xf32>, vector<128x128xf32> -> vector<128x128xf32>
      %17 = arith.index_cast %arg2 : i32 to index
      %c0_13 = arith.constant 0 : index
      %c0_14 = arith.constant 0 : index
      %18 = vector.load %arg8[%17, %c0_13, %c0_14] : memref<2x128x128xf32, #tpu.memory_space<vmem>>, vector<1x128x128xf32>
      %19 = vector.shape_cast %18 : vector<1x128x128xf32> to vector<128x128xf32>
      %20 = vector.shape_cast %16 : vector<128x128xf32> to vector<1x128x128xf32>
      tpu.vector_store %arg8[%17, %c0_13, %c0_14], %20 {strides = array<i32>} : memref<2x128x128xf32, #tpu.memory_space<vmem>>, vector<1x128x128xf32>,
    } else {
    }
    %3 = arith.index_cast %arg2 : i32 to index
    %c0 = arith.constant 0 : index
    %c0_1 = arith.constant 0 : index
    %4 = vector.load %arg8[%3, %c0, %c0_1] : memref<2x128x128xf32, #tpu.memory_space<vmem>>, vector<1x128x128xf32>
    %5 = vector.shape_cast %4 : vector<1x128x128xf32> to vector<128x128xf32>
    %c0_2 = arith.constant 0 : index
    %c0_3 = arith.constant 0 : index
    %6 = vector.load %arg5[%c0_2, %c0_3] : memref<128x128xf32, #tpu.memory_space<vmem>>, vector<128x128xf32>
    %cst = arith.constant dense<0.000000e+00> : vector<128x128xf32>
    %7 = tpu.matmul %5, %6, %cst {dimension_numbers = #tpu.dot_dimension_numbers<[1], [0], [0], [1], [0, 0, 1, 1], [], []>} : vector<128x128xf32>, vector<128x128xf32>, vector<128x128xf32> -> vector<128x128xf32>
    %c0_i32_4 = arith.constant 0 : i32
    %8 = arith.cmpi eq, %arg2, %c0_i32_4 : i32
    %9 = arith.extui %8 : i1 to i32
    %c0_i32_5 = arith.constant 0 : i32
    %10 = arith.cmpi ne, %9, %c0_i32_5 : i32
    scf.if %10 {
      %c0_8 = arith.constant 0 : index
      %c0_9 = arith.constant 0 : index
      %14 = vector.load %arg6[%c0_8, %c0_9] : memref<128x128xf32, #tpu.memory_space<vmem>>, vector<128x128xf32>
      %15 = arith.subf %14, %7 : vector<128x128xf32>
      %c0_10 = arith.constant 0 : index
      %c0_11 = arith.constant 0 : index
      %16 = vector.load %arg7[%c0_10, %c0_11] : memref<128x128xf32, #tpu.memory_space<vmem>>, vector<128x128xf32>
      tpu.vector_store %arg7[%c0_10, %c0_11], %15 {strides = array<i32>} : memref<128x128xf32, #tpu.memory_space<vmem>>, vector<128x128xf32>,
    } else {
    }
    %c0_i32_6 = arith.constant 0 : i32
    %11 = arith.cmpi sgt, %arg2, %c0_i32_6 : i32
    %12 = arith.extui %11 : i1 to i32
    %c0_i32_7 = arith.constant 0 : i32
    %13 = arith.cmpi ne, %12, %c0_i32_7 : i32
    scf.if %13 {
      %c0_8 = arith.constant 0 : index
      %c0_9 = arith.constant 0 : index
      %14 = vector.load %arg7[%c0_8, %c0_9] : memref<128x128xf32, #tpu.memory_space<vmem>>, vector<128x128xf32>
      %15 = arith.subf %14, %7 : vector<128x128xf32>
      %c0_10 = arith.constant 0 : index
      %c0_11 = arith.constant 0 : index
      %16 = vector.load %arg7[%c0_10, %c0_11] : memref<128x128xf32, #tpu.memory_space<vmem>>, vector<128x128xf32>
      tpu.vector_store %arg7[%c0_10, %c0_11], %15 {strides = array<i32>} : memref<128x128xf32, #tpu.memory_space<vmem>>, vector<128x128xf32>,
    } else {
    }
    return
  }
  func.func @transform_0(%arg0: i32, %arg1: i32, %arg2: i32) -> (i32, i32) {
    %c0_i32 = arith.constant 0 : i32
    %c0_i32_0 = arith.constant 0 : i32
    return %arg0, %c0_i32 : i32, i32
  }
  func.func @transform_1(%arg0: i32, %arg1: i32, %arg2: i32) -> (i32, i32) {
    %c0_i32 = arith.constant 0 : i32
    %0 = arith.cmpi eq, %arg1, %c0_i32 : i32
    %c1_i32 = arith.constant 1 : i32
    %1 = arith.select %0, %arg2, %c1_i32 : i32
    %c0_i32_0 = arith.constant 0 : i32
    %c0_i32_1 = arith.constant 0 : i32
    return %c0_i32_0, %1 : i32, i32
  }
  func.func @transform_2(%arg0: i32, %arg1: i32, %arg2: i32) -> (i32, i32) {
    %c0_i32 = arith.constant 0 : i32
    return %arg2, %arg1 : i32, i32
  }
  func.func @transform_3(%arg0: i32, %arg1: i32, %arg2: i32) -> (i32, i32) {
    %c0_i32 = arith.constant 0 : i32
    return %arg0, %arg1 : i32, i32
  }
  func.func @transform_4(%arg0: i32, %arg1: i32, %arg2: i32) -> (i32, i32) {
    %c0_i32 = arith.constant 0 : i32
    return %arg0, %arg1 : i32, i32
  }
}

</mosaic_0001>

<llo_original>
// kernel: custom-call.3
$region0: #{custom-call.3}
  %s0 = inlined_call_operand.vmem [shape: f32[128,128], index: 0, kind: input, shape index: {}]
  %s1 = inlined_call_operand.vmem [shape: f32[128,128], index: 1, kind: input, shape index: {}]
  %s2 = inlined_call_operand.vmem [shape: f32[128,128], index: 2, kind: input, shape index: {}]
  %s3 = inlined_call_operand.vmem [shape: f32[128,128], index: 3, kind: input, shape index: {}]
  %s4 = inlined_call_operand.vmem [shape: f32[128], index: 4, kind: output, shape index: {0}]
  %s5 = inlined_call_operand.vmem [shape: f32[128], index: 5, kind: output, shape index: {1}]
  %s6 = inlined_call_operand.hbm [shape: f32[128,128], index: 6, kind: output, shape index: {2}]
  %s7 = inlined_call_operand.hbm [shape: f32[128,128], index: 7, kind: output, shape index: {3}]
  %s8 = inlined_call_operand.hbm [shape: f32[128,128], index: 8, kind: output, shape index: {4}]
  %s9 = inlined_call_operand.hbm [shape: f32[128,128], index: 9, kind: output, shape index: {5}]
  %10 = xla_tuple %s4, %s5, %s6, %s7, %s8, %s9
  $region1: #{custom-call.3} parent=0
    #allocation0 [shape = 'u8[65536]{0}', space=vmem, size = 0x10000, scoped, tag = 'operand span for operand 0']
    #allocation1 [shape = 'u8[65536]{0}', space=vmem, size = 0x10000, scoped, tag = 'operand span for operand 1']
    #allocation2 [shape = 'u8[65536]{0}', space=vmem, size = 0x10000, scoped, tag = 'operand span for operand 2']
    #allocation3 [shape = 'u8[65536]{0}', space=vmem, size = 0x10000, scoped, tag = 'operand span for operand 3']
    #allocation4 [shape = 'u8[4096]{0}', space=vmem, size = 0x1000, scoped, tag = 'operand span for operand 4']
    #allocation5 [shape = 'u8[512]{0}', space=vmem, size = 0x400, scoped, tag = 'packed  for operand 4']
    #allocation6 [shape = 'u8[4096]{0}', space=vmem, size = 0x1000, scoped, tag = 'operand span for operand 5']
    #allocation7 [shape = 'u8[512]{0}', space=vmem, size = 0x400, scoped, tag = 'packed  for operand 5']
    #allocation8 [shape = 'u8[65536]{0}', space=vmem, size = 0x10000, scoped, tag = 'operand span for operand 6']
    #allocation9 [shape = 's32[1]{0}', space=sflag, size = 0x4, scoped, tag = 'scoped memory for custom-call.3']
    #allocation10 [shape = 'u8[65536]{0}', space=vmem, size = 0x10000, scoped, tag = 'operand span for operand 7']
    #allocation11 [shape = 's32[1]{0}', space=sflag, size = 0x4, scoped, tag = 'scoped memory for custom-call.3']
    #allocation12 [shape = 'u8[65536]{0}', space=vmem, size = 0x10000, scoped, tag = 'operand span for operand 8']
    #allocation13 [shape = 'u8[65536]{0}', space=vmem, size = 0x10000, scoped, tag = 'operand span for operand 9']
    #allocation14 [shape = 's32[1]{0}', space=sflag, size = 0x4, scoped, tag = 'scoped memory for custom-call.3']
    #allocation15 [shape = 'f32[128,128]{1,0}', space=vmem, size = 0x10000, scoped, tag = 'a top-left matrix']
    #allocation16 [shape = 'f32[128,128]{1,0}', space=vmem, size = 0x10000, scoped, tag = 'a top-right matrix']
    #allocation17 [shape = 'f32[128,128]{1,0}', space=vmem, size = 0x10000, scoped, tag = 'a bottom-left matrix']
    #allocation18 [shape = 'f32[128,128]{1,0}', space=vmem, size = 0x10000, scoped, tag = 'a bottom-right matrix']
    %11 = vsyncpa [#allocation9], 0
    %12 = vsyncpa [#allocation11], 0
    %13 = vsyncpa [#allocation14], 0
    %p15 = scmp.gt.s32.totalorder 128, 0
    // Predicated region
    $region2: #{custom-call.3} parent=1 // pred_check
      %p16 = pneg %p15
    $region3: #{custom-call.3} parent=1 // pred_check_branch
      %18 = sbr.rel (%p16) target = $region5
    $region4: #{custom-call.3} parent=1 // pred_region
      %s19 = sshra.s32 128, 3
      %p20 = scmp.gt.s32.totalorder %s19, 0
      // Predicated region
      $region6: #{custom-call.3} parent=4 // pred_check
        %p21 = pneg %p20
      $region7: #{custom-call.3} parent=4 // pred_check_branch
        %23 = sbr.rel (%p21) target = $region9
      $region8: #{custom-call.3} parent=4 // pred_region
        %s24 = ssub.s32 %s19, 1
        %s25 = smul.u32 %s24, 128
        %s26 = sshra.s32 %s25, 4
        %s27 = scalar_lea.vmem %s0, %s26
        %v28 = vld [vmem:[%s0] sm:$0xff]
        // While loop
        $region10: #{custom-call.3} parent=8 // loop_pre_header
          _
        $region11: #{custom-call.3} parent=8 // loop_header
          %s29 = sphi %s0, %s51
          %s30 = sphi [#allocation0], %s52
          %v31 = vphi %v28, %v53
          %s32 = ssub.s32 %s27, 64
          %p33 = scmp.gt.s32.totalorder %s29, %s32
        $region12: #{custom-call.3} parent=8 // loop_header_branch
          %35 = sbr.rel (%p33) target = $region16
        $region13: #{custom-call.3} parent=8 // loop_body
          %36 = vst [vmem:[%s30] sm:$0xff] %v31
          %v37 = vld [vmem:[%s29 + $0x8] sm:$0xff]
          %38 = vst [vmem:[%s30 + $0x8] sm:$0xff] %v37
          %v39 = vld [vmem:[%s29 + $0x10] sm:$0xff]
          %40 = vst [vmem:[%s30 + $0x10] sm:$0xff] %v39
          %v41 = vld [vmem:[%s29 + $0x18] sm:$0xff]
          %42 = vst [vmem:[%s30 + $0x18] sm:$0xff] %v41
          %v43 = vld [vmem:[%s29 + $0x20] sm:$0xff]
          %44 = vst [vmem:[%s30 + $0x20] sm:$0xff] %v43
          %v45 = vld [vmem:[%s29 + $0x28] sm:$0xff]
          %46 = vst [vmem:[%s30 + $0x28] sm:$0xff] %v45
          %v47 = vld [vmem:[%s29 + $0x30] sm:$0xff]
          %48 = vst [vmem:[%s30 + $0x30] sm:$0xff] %v47
          %v49 = vld [vmem:[%s29 + $0x38] sm:$0xff]
          %50 = vst [vmem:[%s30 + $0x38] sm:$0xff] %v49
        $region14: #{custom-call.3} parent=8 // loop_footer
          %s51 = scalar_lea.vmem %s29, 64
          %s52 = scalar_lea.vmem %s30, 64
          %v53 = vld [vmem:[%s29 + $0x40] sm:$0xff]
        $region15: #{custom-call.3} parent=8 // loop_footer_branch
          %54 = sbr.rel target = $region11
        $region16: #{custom-call.3} parent=8 // loop_exit
          _
        // While loop
        $region17: #{custom-call.3} parent=8 // loop_pre_header
          _
        $region18: #{custom-call.3} parent=8 // loop_header
          %s55 = sphi %s29, %s63
          %s56 = sphi %s30, %s64
          %v57 = vphi %v31, %v57
          %p58 = scmp.gt.s32.totalorder %s55, %s27
        $region19: #{custom-call.3} parent=8 // loop_header_branch
          %60 = sbr.rel (%p58) target = $region23
        $region20: #{custom-call.3} parent=8 // loop_body
          %v61 = vld [vmem:[%s55] sm:$0xff]
          %62 = vst [vmem:[%s56] sm:$0xff] %v61
        $region21: #{custom-call.3} parent=8 // loop_footer
          %s63 = scalar_lea.vmem %s55, 8
          %s64 = scalar_lea.vmem %s56, 8
        $region22: #{custom-call.3} parent=8 // loop_footer_branch
          %65 = sbr.rel target = $region18
        $region23: #{custom-call.3} parent=8 // loop_exit
          _
      $region9: #{custom-call.3} parent=4 // pred_fallthru
        _
      %s66 = sand.u32 128, 7
      %s67 = sshll.u32 1, %s66
      %s68 = ssub.s32 %s67, 1
      %s69 = smul.u32 %s19, 128
      %s70 = sshra.s32 %s69, 4
      %s71 = scalar_lea.vmem [#allocation0], %s70
      %s72 = smul.u32 %s19, 128
      %s73 = sshra.s32 %s72, 4
      %s74 = scalar_lea.vmem %s0, %s73
      %v75 = vld [vmem:[%s74] sm:%s68]
      %76 = vst [vmem:[%s71] sm:%s68] %v75
    $region5: #{custom-call.3} parent=1 // pred_fallthru
      _
    %p78 = scmp.gt.s32.totalorder 128, 0
    // Predicated region
    $region24: #{custom-call.3} parent=1 // pred_check
      %p79 = pneg %p78
    $region25: #{custom-call.3} parent=1 // pred_check_branch
      %81 = sbr.rel (%p79) target = $region27
    $region26: #{custom-call.3} parent=1 // pred_region
      %s82 = sshra.s32 128, 3
      %p83 = scmp.gt.s32.totalorder %s82, 0
      // Predicated region
      $region28: #{custom-call.3} parent=26 // pred_check
        %p84 = pneg %p83
      $region29: #{custom-call.3} parent=26 // pred_check_branch
        %86 = sbr.rel (%p84) target = $region31
      $region30: #{custom-call.3} parent=26 // pred_region
        %s87 = ssub.s32 %s82, 1
        %s88 = smul.u32 %s87, 128
        %s89 = sshra.s32 %s88, 4
        %s90 = scalar_lea.vmem %s1, %s89
        %v91 = vld [vmem:[%s1] sm:$0xff]
        // While loop
        $region32: #{custom-call.3} parent=30 // loop_pre_header
          _
        $region33: #{custom-call.3} parent=30 // loop_header
          %s92 = sphi %s1, %s114
          %s93 = sphi [#allocation1], %s115
          %v94 = vphi %v91, %v116
          %s95 = ssub.s32 %s90, 64
          %p96 = scmp.gt.s32.totalorder %s92, %s95
        $region34: #{custom-call.3} parent=30 // loop_header_branch
          %98 = sbr.rel (%p96) target = $region38
        $region35: #{custom-call.3} parent=30 // loop_body
          %99 = vst [vmem:[%s93] sm:$0xff] %v94
          %v100 = vld [vmem:[%s92 + $0x8] sm:$0xff]
          %101 = vst [vmem:[%s93 + $0x8] sm:$0xff] %v100
          %v102 = vld [vmem:[%s92 + $0x10] sm:$0xff]
          %103 = vst [vmem:[%s93 + $0x10] sm:$0xff] %v102
          %v104 = vld [vmem:[%s92 + $0x18] sm:$0xff]
          %105 = vst [vmem:[%s93 + $0x18] sm:$0xff] %v104
          %v106 = vld [vmem:[%s92 + $0x20] sm:$0xff]
          %107 = vst [vmem:[%s93 + $0x20] sm:$0xff] %v106
          %v108 = vld [vmem:[%s92 + $0x28] sm:$0xff]
          %109 = vst [vmem:[%s93 + $0x28] sm:$0xff] %v108
          %v110 = vld [vmem:[%s92 + $0x30] sm:$0xff]
          %111 = vst [vmem:[%s93 + $0x30] sm:$0xff] %v110
          %v112 = vld [vmem:[%s92 + $0x38] sm:$0xff]
          %113 = vst [vmem:[%s93 + $0x38] sm:$0xff] %v112
        $region36: #{custom-call.3} parent=30 // loop_footer
          %s114 = scalar_lea.vmem %s92, 64
          %s115 = scalar_lea.vmem %s93, 64
          %v116 = vld [vmem:[%s92 + $0x40] sm:$0xff]
        $region37: #{custom-call.3} parent=30 // loop_footer_branch
          %117 = sbr.rel target = $region33
        $region38: #{custom-call.3} parent=30 // loop_exit
          _
        // While loop
        $region39: #{custom-call.3} parent=30 // loop_pre_header
          _
        $region40: #{custom-call.3} parent=30 // loop_header
          %s118 = sphi %s92, %s126
          %s119 = sphi %s93, %s127
          %v120 = vphi %v94, %v120
          %p121 = scmp.gt.s32.totalorder %s118, %s90
        $region41: #{custom-call.3} parent=30 // loop_header_branch
          %123 = sbr.rel (%p121) target = $region45
        $region42: #{custom-call.3} parent=30 // loop_body
          %v124 = vld [vmem:[%s118] sm:$0xff]
          %125 = vst [vmem:[%s119] sm:$0xff] %v124
        $region43: #{custom-call.3} parent=30 // loop_footer
          %s126 = scalar_lea.vmem %s118, 8
          %s127 = scalar_lea.vmem %s119, 8
        $region44: #{custom-call.3} parent=30 // loop_footer_branch
          %128 = sbr.rel target = $region40
        $region45: #{custom-call.3} parent=30 // loop_exit
          _
      $region31: #{custom-call.3} parent=26 // pred_fallthru
        _
      %s129 = sand.u32 128, 7
      %s130 = sshll.u32 1, %s129
      %s131 = ssub.s32 %s130, 1
      %s132 = smul.u32 %s82, 128
      %s133 = sshra.s32 %s132, 4
      %s134 = scalar_lea.vmem [#allocation1], %s133
      %s135 = smul.u32 %s82, 128
      %s136 = sshra.s32 %s135, 4
      %s137 = scalar_lea.vmem %s1, %s136
      %v138 = vld [vmem:[%s137] sm:%s131]
      %139 = vst [vmem:[%s134] sm:%s131] %v138
    $region27: #{custom-call.3} parent=1 // pred_fallthru
      _
    %p141 = scmp.gt.s32.totalorder 128, 0
    // Predicated region
    $region46: #{custom-call.3} parent=1 // pred_check
      %p142 = pneg %p141
    $region47: #{custom-call.3} parent=1 // pred_check_branch
      %144 = sbr.rel (%p142) target = $region49
    $region48: #{custom-call.3} parent=1 // pred_region
      %s145 = sshra.s32 128, 3
      %p146 = scmp.gt.s32.totalorder %s145, 0
      // Predicated region
      $region50: #{custom-call.3} parent=48 // pred_check
        %p147 = pneg %p146
      $region51: #{custom-call.3} parent=48 // pred_check_branch
        %149 = sbr.rel (%p147) target = $region53
      $region52: #{custom-call.3} parent=48 // pred_region
        %s150 = ssub.s32 %s145, 1
        %s151 = smul.u32 %s150, 128
        %s152 = sshra.s32 %s151, 4
        %s153 = scalar_lea.vmem %s2, %s152
        %v154 = vld [vmem:[%s2] sm:$0xff]
        // While loop
        $region54: #{custom-call.3} parent=52 // loop_pre_header
          _
        $region55: #{custom-call.3} parent=52 // loop_header
          %s155 = sphi %s2, %s177
          %s156 = sphi [#allocation2], %s178
          %v157 = vphi %v154, %v179
          %s158 = ssub.s32 %s153, 64
          %p159 = scmp.gt.s32.totalorder %s155, %s158
        $region56: #{custom-call.3} parent=52 // loop_header_branch
          %161 = sbr.rel (%p159) target = $region60
        $region57: #{custom-call.3} parent=52 // loop_body
          %162 = vst [vmem:[%s156] sm:$0xff] %v157
          %v163 = vld [vmem:[%s155 + $0x8] sm:$0xff]
          %164 = vst [vmem:[%s156 + $0x8] sm:$0xff] %v163
          %v165 = vld [vmem:[%s155 + $0x10] sm:$0xff]
          %166 = vst [vmem:[%s156 + $0x10] sm:$0xff] %v165
          %v167 = vld [vmem:[%s155 + $0x18] sm:$0xff]
          %168 = vst [vmem:[%s156 + $0x18] sm:$0xff] %v167
          %v169 = vld [vmem:[%s155 + $0x20] sm:$0xff]
          %170 = vst [vmem:[%s156 + $0x20] sm:$0xff] %v169
          %v171 = vld [vmem:[%s155 + $0x28] sm:$0xff]
          %172 = vst [vmem:[%s156 + $0x28] sm:$0xff] %v171
          %v173 = vld [vmem:[%s155 + $0x30] sm:$0xff]
          %174 = vst [vmem:[%s156 + $0x30] sm:$0xff] %v173
          %v175 = vld [vmem:[%s155 + $0x38] sm:$0xff]
          %176 = vst [vmem:[%s156 + $0x38] sm:$0xff] %v175
        $region58: #{custom-call.3} parent=52 // loop_footer
          %s177 = scalar_lea.vmem %s155, 64
          %s178 = scalar_lea.vmem %s156, 64
          %v179 = vld [vmem:[%s155 + $0x40] sm:$0xff]
        $region59: #{custom-call.3} parent=52 // loop_footer_branch
          %180 = sbr.rel target = $region55
        $region60: #{custom-call.3} parent=52 // loop_exit
          _
        // While loop
        $region61: #{custom-call.3} parent=52 // loop_pre_header
          _
        $region62: #{custom-call.3} parent=52 // loop_header
          %s181 = sphi %s155, %s189
          %s182 = sphi %s156, %s190
          %v183 = vphi %v157, %v183
          %p184 = scmp.gt.s32.totalorder %s181, %s153
        $region63: #{custom-call.3} parent=52 // loop_header_branch
          %186 = sbr.rel (%p184) target = $region67
        $region64: #{custom-call.3} parent=52 // loop_body
          %v187 = vld [vmem:[%s181] sm:$0xff]
          %188 = vst [vmem:[%s182] sm:$0xff] %v187
        $region65: #{custom-call.3} parent=52 // loop_footer
          %s189 = scalar_lea.vmem %s181, 8
          %s190 = scalar_lea.vmem %s182, 8
        $region66: #{custom-call.3} parent=52 // loop_footer_branch
          %191 = sbr.rel target = $region62
        $region67: #{custom-call.3} parent=52 // loop_exit
          _
      $region53: #{custom-call.3} parent=48 // pred_fallthru
        _
      %s192 = sand.u32 128, 7
      %s193 = sshll.u32 1, %s192
      %s194 = ssub.s32 %s193, 1
      %s195 = smul.u32 %s145, 128
      %s196 = sshra.s32 %s195, 4
      %s197 = scalar_lea.vmem [#allocation2], %s196
      %s198 = smul.u32 %s145, 128
      %s199 = sshra.s32 %s198, 4
      %s200 = scalar_lea.vmem %s2, %s199
      %v201 = vld [vmem:[%s200] sm:%s194]
      %202 = vst [vmem:[%s197] sm:%s194] %v201
    $region49: #{custom-call.3} parent=1 // pred_fallthru
      _
    %p204 = scmp.gt.s32.totalorder 128, 0
    // Predicated region
    $region68: #{custom-call.3} parent=1 // pred_check
      %p205 = pneg %p204
    $region69: #{custom-call.3} parent=1 // pred_check_branch
      %207 = sbr.rel (%p205) target = $region71
    $region70: #{custom-call.3} parent=1 // pred_region
      %s208 = sshra.s32 128, 3
      %p209 = scmp.gt.s32.totalorder %s208, 0
      // Predicated region
      $region72: #{custom-call.3} parent=70 // pred_check
        %p210 = pneg %p209
      $region73: #{custom-call.3} parent=70 // pred_check_branch
        %212 = sbr.rel (%p210) target = $region75
      $region74: #{custom-call.3} parent=70 // pred_region
        %s213 = ssub.s32 %s208, 1
        %s214 = smul.u32 %s213, 128
        %s215 = sshra.s32 %s214, 4
        %s216 = scalar_lea.vmem %s3, %s215
        %v217 = vld [vmem:[%s3] sm:$0xff]
        // While loop
        $region76: #{custom-call.3} parent=74 // loop_pre_header
          _
        $region77: #{custom-call.3} parent=74 // loop_header
          %s218 = sphi %s3, %s240
          %s219 = sphi [#allocation3], %s241
          %v220 = vphi %v217, %v242
          %s221 = ssub.s32 %s216, 64
          %p222 = scmp.gt.s32.totalorder %s218, %s221
        $region78: #{custom-call.3} parent=74 // loop_header_branch
          %224 = sbr.rel (%p222) target = $region82
        $region79: #{custom-call.3} parent=74 // loop_body
          %225 = vst [vmem:[%s219] sm:$0xff] %v220
          %v226 = vld [vmem:[%s218 + $0x8] sm:$0xff]
          %227 = vst [vmem:[%s219 + $0x8] sm:$0xff] %v226
          %v228 = vld [vmem:[%s218 + $0x10] sm:$0xff]
          %229 = vst [vmem:[%s219 + $0x10] sm:$0xff] %v228
          %v230 = vld [vmem:[%s218 + $0x18] sm:$0xff]
          %231 = vst [vmem:[%s219 + $0x18] sm:$0xff] %v230
          %v232 = vld [vmem:[%s218 + $0x20] sm:$0xff]
          %233 = vst [vmem:[%s219 + $0x20] sm:$0xff] %v232
          %v234 = vld [vmem:[%s218 + $0x28] sm:$0xff]
          %235 = vst [vmem:[%s219 + $0x28] sm:$0xff] %v234
          %v236 = vld [vmem:[%s218 + $0x30] sm:$0xff]
          %237 = vst [vmem:[%s219 + $0x30] sm:$0xff] %v236
          %v238 = vld [vmem:[%s218 + $0x38] sm:$0xff]
          %239 = vst [vmem:[%s219 + $0x38] sm:$0xff] %v238
        $region80: #{custom-call.3} parent=74 // loop_footer
          %s240 = scalar_lea.vmem %s218, 64
          %s241 = scalar_lea.vmem %s219, 64
          %v242 = vld [vmem:[%s218 + $0x40] sm:$0xff]
        $region81: #{custom-call.3} parent=74 // loop_footer_branch
          %243 = sbr.rel target = $region77
        $region82: #{custom-call.3} parent=74 // loop_exit
          _
        // While loop
        $region83: #{custom-call.3} parent=74 // loop_pre_header
          _
        $region84: #{custom-call.3} parent=74 // loop_header
          %s244 = sphi %s218, %s252
          %s245 = sphi %s219, %s253
          %v246 = vphi %v220, %v246
          %p247 = scmp.gt.s32.totalorder %s244, %s216
        $region85: #{custom-call.3} parent=74 // loop_header_branch
          %249 = sbr.rel (%p247) target = $region89
        $region86: #{custom-call.3} parent=74 // loop_body
          %v250 = vld [vmem:[%s244] sm:$0xff]
          %251 = vst [vmem:[%s245] sm:$0xff] %v250
        $region87: #{custom-call.3} parent=74 // loop_footer
          %s252 = scalar_lea.vmem %s244, 8
          %s253 = scalar_lea.vmem %s245, 8
        $region88: #{custom-call.3} parent=74 // loop_footer_branch
          %254 = sbr.rel target = $region84
        $region89: #{custom-call.3} parent=74 // loop_exit
          _
      $region75: #{custom-call.3} parent=70 // pred_fallthru
        _
      %s255 = sand.u32 128, 7
      %s256 = sshll.u32 1, %s255
      %s257 = ssub.s32 %s256, 1
      %s258 = smul.u32 %s208, 128
      %s259 = sshra.s32 %s258, 4
      %s260 = scalar_lea.vmem [#allocation3], %s259
      %s261 = smul.u32 %s208, 128
      %s262 = sshra.s32 %s261, 4
      %s263 = scalar_lea.vmem %s3, %s262
      %v264 = vld [vmem:[%s263] sm:%s257]
      %265 = vst [vmem:[%s260] sm:%s257] %v264
    $region71: #{custom-call.3} parent=1 // pred_fallthru
      _
    %s266 = smov [#allocation15]
    %v267 = vld [vmem:[#allocation0] sm:$0xff]
    %268 = vst [vmem:[%s266] sm:$0xff] %v267
    %s269 = scalar_lea.vmem %s266, 8
    %s270 = scalar_lea.vmem [#allocation0], 8
    %v271 = vld [vmem:[%s270] sm:$0xff]
    %272 = vst [vmem:[%s269] sm:$0xff] %v271
    %s273 = scalar_lea.vmem %s266, 16
    %s274 = scalar_lea.vmem [#allocation0], 16
    %v275 = vld [vmem:[%s274] sm:$0xff]
    %276 = vst [vmem:[%s273] sm:$0xff] %v275
    %s277 = scalar_lea.vmem %s266, 24
    %s278 = scalar_lea.vmem [#allocation0], 24
    %v279 = vld [vmem:[%s278] sm:$0xff]
    %280 = vst [vmem:[%s277] sm:$0xff] %v279
    %s281 = scalar_lea.vmem %s266, 32
    %s282 = scalar_lea.vmem [#allocation0], 32
    %v283 = vld [vmem:[%s282] sm:$0xff]
    %284 = vst [vmem:[%s281] sm:$0xff] %v283
    %s285 = scalar_lea.vmem %s266, 40
    %s286 = scalar_lea.vmem [#allocation0], 40
    %v287 = vld [vmem:[%s286] sm:$0xff]
    %288 = vst [vmem:[%s285] sm:$0xff] %v287
    %s289 = scalar_lea.vmem %s266, 48
    %s290 = scalar_lea.vmem [#allocation0], 48
    %v291 = vld [vmem:[%s290] sm:$0xff]
    %292 = vst [vmem:[%s289] sm:$0xff] %v291
    %s293 = scalar_lea.vmem %s266, 56
    %s294 = scalar_lea.vmem [#allocation0], 56
    %v295 = vld [vmem:[%s294] sm:$0xff]
    %296 = vst [vmem:[%s293] sm:$0xff] %v295
    %s297 = scalar_lea.vmem %s266, 64
    %s298 = scalar_lea.vmem [#allocation0], 64
    %v299 = vld [vmem:[%s298] sm:$0xff]
    %300 = vst [vmem:[%s297] sm:$0xff] %v299
    %s301 = scalar_lea.vmem %s266, 72
    %s302 = scalar_lea.vmem [#allocation0], 72
    %v303 = vld [vmem:[%s302] sm:$0xff]
    %304 = vst [vmem:[%s301] sm:$0xff] %v303
    %s305 = scalar_lea.vmem %s266, 80
    %s306 = scalar_lea.vmem [#allocation0], 80
    %v307 = vld [vmem:[%s306] sm:$0xff]
    %308 = vst [vmem:[%s305] sm:$0xff] %v307
    %s309 = scalar_lea.vmem %s266, 88
    %s310 = scalar_lea.vmem [#allocation0], 88
    %v311 = vld [vmem:[%s310] sm:$0xff]
    %312 = vst [vmem:[%s309] sm:$0xff] %v311
    %s313 = scalar_lea.vmem %s266, 96
    %s314 = scalar_lea.vmem [#allocation0], 96
    %v315 = vld [vmem:[%s314] sm:$0xff]
    %316 = vst [vmem:[%s313] sm:$0xff] %v315
    %s317 = scalar_lea.vmem %s266, 104
    %s318 = scalar_lea.vmem [#allocation0], 104
    %v319 = vld [vmem:[%s318] sm:$0xff]
    %320 = vst [vmem:[%s317] sm:$0xff] %v319
    %s321 = scalar_lea.vmem %s266, 112
    %s322 = scalar_lea.vmem [#allocation0], 112
    %v323 = vld [vmem:[%s322] sm:$0xff]
    %324 = vst [vmem:[%s321] sm:$0xff] %v323
    %s325 = scalar_lea.vmem %s266, 120
    %s326 = scalar_lea.vmem [#allocation0], 120
    %v327 = vld [vmem:[%s326] sm:$0xff]
    %328 = vst [vmem:[%s325] sm:$0xff] %v327
    %s329 = smov [#allocation16]
    %v330 = vld [vmem:[#allocation1] sm:$0xff]
    %331 = vst [vmem:[%s329] sm:$0xff] %v330
    %s332 = scalar_lea.vmem %s329, 8
    %s333 = scalar_lea.vmem [#allocation1], 8
    %v334 = vld [vmem:[%s333] sm:$0xff]
    %335 = vst [vmem:[%s332] sm:$0xff] %v334
    %s336 = scalar_lea.vmem %s329, 16
    %s337 = scalar_lea.vmem [#allocation1], 16
    %v338 = vld [vmem:[%s337] sm:$0xff]
    %339 = vst [vmem:[%s336] sm:$0xff] %v338
    %s340 = scalar_lea.vmem %s329, 24
    %s341 = scalar_lea.vmem [#allocation1], 24
    %v342 = vld [vmem:[%s341] sm:$0xff]
    %343 = vst [vmem:[%s340] sm:$0xff] %v342
    %s344 = scalar_lea.vmem %s329, 32
    %s345 = scalar_lea.vmem [#allocation1], 32
    %v346 = vld [vmem:[%s345] sm:$0xff]
    %347 = vst [vmem:[%s344] sm:$0xff] %v346
    %s348 = scalar_lea.vmem %s329, 40
    %s349 = scalar_lea.vmem [#allocation1], 40
    %v350 = vld [vmem:[%s349] sm:$0xff]
    %351 = vst [vmem:[%s348] sm:$0xff] %v350
    %s352 = scalar_lea.vmem %s329, 48
    %s353 = scalar_lea.vmem [#allocation1], 48
    %v354 = vld [vmem:[%s353] sm:$0xff]
    %355 = vst [vmem:[%s352] sm:$0xff] %v354
    %s356 = scalar_lea.vmem %s329, 56
    %s357 = scalar_lea.vmem [#allocation1], 56
    %v358 = vld [vmem:[%s357] sm:$0xff]
    %359 = vst [vmem:[%s356] sm:$0xff] %v358
    %s360 = scalar_lea.vmem %s329, 64
    %s361 = scalar_lea.vmem [#allocation1], 64
    %v362 = vld [vmem:[%s361] sm:$0xff]
    %363 = vst [vmem:[%s360] sm:$0xff] %v362
    %s364 = scalar_lea.vmem %s329, 72
    %s365 = scalar_lea.vmem [#allocation1], 72
    %v366 = vld [vmem:[%s365] sm:$0xff]
    %367 = vst [vmem:[%s364] sm:$0xff] %v366
    %s368 = scalar_lea.vmem %s329, 80
    %s369 = scalar_lea.vmem [#allocation1], 80
    %v370 = vld [vmem:[%s369] sm:$0xff]
    %371 = vst [vmem:[%s368] sm:$0xff] %v370
    %s372 = scalar_lea.vmem %s329, 88
    %s373 = scalar_lea.vmem [#allocation1], 88
    %v374 = vld [vmem:[%s373] sm:$0xff]
    %375 = vst [vmem:[%s372] sm:$0xff] %v374
    %s376 = scalar_lea.vmem %s329, 96
    %s377 = scalar_lea.vmem [#allocation1], 96
    %v378 = vld [vmem:[%s377] sm:$0xff]
    %379 = vst [vmem:[%s376] sm:$0xff] %v378
    %s380 = scalar_lea.vmem %s329, 104
    %s381 = scalar_lea.vmem [#allocation1], 104
    %v382 = vld [vmem:[%s381] sm:$0xff]
    %383 = vst [vmem:[%s380] sm:$0xff] %v382
    %s384 = scalar_lea.vmem %s329, 112
    %s385 = scalar_lea.vmem [#allocation1], 112
    %v386 = vld [vmem:[%s385] sm:$0xff]
    %387 = vst [vmem:[%s384] sm:$0xff] %v386
    %s388 = scalar_lea.vmem %s329, 120
    %s389 = scalar_lea.vmem [#allocation1], 120
    %v390 = vld [vmem:[%s389] sm:$0xff]
    %391 = vst [vmem:[%s388] sm:$0xff] %v390
    %s392 = smov [#allocation17]
    %v393 = vld [vmem:[#allocation2] sm:$0xff]
    %394 = vst [vmem:[%s392] sm:$0xff] %v393
    %s395 = scalar_lea.vmem %s392, 8
    %s396 = scalar_lea.vmem [#allocation2], 8
    %v397 = vld [vmem:[%s396] sm:$0xff]
    %398 = vst [vmem:[%s395] sm:$0xff] %v397
    %s399 = scalar_lea.vmem %s392, 16
    %s400 = scalar_lea.vmem [#allocation2], 16
    %v401 = vld [vmem:[%s400] sm:$0xff]
    %402 = vst [vmem:[%s399] sm:$0xff] %v401
    %s403 = scalar_lea.vmem %s392, 24
    %s404 = scalar_lea.vmem [#allocation2], 24
    %v405 = vld [vmem:[%s404] sm:$0xff]
    %406 = vst [vmem:[%s403] sm:$0xff] %v405
    %s407 = scalar_lea.vmem %s392, 32
    %s408 = scalar_lea.vmem [#allocation2], 32
    %v409 = vld [vmem:[%s408] sm:$0xff]
    %410 = vst [vmem:[%s407] sm:$0xff] %v409
    %s411 = scalar_lea.vmem %s392, 40
    %s412 = scalar_lea.vmem [#allocation2], 40
    %v413 = vld [vmem:[%s412] sm:$0xff]
    %414 = vst [vmem:[%s411] sm:$0xff] %v413
    %s415 = scalar_lea.vmem %s392, 48
    %s416 = scalar_lea.vmem [#allocation2], 48
    %v417 = vld [vmem:[%s416] sm:$0xff]
    %418 = vst [vmem:[%s415] sm:$0xff] %v417
    %s419 = scalar_lea.vmem %s392, 56
    %s420 = scalar_lea.vmem [#allocation2], 56
    %v421 = vld [vmem:[%s420] sm:$0xff]
    %422 = vst [vmem:[%s419] sm:$0xff] %v421
    %s423 = scalar_lea.vmem %s392, 64
    %s424 = scalar_lea.vmem [#allocation2], 64
    %v425 = vld [vmem:[%s424] sm:$0xff]
    %426 = vst [vmem:[%s423] sm:$0xff] %v425
    %s427 = scalar_lea.vmem %s392, 72
    %s428 = scalar_lea.vmem [#allocation2], 72
    %v429 = vld [vmem:[%s428] sm:$0xff]
    %430 = vst [vmem:[%s427] sm:$0xff] %v429
    %s431 = scalar_lea.vmem %s392, 80
    %s432 = scalar_lea.vmem [#allocation2], 80
    %v433 = vld [vmem:[%s432] sm:$0xff]
    %434 = vst [vmem:[%s431] sm:$0xff] %v433
    %s435 = scalar_lea.vmem %s392, 88
    %s436 = scalar_lea.vmem [#allocation2], 88
    %v437 = vld [vmem:[%s436] sm:$0xff]
    %438 = vst [vmem:[%s435] sm:$0xff] %v437
    %s439 = scalar_lea.vmem %s392, 96
    %s440 = scalar_lea.vmem [#allocation2], 96
    %v441 = vld [vmem:[%s440] sm:$0xff]
    %442 = vst [vmem:[%s439] sm:$0xff] %v441
    %s443 = scalar_lea.vmem %s392, 104
    %s444 = scalar_lea.vmem [#allocation2], 104
    %v445 = vld [vmem:[%s444] sm:$0xff]
    %446 = vst [vmem:[%s443] sm:$0xff] %v445
    %s447 = scalar_lea.vmem %s392, 112
    %s448 = scalar_lea.vmem [#allocation2], 112
    %v449 = vld [vmem:[%s448] sm:$0xff]
    %450 = vst [vmem:[%s447] sm:$0xff] %v449
    %s451 = scalar_lea.vmem %s392, 120
    %s452 = scalar_lea.vmem [#allocation2], 120
    %v453 = vld [vmem:[%s452] sm:$0xff]
    %454 = vst [vmem:[%s451] sm:$0xff] %v453
    %s455 = smov [#allocation18]
    %v456 = vld [vmem:[#allocation3] sm:$0xff]
    %457 = vst [vmem:[%s455] sm:$0xff] %v456
    %s458 = scalar_lea.vmem %s455, 8
    %s459 = scalar_lea.vmem [#allocation3], 8
    %v460 = vld [vmem:[%s459] sm:$0xff]
    %461 = vst [vmem:[%s458] sm:$0xff] %v460
    %s462 = scalar_lea.vmem %s455, 16
    %s463 = scalar_lea.vmem [#allocation3], 16
    %v464 = vld [vmem:[%s463] sm:$0xff]
    %465 = vst [vmem:[%s462] sm:$0xff] %v464
    %s466 = scalar_lea.vmem %s455, 24
    %s467 = scalar_lea.vmem [#allocation3], 24
    %v468 = vld [vmem:[%s467] sm:$0xff]
    %469 = vst [vmem:[%s466] sm:$0xff] %v468
    %s470 = scalar_lea.vmem %s455, 32
    %s471 = scalar_lea.vmem [#allocation3], 32
    %v472 = vld [vmem:[%s471] sm:$0xff]
    %473 = vst [vmem:[%s470] sm:$0xff] %v472
    %s474 = scalar_lea.vmem %s455, 40
    %s475 = scalar_lea.vmem [#allocation3], 40
    %v476 = vld [vmem:[%s475] sm:$0xff]
    %477 = vst [vmem:[%s474] sm:$0xff] %v476
    %s478 = scalar_lea.vmem %s455, 48
    %s479 = scalar_lea.vmem [#allocation3], 48
    %v480 = vld [vmem:[%s479] sm:$0xff]
    %481 = vst [vmem:[%s478] sm:$0xff] %v480
    %s482 = scalar_lea.vmem %s455, 56
    %s483 = scalar_lea.vmem [#allocation3], 56
    %v484 = vld [vmem:[%s483] sm:$0xff]
    %485 = vst [vmem:[%s482] sm:$0xff] %v484
    %s486 = scalar_lea.vmem %s455, 64
    %s487 = scalar_lea.vmem [#allocation3], 64
    %v488 = vld [vmem:[%s487] sm:$0xff]
    %489 = vst [vmem:[%s486] sm:$0xff] %v488
    %s490 = scalar_lea.vmem %s455, 72
    %s491 = scalar_lea.vmem [#allocation3], 72
    %v492 = vld [vmem:[%s491] sm:$0xff]
    %493 = vst [vmem:[%s490] sm:$0xff] %v492
    %s494 = scalar_lea.vmem %s455, 80
    %s495 = scalar_lea.vmem [#allocation3], 80
    %v496 = vld [vmem:[%s495] sm:$0xff]
    %497 = vst [vmem:[%s494] sm:$0xff] %v496
    %s498 = scalar_lea.vmem %s455, 88
    %s499 = scalar_lea.vmem [#allocation3], 88
    %v500 = vld [vmem:[%s499] sm:$0xff]
    %501 = vst [vmem:[%s498] sm:$0xff] %v500
    %s502 = scalar_lea.vmem %s455, 96
    %s503 = scalar_lea.vmem [#allocation3], 96
    %v504 = vld [vmem:[%s503] sm:$0xff]
    %505 = vst [vmem:[%s502] sm:$0xff] %v504
    %s506 = scalar_lea.vmem %s455, 104
    %s507 = scalar_lea.vmem [#allocation3], 104
    %v508 = vld [vmem:[%s507] sm:$0xff]
    %509 = vst [vmem:[%s506] sm:$0xff] %v508
    %s510 = scalar_lea.vmem %s455, 112
    %s511 = scalar_lea.vmem [#allocation3], 112
    %v512 = vld [vmem:[%s511] sm:$0xff]
    %513 = vst [vmem:[%s510] sm:$0xff] %v512
    %s514 = scalar_lea.vmem %s455, 120
    %s515 = scalar_lea.vmem [#allocation3], 120
    %v516 = vld [vmem:[%s515] sm:$0xff]
    %517 = vst [vmem:[%s514] sm:$0xff] %v516
    %518 = vst [vmem:[#allocation8] sm:$0xff] 0.0
    %s519 = scalar_lea.vmem [#allocation8], 8
    %520 = vst [vmem:[%s519] sm:$0xff] 0.0
    %s521 = scalar_lea.vmem [#allocation8], 16
    %522 = vst [vmem:[%s521] sm:$0xff] 0.0
    %s523 = scalar_lea.vmem [#allocation8], 24
    %524 = vst [vmem:[%s523] sm:$0xff] 0.0
    %s525 = scalar_lea.vmem [#allocation8], 32
    %526 = vst [vmem:[%s525] sm:$0xff] 0.0
    %s527 = scalar_lea.vmem [#allocation8], 40
    %528 = vst [vmem:[%s527] sm:$0xff] 0.0
    %s529 = scalar_lea.vmem [#allocation8], 48
    %530 = vst [vmem:[%s529] sm:$0xff] 0.0
    %s531 = scalar_lea.vmem [#allocation8], 56
    %532 = vst [vmem:[%s531] sm:$0xff] 0.0
    %s533 = scalar_lea.vmem [#allocation8], 64
    %534 = vst [vmem:[%s533] sm:$0xff] 0.0
    %s535 = scalar_lea.vmem [#allocation8], 72
    %536 = vst [vmem:[%s535] sm:$0xff] 0.0
    %s537 = scalar_lea.vmem [#allocation8], 80
    %538 = vst [vmem:[%s537] sm:$0xff] 0.0
    %s539 = scalar_lea.vmem [#allocation8], 88
    %540 = vst [vmem:[%s539] sm:$0xff] 0.0
    %s541 = scalar_lea.vmem [#allocation8], 96
    %542 = vst [vmem:[%s541] sm:$0xff] 0.0
    %s543 = scalar_lea.vmem [#allocation8], 104
    %544 = vst [vmem:[%s543] sm:$0xff] 0.0
    %s545 = scalar_lea.vmem [#allocation8], 112
    %546 = vst [vmem:[%s545] sm:$0xff] 0.0
    %s547 = scalar_lea.vmem [#allocation8], 120
    %548 = vst [vmem:[%s547] sm:$0xff] 0.0
    %549 = vst [vmem:[#allocation10] sm:$0xff] 0.0
    %s550 = scalar_lea.vmem [#allocation10], 8
    %551 = vst [vmem:[%s550] sm:$0xff] 0.0
    %s552 = scalar_lea.vmem [#allocation10], 16
    %553 = vst [vmem:[%s552] sm:$0xff] 0.0
    %s554 = scalar_lea.vmem [#allocation10], 24
    %555 = vst [vmem:[%s554] sm:$0xff] 0.0
    %s556 = scalar_lea.vmem [#allocation10], 32
    %557 = vst [vmem:[%s556] sm:$0xff] 0.0
    %s558 = scalar_lea.vmem [#allocation10], 40
    %559 = vst [vmem:[%s558] sm:$0xff] 0.0
    %s560 = scalar_lea.vmem [#allocation10], 48
    %561 = vst [vmem:[%s560] sm:$0xff] 0.0
    %s562 = scalar_lea.vmem [#allocation10], 56
    %563 = vst [vmem:[%s562] sm:$0xff] 0.0
    %s564 = scalar_lea.vmem [#allocation10], 64
    %565 = vst [vmem:[%s564] sm:$0xff] 0.0
    %s566 = scalar_lea.vmem [#allocation10], 72
    %567 = vst [vmem:[%s566] sm:$0xff] 0.0
    %s568 = scalar_lea.vmem [#allocation10], 80
    %569 = vst [vmem:[%s568] sm:$0xff] 0.0
    %s570 = scalar_lea.vmem [#allocation10], 88
    %571 = vst [vmem:[%s570] sm:$0xff] 0.0
    %s572 = scalar_lea.vmem [#allocation10], 96
    %573 = vst [vmem:[%s572] sm:$0xff] 0.0
    %s574 = scalar_lea.vmem [#allocation10], 104
    %575 = vst [vmem:[%s574] sm:$0xff] 0.0
    %s576 = scalar_lea.vmem [#allocation10], 112
    %577 = vst [vmem:[%s576] sm:$0xff] 0.0
    %s578 = scalar_lea.vmem [#allocation10], 120
    %579 = vst [vmem:[%s578] sm:$0xff] 0.0
    %580 = vst [vmem:[#allocation12] sm:$0xff] 0.0
    %s581 = scalar_lea.vmem [#allocation12], 8
    %582 = vst [vmem:[%s581] sm:$0xff] 0.0
    %s583 = scalar_lea.vmem [#allocation12], 16
    %584 = vst [vmem:[%s583] sm:$0xff] 0.0
    %s585 = scalar_lea.vmem [#allocation12], 24
    %586 = vst [vmem:[%s585] sm:$0xff] 0.0
    %s587 = scalar_lea.vmem [#allocation12], 32
    %588 = vst [vmem:[%s587] sm:$0xff] 0.0
    %s589 = scalar_lea.vmem [#allocation12], 40
    %590 = vst [vmem:[%s589] sm:$0xff] 0.0
    %s591 = scalar_lea.vmem [#allocation12], 48
    %592 = vst [vmem:[%s591] sm:$0xff] 0.0
    %s593 = scalar_lea.vmem [#allocation12], 56
    %594 = vst [vmem:[%s593] sm:$0xff] 0.0
    %s595 = scalar_lea.vmem [#allocation12], 64
    %596 = vst [vmem:[%s595] sm:$0xff] 0.0
    %s597 = scalar_lea.vmem [#allocation12], 72
    %598 = vst [vmem:[%s597] sm:$0xff] 0.0
    %s599 = scalar_lea.vmem [#allocation12], 80
    %600 = vst [vmem:[%s599] sm:$0xff] 0.0
    %s601 = scalar_lea.vmem [#allocation12], 88
    %602 = vst [vmem:[%s601] sm:$0xff] 0.0
    %s603 = scalar_lea.vmem [#allocation12], 96
    %604 = vst [vmem:[%s603] sm:$0xff] 0.0
    %s605 = scalar_lea.vmem [#allocation12], 104
    %606 = vst [vmem:[%s605] sm:$0xff] 0.0
    %s607 = scalar_lea.vmem [#allocation12], 112
    %608 = vst [vmem:[%s607] sm:$0xff] 0.0
    %s609 = scalar_lea.vmem [#allocation12], 120
    %610 = vst [vmem:[%s609] sm:$0xff] 0.0
    %611 = vst [vmem:[#allocation13] sm:$0xff] 0.0
    %s612 = scalar_lea.vmem [#allocation13], 8
    %613 = vst [vmem:[%s612] sm:$0xff] 0.0
    %s614 = scalar_lea.vmem [#allocation13], 16
    %615 = vst [vmem:[%s614] sm:$0xff] 0.0
    %s616 = scalar_lea.vmem [#allocation13], 24
    %617 = vst [vmem:[%s616] sm:$0xff] 0.0
    %s618 = scalar_lea.vmem [#allocation13], 32
    %619 = vst [vmem:[%s618] sm:$0xff] 0.0
    %s620 = scalar_lea.vmem [#allocation13], 40
    %621 = vst [vmem:[%s620] sm:$0xff] 0.0
    %s622 = scalar_lea.vmem [#allocation13], 48
    %623 = vst [vmem:[%s622] sm:$0xff] 0.0
    %s624 = scalar_lea.vmem [#allocation13], 56
    %625 = vst [vmem:[%s624] sm:$0xff] 0.0
    %s626 = scalar_lea.vmem [#allocation13], 64
    %627 = vst [vmem:[%s626] sm:$0xff] 0.0
    %s628 = scalar_lea.vmem [#allocation13], 72
    %629 = vst [vmem:[%s628] sm:$0xff] 0.0
    %s630 = scalar_lea.vmem [#allocation13], 80
    %631 = vst [vmem:[%s630] sm:$0xff] 0.0
    %s632 = scalar_lea.vmem [#allocation13], 88
    %633 = vst [vmem:[%s632] sm:$0xff] 0.0
    %s634 = scalar_lea.vmem [#allocation13], 96
    %635 = vst [vmem:[%s634] sm:$0xff] 0.0
    %s636 = scalar_lea.vmem [#allocation13], 104
    %637 = vst [vmem:[%s636] sm:$0xff] 0.0
    %s638 = scalar_lea.vmem [#allocation13], 112
    %639 = vst [vmem:[%s638] sm:$0xff] 0.0
    %s640 = scalar_lea.vmem [#allocation13], 120
    %641 = vst [vmem:[%s640] sm:$0xff] 0.0
    %s642 = smov [#allocation8]
    %v643 = vlaneseq
    %v644 = vand.u32 %v643, 127
    %v645 = vmov %v644
    %v646 = vlaneseq
    %v647 = vshrl.u32 %v646, 7
    %v648 = vmov %v647
    %v649 = vld [vmem:[%s642] sm:$0xff]
    %vm652 = vcmp.eq.s32.totalorder %v648, %v645
    %v653 = vsel %vm652, 1.0, %v649
    %654 = vst [vmem:[%s642] sm:$0xff] %v653
    %s655 = scalar_lea.vmem %s642, 8
    %v656 = vld [vmem:[%s655] sm:$0xff]
    %v658 = vadd.s32 %v648, 8
    %vm659 = vcmp.eq.s32.totalorder %v658, %v645
    %v660 = vsel %vm659, 1.0, %v656
    %661 = vst [vmem:[%s655] sm:$0xff] %v660
    %s662 = scalar_lea.vmem %s642, 16
    %v663 = vld [vmem:[%s662] sm:$0xff]
    %v665 = vadd.s32 %v648, 16
    %vm666 = vcmp.eq.s32.totalorder %v665, %v645
    %v667 = vsel %vm666, 1.0, %v663
    %668 = vst [vmem:[%s662] sm:$0xff] %v667
    %s669 = scalar_lea.vmem %s642, 24
    %v670 = vld [vmem:[%s669] sm:$0xff]
    %v672 = vadd.s32 %v648, 24
    %vm673 = vcmp.eq.s32.totalorder %v672, %v645
    %v674 = vsel %vm673, 1.0, %v670
    %675 = vst [vmem:[%s669] sm:$0xff] %v674
    %s676 = scalar_lea.vmem %s642, 32
    %v677 = vld [vmem:[%s676] sm:$0xff]
    %v679 = vadd.s32 %v648, 32
    %vm680 = vcmp.eq.s32.totalorder %v679, %v645
    %v681 = vsel %vm680, 1.0, %v677
    %682 = vst [vmem:[%s676] sm:$0xff] %v681
    %s683 = scalar_lea.vmem %s642, 40
    %v684 = vld [vmem:[%s683] sm:$0xff]
    %v686 = vadd.s32 %v648, 40
    %vm687 = vcmp.eq.s32.totalorder %v686, %v645
    %v688 = vsel %vm687, 1.0, %v684
    %689 = vst [vmem:[%s683] sm:$0xff] %v688
    %s690 = scalar_lea.vmem %s642, 48
    %v691 = vld [vmem:[%s690] sm:$0xff]
    %v693 = vadd.s32 %v648, 48
    %vm694 = vcmp.eq.s32.totalorder %v693, %v645
    %v695 = vsel %vm694, 1.0, %v691
    %696 = vst [vmem:[%s690] sm:$0xff] %v695
    %s697 = scalar_lea.vmem %s642, 56
    %v698 = vld [vmem:[%s697] sm:$0xff]
    %v700 = vadd.s32 %v648, 56
    %vm701 = vcmp.eq.s32.totalorder %v700, %v645
    %v702 = vsel %vm701, 1.0, %v698
    %703 = vst [vmem:[%s697] sm:$0xff] %v702
    %s704 = scalar_lea.vmem %s642, 64
    %v705 = vld [vmem:[%s704] sm:$0xff]
    %v707 = vadd.s32 %v648, 64
    %vm708 = vcmp.eq.s32.totalorder %v707, %v645
    %v709 = vsel %vm708, 1.0, %v705
    %710 = vst [vmem:[%s704] sm:$0xff] %v709
    %s711 = scalar_lea.vmem %s642, 72
    %v712 = vld [vmem:[%s711] sm:$0xff]
    %v714 = vadd.s32 %v648, 72
    %vm715 = vcmp.eq.s32.totalorder %v714, %v645
    %v716 = vsel %vm715, 1.0, %v712
    %717 = vst [vmem:[%s711] sm:$0xff] %v716
    %s718 = scalar_lea.vmem %s642, 80
    %v719 = vld [vmem:[%s718] sm:$0xff]
    %v721 = vadd.s32 %v648, 80
    %vm722 = vcmp.eq.s32.totalorder %v721, %v645
    %v723 = vsel %vm722, 1.0, %v719
    %724 = vst [vmem:[%s718] sm:$0xff] %v723
    %s725 = scalar_lea.vmem %s642, 88
    %v726 = vld [vmem:[%s725] sm:$0xff]
    %v728 = vadd.s32 %v648, 88
    %vm729 = vcmp.eq.s32.totalorder %v728, %v645
    %v730 = vsel %vm729, 1.0, %v726
    %731 = vst [vmem:[%s725] sm:$0xff] %v730
    %s732 = scalar_lea.vmem %s642, 96
    %v733 = vld [vmem:[%s732] sm:$0xff]
    %v735 = vadd.s32 %v648, 96
    %vm736 = vcmp.eq.s32.totalorder %v735, %v645
    %v737 = vsel %vm736, 1.0, %v733
    %738 = vst [vmem:[%s732] sm:$0xff] %v737
    %s739 = scalar_lea.vmem %s642, 104
    %v740 = vld [vmem:[%s739] sm:$0xff]
    %v742 = vadd.s32 %v648, 104
    %vm743 = vcmp.eq.s32.totalorder %v742, %v645
    %v744 = vsel %vm743, 1.0, %v740
    %745 = vst [vmem:[%s739] sm:$0xff] %v744
    %s746 = scalar_lea.vmem %s642, 112
    %v747 = vld [vmem:[%s746] sm:$0xff]
    %v749 = vadd.s32 %v648, 112
    %vm750 = vcmp.eq.s32.totalorder %v749, %v645
    %v751 = vsel %vm750, 1.0, %v747
    %752 = vst [vmem:[%s746] sm:$0xff] %v751
    %s753 = scalar_lea.vmem %s642, 120
    %v754 = vld [vmem:[%s753] sm:$0xff]
    %v756 = vadd.s32 %v648, 120
    %vm757 = vcmp.eq.s32.totalorder %v756, %v645
    %v758 = vsel %vm757, 1.0, %v754
    %759 = vst [vmem:[%s753] sm:$0xff] %v758
    %s760 = smov [#allocation13]
    %v761 = vlaneseq
    %v762 = vand.u32 %v761, 127
    %v763 = vmov %v762
    %v764 = vlaneseq
    %v765 = vshrl.u32 %v764, 7
    %v766 = vmov %v765
    %v767 = vld [vmem:[%s760] sm:$0xff]
    %vm770 = vcmp.eq.s32.totalorder %v766, %v763
    %v771 = vsel %vm770, 1.0, %v767
    %772 = vst [vmem:[%s760] sm:$0xff] %v771
    %s773 = scalar_lea.vmem %s760, 8
    %v774 = vld [vmem:[%s773] sm:$0xff]
    %v776 = vadd.s32 %v766, 8
    %vm777 = vcmp.eq.s32.totalorder %v776, %v763
    %v778 = vsel %vm777, 1.0, %v774
    %779 = vst [vmem:[%s773] sm:$0xff] %v778
    %s780 = scalar_lea.vmem %s760, 16
    %v781 = vld [vmem:[%s780] sm:$0xff]
    %v783 = vadd.s32 %v766, 16
    %vm784 = vcmp.eq.s32.totalorder %v783, %v763
    %v785 = vsel %vm784, 1.0, %v781
    %786 = vst [vmem:[%s780] sm:$0xff] %v785
    %s787 = scalar_lea.vmem %s760, 24
    %v788 = vld [vmem:[%s787] sm:$0xff]
    %v790 = vadd.s32 %v766, 24
    %vm791 = vcmp.eq.s32.totalorder %v790, %v763
    %v792 = vsel %vm791, 1.0, %v788
    %793 = vst [vmem:[%s787] sm:$0xff] %v792
    %s794 = scalar_lea.vmem %s760, 32
    %v795 = vld [vmem:[%s794] sm:$0xff]
    %v797 = vadd.s32 %v766, 32
    %vm798 = vcmp.eq.s32.totalorder %v797, %v763
    %v799 = vsel %vm798, 1.0, %v795
    %800 = vst [vmem:[%s794] sm:$0xff] %v799
    %s801 = scalar_lea.vmem %s760, 40
    %v802 = vld [vmem:[%s801] sm:$0xff]
    %v804 = vadd.s32 %v766, 40
    %vm805 = vcmp.eq.s32.totalorder %v804, %v763
    %v806 = vsel %vm805, 1.0, %v802
    %807 = vst [vmem:[%s801] sm:$0xff] %v806
    %s808 = scalar_lea.vmem %s760, 48
    %v809 = vld [vmem:[%s808] sm:$0xff]
    %v811 = vadd.s32 %v766, 48
    %vm812 = vcmp.eq.s32.totalorder %v811, %v763
    %v813 = vsel %vm812, 1.0, %v809
    %814 = vst [vmem:[%s808] sm:$0xff] %v813
    %s815 = scalar_lea.vmem %s760, 56
    %v816 = vld [vmem:[%s815] sm:$0xff]
    %v818 = vadd.s32 %v766, 56
    %vm819 = vcmp.eq.s32.totalorder %v818, %v763
    %v820 = vsel %vm819, 1.0, %v816
    %821 = vst [vmem:[%s815] sm:$0xff] %v820
    %s822 = scalar_lea.vmem %s760, 64
    %v823 = vld [vmem:[%s822] sm:$0xff]
    %v825 = vadd.s32 %v766, 64
    %vm826 = vcmp.eq.s32.totalorder %v825, %v763
    %v827 = vsel %vm826, 1.0, %v823
    %828 = vst [vmem:[%s822] sm:$0xff] %v827
    %s829 = scalar_lea.vmem %s760, 72
    %v830 = vld [vmem:[%s829] sm:$0xff]
    %v832 = vadd.s32 %v766, 72
    %vm833 = vcmp.eq.s32.totalorder %v832, %v763
    %v834 = vsel %vm833, 1.0, %v830
    %835 = vst [vmem:[%s829] sm:$0xff] %v834
    %s836 = scalar_lea.vmem %s760, 80
    %v837 = vld [vmem:[%s836] sm:$0xff]
    %v839 = vadd.s32 %v766, 80
    %vm840 = vcmp.eq.s32.totalorder %v839, %v763
    %v841 = vsel %vm840, 1.0, %v837
    %842 = vst [vmem:[%s836] sm:$0xff] %v841
    %s843 = scalar_lea.vmem %s760, 88
    %v844 = vld [vmem:[%s843] sm:$0xff]
    %v846 = vadd.s32 %v766, 88
    %vm847 = vcmp.eq.s32.totalorder %v846, %v763
    %v848 = vsel %vm847, 1.0, %v844
    %849 = vst [vmem:[%s843] sm:$0xff] %v848
    %s850 = scalar_lea.vmem %s760, 96
    %v851 = vld [vmem:[%s850] sm:$0xff]
    %v853 = vadd.s32 %v766, 96
    %vm854 = vcmp.eq.s32.totalorder %v853, %v763
    %v855 = vsel %vm854, 1.0, %v851
    %856 = vst [vmem:[%s850] sm:$0xff] %v855
    %s857 = scalar_lea.vmem %s760, 104
    %v858 = vld [vmem:[%s857] sm:$0xff]
    %v860 = vadd.s32 %v766, 104
    %vm861 = vcmp.eq.s32.totalorder %v860, %v763
    %v862 = vsel %vm861, 1.0, %v858
    %863 = vst [vmem:[%s857] sm:$0xff] %v862
    %s864 = scalar_lea.vmem %s760, 112
    %v865 = vld [vmem:[%s864] sm:$0xff]
    %v867 = vadd.s32 %v766, 112
    %vm868 = vcmp.eq.s32.totalorder %v867, %v763
    %v869 = vsel %vm868, 1.0, %v865
    %870 = vst [vmem:[%s864] sm:$0xff] %v869
    %s871 = scalar_lea.vmem %s760, 120
    %v872 = vld [vmem:[%s871] sm:$0xff]
    %v874 = vadd.s32 %v766, 120
    %vm875 = vcmp.eq.s32.totalorder %v874, %v763
    %v876 = vsel %vm875, 1.0, %v872
    %877 = vst [vmem:[%s871] sm:$0xff] %v876
    // While loop
    $region90: #{custom-call.3} parent=1 // loop_pre_header
      _
    $region91: #{custom-call.3} parent=1 // loop_header
      %s879 = sphi 0, %s6677
      %v880 = vlaneseq
      %v881 = vand.u32 %v880, 127
      %v882 = vmov %v881
      %v883 = vlaneseq
      %v884 = vshrl.u32 %v883, 7
      %v885 = vmov %v884
      %s886 = smov [#allocation15]
      %v887 = vld [vmem:[%s886] sm:$0xff]
      %v888 = vmul.f32 %v887, %v887
      %vm891 = vcmp.eq.s32.totalorder %v885, %v882
      %v892 = vsel %vm891, 0.0, %v888
      %s893 = scalar_lea.vmem %s886, 8
      %v894 = vld [vmem:[%s893] sm:$0xff]
      %v895 = vmul.f32 %v894, %v894
      %v897 = vadd.s32 %v885, 8
      %vm898 = vcmp.eq.s32.totalorder %v897, %v882
      %v899 = vsel %vm898, 0.0, %v895
      %v900 = vadd.f32 %v892, %v899
      %v901 = vadd.f32 %v888, %v895
      %s902 = scalar_lea.vmem %s886, 16
      %v903 = vld [vmem:[%s902] sm:$0xff]
      %v904 = vmul.f32 %v903, %v903
      %v906 = vadd.s32 %v885, 16
      %vm907 = vcmp.eq.s32.totalorder %v906, %v882
      %v908 = vsel %vm907, 0.0, %v904
      %v909 = vadd.f32 %v900, %v908
      %v910 = vadd.f32 %v901, %v904
      %s911 = scalar_lea.vmem %s886, 24
      %v912 = vld [vmem:[%s911] sm:$0xff]
      %v913 = vmul.f32 %v912, %v912
      %v915 = vadd.s32 %v885, 24
      %vm916 = vcmp.eq.s32.totalorder %v915, %v882
      %v917 = vsel %vm916, 0.0, %v913
      %v918 = vadd.f32 %v909, %v917
      %v919 = vadd.f32 %v910, %v913
      %s920 = scalar_lea.vmem %s886, 32
      %v921 = vld [vmem:[%s920] sm:$0xff]
      %v922 = vmul.f32 %v921, %v921
      %v924 = vadd.s32 %v885, 32
      %vm925 = vcmp.eq.s32.totalorder %v924, %v882
      %v926 = vsel %vm925, 0.0, %v922
      %v927 = vadd.f32 %v918, %v926
      %v928 = vadd.f32 %v919, %v922
      %s929 = scalar_lea.vmem %s886, 40
      %v930 = vld [vmem:[%s929] sm:$0xff]
      %v931 = vmul.f32 %v930, %v930
      %v933 = vadd.s32 %v885, 40
      %vm934 = vcmp.eq.s32.totalorder %v933, %v882
      %v935 = vsel %vm934, 0.0, %v931
      %v936 = vadd.f32 %v927, %v935
      %v937 = vadd.f32 %v928, %v931
      %s938 = scalar_lea.vmem %s886, 48
      %v939 = vld [vmem:[%s938] sm:$0xff]
      %v940 = vmul.f32 %v939, %v939
      %v942 = vadd.s32 %v885, 48
      %vm943 = vcmp.eq.s32.totalorder %v942, %v882
      %v944 = vsel %vm943, 0.0, %v940
      %v945 = vadd.f32 %v936, %v944
      %v946 = vadd.f32 %v937, %v940
      %s947 = scalar_lea.vmem %s886, 56
      %v948 = vld [vmem:[%s947] sm:$0xff]
      %v949 = vmul.f32 %v948, %v948
      %v951 = vadd.s32 %v885, 56
      %vm952 = vcmp.eq.s32.totalorder %v951, %v882
      %v953 = vsel %vm952, 0.0, %v949
      %v954 = vadd.f32 %v945, %v953
      %v955 = vadd.f32 %v946, %v949
      %s956 = scalar_lea.vmem %s886, 64
      %v957 = vld [vmem:[%s956] sm:$0xff]
      %v958 = vmul.f32 %v957, %v957
      %v960 = vadd.s32 %v885, 64
      %vm961 = vcmp.eq.s32.totalorder %v960, %v882
      %v962 = vsel %vm961, 0.0, %v958
      %v963 = vadd.f32 %v954, %v962
      %v964 = vadd.f32 %v955, %v958
      %s965 = scalar_lea.vmem %s886, 72
      %v966 = vld [vmem:[%s965] sm:$0xff]
      %v967 = vmul.f32 %v966, %v966
      %v969 = vadd.s32 %v885, 72
      %vm970 = vcmp.eq.s32.totalorder %v969, %v882
      %v971 = vsel %vm970, 0.0, %v967
      %v972 = vadd.f32 %v963, %v971
      %v973 = vadd.f32 %v964, %v967
      %s974 = scalar_lea.vmem %s886, 80
      %v975 = vld [vmem:[%s974] sm:$0xff]
      %v976 = vmul.f32 %v975, %v975
      %v978 = vadd.s32 %v885, 80
      %vm979 = vcmp.eq.s32.totalorder %v978, %v882
      %v980 = vsel %vm979, 0.0, %v976
      %v981 = vadd.f32 %v972, %v980
      %v982 = vadd.f32 %v973, %v976
      %s983 = scalar_lea.vmem %s886, 88
      %v984 = vld [vmem:[%s983] sm:$0xff]
      %v985 = vmul.f32 %v984, %v984
      %v987 = vadd.s32 %v885, 88
      %vm988 = vcmp.eq.s32.totalorder %v987, %v882
      %v989 = vsel %vm988, 0.0, %v985
      %v990 = vadd.f32 %v981, %v989
      %v991 = vadd.f32 %v982, %v985
      %s992 = scalar_lea.vmem %s886, 96
      %v993 = vld [vmem:[%s992] sm:$0xff]
      %v994 = vmul.f32 %v993, %v993
      %v996 = vadd.s32 %v885, 96
      %vm997 = vcmp.eq.s32.totalorder %v996, %v882
      %v998 = vsel %vm997, 0.0, %v994
      %v999 = vadd.f32 %v990, %v998
      %v1000 = vadd.f32 %v991, %v994
      %s1001 = scalar_lea.vmem %s886, 104
      %v1002 = vld [vmem:[%s1001] sm:$0xff]
      %v1003 = vmul.f32 %v1002, %v1002
      %v1005 = vadd.s32 %v885, 104
      %vm1006 = vcmp.eq.s32.totalorder %v1005, %v882
      %v1007 = vsel %vm1006, 0.0, %v1003
      %v1008 = vadd.f32 %v999, %v1007
      %v1009 = vadd.f32 %v1000, %v1003
      %s1010 = scalar_lea.vmem %s886, 112
      %v1011 = vld [vmem:[%s1010] sm:$0xff]
      %v1012 = vmul.f32 %v1011, %v1011
      %v1014 = vadd.s32 %v885, 112
      %vm1015 = vcmp.eq.s32.totalorder %v1014, %v882
      %v1016 = vsel %vm1015, 0.0, %v1012
      %v1017 = vadd.f32 %v1008, %v1016
      %v1018 = vadd.f32 %v1009, %v1012
      %s1019 = scalar_lea.vmem %s886, 120
      %v1020 = vld [vmem:[%s1019] sm:$0xff]
      %v1021 = vmul.f32 %v1020, %v1020
      %v1023 = vadd.s32 %v885, 120
      %vm1024 = vcmp.eq.s32.totalorder %v1023, %v882
      %v1025 = vsel %vm1024, 0.0, %v1021
      %v1026 = vadd.f32 %v1017, %v1025
      %v1027 = vadd.f32 %v1018, %v1021
      %v1028 = vlaneseq
      %v1029 = vand.u32 %v1028, 127
      %v1030 = vmov %v1029
      %v1031 = vlaneseq
      %v1032 = vshrl.u32 %v1031, 7
      %v1033 = vmov %v1032
      %s1034 = smov [#allocation16]
      %v1035 = vld [vmem:[%s1034] sm:$0xff]
      %v1036 = vmul.f32 %v1035, %v1035
      %v1037 = vadd.f32 %v1026, %v1036
      %v1038 = vadd.f32 %v1027, %v1036
      %s1039 = scalar_lea.vmem %s1034, 8
      %v1040 = vld [vmem:[%s1039] sm:$0xff]
      %v1041 = vmul.f32 %v1040, %v1040
      %v1042 = vadd.f32 %v1037, %v1041
      %v1043 = vadd.f32 %v1038, %v1041
      %s1044 = scalar_lea.vmem %s1034, 16
      %v1045 = vld [vmem:[%s1044] sm:$0xff]
      %v1046 = vmul.f32 %v1045, %v1045
      %v1047 = vadd.f32 %v1042, %v1046
      %v1048 = vadd.f32 %v1043, %v1046
      %s1049 = scalar_lea.vmem %s1034, 24
      %v1050 = vld [vmem:[%s1049] sm:$0xff]
      %v1051 = vmul.f32 %v1050, %v1050
      %v1052 = vadd.f32 %v1047, %v1051
      %v1053 = vadd.f32 %v1048, %v1051
      %s1054 = scalar_lea.vmem %s1034, 32
      %v1055 = vld [vmem:[%s1054] sm:$0xff]
      %v1056 = vmul.f32 %v1055, %v1055
      %v1057 = vadd.f32 %v1052, %v1056
      %v1058 = vadd.f32 %v1053, %v1056
      %s1059 = scalar_lea.vmem %s1034, 40
      %v1060 = vld [vmem:[%s1059] sm:$0xff]
      %v1061 = vmul.f32 %v1060, %v1060
      %v1062 = vadd.f32 %v1057, %v1061
      %v1063 = vadd.f32 %v1058, %v1061
      %s1064 = scalar_lea.vmem %s1034, 48
      %v1065 = vld [vmem:[%s1064] sm:$0xff]
      %v1066 = vmul.f32 %v1065, %v1065
      %v1067 = vadd.f32 %v1062, %v1066
      %v1068 = vadd.f32 %v1063, %v1066
      %s1069 = scalar_lea.vmem %s1034, 56
      %v1070 = vld [vmem:[%s1069] sm:$0xff]
      %v1071 = vmul.f32 %v1070, %v1070
      %v1072 = vadd.f32 %v1067, %v1071
      %v1073 = vadd.f32 %v1068, %v1071
      %s1074 = scalar_lea.vmem %s1034, 64
      %v1075 = vld [vmem:[%s1074] sm:$0xff]
      %v1076 = vmul.f32 %v1075, %v1075
      %v1077 = vadd.f32 %v1072, %v1076
      %v1078 = vadd.f32 %v1073, %v1076
      %s1079 = scalar_lea.vmem %s1034, 72
      %v1080 = vld [vmem:[%s1079] sm:$0xff]
      %v1081 = vmul.f32 %v1080, %v1080
      %v1082 = vadd.f32 %v1077, %v1081
      %v1083 = vadd.f32 %v1078, %v1081
      %s1084 = scalar_lea.vmem %s1034, 80
      %v1085 = vld [vmem:[%s1084] sm:$0xff]
      %v1086 = vmul.f32 %v1085, %v1085
      %v1087 = vadd.f32 %v1082, %v1086
      %v1088 = vadd.f32 %v1083, %v1086
      %s1089 = scalar_lea.vmem %s1034, 88
      %v1090 = vld [vmem:[%s1089] sm:$0xff]
      %v1091 = vmul.f32 %v1090, %v1090
      %v1092 = vadd.f32 %v1087, %v1091
      %v1093 = vadd.f32 %v1088, %v1091
      %s1094 = scalar_lea.vmem %s1034, 96
      %v1095 = vld [vmem:[%s1094] sm:$0xff]
      %v1096 = vmul.f32 %v1095, %v1095
      %v1097 = vadd.f32 %v1092, %v1096
      %v1098 = vadd.f32 %v1093, %v1096
      %s1099 = scalar_lea.vmem %s1034, 104
      %v1100 = vld [vmem:[%s1099] sm:$0xff]
      %v1101 = vmul.f32 %v1100, %v1100
      %v1102 = vadd.f32 %v1097, %v1101
      %v1103 = vadd.f32 %v1098, %v1101
      %s1104 = scalar_lea.vmem %s1034, 112
      %v1105 = vld [vmem:[%s1104] sm:$0xff]
      %v1106 = vmul.f32 %v1105, %v1105
      %v1107 = vadd.f32 %v1102, %v1106
      %v1108 = vadd.f32 %v1103, %v1106
      %s1109 = scalar_lea.vmem %s1034, 120
      %v1110 = vld [vmem:[%s1109] sm:$0xff]
      %v1111 = vmul.f32 %v1110, %v1110
      %v1112 = vadd.f32 %v1107, %v1111
      %v1113 = vadd.f32 %v1108, %v1111
      %v1114 = vlaneseq
      %v1115 = vand.u32 %v1114, 127
      %v1116 = vmov %v1115
      %v1117 = vlaneseq
      %v1118 = vshrl.u32 %v1117, 7
      %v1119 = vmov %v1118
      %s1120 = smov [#allocation17]
      %v1121 = vld [vmem:[%s1120] sm:$0xff]
      %v1122 = vmul.f32 %v1121, %v1121
      %v1123 = vadd.f32 %v1112, %v1122
      %v1124 = vadd.f32 %v1113, %v1122
      %s1125 = scalar_lea.vmem %s1120, 8
      %v1126 = vld [vmem:[%s1125] sm:$0xff]
      %v1127 = vmul.f32 %v1126, %v1126
      %v1128 = vadd.f32 %v1123, %v1127
      %v1129 = vadd.f32 %v1124, %v1127
      %s1130 = scalar_lea.vmem %s1120, 16
      %v1131 = vld [vmem:[%s1130] sm:$0xff]
      %v1132 = vmul.f32 %v1131, %v1131
      %v1133 = vadd.f32 %v1128, %v1132
      %v1134 = vadd.f32 %v1129, %v1132
      %s1135 = scalar_lea.vmem %s1120, 24
      %v1136 = vld [vmem:[%s1135] sm:$0xff]
      %v1137 = vmul.f32 %v1136, %v1136
      %v1138 = vadd.f32 %v1133, %v1137
      %v1139 = vadd.f32 %v1134, %v1137
      %s1140 = scalar_lea.vmem %s1120, 32
      %v1141 = vld [vmem:[%s1140] sm:$0xff]
      %v1142 = vmul.f32 %v1141, %v1141
      %v1143 = vadd.f32 %v1138, %v1142
      %v1144 = vadd.f32 %v1139, %v1142
      %s1145 = scalar_lea.vmem %s1120, 40
      %v1146 = vld [vmem:[%s1145] sm:$0xff]
      %v1147 = vmul.f32 %v1146, %v1146
      %v1148 = vadd.f32 %v1143, %v1147
      %v1149 = vadd.f32 %v1144, %v1147
      %s1150 = scalar_lea.vmem %s1120, 48
      %v1151 = vld [vmem:[%s1150] sm:$0xff]
      %v1152 = vmul.f32 %v1151, %v1151
      %v1153 = vadd.f32 %v1148, %v1152
      %v1154 = vadd.f32 %v1149, %v1152
      %s1155 = scalar_lea.vmem %s1120, 56
      %v1156 = vld [vmem:[%s1155] sm:$0xff]
      %v1157 = vmul.f32 %v1156, %v1156
      %v1158 = vadd.f32 %v1153, %v1157
      %v1159 = vadd.f32 %v1154, %v1157
      %s1160 = scalar_lea.vmem %s1120, 64
      %v1161 = vld [vmem:[%s1160] sm:$0xff]
      %v1162 = vmul.f32 %v1161, %v1161
      %v1163 = vadd.f32 %v1158, %v1162
      %v1164 = vadd.f32 %v1159, %v1162
      %s1165 = scalar_lea.vmem %s1120, 72
      %v1166 = vld [vmem:[%s1165] sm:$0xff]
      %v1167 = vmul.f32 %v1166, %v1166
      %v1168 = vadd.f32 %v1163, %v1167
      %v1169 = vadd.f32 %v1164, %v1167
      %s1170 = scalar_lea.vmem %s1120, 80
      %v1171 = vld [vmem:[%s1170] sm:$0xff]
      %v1172 = vmul.f32 %v1171, %v1171
      %v1173 = vadd.f32 %v1168, %v1172
      %v1174 = vadd.f32 %v1169, %v1172
      %s1175 = scalar_lea.vmem %s1120, 88
      %v1176 = vld [vmem:[%s1175] sm:$0xff]
      %v1177 = vmul.f32 %v1176, %v1176
      %v1178 = vadd.f32 %v1173, %v1177
      %v1179 = vadd.f32 %v1174, %v1177
      %s1180 = scalar_lea.vmem %s1120, 96
      %v1181 = vld [vmem:[%s1180] sm:$0xff]
      %v1182 = vmul.f32 %v1181, %v1181
      %v1183 = vadd.f32 %v1178, %v1182
      %v1184 = vadd.f32 %v1179, %v1182
      %s1185 = scalar_lea.vmem %s1120, 104
      %v1186 = vld [vmem:[%s1185] sm:$0xff]
      %v1187 = vmul.f32 %v1186, %v1186
      %v1188 = vadd.f32 %v1183, %v1187
      %v1189 = vadd.f32 %v1184, %v1187
      %s1190 = scalar_lea.vmem %s1120, 112
      %v1191 = vld [vmem:[%s1190] sm:$0xff]
      %v1192 = vmul.f32 %v1191, %v1191
      %v1193 = vadd.f32 %v1188, %v1192
      %v1194 = vadd.f32 %v1189, %v1192
      %s1195 = scalar_lea.vmem %s1120, 120
      %v1196 = vld [vmem:[%s1195] sm:$0xff]
      %v1197 = vmul.f32 %v1196, %v1196
      %v1198 = vadd.f32 %v1193, %v1197
      %v1199 = vadd.f32 %v1194, %v1197
      %v1200 = vlaneseq
      %v1201 = vand.u32 %v1200, 127
      %v1202 = vmov %v1201
      %v1203 = vlaneseq
      %v1204 = vshrl.u32 %v1203, 7
      %v1205 = vmov %v1204
      %s1206 = smov [#allocation18]
      %v1207 = vld [vmem:[%s1206] sm:$0xff]
      %v1208 = vmul.f32 %v1207, %v1207
      %vm1211 = vcmp.eq.s32.totalorder %v1205, %v1202
      %v1212 = vsel %vm1211, 0.0, %v1208
      %v1213 = vadd.f32 %v1198, %v1212
      %v1214 = vadd.f32 %v1199, %v1208
      %s1215 = scalar_lea.vmem %s1206, 8
      %v1216 = vld [vmem:[%s1215] sm:$0xff]
      %v1217 = vmul.f32 %v1216, %v1216
      %v1219 = vadd.s32 %v1205, 8
      %vm1220 = vcmp.eq.s32.totalorder %v1219, %v1202
      %v1221 = vsel %vm1220, 0.0, %v1217
      %v1222 = vadd.f32 %v1213, %v1221
      %v1223 = vadd.f32 %v1214, %v1217
      %s1224 = scalar_lea.vmem %s1206, 16
      %v1225 = vld [vmem:[%s1224] sm:$0xff]
      %v1226 = vmul.f32 %v1225, %v1225
      %v1228 = vadd.s32 %v1205, 16
      %vm1229 = vcmp.eq.s32.totalorder %v1228, %v1202
      %v1230 = vsel %vm1229, 0.0, %v1226
      %v1231 = vadd.f32 %v1222, %v1230
      %v1232 = vadd.f32 %v1223, %v1226
      %s1233 = scalar_lea.vmem %s1206, 24
      %v1234 = vld [vmem:[%s1233] sm:$0xff]
      %v1235 = vmul.f32 %v1234, %v1234
      %v1237 = vadd.s32 %v1205, 24
      %vm1238 = vcmp.eq.s32.totalorder %v1237, %v1202
      %v1239 = vsel %vm1238, 0.0, %v1235
      %v1240 = vadd.f32 %v1231, %v1239
      %v1241 = vadd.f32 %v1232, %v1235
      %s1242 = scalar_lea.vmem %s1206, 32
      %v1243 = vld [vmem:[%s1242] sm:$0xff]
      %v1244 = vmul.f32 %v1243, %v1243
      %v1246 = vadd.s32 %v1205, 32
      %vm1247 = vcmp.eq.s32.totalorder %v1246, %v1202
      %v1248 = vsel %vm1247, 0.0, %v1244
      %v1249 = vadd.f32 %v1240, %v1248
      %v1250 = vadd.f32 %v1241, %v1244
      %s1251 = scalar_lea.vmem %s1206, 40
      %v1252 = vld [vmem:[%s1251] sm:$0xff]
      %v1253 = vmul.f32 %v1252, %v1252
      %v1255 = vadd.s32 %v1205, 40
      %vm1256 = vcmp.eq.s32.totalorder %v1255, %v1202
      %v1257 = vsel %vm1256, 0.0, %v1253
      %v1258 = vadd.f32 %v1249, %v1257
      %v1259 = vadd.f32 %v1250, %v1253
      %s1260 = scalar_lea.vmem %s1206, 48
      %v1261 = vld [vmem:[%s1260] sm:$0xff]
      %v1262 = vmul.f32 %v1261, %v1261
      %v1264 = vadd.s32 %v1205, 48
      %vm1265 = vcmp.eq.s32.totalorder %v1264, %v1202
      %v1266 = vsel %vm1265, 0.0, %v1262
      %v1267 = vadd.f32 %v1258, %v1266
      %v1268 = vadd.f32 %v1259, %v1262
      %s1269 = scalar_lea.vmem %s1206, 56
      %v1270 = vld [vmem:[%s1269] sm:$0xff]
      %v1271 = vmul.f32 %v1270, %v1270
      %v1273 = vadd.s32 %v1205, 56
      %vm1274 = vcmp.eq.s32.totalorder %v1273, %v1202
      %v1275 = vsel %vm1274, 0.0, %v1271
      %v1276 = vadd.f32 %v1267, %v1275
      %v1277 = vadd.f32 %v1268, %v1271
      %s1278 = scalar_lea.vmem %s1206, 64
      %v1279 = vld [vmem:[%s1278] sm:$0xff]
      %v1280 = vmul.f32 %v1279, %v1279
      %v1282 = vadd.s32 %v1205, 64
      %vm1283 = vcmp.eq.s32.totalorder %v1282, %v1202
      %v1284 = vsel %vm1283, 0.0, %v1280
      %v1285 = vadd.f32 %v1276, %v1284
      %v1286 = vadd.f32 %v1277, %v1280
      %s1287 = scalar_lea.vmem %s1206, 72
      %v1288 = vld [vmem:[%s1287] sm:$0xff]
      %v1289 = vmul.f32 %v1288, %v1288
      %v1291 = vadd.s32 %v1205, 72
      %vm1292 = vcmp.eq.s32.totalorder %v1291, %v1202
      %v1293 = vsel %vm1292, 0.0, %v1289
      %v1294 = vadd.f32 %v1285, %v1293
      %v1295 = vadd.f32 %v1286, %v1289
      %s1296 = scalar_lea.vmem %s1206, 80
      %v1297 = vld [vmem:[%s1296] sm:$0xff]
      %v1298 = vmul.f32 %v1297, %v1297
      %v1300 = vadd.s32 %v1205, 80
      %vm1301 = vcmp.eq.s32.totalorder %v1300, %v1202
      %v1302 = vsel %vm1301, 0.0, %v1298
      %v1303 = vadd.f32 %v1294, %v1302
      %v1304 = vadd.f32 %v1295, %v1298
      %s1305 = scalar_lea.vmem %s1206, 88
      %v1306 = vld [vmem:[%s1305] sm:$0xff]
      %v1307 = vmul.f32 %v1306, %v1306
      %v1309 = vadd.s32 %v1205, 88
      %vm1310 = vcmp.eq.s32.totalorder %v1309, %v1202
      %v1311 = vsel %vm1310, 0.0, %v1307
      %v1312 = vadd.f32 %v1303, %v1311
      %v1313 = vadd.f32 %v1304, %v1307
      %s1314 = scalar_lea.vmem %s1206, 96
      %v1315 = vld [vmem:[%s1314] sm:$0xff]
      %v1316 = vmul.f32 %v1315, %v1315
      %v1318 = vadd.s32 %v1205, 96
      %vm1319 = vcmp.eq.s32.totalorder %v1318, %v1202
      %v1320 = vsel %vm1319, 0.0, %v1316
      %v1321 = vadd.f32 %v1312, %v1320
      %v1322 = vadd.f32 %v1313, %v1316
      %s1323 = scalar_lea.vmem %s1206, 104
      %v1324 = vld [vmem:[%s1323] sm:$0xff]
      %v1325 = vmul.f32 %v1324, %v1324
      %v1327 = vadd.s32 %v1205, 104
      %vm1328 = vcmp.eq.s32.totalorder %v1327, %v1202
      %v1329 = vsel %vm1328, 0.0, %v1325
      %v1330 = vadd.f32 %v1321, %v1329
      %v1331 = vadd.f32 %v1322, %v1325
      %s1332 = scalar_lea.vmem %s1206, 112
      %v1333 = vld [vmem:[%s1332] sm:$0xff]
      %v1334 = vmul.f32 %v1333, %v1333
      %v1336 = vadd.s32 %v1205, 112
      %vm1337 = vcmp.eq.s32.totalorder %v1336, %v1202
      %v1338 = vsel %vm1337, 0.0, %v1334
      %v1339 = vadd.f32 %v1330, %v1338
      %v1340 = vadd.f32 %v1331, %v1334
      %s1341 = scalar_lea.vmem %s1206, 120
      %v1342 = vld [vmem:[%s1341] sm:$0xff]
      %v1343 = vmul.f32 %v1342, %v1342
      %v1345 = vadd.s32 %v1205, 120
      %vm1346 = vcmp.eq.s32.totalorder %v1345, %v1202
      %v1347 = vsel %vm1346, 0.0, %v1343
      %v1348 = vadd.f32 %v1339, %v1347
      %v1349 = vadd.f32 %v1340, %v1343
      %1350 = vadd.xlane.f32.xlu0 %v1349
      %v1351 = vpop.xlane.xlu0 %1350
      %v1352 = vrot.slane %v1351, 4
      %v1353 = vadd.f32 %v1351, %v1352
      %v1354 = vrot.slane %v1353, 2
      %v1355 = vadd.f32 %v1353, %v1354
      %v1356 = vrot.slane %v1355, 1
      %v1357 = vadd.f32 %v1355, %v1356
      %1358 = vadd.xlane.f32.xlu0 %v1348
      %v1359 = vpop.xlane.xlu0 %1358
      %v1360 = vrot.slane %v1359, 4
      %v1361 = vadd.f32 %v1359, %v1360
      %v1362 = vrot.slane %v1361, 2
      %v1363 = vadd.f32 %v1361, %v1362
      %v1364 = vrot.slane %v1363, 1
      %v1365 = vadd.f32 %v1363, %v1364
      %s1366 = vtos %v1365
      %s1367 = vtos %v1357
      %s1368 = smul.f32 1e-10, %s1367
      %p1369 = scmp.le.f32.partialorder %s1366, %s1368
      %p1370 = scmp.ge.s32.totalorder %s879, 15
      %p1371 = por %p1369, %p1370
    $region92: #{custom-call.3} parent=1 // loop_header_branch
      %6679 = sbr.rel (%p1371) target = $region96
    $region93: #{custom-call.3} parent=1 // loop_body
      loop: start=0, step=1, limit=255
      $region97: #{custom-call.3} parent=93 // loop_pre_header
        _
      $region98: #{custom-call.3} parent=93 // loop_header
        %s1373 = sphi 0, %s1377
        %p1374 = scmp.ge.s32.totalorder %s1373, 255
      $region99: #{custom-call.3} parent=93 // loop_header_branch
        %1376 = sbr.rel (%p1374) target = $region103
      $region100: #{custom-call.3} parent=93 // loop_body
        #allocation19 [shape = 'f32[1024]{0}', space=vmem, size = 0x1000, scoped, tag = 'a_tl_diag vmem']
        #allocation20 [shape = 'f32[1024]{0}', space=vmem, size = 0x1000, scoped, tag = 'a_tr_diag vmem']
        #allocation21 [shape = 'f32[1024]{0}', space=vmem, size = 0x1000, scoped, tag = 'a_br_diag vmem']
        #allocation22 [shape = 'f32[1024]{0}', space=vmem, size = 0x1000, scoped, tag = 'rt1 vmem']
        #allocation23 [shape = 'f32[1024]{0}', space=vmem, size = 0x1000, scoped, tag = 'rt2 vmem']
        #allocation24 [shape = 'f32[1024]{0}', space=vmem, size = 0x1000, scoped, tag = 'c vmem']
        #allocation25 [shape = 'f32[1024]{0}', space=vmem, size = 0x1000, scoped, tag = 's vmem']
        #allocation26 [shape = 'f32[65536]{0}', space=vmem, size = 0x40000, scoped, tag = 'c broadcast']
        #allocation27 [shape = 'f32[65536]{0}', space=vmem, size = 0x40000, scoped, tag = 's broadcast']
        %s1378 = smov [#allocation15]
        %s1379 = smov [#allocation19]
        %v1380 = vlaneseq
        %v1381 = vand.u32 %v1380, 127
        %v1382 = vmov %v1381
        %v1383 = vlaneseq
        %v1384 = vshrl.u32 %v1383, 7
        %v1385 = vmov %v1384
        %v1386 = vld [vmem:[%s1378] sm:$0xff]
        %vm1389 = vcmp.eq.s32.totalorder %v1385, %v1382
        %v1390 = vsel %vm1389, %v1386, 0.0
        %s1391 = scalar_lea.vmem %s1378, 8
        %v1392 = vld [vmem:[%s1391] sm:$0xff]
        %v1394 = vadd.s32 %v1385, 8
        %vm1395 = vcmp.eq.s32.totalorder %v1394, %v1382
        %v1396 = vsel %vm1395, %v1392, %v1390
        %s1397 = scalar_lea.vmem %s1378, 16
        %v1398 = vld [vmem:[%s1397] sm:$0xff]
        %v1400 = vadd.s32 %v1385, 16
        %vm1401 = vcmp.eq.s32.totalorder %v1400, %v1382
        %v1402 = vsel %vm1401, %v1398, %v1396
        %s1403 = scalar_lea.vmem %s1378, 24
        %v1404 = vld [vmem:[%s1403] sm:$0xff]
        %v1406 = vadd.s32 %v1385, 24
        %vm1407 = vcmp.eq.s32.totalorder %v1406, %v1382
        %v1408 = vsel %vm1407, %v1404, %v1402
        %s1409 = scalar_lea.vmem %s1378, 32
        %v1410 = vld [vmem:[%s1409] sm:$0xff]
        %v1412 = vadd.s32 %v1385, 32
        %vm1413 = vcmp.eq.s32.totalorder %v1412, %v1382
        %v1414 = vsel %vm1413, %v1410, %v1408
        %s1415 = scalar_lea.vmem %s1378, 40
        %v1416 = vld [vmem:[%s1415] sm:$0xff]
        %v1418 = vadd.s32 %v1385, 40
        %vm1419 = vcmp.eq.s32.totalorder %v1418, %v1382
        %v1420 = vsel %vm1419, %v1416, %v1414
        %s1421 = scalar_lea.vmem %s1378, 48
        %v1422 = vld [vmem:[%s1421] sm:$0xff]
        %v1424 = vadd.s32 %v1385, 48
        %vm1425 = vcmp.eq.s32.totalorder %v1424, %v1382
        %v1426 = vsel %vm1425, %v1422, %v1420
        %s1427 = scalar_lea.vmem %s1378, 56
        %v1428 = vld [vmem:[%s1427] sm:$0xff]
        %v1430 = vadd.s32 %v1385, 56
        %vm1431 = vcmp.eq.s32.totalorder %v1430, %v1382
        %v1432 = vsel %vm1431, %v1428, %v1426
        %s1433 = scalar_lea.vmem %s1378, 64
        %v1434 = vld [vmem:[%s1433] sm:$0xff]
        %v1436 = vadd.s32 %v1385, 64
        %vm1437 = vcmp.eq.s32.totalorder %v1436, %v1382
        %v1438 = vsel %vm1437, %v1434, %v1432
        %s1439 = scalar_lea.vmem %s1378, 72
        %v1440 = vld [vmem:[%s1439] sm:$0xff]
        %v1442 = vadd.s32 %v1385, 72
        %vm1443 = vcmp.eq.s32.totalorder %v1442, %v1382
        %v1444 = vsel %vm1443, %v1440, %v1438
        %s1445 = scalar_lea.vmem %s1378, 80
        %v1446 = vld [vmem:[%s1445] sm:$0xff]
        %v1448 = vadd.s32 %v1385, 80
        %vm1449 = vcmp.eq.s32.totalorder %v1448, %v1382
        %v1450 = vsel %vm1449, %v1446, %v1444
        %s1451 = scalar_lea.vmem %s1378, 88
        %v1452 = vld [vmem:[%s1451] sm:$0xff]
        %v1454 = vadd.s32 %v1385, 88
        %vm1455 = vcmp.eq.s32.totalorder %v1454, %v1382
        %v1456 = vsel %vm1455, %v1452, %v1450
        %s1457 = scalar_lea.vmem %s1378, 96
        %v1458 = vld [vmem:[%s1457] sm:$0xff]
        %v1460 = vadd.s32 %v1385, 96
        %vm1461 = vcmp.eq.s32.totalorder %v1460, %v1382
        %v1462 = vsel %vm1461, %v1458, %v1456
        %s1463 = scalar_lea.vmem %s1378, 104
        %v1464 = vld [vmem:[%s1463] sm:$0xff]
        %v1466 = vadd.s32 %v1385, 104
        %vm1467 = vcmp.eq.s32.totalorder %v1466, %v1382
        %v1468 = vsel %vm1467, %v1464, %v1462
        %s1469 = scalar_lea.vmem %s1378, 112
        %v1470 = vld [vmem:[%s1469] sm:$0xff]
        %v1472 = vadd.s32 %v1385, 112
        %vm1473 = vcmp.eq.s32.totalorder %v1472, %v1382
        %v1474 = vsel %vm1473, %v1470, %v1468
        %s1475 = scalar_lea.vmem %s1378, 120
        %v1476 = vld [vmem:[%s1475] sm:$0xff]
        %v1478 = vadd.s32 %v1385, 120
        %vm1479 = vcmp.eq.s32.totalorder %v1478, %v1382
        %v1480 = vsel %vm1479, %v1476, %v1474
        %v1481 = vrot.slane %v1480, 4
        %v1482 = vadd.f32 %v1480, %v1481
        %v1483 = vrot.slane %v1482, 2
        %v1484 = vadd.f32 %v1482, %v1483
        %v1485 = vrot.slane %v1484, 1
        %v1486 = vadd.f32 %v1484, %v1485
        %1487 = vst [vmem:[%s1379] sm:$0x1] %v1486
        %s1488 = smov [#allocation16]
        %s1489 = smov [#allocation20]
        %v1490 = vlaneseq
        %v1491 = vand.u32 %v1490, 127
        %v1492 = vmov %v1491
        %v1493 = vlaneseq
        %v1494 = vshrl.u32 %v1493, 7
        %v1495 = vmov %v1494
        %v1496 = vld [vmem:[%s1488] sm:$0xff]
        %vm1499 = vcmp.eq.s32.totalorder %v1495, %v1492
        %v1500 = vsel %vm1499, %v1496, 0.0
        %s1501 = scalar_lea.vmem %s1488, 8
        %v1502 = vld [vmem:[%s1501] sm:$0xff]
        %v1504 = vadd.s32 %v1495, 8
        %vm1505 = vcmp.eq.s32.totalorder %v1504, %v1492
        %v1506 = vsel %vm1505, %v1502, %v1500
        %s1507 = scalar_lea.vmem %s1488, 16
        %v1508 = vld [vmem:[%s1507] sm:$0xff]
        %v1510 = vadd.s32 %v1495, 16
        %vm1511 = vcmp.eq.s32.totalorder %v1510, %v1492
        %v1512 = vsel %vm1511, %v1508, %v1506
        %s1513 = scalar_lea.vmem %s1488, 24
        %v1514 = vld [vmem:[%s1513] sm:$0xff]
        %v1516 = vadd.s32 %v1495, 24
        %vm1517 = vcmp.eq.s32.totalorder %v1516, %v1492
        %v1518 = vsel %vm1517, %v1514, %v1512
        %s1519 = scalar_lea.vmem %s1488, 32
        %v1520 = vld [vmem:[%s1519] sm:$0xff]
        %v1522 = vadd.s32 %v1495, 32
        %vm1523 = vcmp.eq.s32.totalorder %v1522, %v1492
        %v1524 = vsel %vm1523, %v1520, %v1518
        %s1525 = scalar_lea.vmem %s1488, 40
        %v1526 = vld [vmem:[%s1525] sm:$0xff]
        %v1528 = vadd.s32 %v1495, 40
        %vm1529 = vcmp.eq.s32.totalorder %v1528, %v1492
        %v1530 = vsel %vm1529, %v1526, %v1524
        %s1531 = scalar_lea.vmem %s1488, 48
        %v1532 = vld [vmem:[%s1531] sm:$0xff]
        %v1534 = vadd.s32 %v1495, 48
        %vm1535 = vcmp.eq.s32.totalorder %v1534, %v1492
        %v1536 = vsel %vm1535, %v1532, %v1530
        %s1537 = scalar_lea.vmem %s1488, 56
        %v1538 = vld [vmem:[%s1537] sm:$0xff]
        %v1540 = vadd.s32 %v1495, 56
        %vm1541 = vcmp.eq.s32.totalorder %v1540, %v1492
        %v1542 = vsel %vm1541, %v1538, %v1536
        %s1543 = scalar_lea.vmem %s1488, 64
        %v1544 = vld [vmem:[%s1543] sm:$0xff]
        %v1546 = vadd.s32 %v1495, 64
        %vm1547 = vcmp.eq.s32.totalorder %v1546, %v1492
        %v1548 = vsel %vm1547, %v1544, %v1542
        %s1549 = scalar_lea.vmem %s1488, 72
        %v1550 = vld [vmem:[%s1549] sm:$0xff]
        %v1552 = vadd.s32 %v1495, 72
        %vm1553 = vcmp.eq.s32.totalorder %v1552, %v1492
        %v1554 = vsel %vm1553, %v1550, %v1548
        %s1555 = scalar_lea.vmem %s1488, 80
        %v1556 = vld [vmem:[%s1555] sm:$0xff]
        %v1558 = vadd.s32 %v1495, 80
        %vm1559 = vcmp.eq.s32.totalorder %v1558, %v1492
        %v1560 = vsel %vm1559, %v1556, %v1554
        %s1561 = scalar_lea.vmem %s1488, 88
        %v1562 = vld [vmem:[%s1561] sm:$0xff]
        %v1564 = vadd.s32 %v1495, 88
        %vm1565 = vcmp.eq.s32.totalorder %v1564, %v1492
        %v1566 = vsel %vm1565, %v1562, %v1560
        %s1567 = scalar_lea.vmem %s1488, 96
        %v1568 = vld [vmem:[%s1567] sm:$0xff]
        %v1570 = vadd.s32 %v1495, 96
        %vm1571 = vcmp.eq.s32.totalorder %v1570, %v1492
        %v1572 = vsel %vm1571, %v1568, %v1566
        %s1573 = scalar_lea.vmem %s1488, 104
        %v1574 = vld [vmem:[%s1573] sm:$0xff]
        %v1576 = vadd.s32 %v1495, 104
        %vm1577 = vcmp.eq.s32.totalorder %v1576, %v1492
        %v1578 = vsel %vm1577, %v1574, %v1572
        %s1579 = scalar_lea.vmem %s1488, 112
        %v1580 = vld [vmem:[%s1579] sm:$0xff]
        %v1582 = vadd.s32 %v1495, 112
        %vm1583 = vcmp.eq.s32.totalorder %v1582, %v1492
        %v1584 = vsel %vm1583, %v1580, %v1578
        %s1585 = scalar_lea.vmem %s1488, 120
        %v1586 = vld [vmem:[%s1585] sm:$0xff]
        %v1588 = vadd.s32 %v1495, 120
        %vm1589 = vcmp.eq.s32.totalorder %v1588, %v1492
        %v1590 = vsel %vm1589, %v1586, %v1584
        %v1591 = vrot.slane %v1590, 4
        %v1592 = vadd.f32 %v1590, %v1591
        %v1593 = vrot.slane %v1592, 2
        %v1594 = vadd.f32 %v1592, %v1593
        %v1595 = vrot.slane %v1594, 1
        %v1596 = vadd.f32 %v1594, %v1595
        %1597 = vst [vmem:[%s1489] sm:$0x1] %v1596
        %s1598 = smov [#allocation18]
        %s1599 = smov [#allocation21]
        %v1600 = vlaneseq
        %v1601 = vand.u32 %v1600, 127
        %v1602 = vmov %v1601
        %v1603 = vlaneseq
        %v1604 = vshrl.u32 %v1603, 7
        %v1605 = vmov %v1604
        %v1606 = vld [vmem:[%s1598] sm:$0xff]
        %vm1609 = vcmp.eq.s32.totalorder %v1605, %v1602
        %v1610 = vsel %vm1609, %v1606, 0.0
        %s1611 = scalar_lea.vmem %s1598, 8
        %v1612 = vld [vmem:[%s1611] sm:$0xff]
        %v1614 = vadd.s32 %v1605, 8
        %vm1615 = vcmp.eq.s32.totalorder %v1614, %v1602
        %v1616 = vsel %vm1615, %v1612, %v1610
        %s1617 = scalar_lea.vmem %s1598, 16
        %v1618 = vld [vmem:[%s1617] sm:$0xff]
        %v1620 = vadd.s32 %v1605, 16
        %vm1621 = vcmp.eq.s32.totalorder %v1620, %v1602
        %v1622 = vsel %vm1621, %v1618, %v1616
        %s1623 = scalar_lea.vmem %s1598, 24
        %v1624 = vld [vmem:[%s1623] sm:$0xff]
        %v1626 = vadd.s32 %v1605, 24
        %vm1627 = vcmp.eq.s32.totalorder %v1626, %v1602
        %v1628 = vsel %vm1627, %v1624, %v1622
        %s1629 = scalar_lea.vmem %s1598, 32
        %v1630 = vld [vmem:[%s1629] sm:$0xff]
        %v1632 = vadd.s32 %v1605, 32
        %vm1633 = vcmp.eq.s32.totalorder %v1632, %v1602
        %v1634 = vsel %vm1633, %v1630, %v1628
        %s1635 = scalar_lea.vmem %s1598, 40
        %v1636 = vld [vmem:[%s1635] sm:$0xff]
        %v1638 = vadd.s32 %v1605, 40
        %vm1639 = vcmp.eq.s32.totalorder %v1638, %v1602
        %v1640 = vsel %vm1639, %v1636, %v1634
        %s1641 = scalar_lea.vmem %s1598, 48
        %v1642 = vld [vmem:[%s1641] sm:$0xff]
        %v1644 = vadd.s32 %v1605, 48
        %vm1645 = vcmp.eq.s32.totalorder %v1644, %v1602
        %v1646 = vsel %vm1645, %v1642, %v1640
        %s1647 = scalar_lea.vmem %s1598, 56
        %v1648 = vld [vmem:[%s1647] sm:$0xff]
        %v1650 = vadd.s32 %v1605, 56
        %vm1651 = vcmp.eq.s32.totalorder %v1650, %v1602
        %v1652 = vsel %vm1651, %v1648, %v1646
        %s1653 = scalar_lea.vmem %s1598, 64
        %v1654 = vld [vmem:[%s1653] sm:$0xff]
        %v1656 = vadd.s32 %v1605, 64
        %vm1657 = vcmp.eq.s32.totalorder %v1656, %v1602
        %v1658 = vsel %vm1657, %v1654, %v1652
        %s1659 = scalar_lea.vmem %s1598, 72
        %v1660 = vld [vmem:[%s1659] sm:$0xff]
        %v1662 = vadd.s32 %v1605, 72
        %vm1663 = vcmp.eq.s32.totalorder %v1662, %v1602
        %v1664 = vsel %vm1663, %v1660, %v1658
        %s1665 = scalar_lea.vmem %s1598, 80
        %v1666 = vld [vmem:[%s1665] sm:$0xff]
        %v1668 = vadd.s32 %v1605, 80
        %vm1669 = vcmp.eq.s32.totalorder %v1668, %v1602
        %v1670 = vsel %vm1669, %v1666, %v1664
        %s1671 = scalar_lea.vmem %s1598, 88
        %v1672 = vld [vmem:[%s1671] sm:$0xff]
        %v1674 = vadd.s32 %v1605, 88
        %vm1675 = vcmp.eq.s32.totalorder %v1674, %v1602
        %v1676 = vsel %vm1675, %v1672, %v1670
        %s1677 = scalar_lea.vmem %s1598, 96
        %v1678 = vld [vmem:[%s1677] sm:$0xff]
        %v1680 = vadd.s32 %v1605, 96
        %vm1681 = vcmp.eq.s32.totalorder %v1680, %v1602
        %v1682 = vsel %vm1681, %v1678, %v1676
        %s1683 = scalar_lea.vmem %s1598, 104
        %v1684 = vld [vmem:[%s1683] sm:$0xff]
        %v1686 = vadd.s32 %v1605, 104
        %vm1687 = vcmp.eq.s32.totalorder %v1686, %v1602
        %v1688 = vsel %vm1687, %v1684, %v1682
        %s1689 = scalar_lea.vmem %s1598, 112
        %v1690 = vld [vmem:[%s1689] sm:$0xff]
        %v1692 = vadd.s32 %v1605, 112
        %vm1693 = vcmp.eq.s32.totalorder %v1692, %v1602
        %v1694 = vsel %vm1693, %v1690, %v1688
        %s1695 = scalar_lea.vmem %s1598, 120
        %v1696 = vld [vmem:[%s1695] sm:$0xff]
        %v1698 = vadd.s32 %v1605, 120
        %vm1699 = vcmp.eq.s32.totalorder %v1698, %v1602
        %v1700 = vsel %vm1699, %v1696, %v1694
        %v1701 = vrot.slane %v1700, 4
        %v1702 = vadd.f32 %v1700, %v1701
        %v1703 = vrot.slane %v1702, 2
        %v1704 = vadd.f32 %v1702, %v1703
        %v1705 = vrot.slane %v1704, 1
        %v1706 = vadd.f32 %v1704, %v1705
        %1707 = vst [vmem:[%s1599] sm:$0x1] %v1706
        %s1708 = smov [#allocation24]
        %s1709 = smov [#allocation25]
        %s1710 = smov [#allocation19]
        %v1711 = vld [vmem:[%s1710] sm:$0xff]
        %s1712 = smov [#allocation20]
        %v1713 = vld [vmem:[%s1712] sm:$0xff]
        %s1714 = smov [#allocation21]
        %v1715 = vld [vmem:[%s1714] sm:$0xff]
        %v1716 = vsub.f32 %v1715, %v1711
        %v1717 = vmul.f32 2.0, %v1713
        %v1718 = vrcp.pop %v1717
        %v1719 = vmul.f32 %v1716, %v1718
        %vm1720 = vcmp.ge.f32.partialorder %v1719, 0.0
        %v1721 = vmul.f32 %v1719, %v1719
        %v1722 = vadd.f32 1.0, %v1721
        %v1723 = vrsqrt.pop %v1722
        %v1724 = vmul.f32 %v1722, %v1723
        %vm1725 = vcmp.eq.f32.partialorder %v1722, inf
        %v1726 = vsel %vm1725, %v1722, %v1724
        %vm1727 = vcmp.eq.f32.partialorder %v1722, 0.0
        %v1728 = vand.u32 %v1722, 2147483648
        %v1729 = vsel %vm1727, %v1728, %v1726
        %v1730 = vxor.u32 %v1729, 2147483648
        %v1731 = vsel %vm1720, %v1729, %v1730
        %v1732 = vadd.f32 %v1719, %v1731
        %v1733 = vrcp.pop %v1732
        %v1734 = vand.u32 2147483647, %v1711
        %v1735 = vand.u32 2147483647, %v1713
        %v1736 = vand.u32 2147483647, %v1715
        %v1737 = vmin.f32 %v1734, %v1736
        %v1738 = vmul.f32 1.1920929e-08, %v1737
        %vm1739 = vcmp.le.f32.partialorder %v1735, %v1738
        %v1740 = vsel %vm1739, 0.0, %v1733
        %v1741 = vmul.f32 %v1740, %v1740
        %v1742 = vadd.f32 1.0, %v1741
        %v1743 = vrsqrt.pop %v1742
        %v1744 = vmul.f32 %v1740, %v1743
        %v1745 = vmul.f32 %v1740, %v1713
        %v1746 = vsub.f32 %v1711, %v1745
        %v1747 = vmul.f32 %v1740, %v1713
        %v1748 = vadd.f32 %v1715, %v1747
        %s1749 = smov [#allocation22]
        %1750 = vst [vmem:[%s1749] sm:$0xff] %v1746
        %s1751 = smov [#allocation23]
        %1752 = vst [vmem:[%s1751] sm:$0xff] %v1748
        %s1753 = smov %s1708
        %1754 = vst [vmem:[%s1753] sm:$0xff] %v1743
        %s1755 = smov %s1709
        %1756 = vst [vmem:[%s1755] sm:$0xff] %v1744
        %s1757 = smov [#allocation24]
        %v1758 = vld [vmem:[%s1757] ss:$0 sm:$0xff]
        %v1759 = vlaneseq
        %v1760 = vand.u32 %v1759, 127
        %v1761 = vmov %v1760
        %v1762 = vlaneseq
        %v1763 = vshrl.u32 %v1762, 7
        %v1764 = vmov %v1763
        %vm1766 = vcmp.eq.s32.totalorder %v1764, %v1761
        %v1767 = vsel %vm1766, %v1758, 0.0
        %1768 = vadd.xlane.f32.xlu0 %v1767
        %v1769 = vpop.xlane.xlu0 %1768
        %s1770 = smov [#allocation26]
        %1771 = vst [vmem:[%s1770] sm:$0xff] %v1769
        %s1772 = smov [#allocation24]
        %v1773 = vld [vmem:[%s1772] ss:$0 sm:$0xff]
        %v1774 = vlaneseq
        %v1775 = vand.u32 %v1774, 127
        %v1776 = vmov %v1775
        %v1777 = vlaneseq
        %v1778 = vshrl.u32 %v1777, 7
        %v1779 = vmov %v1778
        %v1780 = vadd.s32 %v1779, 8
        %vm1781 = vcmp.eq.s32.totalorder %v1780, %v1776
        %v1782 = vsel %vm1781, %v1773, 0.0
        %1783 = vadd.xlane.f32.xlu0 %v1782
        %v1784 = vpop.xlane.xlu0 %1783
        %s1785 = smov [#allocation26]
        %s1786 = scalar_lea.vmem %s1785, 8
        %1787 = vst [vmem:[%s1786] sm:$0xff] %v1784
        %s1788 = smov [#allocation24]
        %v1789 = vld [vmem:[%s1788] ss:$0 sm:$0xff]
        %v1790 = vlaneseq
        %v1791 = vand.u32 %v1790, 127
        %v1792 = vmov %v1791
        %v1793 = vlaneseq
        %v1794 = vshrl.u32 %v1793, 7
        %v1795 = vmov %v1794
        %v1796 = vadd.s32 %v1795, 16
        %vm1797 = vcmp.eq.s32.totalorder %v1796, %v1792
        %v1798 = vsel %vm1797, %v1789, 0.0
        %1799 = vadd.xlane.f32.xlu0 %v1798
        %v1800 = vpop.xlane.xlu0 %1799
        %s1801 = smov [#allocation26]
        %s1802 = scalar_lea.vmem %s1801, 16
        %1803 = vst [vmem:[%s1802] sm:$0xff] %v1800
        %s1804 = smov [#allocation24]
        %v1805 = vld [vmem:[%s1804] ss:$0 sm:$0xff]
        %v1806 = vlaneseq
        %v1807 = vand.u32 %v1806, 127
        %v1808 = vmov %v1807
        %v1809 = vlaneseq
        %v1810 = vshrl.u32 %v1809, 7
        %v1811 = vmov %v1810
        %v1812 = vadd.s32 %v1811, 24
        %vm1813 = vcmp.eq.s32.totalorder %v1812, %v1808
        %v1814 = vsel %vm1813, %v1805, 0.0
        %1815 = vadd.xlane.f32.xlu0 %v1814
        %v1816 = vpop.xlane.xlu0 %1815
        %s1817 = smov [#allocation26]
        %s1818 = scalar_lea.vmem %s1817, 24
        %1819 = vst [vmem:[%s1818] sm:$0xff] %v1816
        %s1820 = smov [#allocation24]
        %v1821 = vld [vmem:[%s1820] ss:$0 sm:$0xff]
        %v1822 = vlaneseq
        %v1823 = vand.u32 %v1822, 127
        %v1824 = vmov %v1823
        %v1825 = vlaneseq
        %v1826 = vshrl.u32 %v1825, 7
        %v1827 = vmov %v1826
        %v1828 = vadd.s32 %v1827, 32
        %vm1829 = vcmp.eq.s32.totalorder %v1828, %v1824
        %v1830 = vsel %vm1829, %v1821, 0.0
        %1831 = vadd.xlane.f32.xlu0 %v1830
        %v1832 = vpop.xlane.xlu0 %1831
        %s1833 = smov [#allocation26]
        %s1834 = scalar_lea.vmem %s1833, 32
        %1835 = vst [vmem:[%s1834] sm:$0xff] %v1832
        %s1836 = smov [#allocation24]
        %v1837 = vld [vmem:[%s1836] ss:$0 sm:$0xff]
        %v1838 = vlaneseq
        %v1839 = vand.u32 %v1838, 127
        %v1840 = vmov %v1839
        %v1841 = vlaneseq
        %v1842 = vshrl.u32 %v1841, 7
        %v1843 = vmov %v1842
        %v1844 = vadd.s32 %v1843, 40
        %vm1845 = vcmp.eq.s32.totalorder %v1844, %v1840
        %v1846 = vsel %vm1845, %v1837, 0.0
        %1847 = vadd.xlane.f32.xlu0 %v1846
        %v1848 = vpop.xlane.xlu0 %1847
        %s1849 = smov [#allocation26]
        %s1850 = scalar_lea.vmem %s1849, 40
        %1851 = vst [vmem:[%s1850] sm:$0xff] %v1848
        %s1852 = smov [#allocation24]
        %v1853 = vld [vmem:[%s1852] ss:$0 sm:$0xff]
        %v1854 = vlaneseq
        %v1855 = vand.u32 %v1854, 127
        %v1856 = vmov %v1855
        %v1857 = vlaneseq
        %v1858 = vshrl.u32 %v1857, 7
        %v1859 = vmov %v1858
        %v1860 = vadd.s32 %v1859, 48
        %vm1861 = vcmp.eq.s32.totalorder %v1860, %v1856
        %v1862 = vsel %vm1861, %v1853, 0.0
        %1863 = vadd.xlane.f32.xlu0 %v1862
        %v1864 = vpop.xlane.xlu0 %1863
        %s1865 = smov [#allocation26]
        %s1866 = scalar_lea.vmem %s1865, 48
        %1867 = vst [vmem:[%s1866] sm:$0xff] %v1864
        %s1868 = smov [#allocation24]
        %v1869 = vld [vmem:[%s1868] ss:$0 sm:$0xff]
        %v1870 = vlaneseq
        %v1871 = vand.u32 %v1870, 127
        %v1872 = vmov %v1871
        %v1873 = vlaneseq
        %v1874 = vshrl.u32 %v1873, 7
        %v1875 = vmov %v1874
        %v1876 = vadd.s32 %v1875, 56
        %vm1877 = vcmp.eq.s32.totalorder %v1876, %v1872
        %v1878 = vsel %vm1877, %v1869, 0.0
        %1879 = vadd.xlane.f32.xlu0 %v1878
        %v1880 = vpop.xlane.xlu0 %1879
        %s1881 = smov [#allocation26]
        %s1882 = scalar_lea.vmem %s1881, 56
        %1883 = vst [vmem:[%s1882] sm:$0xff] %v1880
        %s1884 = smov [#allocation24]
        %v1885 = vld [vmem:[%s1884] ss:$0 sm:$0xff]
        %v1886 = vlaneseq
        %v1887 = vand.u32 %v1886, 127
        %v1888 = vmov %v1887
        %v1889 = vlaneseq
        %v1890 = vshrl.u32 %v1889, 7
        %v1891 = vmov %v1890
        %v1892 = vadd.s32 %v1891, 64
        %vm1893 = vcmp.eq.s32.totalorder %v1892, %v1888
        %v1894 = vsel %vm1893, %v1885, 0.0
        %1895 = vadd.xlane.f32.xlu0 %v1894
        %v1896 = vpop.xlane.xlu0 %1895
        %s1897 = smov [#allocation26]
        %s1898 = scalar_lea.vmem %s1897, 64
        %1899 = vst [vmem:[%s1898] sm:$0xff] %v1896
        %s1900 = smov [#allocation24]
        %v1901 = vld [vmem:[%s1900] ss:$0 sm:$0xff]
        %v1902 = vlaneseq
        %v1903 = vand.u32 %v1902, 127
        %v1904 = vmov %v1903
        %v1905 = vlaneseq
        %v1906 = vshrl.u32 %v1905, 7
        %v1907 = vmov %v1906
        %v1908 = vadd.s32 %v1907, 72
        %vm1909 = vcmp.eq.s32.totalorder %v1908, %v1904
        %v1910 = vsel %vm1909, %v1901, 0.0
        %1911 = vadd.xlane.f32.xlu0 %v1910
        %v1912 = vpop.xlane.xlu0 %1911
        %s1913 = smov [#allocation26]
        %s1914 = scalar_lea.vmem %s1913, 72
        %1915 = vst [vmem:[%s1914] sm:$0xff] %v1912
        %s1916 = smov [#allocation24]
        %v1917 = vld [vmem:[%s1916] ss:$0 sm:$0xff]
        %v1918 = vlaneseq
        %v1919 = vand.u32 %v1918, 127
        %v1920 = vmov %v1919
        %v1921 = vlaneseq
        %v1922 = vshrl.u32 %v1921, 7
        %v1923 = vmov %v1922
        %v1924 = vadd.s32 %v1923, 80
        %vm1925 = vcmp.eq.s32.totalorder %v1924, %v1920
        %v1926 = vsel %vm1925, %v1917, 0.0
        %1927 = vadd.xlane.f32.xlu0 %v1926
        %v1928 = vpop.xlane.xlu0 %1927
        %s1929 = smov [#allocation26]
        %s1930 = scalar_lea.vmem %s1929, 80
        %1931 = vst [vmem:[%s1930] sm:$0xff] %v1928
        %s1932 = smov [#allocation24]
        %v1933 = vld [vmem:[%s1932] ss:$0 sm:$0xff]
        %v1934 = vlaneseq
        %v1935 = vand.u32 %v1934, 127
        %v1936 = vmov %v1935
        %v1937 = vlaneseq
        %v1938 = vshrl.u32 %v1937, 7
        %v1939 = vmov %v1938
        %v1940 = vadd.s32 %v1939, 88
        %vm1941 = vcmp.eq.s32.totalorder %v1940, %v1936
        %v1942 = vsel %vm1941, %v1933, 0.0
        %1943 = vadd.xlane.f32.xlu0 %v1942
        %v1944 = vpop.xlane.xlu0 %1943
        %s1945 = smov [#allocation26]
        %s1946 = scalar_lea.vmem %s1945, 88
        %1947 = vst [vmem:[%s1946] sm:$0xff] %v1944
        %s1948 = smov [#allocation24]
        %v1949 = vld [vmem:[%s1948] ss:$0 sm:$0xff]
        %v1950 = vlaneseq
        %v1951 = vand.u32 %v1950, 127
        %v1952 = vmov %v1951
        %v1953 = vlaneseq
        %v1954 = vshrl.u32 %v1953, 7
        %v1955 = vmov %v1954
        %v1956 = vadd.s32 %v1955, 96
        %vm1957 = vcmp.eq.s32.totalorder %v1956, %v1952
        %v1958 = vsel %vm1957, %v1949, 0.0
        %1959 = vadd.xlane.f32.xlu0 %v1958
        %v1960 = vpop.xlane.xlu0 %1959
        %s1961 = smov [#allocation26]
        %s1962 = scalar_lea.vmem %s1961, 96
        %1963 = vst [vmem:[%s1962] sm:$0xff] %v1960
        %s1964 = smov [#allocation24]
        %v1965 = vld [vmem:[%s1964] ss:$0 sm:$0xff]
        %v1966 = vlaneseq
        %v1967 = vand.u32 %v1966, 127
        %v1968 = vmov %v1967
        %v1969 = vlaneseq
        %v1970 = vshrl.u32 %v1969, 7
        %v1971 = vmov %v1970
        %v1972 = vadd.s32 %v1971, 104
        %vm1973 = vcmp.eq.s32.totalorder %v1972, %v1968
        %v1974 = vsel %vm1973, %v1965, 0.0
        %1975 = vadd.xlane.f32.xlu0 %v1974
        %v1976 = vpop.xlane.xlu0 %1975
        %s1977 = smov [#allocation26]
        %s1978 = scalar_lea.vmem %s1977, 104
        %1979 = vst [vmem:[%s1978] sm:$0xff] %v1976
        %s1980 = smov [#allocation24]
        %v1981 = vld [vmem:[%s1980] ss:$0 sm:$0xff]
        %v1982 = vlaneseq
        %v1983 = vand.u32 %v1982, 127
        %v1984 = vmov %v1983
        %v1985 = vlaneseq
        %v1986 = vshrl.u32 %v1985, 7
        %v1987 = vmov %v1986
        %v1988 = vadd.s32 %v1987, 112
        %vm1989 = vcmp.eq.s32.totalorder %v1988, %v1984
        %v1990 = vsel %vm1989, %v1981, 0.0
        %1991 = vadd.xlane.f32.xlu0 %v1990
        %v1992 = vpop.xlane.xlu0 %1991
        %s1993 = smov [#allocation26]
        %s1994 = scalar_lea.vmem %s1993, 112
        %1995 = vst [vmem:[%s1994] sm:$0xff] %v1992
        %s1996 = smov [#allocation24]
        %v1997 = vld [vmem:[%s1996] ss:$0 sm:$0xff]
        %v1998 = vlaneseq
        %v1999 = vand.u32 %v1998, 127
        %v2000 = vmov %v1999
        %v2001 = vlaneseq
        %v2002 = vshrl.u32 %v2001, 7
        %v2003 = vmov %v2002
        %v2004 = vadd.s32 %v2003, 120
        %vm2005 = vcmp.eq.s32.totalorder %v2004, %v2000
        %v2006 = vsel %vm2005, %v1997, 0.0
        %2007 = vadd.xlane.f32.xlu0 %v2006
        %v2008 = vpop.xlane.xlu0 %2007
        %s2009 = smov [#allocation26]
        %s2010 = scalar_lea.vmem %s2009, 120
        %2011 = vst [vmem:[%s2010] sm:$0xff] %v2008
        %s2012 = smov [#allocation25]
        %v2013 = vld [vmem:[%s2012] ss:$0 sm:$0xff]
        %v2014 = vlaneseq
        %v2015 = vand.u32 %v2014, 127
        %v2016 = vmov %v2015
        %v2017 = vlaneseq
        %v2018 = vshrl.u32 %v2017, 7
        %v2019 = vmov %v2018
        %vm2021 = vcmp.eq.s32.totalorder %v2019, %v2016
        %v2022 = vsel %vm2021, %v2013, 0.0
        %2023 = vadd.xlane.f32.xlu0 %v2022
        %v2024 = vpop.xlane.xlu0 %2023
        %s2025 = smov [#allocation27]
        %2026 = vst [vmem:[%s2025] sm:$0xff] %v2024
        %s2027 = smov [#allocation25]
        %v2028 = vld [vmem:[%s2027] ss:$0 sm:$0xff]
        %v2029 = vlaneseq
        %v2030 = vand.u32 %v2029, 127
        %v2031 = vmov %v2030
        %v2032 = vlaneseq
        %v2033 = vshrl.u32 %v2032, 7
        %v2034 = vmov %v2033
        %v2035 = vadd.s32 %v2034, 8
        %vm2036 = vcmp.eq.s32.totalorder %v2035, %v2031
        %v2037 = vsel %vm2036, %v2028, 0.0
        %2038 = vadd.xlane.f32.xlu0 %v2037
        %v2039 = vpop.xlane.xlu0 %2038
        %s2040 = smov [#allocation27]
        %s2041 = scalar_lea.vmem %s2040, 8
        %2042 = vst [vmem:[%s2041] sm:$0xff] %v2039
        %s2043 = smov [#allocation25]
        %v2044 = vld [vmem:[%s2043] ss:$0 sm:$0xff]
        %v2045 = vlaneseq
        %v2046 = vand.u32 %v2045, 127
        %v2047 = vmov %v2046
        %v2048 = vlaneseq
        %v2049 = vshrl.u32 %v2048, 7
        %v2050 = vmov %v2049
        %v2051 = vadd.s32 %v2050, 16
        %vm2052 = vcmp.eq.s32.totalorder %v2051, %v2047
        %v2053 = vsel %vm2052, %v2044, 0.0
        %2054 = vadd.xlane.f32.xlu0 %v2053
        %v2055 = vpop.xlane.xlu0 %2054
        %s2056 = smov [#allocation27]
        %s2057 = scalar_lea.vmem %s2056, 16
        %2058 = vst [vmem:[%s2057] sm:$0xff] %v2055
        %s2059 = smov [#allocation25]
        %v2060 = vld [vmem:[%s2059] ss:$0 sm:$0xff]
        %v2061 = vlaneseq
        %v2062 = vand.u32 %v2061, 127
        %v2063 = vmov %v2062
        %v2064 = vlaneseq
        %v2065 = vshrl.u32 %v2064, 7
        %v2066 = vmov %v2065
        %v2067 = vadd.s32 %v2066, 24
        %vm2068 = vcmp.eq.s32.totalorder %v2067, %v2063
        %v2069 = vsel %vm2068, %v2060, 0.0
        %2070 = vadd.xlane.f32.xlu0 %v2069
        %v2071 = vpop.xlane.xlu0 %2070
        %s2072 = smov [#allocation27]
        %s2073 = scalar_lea.vmem %s2072, 24
        %2074 = vst [vmem:[%s2073] sm:$0xff] %v2071
        %s2075 = smov [#allocation25]
        %v2076 = vld [vmem:[%s2075] ss:$0 sm:$0xff]
        %v2077 = vlaneseq
        %v2078 = vand.u32 %v2077, 127
        %v2079 = vmov %v2078
        %v2080 = vlaneseq
        %v2081 = vshrl.u32 %v2080, 7
        %v2082 = vmov %v2081
        %v2083 = vadd.s32 %v2082, 32
        %vm2084 = vcmp.eq.s32.totalorder %v2083, %v2079
        %v2085 = vsel %vm2084, %v2076, 0.0
        %2086 = vadd.xlane.f32.xlu0 %v2085
        %v2087 = vpop.xlane.xlu0 %2086
        %s2088 = smov [#allocation27]
        %s2089 = scalar_lea.vmem %s2088, 32
        %2090 = vst [vmem:[%s2089] sm:$0xff] %v2087
        %s2091 = smov [#allocation25]
        %v2092 = vld [vmem:[%s2091] ss:$0 sm:$0xff]
        %v2093 = vlaneseq
        %v2094 = vand.u32 %v2093, 127
        %v2095 = vmov %v2094
        %v2096 = vlaneseq
        %v2097 = vshrl.u32 %v2096, 7
        %v2098 = vmov %v2097
        %v2099 = vadd.s32 %v2098, 40
        %vm2100 = vcmp.eq.s32.totalorder %v2099, %v2095
        %v2101 = vsel %vm2100, %v2092, 0.0
        %2102 = vadd.xlane.f32.xlu0 %v2101
        %v2103 = vpop.xlane.xlu0 %2102
        %s2104 = smov [#allocation27]
        %s2105 = scalar_lea.vmem %s2104, 40
        %2106 = vst [vmem:[%s2105] sm:$0xff] %v2103
        %s2107 = smov [#allocation25]
        %v2108 = vld [vmem:[%s2107] ss:$0 sm:$0xff]
        %v2109 = vlaneseq
        %v2110 = vand.u32 %v2109, 127
        %v2111 = vmov %v2110
        %v2112 = vlaneseq
        %v2113 = vshrl.u32 %v2112, 7
        %v2114 = vmov %v2113
        %v2115 = vadd.s32 %v2114, 48
        %vm2116 = vcmp.eq.s32.totalorder %v2115, %v2111
        %v2117 = vsel %vm2116, %v2108, 0.0
        %2118 = vadd.xlane.f32.xlu0 %v2117
        %v2119 = vpop.xlane.xlu0 %2118
        %s2120 = smov [#allocation27]
        %s2121 = scalar_lea.vmem %s2120, 48
        %2122 = vst [vmem:[%s2121] sm:$0xff] %v2119
        %s2123 = smov [#allocation25]
        %v2124 = vld [vmem:[%s2123] ss:$0 sm:$0xff]
        %v2125 = vlaneseq
        %v2126 = vand.u32 %v2125, 127
        %v2127 = vmov %v2126
        %v2128 = vlaneseq
        %v2129 = vshrl.u32 %v2128, 7
        %v2130 = vmov %v2129
        %v2131 = vadd.s32 %v2130, 56
        %vm2132 = vcmp.eq.s32.totalorder %v2131, %v2127
        %v2133 = vsel %vm2132, %v2124, 0.0
        %2134 = vadd.xlane.f32.xlu0 %v2133
        %v2135 = vpop.xlane.xlu0 %2134
        %s2136 = smov [#allocation27]
        %s2137 = scalar_lea.vmem %s2136, 56
        %2138 = vst [vmem:[%s2137] sm:$0xff] %v2135
        %s2139 = smov [#allocation25]
        %v2140 = vld [vmem:[%s2139] ss:$0 sm:$0xff]
        %v2141 = vlaneseq
        %v2142 = vand.u32 %v2141, 127
        %v2143 = vmov %v2142
        %v2144 = vlaneseq
        %v2145 = vshrl.u32 %v2144, 7
        %v2146 = vmov %v2145
        %v2147 = vadd.s32 %v2146, 64
        %vm2148 = vcmp.eq.s32.totalorder %v2147, %v2143
        %v2149 = vsel %vm2148, %v2140, 0.0
        %2150 = vadd.xlane.f32.xlu0 %v2149
        %v2151 = vpop.xlane.xlu0 %2150
        %s2152 = smov [#allocation27]
        %s2153 = scalar_lea.vmem %s2152, 64
        %2154 = vst [vmem:[%s2153] sm:$0xff] %v2151
        %s2155 = smov [#allocation25]
        %v2156 = vld [vmem:[%s2155] ss:$0 sm:$0xff]
        %v2157 = vlaneseq
        %v2158 = vand.u32 %v2157, 127
        %v2159 = vmov %v2158
        %v2160 = vlaneseq
        %v2161 = vshrl.u32 %v2160, 7
        %v2162 = vmov %v2161
        %v2163 = vadd.s32 %v2162, 72
        %vm2164 = vcmp.eq.s32.totalorder %v2163, %v2159
        %v2165 = vsel %vm2164, %v2156, 0.0
        %2166 = vadd.xlane.f32.xlu0 %v2165
        %v2167 = vpop.xlane.xlu0 %2166
        %s2168 = smov [#allocation27]
        %s2169 = scalar_lea.vmem %s2168, 72
        %2170 = vst [vmem:[%s2169] sm:$0xff] %v2167
        %s2171 = smov [#allocation25]
        %v2172 = vld [vmem:[%s2171] ss:$0 sm:$0xff]
        %v2173 = vlaneseq
        %v2174 = vand.u32 %v2173, 127
        %v2175 = vmov %v2174
        %v2176 = vlaneseq
        %v2177 = vshrl.u32 %v2176, 7
        %v2178 = vmov %v2177
        %v2179 = vadd.s32 %v2178, 80
        %vm2180 = vcmp.eq.s32.totalorder %v2179, %v2175
        %v2181 = vsel %vm2180, %v2172, 0.0
        %2182 = vadd.xlane.f32.xlu0 %v2181
        %v2183 = vpop.xlane.xlu0 %2182
        %s2184 = smov [#allocation27]
        %s2185 = scalar_lea.vmem %s2184, 80
        %2186 = vst [vmem:[%s2185] sm:$0xff] %v2183
        %s2187 = smov [#allocation25]
        %v2188 = vld [vmem:[%s2187] ss:$0 sm:$0xff]
        %v2189 = vlaneseq
        %v2190 = vand.u32 %v2189, 127
        %v2191 = vmov %v2190
        %v2192 = vlaneseq
        %v2193 = vshrl.u32 %v2192, 7
        %v2194 = vmov %v2193
        %v2195 = vadd.s32 %v2194, 88
        %vm2196 = vcmp.eq.s32.totalorder %v2195, %v2191
        %v2197 = vsel %vm2196, %v2188, 0.0
        %2198 = vadd.xlane.f32.xlu0 %v2197
        %v2199 = vpop.xlane.xlu0 %2198
        %s2200 = smov [#allocation27]
        %s2201 = scalar_lea.vmem %s2200, 88
        %2202 = vst [vmem:[%s2201] sm:$0xff] %v2199
        %s2203 = smov [#allocation25]
        %v2204 = vld [vmem:[%s2203] ss:$0 sm:$0xff]
        %v2205 = vlaneseq
        %v2206 = vand.u32 %v2205, 127
        %v2207 = vmov %v2206
        %v2208 = vlaneseq
        %v2209 = vshrl.u32 %v2208, 7
        %v2210 = vmov %v2209
        %v2211 = vadd.s32 %v2210, 96
        %vm2212 = vcmp.eq.s32.totalorder %v2211, %v2207
        %v2213 = vsel %vm2212, %v2204, 0.0
        %2214 = vadd.xlane.f32.xlu0 %v2213
        %v2215 = vpop.xlane.xlu0 %2214
        %s2216 = smov [#allocation27]
        %s2217 = scalar_lea.vmem %s2216, 96
        %2218 = vst [vmem:[%s2217] sm:$0xff] %v2215
        %s2219 = smov [#allocation25]
        %v2220 = vld [vmem:[%s2219] ss:$0 sm:$0xff]
        %v2221 = vlaneseq
        %v2222 = vand.u32 %v2221, 127
        %v2223 = vmov %v2222
        %v2224 = vlaneseq
        %v2225 = vshrl.u32 %v2224, 7
        %v2226 = vmov %v2225
        %v2227 = vadd.s32 %v2226, 104
        %vm2228 = vcmp.eq.s32.totalorder %v2227, %v2223
        %v2229 = vsel %vm2228, %v2220, 0.0
        %2230 = vadd.xlane.f32.xlu0 %v2229
        %v2231 = vpop.xlane.xlu0 %2230
        %s2232 = smov [#allocation27]
        %s2233 = scalar_lea.vmem %s2232, 104
        %2234 = vst [vmem:[%s2233] sm:$0xff] %v2231
        %s2235 = smov [#allocation25]
        %v2236 = vld [vmem:[%s2235] ss:$0 sm:$0xff]
        %v2237 = vlaneseq
        %v2238 = vand.u32 %v2237, 127
        %v2239 = vmov %v2238
        %v2240 = vlaneseq
        %v2241 = vshrl.u32 %v2240, 7
        %v2242 = vmov %v2241
        %v2243 = vadd.s32 %v2242, 112
        %vm2244 = vcmp.eq.s32.totalorder %v2243, %v2239
        %v2245 = vsel %vm2244, %v2236, 0.0
        %2246 = vadd.xlane.f32.xlu0 %v2245
        %v2247 = vpop.xlane.xlu0 %2246
        %s2248 = smov [#allocation27]
        %s2249 = scalar_lea.vmem %s2248, 112
        %2250 = vst [vmem:[%s2249] sm:$0xff] %v2247
        %s2251 = smov [#allocation25]
        %v2252 = vld [vmem:[%s2251] ss:$0 sm:$0xff]
        %v2253 = vlaneseq
        %v2254 = vand.u32 %v2253, 127
        %v2255 = vmov %v2254
        %v2256 = vlaneseq
        %v2257 = vshrl.u32 %v2256, 7
        %v2258 = vmov %v2257
        %v2259 = vadd.s32 %v2258, 120
        %vm2260 = vcmp.eq.s32.totalorder %v2259, %v2255
        %v2261 = vsel %vm2260, %v2252, 0.0
        %2262 = vadd.xlane.f32.xlu0 %v2261
        %v2263 = vpop.xlane.xlu0 %2262
        %s2264 = smov [#allocation27]
        %s2265 = scalar_lea.vmem %s2264, 120
        %2266 = vst [vmem:[%s2265] sm:$0xff] %v2263
        %s2267 = smov [#allocation26]
        %v2268 = vld [vmem:[%s2267] sm:$0xff]
        %s2269 = smov [#allocation27]
        %v2270 = vld [vmem:[%s2269] sm:$0xff]
        %s2271 = smov [#allocation15]
        %s2272 = smov [#allocation16]
        %s2273 = smov [#allocation17]
        %s2274 = smov [#allocation18]
        %v2275 = vld [vmem:[%s2271] sm:$0xff]
        %v2276 = vld [vmem:[%s2272] sm:$0xff]
        %v2277 = vld [vmem:[%s2273] sm:$0xff]
        %v2278 = vld [vmem:[%s2274] sm:$0xff]
        %v2279 = vmul.f32 %v2268, %v2275
        %v2280 = vmul.f32 %v2270, %v2277
        %v2281 = vsub.f32 %v2279, %v2280
        %v2282 = vmul.f32 %v2268, %v2276
        %v2283 = vmul.f32 %v2270, %v2278
        %v2284 = vsub.f32 %v2282, %v2283
        %v2285 = vmul.f32 %v2270, %v2275
        %v2286 = vmul.f32 %v2268, %v2277
        %v2287 = vadd.f32 %v2285, %v2286
        %v2288 = vmul.f32 %v2270, %v2276
        %v2289 = vmul.f32 %v2268, %v2278
        %v2290 = vadd.f32 %v2288, %v2289
        %2291 = vst [vmem:[%s2271] sm:$0xff] %v2281
        %2292 = vst [vmem:[%s2272] sm:$0xff] %v2284
        %2293 = vst [vmem:[%s2273] sm:$0xff] %v2287
        %2294 = vst [vmem:[%s2274] sm:$0xff] %v2290
        %s2295 = smov [#allocation26]
        %s2296 = scalar_lea.vmem %s2295, 8
        %v2297 = vld [vmem:[%s2296] sm:$0xff]
        %s2298 = smov [#allocation27]
        %s2299 = scalar_lea.vmem %s2298, 8
        %v2300 = vld [vmem:[%s2299] sm:$0xff]
        %s2301 = smov [#allocation15]
        %s2302 = scalar_lea.vmem %s2301, 8
        %s2303 = smov [#allocation16]
        %s2304 = scalar_lea.vmem %s2303, 8
        %s2305 = smov [#allocation17]
        %s2306 = scalar_lea.vmem %s2305, 8
        %s2307 = smov [#allocation18]
        %s2308 = scalar_lea.vmem %s2307, 8
        %v2309 = vld [vmem:[%s2302] sm:$0xff]
        %v2310 = vld [vmem:[%s2304] sm:$0xff]
        %v2311 = vld [vmem:[%s2306] sm:$0xff]
        %v2312 = vld [vmem:[%s2308] sm:$0xff]
        %v2313 = vmul.f32 %v2297, %v2309
        %v2314 = vmul.f32 %v2300, %v2311
        %v2315 = vsub.f32 %v2313, %v2314
        %v2316 = vmul.f32 %v2297, %v2310
        %v2317 = vmul.f32 %v2300, %v2312
        %v2318 = vsub.f32 %v2316, %v2317
        %v2319 = vmul.f32 %v2300, %v2309
        %v2320 = vmul.f32 %v2297, %v2311
        %v2321 = vadd.f32 %v2319, %v2320
        %v2322 = vmul.f32 %v2300, %v2310
        %v2323 = vmul.f32 %v2297, %v2312
        %v2324 = vadd.f32 %v2322, %v2323
        %2325 = vst [vmem:[%s2302] sm:$0xff] %v2315
        %2326 = vst [vmem:[%s2304] sm:$0xff] %v2318
        %2327 = vst [vmem:[%s2306] sm:$0xff] %v2321
        %2328 = vst [vmem:[%s2308] sm:$0xff] %v2324
        %s2329 = smov [#allocation26]
        %s2330 = scalar_lea.vmem %s2329, 16
        %v2331 = vld [vmem:[%s2330] sm:$0xff]
        %s2332 = smov [#allocation27]
        %s2333 = scalar_lea.vmem %s2332, 16
        %v2334 = vld [vmem:[%s2333] sm:$0xff]
        %s2335 = smov [#allocation15]
        %s2336 = scalar_lea.vmem %s2335, 16
        %s2337 = smov [#allocation16]
        %s2338 = scalar_lea.vmem %s2337, 16
        %s2339 = smov [#allocation17]
        %s2340 = scalar_lea.vmem %s2339, 16
        %s2341 = smov [#allocation18]
        %s2342 = scalar_lea.vmem %s2341, 16
        %v2343 = vld [vmem:[%s2336] sm:$0xff]
        %v2344 = vld [vmem:[%s2338] sm:$0xff]
        %v2345 = vld [vmem:[%s2340] sm:$0xff]
        %v2346 = vld [vmem:[%s2342] sm:$0xff]
        %v2347 = vmul.f32 %v2331, %v2343
        %v2348 = vmul.f32 %v2334, %v2345
        %v2349 = vsub.f32 %v2347, %v2348
        %v2350 = vmul.f32 %v2331, %v2344
        %v2351 = vmul.f32 %v2334, %v2346
        %v2352 = vsub.f32 %v2350, %v2351
        %v2353 = vmul.f32 %v2334, %v2343
        %v2354 = vmul.f32 %v2331, %v2345
        %v2355 = vadd.f32 %v2353, %v2354
        %v2356 = vmul.f32 %v2334, %v2344
        %v2357 = vmul.f32 %v2331, %v2346
        %v2358 = vadd.f32 %v2356, %v2357
        %2359 = vst [vmem:[%s2336] sm:$0xff] %v2349
        %2360 = vst [vmem:[%s2338] sm:$0xff] %v2352
        %2361 = vst [vmem:[%s2340] sm:$0xff] %v2355
        %2362 = vst [vmem:[%s2342] sm:$0xff] %v2358
        %s2363 = smov [#allocation26]
        %s2364 = scalar_lea.vmem %s2363, 24
        %v2365 = vld [vmem:[%s2364] sm:$0xff]
        %s2366 = smov [#allocation27]
        %s2367 = scalar_lea.vmem %s2366, 24
        %v2368 = vld [vmem:[%s2367] sm:$0xff]
        %s2369 = smov [#allocation15]
        %s2370 = scalar_lea.vmem %s2369, 24
        %s2371 = smov [#allocation16]
        %s2372 = scalar_lea.vmem %s2371, 24
        %s2373 = smov [#allocation17]
        %s2374 = scalar_lea.vmem %s2373, 24
        %s2375 = smov [#allocation18]
        %s2376 = scalar_lea.vmem %s2375, 24
        %v2377 = vld [vmem:[%s2370] sm:$0xff]
        %v2378 = vld [vmem:[%s2372] sm:$0xff]
        %v2379 = vld [vmem:[%s2374] sm:$0xff]
        %v2380 = vld [vmem:[%s2376] sm:$0xff]
        %v2381 = vmul.f32 %v2365, %v2377
        %v2382 = vmul.f32 %v2368, %v2379
        %v2383 = vsub.f32 %v2381, %v2382
        %v2384 = vmul.f32 %v2365, %v2378
        %v2385 = vmul.f32 %v2368, %v2380
        %v2386 = vsub.f32 %v2384, %v2385
        %v2387 = vmul.f32 %v2368, %v2377
        %v2388 = vmul.f32 %v2365, %v2379
        %v2389 = vadd.f32 %v2387, %v2388
        %v2390 = vmul.f32 %v2368, %v2378
        %v2391 = vmul.f32 %v2365, %v2380
        %v2392 = vadd.f32 %v2390, %v2391
        %2393 = vst [vmem:[%s2370] sm:$0xff] %v2383
        %2394 = vst [vmem:[%s2372] sm:$0xff] %v2386
        %2395 = vst [vmem:[%s2374] sm:$0xff] %v2389
        %2396 = vst [vmem:[%s2376] sm:$0xff] %v2392
        %s2397 = smov [#allocation26]
        %s2398 = scalar_lea.vmem %s2397, 32
        %v2399 = vld [vmem:[%s2398] sm:$0xff]
        %s2400 = smov [#allocation27]
        %s2401 = scalar_lea.vmem %s2400, 32
        %v2402 = vld [vmem:[%s2401] sm:$0xff]
        %s2403 = smov [#allocation15]
        %s2404 = scalar_lea.vmem %s2403, 32
        %s2405 = smov [#allocation16]
        %s2406 = scalar_lea.vmem %s2405, 32
        %s2407 = smov [#allocation17]
        %s2408 = scalar_lea.vmem %s2407, 32
        %s2409 = smov [#allocation18]
        %s2410 = scalar_lea.vmem %s2409, 32
        %v2411 = vld [vmem:[%s2404] sm:$0xff]
        %v2412 = vld [vmem:[%s2406] sm:$0xff]
        %v2413 = vld [vmem:[%s2408] sm:$0xff]
        %v2414 = vld [vmem:[%s2410] sm:$0xff]
        %v2415 = vmul.f32 %v2399, %v2411
        %v2416 = vmul.f32 %v2402, %v2413
        %v2417 = vsub.f32 %v2415, %v2416
        %v2418 = vmul.f32 %v2399, %v2412
        %v2419 = vmul.f32 %v2402, %v2414
        %v2420 = vsub.f32 %v2418, %v2419
        %v2421 = vmul.f32 %v2402, %v2411
        %v2422 = vmul.f32 %v2399, %v2413
        %v2423 = vadd.f32 %v2421, %v2422
        %v2424 = vmul.f32 %v2402, %v2412
        %v2425 = vmul.f32 %v2399, %v2414
        %v2426 = vadd.f32 %v2424, %v2425
        %2427 = vst [vmem:[%s2404] sm:$0xff] %v2417
        %2428 = vst [vmem:[%s2406] sm:$0xff] %v2420
        %2429 = vst [vmem:[%s2408] sm:$0xff] %v2423
        %2430 = vst [vmem:[%s2410] sm:$0xff] %v2426
        %s2431 = smov [#allocation26]
        %s2432 = scalar_lea.vmem %s2431, 40
        %v2433 = vld [vmem:[%s2432] sm:$0xff]
        %s2434 = smov [#allocation27]
        %s2435 = scalar_lea.vmem %s2434, 40
        %v2436 = vld [vmem:[%s2435] sm:$0xff]
        %s2437 = smov [#allocation15]
        %s2438 = scalar_lea.vmem %s2437, 40
        %s2439 = smov [#allocation16]
        %s2440 = scalar_lea.vmem %s2439, 40
        %s2441 = smov [#allocation17]
        %s2442 = scalar_lea.vmem %s2441, 40
        %s2443 = smov [#allocation18]
        %s2444 = scalar_lea.vmem %s2443, 40
        %v2445 = vld [vmem:[%s2438] sm:$0xff]
        %v2446 = vld [vmem:[%s2440] sm:$0xff]
        %v2447 = vld [vmem:[%s2442] sm:$0xff]
        %v2448 = vld [vmem:[%s2444] sm:$0xff]
        %v2449 = vmul.f32 %v2433, %v2445
        %v2450 = vmul.f32 %v2436, %v2447
        %v2451 = vsub.f32 %v2449, %v2450
        %v2452 = vmul.f32 %v2433, %v2446
        %v2453 = vmul.f32 %v2436, %v2448
        %v2454 = vsub.f32 %v2452, %v2453
        %v2455 = vmul.f32 %v2436, %v2445
        %v2456 = vmul.f32 %v2433, %v2447
        %v2457 = vadd.f32 %v2455, %v2456
        %v2458 = vmul.f32 %v2436, %v2446
        %v2459 = vmul.f32 %v2433, %v2448
        %v2460 = vadd.f32 %v2458, %v2459
        %2461 = vst [vmem:[%s2438] sm:$0xff] %v2451
        %2462 = vst [vmem:[%s2440] sm:$0xff] %v2454
        %2463 = vst [vmem:[%s2442] sm:$0xff] %v2457
        %2464 = vst [vmem:[%s2444] sm:$0xff] %v2460
        %s2465 = smov [#allocation26]
        %s2466 = scalar_lea.vmem %s2465, 48
        %v2467 = vld [vmem:[%s2466] sm:$0xff]
        %s2468 = smov [#allocation27]
        %s2469 = scalar_lea.vmem %s2468, 48
        %v2470 = vld [vmem:[%s2469] sm:$0xff]
        %s2471 = smov [#allocation15]
        %s2472 = scalar_lea.vmem %s2471, 48
        %s2473 = smov [#allocation16]
        %s2474 = scalar_lea.vmem %s2473, 48
        %s2475 = smov [#allocation17]
        %s2476 = scalar_lea.vmem %s2475, 48
        %s2477 = smov [#allocation18]
        %s2478 = scalar_lea.vmem %s2477, 48
        %v2479 = vld [vmem:[%s2472] sm:$0xff]
        %v2480 = vld [vmem:[%s2474] sm:$0xff]
        %v2481 = vld [vmem:[%s2476] sm:$0xff]
        %v2482 = vld [vmem:[%s2478] sm:$0xff]
        %v2483 = vmul.f32 %v2467, %v2479
        %v2484 = vmul.f32 %v2470, %v2481
        %v2485 = vsub.f32 %v2483, %v2484
        %v2486 = vmul.f32 %v2467, %v2480
        %v2487 = vmul.f32 %v2470, %v2482
        %v2488 = vsub.f32 %v2486, %v2487
        %v2489 = vmul.f32 %v2470, %v2479
        %v2490 = vmul.f32 %v2467, %v2481
        %v2491 = vadd.f32 %v2489, %v2490
        %v2492 = vmul.f32 %v2470, %v2480
        %v2493 = vmul.f32 %v2467, %v2482
        %v2494 = vadd.f32 %v2492, %v2493
        %2495 = vst [vmem:[%s2472] sm:$0xff] %v2485
        %2496 = vst [vmem:[%s2474] sm:$0xff] %v2488
        %2497 = vst [vmem:[%s2476] sm:$0xff] %v2491
        %2498 = vst [vmem:[%s2478] sm:$0xff] %v2494
        %s2499 = smov [#allocation26]
        %s2500 = scalar_lea.vmem %s2499, 56
        %v2501 = vld [vmem:[%s2500] sm:$0xff]
        %s2502 = smov [#allocation27]
        %s2503 = scalar_lea.vmem %s2502, 56
        %v2504 = vld [vmem:[%s2503] sm:$0xff]
        %s2505 = smov [#allocation15]
        %s2506 = scalar_lea.vmem %s2505, 56
        %s2507 = smov [#allocation16]
        %s2508 = scalar_lea.vmem %s2507, 56
        %s2509 = smov [#allocation17]
        %s2510 = scalar_lea.vmem %s2509, 56
        %s2511 = smov [#allocation18]
        %s2512 = scalar_lea.vmem %s2511, 56
        %v2513 = vld [vmem:[%s2506] sm:$0xff]
        %v2514 = vld [vmem:[%s2508] sm:$0xff]
        %v2515 = vld [vmem:[%s2510] sm:$0xff]
        %v2516 = vld [vmem:[%s2512] sm:$0xff]
        %v2517 = vmul.f32 %v2501, %v2513
        %v2518 = vmul.f32 %v2504, %v2515
        %v2519 = vsub.f32 %v2517, %v2518
        %v2520 = vmul.f32 %v2501, %v2514
        %v2521 = vmul.f32 %v2504, %v2516
        %v2522 = vsub.f32 %v2520, %v2521
        %v2523 = vmul.f32 %v2504, %v2513
        %v2524 = vmul.f32 %v2501, %v2515
        %v2525 = vadd.f32 %v2523, %v2524
        %v2526 = vmul.f32 %v2504, %v2514
        %v2527 = vmul.f32 %v2501, %v2516
        %v2528 = vadd.f32 %v2526, %v2527
        %2529 = vst [vmem:[%s2506] sm:$0xff] %v2519
        %2530 = vst [vmem:[%s2508] sm:$0xff] %v2522
        %2531 = vst [vmem:[%s2510] sm:$0xff] %v2525
        %2532 = vst [vmem:[%s2512] sm:$0xff] %v2528
        %s2533 = smov [#allocation26]
        %s2534 = scalar_lea.vmem %s2533, 64
        %v2535 = vld [vmem:[%s2534] sm:$0xff]
        %s2536 = smov [#allocation27]
        %s2537 = scalar_lea.vmem %s2536, 64
        %v2538 = vld [vmem:[%s2537] sm:$0xff]
        %s2539 = smov [#allocation15]
        %s2540 = scalar_lea.vmem %s2539, 64
        %s2541 = smov [#allocation16]
        %s2542 = scalar_lea.vmem %s2541, 64
        %s2543 = smov [#allocation17]
        %s2544 = scalar_lea.vmem %s2543, 64
        %s2545 = smov [#allocation18]
        %s2546 = scalar_lea.vmem %s2545, 64
        %v2547 = vld [vmem:[%s2540] sm:$0xff]
        %v2548 = vld [vmem:[%s2542] sm:$0xff]
        %v2549 = vld [vmem:[%s2544] sm:$0xff]
        %v2550 = vld [vmem:[%s2546] sm:$0xff]
        %v2551 = vmul.f32 %v2535, %v2547
        %v2552 = vmul.f32 %v2538, %v2549
        %v2553 = vsub.f32 %v2551, %v2552
        %v2554 = vmul.f32 %v2535, %v2548
        %v2555 = vmul.f32 %v2538, %v2550
        %v2556 = vsub.f32 %v2554, %v2555
        %v2557 = vmul.f32 %v2538, %v2547
        %v2558 = vmul.f32 %v2535, %v2549
        %v2559 = vadd.f32 %v2557, %v2558
        %v2560 = vmul.f32 %v2538, %v2548
        %v2561 = vmul.f32 %v2535, %v2550
        %v2562 = vadd.f32 %v2560, %v2561
        %2563 = vst [vmem:[%s2540] sm:$0xff] %v2553
        %2564 = vst [vmem:[%s2542] sm:$0xff] %v2556
        %2565 = vst [vmem:[%s2544] sm:$0xff] %v2559
        %2566 = vst [vmem:[%s2546] sm:$0xff] %v2562
        %s2567 = smov [#allocation26]
        %s2568 = scalar_lea.vmem %s2567, 72
        %v2569 = vld [vmem:[%s2568] sm:$0xff]
        %s2570 = smov [#allocation27]
        %s2571 = scalar_lea.vmem %s2570, 72
        %v2572 = vld [vmem:[%s2571] sm:$0xff]
        %s2573 = smov [#allocation15]
        %s2574 = scalar_lea.vmem %s2573, 72
        %s2575 = smov [#allocation16]
        %s2576 = scalar_lea.vmem %s2575, 72
        %s2577 = smov [#allocation17]
        %s2578 = scalar_lea.vmem %s2577, 72
        %s2579 = smov [#allocation18]
        %s2580 = scalar_lea.vmem %s2579, 72
        %v2581 = vld [vmem:[%s2574] sm:$0xff]
        %v2582 = vld [vmem:[%s2576] sm:$0xff]
        %v2583 = vld [vmem:[%s2578] sm:$0xff]
        %v2584 = vld [vmem:[%s2580] sm:$0xff]
        %v2585 = vmul.f32 %v2569, %v2581
        %v2586 = vmul.f32 %v2572, %v2583
        %v2587 = vsub.f32 %v2585, %v2586
        %v2588 = vmul.f32 %v2569, %v2582
        %v2589 = vmul.f32 %v2572, %v2584
        %v2590 = vsub.f32 %v2588, %v2589
        %v2591 = vmul.f32 %v2572, %v2581
        %v2592 = vmul.f32 %v2569, %v2583
        %v2593 = vadd.f32 %v2591, %v2592
        %v2594 = vmul.f32 %v2572, %v2582
        %v2595 = vmul.f32 %v2569, %v2584
        %v2596 = vadd.f32 %v2594, %v2595
        %2597 = vst [vmem:[%s2574] sm:$0xff] %v2587
        %2598 = vst [vmem:[%s2576] sm:$0xff] %v2590
        %2599 = vst [vmem:[%s2578] sm:$0xff] %v2593
        %2600 = vst [vmem:[%s2580] sm:$0xff] %v2596
        %s2601 = smov [#allocation26]
        %s2602 = scalar_lea.vmem %s2601, 80
        %v2603 = vld [vmem:[%s2602] sm:$0xff]
        %s2604 = smov [#allocation27]
        %s2605 = scalar_lea.vmem %s2604, 80
        %v2606 = vld [vmem:[%s2605] sm:$0xff]
        %s2607 = smov [#allocation15]
        %s2608 = scalar_lea.vmem %s2607, 80
        %s2609 = smov [#allocation16]
        %s2610 = scalar_lea.vmem %s2609, 80
        %s2611 = smov [#allocation17]
        %s2612 = scalar_lea.vmem %s2611, 80
        %s2613 = smov [#allocation18]
        %s2614 = scalar_lea.vmem %s2613, 80
        %v2615 = vld [vmem:[%s2608] sm:$0xff]
        %v2616 = vld [vmem:[%s2610] sm:$0xff]
        %v2617 = vld [vmem:[%s2612] sm:$0xff]
        %v2618 = vld [vmem:[%s2614] sm:$0xff]
        %v2619 = vmul.f32 %v2603, %v2615
        %v2620 = vmul.f32 %v2606, %v2617
        %v2621 = vsub.f32 %v2619, %v2620
        %v2622 = vmul.f32 %v2603, %v2616
        %v2623 = vmul.f32 %v2606, %v2618
        %v2624 = vsub.f32 %v2622, %v2623
        %v2625 = vmul.f32 %v2606, %v2615
        %v2626 = vmul.f32 %v2603, %v2617
        %v2627 = vadd.f32 %v2625, %v2626
        %v2628 = vmul.f32 %v2606, %v2616
        %v2629 = vmul.f32 %v2603, %v2618
        %v2630 = vadd.f32 %v2628, %v2629
        %2631 = vst [vmem:[%s2608] sm:$0xff] %v2621
        %2632 = vst [vmem:[%s2610] sm:$0xff] %v2624
        %2633 = vst [vmem:[%s2612] sm:$0xff] %v2627
        %2634 = vst [vmem:[%s2614] sm:$0xff] %v2630
        %s2635 = smov [#allocation26]
        %s2636 = scalar_lea.vmem %s2635, 88
        %v2637 = vld [vmem:[%s2636] sm:$0xff]
        %s2638 = smov [#allocation27]
        %s2639 = scalar_lea.vmem %s2638, 88
        %v2640 = vld [vmem:[%s2639] sm:$0xff]
        %s2641 = smov [#allocation15]
        %s2642 = scalar_lea.vmem %s2641, 88
        %s2643 = smov [#allocation16]
        %s2644 = scalar_lea.vmem %s2643, 88
        %s2645 = smov [#allocation17]
        %s2646 = scalar_lea.vmem %s2645, 88
        %s2647 = smov [#allocation18]
        %s2648 = scalar_lea.vmem %s2647, 88
        %v2649 = vld [vmem:[%s2642] sm:$0xff]
        %v2650 = vld [vmem:[%s2644] sm:$0xff]
        %v2651 = vld [vmem:[%s2646] sm:$0xff]
        %v2652 = vld [vmem:[%s2648] sm:$0xff]
        %v2653 = vmul.f32 %v2637, %v2649
        %v2654 = vmul.f32 %v2640, %v2651
        %v2655 = vsub.f32 %v2653, %v2654
        %v2656 = vmul.f32 %v2637, %v2650
        %v2657 = vmul.f32 %v2640, %v2652
        %v2658 = vsub.f32 %v2656, %v2657
        %v2659 = vmul.f32 %v2640, %v2649
        %v2660 = vmul.f32 %v2637, %v2651
        %v2661 = vadd.f32 %v2659, %v2660
        %v2662 = vmul.f32 %v2640, %v2650
        %v2663 = vmul.f32 %v2637, %v2652
        %v2664 = vadd.f32 %v2662, %v2663
        %2665 = vst [vmem:[%s2642] sm:$0xff] %v2655
        %2666 = vst [vmem:[%s2644] sm:$0xff] %v2658
        %2667 = vst [vmem:[%s2646] sm:$0xff] %v2661
        %2668 = vst [vmem:[%s2648] sm:$0xff] %v2664
        %s2669 = smov [#allocation26]
        %s2670 = scalar_lea.vmem %s2669, 96
        %v2671 = vld [vmem:[%s2670] sm:$0xff]
        %s2672 = smov [#allocation27]
        %s2673 = scalar_lea.vmem %s2672, 96
        %v2674 = vld [vmem:[%s2673] sm:$0xff]
        %s2675 = smov [#allocation15]
        %s2676 = scalar_lea.vmem %s2675, 96
        %s2677 = smov [#allocation16]
        %s2678 = scalar_lea.vmem %s2677, 96
        %s2679 = smov [#allocation17]
        %s2680 = scalar_lea.vmem %s2679, 96
        %s2681 = smov [#allocation18]
        %s2682 = scalar_lea.vmem %s2681, 96
        %v2683 = vld [vmem:[%s2676] sm:$0xff]
        %v2684 = vld [vmem:[%s2678] sm:$0xff]
        %v2685 = vld [vmem:[%s2680] sm:$0xff]
        %v2686 = vld [vmem:[%s2682] sm:$0xff]
        %v2687 = vmul.f32 %v2671, %v2683
        %v2688 = vmul.f32 %v2674, %v2685
        %v2689 = vsub.f32 %v2687, %v2688
        %v2690 = vmul.f32 %v2671, %v2684
        %v2691 = vmul.f32 %v2674, %v2686
        %v2692 = vsub.f32 %v2690, %v2691
        %v2693 = vmul.f32 %v2674, %v2683
        %v2694 = vmul.f32 %v2671, %v2685
        %v2695 = vadd.f32 %v2693, %v2694
        %v2696 = vmul.f32 %v2674, %v2684
        %v2697 = vmul.f32 %v2671, %v2686
        %v2698 = vadd.f32 %v2696, %v2697
        %2699 = vst [vmem:[%s2676] sm:$0xff] %v2689
        %2700 = vst [vmem:[%s2678] sm:$0xff] %v2692
        %2701 = vst [vmem:[%s2680] sm:$0xff] %v2695
        %2702 = vst [vmem:[%s2682] sm:$0xff] %v2698
        %s2703 = smov [#allocation26]
        %s2704 = scalar_lea.vmem %s2703, 104
        %v2705 = vld [vmem:[%s2704] sm:$0xff]
        %s2706 = smov [#allocation27]
        %s2707 = scalar_lea.vmem %s2706, 104
        %v2708 = vld [vmem:[%s2707] sm:$0xff]
        %s2709 = smov [#allocation15]
        %s2710 = scalar_lea.vmem %s2709, 104
        %s2711 = smov [#allocation16]
        %s2712 = scalar_lea.vmem %s2711, 104
        %s2713 = smov [#allocation17]
        %s2714 = scalar_lea.vmem %s2713, 104
        %s2715 = smov [#allocation18]
        %s2716 = scalar_lea.vmem %s2715, 104
        %v2717 = vld [vmem:[%s2710] sm:$0xff]
        %v2718 = vld [vmem:[%s2712] sm:$0xff]
        %v2719 = vld [vmem:[%s2714] sm:$0xff]
        %v2720 = vld [vmem:[%s2716] sm:$0xff]
        %v2721 = vmul.f32 %v2705, %v2717
        %v2722 = vmul.f32 %v2708, %v2719
        %v2723 = vsub.f32 %v2721, %v2722
        %v2724 = vmul.f32 %v2705, %v2718
        %v2725 = vmul.f32 %v2708, %v2720
        %v2726 = vsub.f32 %v2724, %v2725
        %v2727 = vmul.f32 %v2708, %v2717
        %v2728 = vmul.f32 %v2705, %v2719
        %v2729 = vadd.f32 %v2727, %v2728
        %v2730 = vmul.f32 %v2708, %v2718
        %v2731 = vmul.f32 %v2705, %v2720
        %v2732 = vadd.f32 %v2730, %v2731
        %2733 = vst [vmem:[%s2710] sm:$0xff] %v2723
        %2734 = vst [vmem:[%s2712] sm:$0xff] %v2726
        %2735 = vst [vmem:[%s2714] sm:$0xff] %v2729
        %2736 = vst [vmem:[%s2716] sm:$0xff] %v2732
        %s2737 = smov [#allocation26]
        %s2738 = scalar_lea.vmem %s2737, 112
        %v2739 = vld [vmem:[%s2738] sm:$0xff]
        %s2740 = smov [#allocation27]
        %s2741 = scalar_lea.vmem %s2740, 112
        %v2742 = vld [vmem:[%s2741] sm:$0xff]
        %s2743 = smov [#allocation15]
        %s2744 = scalar_lea.vmem %s2743, 112
        %s2745 = smov [#allocation16]
        %s2746 = scalar_lea.vmem %s2745, 112
        %s2747 = smov [#allocation17]
        %s2748 = scalar_lea.vmem %s2747, 112
        %s2749 = smov [#allocation18]
        %s2750 = scalar_lea.vmem %s2749, 112
        %v2751 = vld [vmem:[%s2744] sm:$0xff]
        %v2752 = vld [vmem:[%s2746] sm:$0xff]
        %v2753 = vld [vmem:[%s2748] sm:$0xff]
        %v2754 = vld [vmem:[%s2750] sm:$0xff]
        %v2755 = vmul.f32 %v2739, %v2751
        %v2756 = vmul.f32 %v2742, %v2753
        %v2757 = vsub.f32 %v2755, %v2756
        %v2758 = vmul.f32 %v2739, %v2752
        %v2759 = vmul.f32 %v2742, %v2754
        %v2760 = vsub.f32 %v2758, %v2759
        %v2761 = vmul.f32 %v2742, %v2751
        %v2762 = vmul.f32 %v2739, %v2753
        %v2763 = vadd.f32 %v2761, %v2762
        %v2764 = vmul.f32 %v2742, %v2752
        %v2765 = vmul.f32 %v2739, %v2754
        %v2766 = vadd.f32 %v2764, %v2765
        %2767 = vst [vmem:[%s2744] sm:$0xff] %v2757
        %2768 = vst [vmem:[%s2746] sm:$0xff] %v2760
        %2769 = vst [vmem:[%s2748] sm:$0xff] %v2763
        %2770 = vst [vmem:[%s2750] sm:$0xff] %v2766
        %s2771 = smov [#allocation26]
        %s2772 = scalar_lea.vmem %s2771, 120
        %v2773 = vld [vmem:[%s2772] sm:$0xff]
        %s2774 = smov [#allocation27]
        %s2775 = scalar_lea.vmem %s2774, 120
        %v2776 = vld [vmem:[%s2775] sm:$0xff]
        %s2777 = smov [#allocation15]
        %s2778 = scalar_lea.vmem %s2777, 120
        %s2779 = smov [#allocation16]
        %s2780 = scalar_lea.vmem %s2779, 120
        %s2781 = smov [#allocation17]
        %s2782 = scalar_lea.vmem %s2781, 120
        %s2783 = smov [#allocation18]
        %s2784 = scalar_lea.vmem %s2783, 120
        %v2785 = vld [vmem:[%s2778] sm:$0xff]
        %v2786 = vld [vmem:[%s2780] sm:$0xff]
        %v2787 = vld [vmem:[%s2782] sm:$0xff]
        %v2788 = vld [vmem:[%s2784] sm:$0xff]
        %v2789 = vmul.f32 %v2773, %v2785
        %v2790 = vmul.f32 %v2776, %v2787
        %v2791 = vsub.f32 %v2789, %v2790
        %v2792 = vmul.f32 %v2773, %v2786
        %v2793 = vmul.f32 %v2776, %v2788
        %v2794 = vsub.f32 %v2792, %v2793
        %v2795 = vmul.f32 %v2776, %v2785
        %v2796 = vmul.f32 %v2773, %v2787
        %v2797 = vadd.f32 %v2795, %v2796
        %v2798 = vmul.f32 %v2776, %v2786
        %v2799 = vmul.f32 %v2773, %v2788
        %v2800 = vadd.f32 %v2798, %v2799
        %2801 = vst [vmem:[%s2778] sm:$0xff] %v2791
        %2802 = vst [vmem:[%s2780] sm:$0xff] %v2794
        %2803 = vst [vmem:[%s2782] sm:$0xff] %v2797
        %2804 = vst [vmem:[%s2784] sm:$0xff] %v2800
        %s2805 = smov [#allocation24]
        %v2806 = vld [vmem:[%s2805] ss:$0 sm:$0xff]
        %s2807 = smov [#allocation25]
        %v2808 = vld [vmem:[%s2807] ss:$0 sm:$0xff]
        %s2809 = smov [#allocation15]
        %s2810 = smov [#allocation16]
        %s2811 = smov [#allocation17]
        %s2812 = smov [#allocation18]
        %v2813 = vld [vmem:[%s2809] sm:$0xff]
        %v2814 = vld [vmem:[%s2810] sm:$0xff]
        %v2815 = vld [vmem:[%s2811] sm:$0xff]
        %v2816 = vld [vmem:[%s2812] sm:$0xff]
        %v2817 = vmul.f32 %v2806, %v2813
        %v2818 = vmul.f32 %v2808, %v2814
        %v2819 = vsub.f32 %v2817, %v2818
        %v2820 = vmul.f32 %v2808, %v2813
        %v2821 = vmul.f32 %v2806, %v2814
        %v2822 = vadd.f32 %v2820, %v2821
        %v2823 = vmul.f32 %v2806, %v2815
        %v2824 = vmul.f32 %v2808, %v2816
        %v2825 = vsub.f32 %v2823, %v2824
        %v2826 = vmul.f32 %v2808, %v2815
        %v2827 = vmul.f32 %v2806, %v2816
        %v2828 = vadd.f32 %v2826, %v2827
        %2829 = vst [vmem:[%s2809] sm:$0xff] %v2819
        %2830 = vst [vmem:[%s2810] sm:$0xff] %v2822
        %2831 = vst [vmem:[%s2811] sm:$0xff] %v2825
        %2832 = vst [vmem:[%s2812] sm:$0xff] %v2828
        %s2833 = smov [#allocation15]
        %s2834 = scalar_lea.vmem %s2833, 8
        %s2835 = smov [#allocation16]
        %s2836 = scalar_lea.vmem %s2835, 8
        %s2837 = smov [#allocation17]
        %s2838 = scalar_lea.vmem %s2837, 8
        %s2839 = smov [#allocation18]
        %s2840 = scalar_lea.vmem %s2839, 8
        %v2841 = vld [vmem:[%s2834] sm:$0xff]
        %v2842 = vld [vmem:[%s2836] sm:$0xff]
        %v2843 = vld [vmem:[%s2838] sm:$0xff]
        %v2844 = vld [vmem:[%s2840] sm:$0xff]
        %v2845 = vmul.f32 %v2806, %v2841
        %v2846 = vmul.f32 %v2808, %v2842
        %v2847 = vsub.f32 %v2845, %v2846
        %v2848 = vmul.f32 %v2808, %v2841
        %v2849 = vmul.f32 %v2806, %v2842
        %v2850 = vadd.f32 %v2848, %v2849
        %v2851 = vmul.f32 %v2806, %v2843
        %v2852 = vmul.f32 %v2808, %v2844
        %v2853 = vsub.f32 %v2851, %v2852
        %v2854 = vmul.f32 %v2808, %v2843
        %v2855 = vmul.f32 %v2806, %v2844
        %v2856 = vadd.f32 %v2854, %v2855
        %2857 = vst [vmem:[%s2834] sm:$0xff] %v2847
        %2858 = vst [vmem:[%s2836] sm:$0xff] %v2850
        %2859 = vst [vmem:[%s2838] sm:$0xff] %v2853
        %2860 = vst [vmem:[%s2840] sm:$0xff] %v2856
        %s2861 = smov [#allocation15]
        %s2862 = scalar_lea.vmem %s2861, 16
        %s2863 = smov [#allocation16]
        %s2864 = scalar_lea.vmem %s2863, 16
        %s2865 = smov [#allocation17]
        %s2866 = scalar_lea.vmem %s2865, 16
        %s2867 = smov [#allocation18]
        %s2868 = scalar_lea.vmem %s2867, 16
        %v2869 = vld [vmem:[%s2862] sm:$0xff]
        %v2870 = vld [vmem:[%s2864] sm:$0xff]
        %v2871 = vld [vmem:[%s2866] sm:$0xff]
        %v2872 = vld [vmem:[%s2868] sm:$0xff]
        %v2873 = vmul.f32 %v2806, %v2869
        %v2874 = vmul.f32 %v2808, %v2870
        %v2875 = vsub.f32 %v2873, %v2874
        %v2876 = vmul.f32 %v2808, %v2869
        %v2877 = vmul.f32 %v2806, %v2870
        %v2878 = vadd.f32 %v2876, %v2877
        %v2879 = vmul.f32 %v2806, %v2871
        %v2880 = vmul.f32 %v2808, %v2872
        %v2881 = vsub.f32 %v2879, %v2880
        %v2882 = vmul.f32 %v2808, %v2871
        %v2883 = vmul.f32 %v2806, %v2872
        %v2884 = vadd.f32 %v2882, %v2883
        %2885 = vst [vmem:[%s2862] sm:$0xff] %v2875
        %2886 = vst [vmem:[%s2864] sm:$0xff] %v2878
        %2887 = vst [vmem:[%s2866] sm:$0xff] %v2881
        %2888 = vst [vmem:[%s2868] sm:$0xff] %v2884
        %s2889 = smov [#allocation15]
        %s2890 = scalar_lea.vmem %s2889, 24
        %s2891 = smov [#allocation16]
        %s2892 = scalar_lea.vmem %s2891, 24
        %s2893 = smov [#allocation17]
        %s2894 = scalar_lea.vmem %s2893, 24
        %s2895 = smov [#allocation18]
        %s2896 = scalar_lea.vmem %s2895, 24
        %v2897 = vld [vmem:[%s2890] sm:$0xff]
        %v2898 = vld [vmem:[%s2892] sm:$0xff]
        %v2899 = vld [vmem:[%s2894] sm:$0xff]
        %v2900 = vld [vmem:[%s2896] sm:$0xff]
        %v2901 = vmul.f32 %v2806, %v2897
        %v2902 = vmul.f32 %v2808, %v2898
        %v2903 = vsub.f32 %v2901, %v2902
        %v2904 = vmul.f32 %v2808, %v2897
        %v2905 = vmul.f32 %v2806, %v2898
        %v2906 = vadd.f32 %v2904, %v2905
        %v2907 = vmul.f32 %v2806, %v2899
        %v2908 = vmul.f32 %v2808, %v2900
        %v2909 = vsub.f32 %v2907, %v2908
        %v2910 = vmul.f32 %v2808, %v2899
        %v2911 = vmul.f32 %v2806, %v2900
        %v2912 = vadd.f32 %v2910, %v2911
        %2913 = vst [vmem:[%s2890] sm:$0xff] %v2903
        %2914 = vst [vmem:[%s2892] sm:$0xff] %v2906
        %2915 = vst [vmem:[%s2894] sm:$0xff] %v2909
        %2916 = vst [vmem:[%s2896] sm:$0xff] %v2912
        %s2917 = smov [#allocation15]
        %s2918 = scalar_lea.vmem %s2917, 32
        %s2919 = smov [#allocation16]
        %s2920 = scalar_lea.vmem %s2919, 32
        %s2921 = smov [#allocation17]
        %s2922 = scalar_lea.vmem %s2921, 32
        %s2923 = smov [#allocation18]
        %s2924 = scalar_lea.vmem %s2923, 32
        %v2925 = vld [vmem:[%s2918] sm:$0xff]
        %v2926 = vld [vmem:[%s2920] sm:$0xff]
        %v2927 = vld [vmem:[%s2922] sm:$0xff]
        %v2928 = vld [vmem:[%s2924] sm:$0xff]
        %v2929 = vmul.f32 %v2806, %v2925
        %v2930 = vmul.f32 %v2808, %v2926
        %v2931 = vsub.f32 %v2929, %v2930
        %v2932 = vmul.f32 %v2808, %v2925
        %v2933 = vmul.f32 %v2806, %v2926
        %v2934 = vadd.f32 %v2932, %v2933
        %v2935 = vmul.f32 %v2806, %v2927
        %v2936 = vmul.f32 %v2808, %v2928
        %v2937 = vsub.f32 %v2935, %v2936
        %v2938 = vmul.f32 %v2808, %v2927
        %v2939 = vmul.f32 %v2806, %v2928
        %v2940 = vadd.f32 %v2938, %v2939
        %2941 = vst [vmem:[%s2918] sm:$0xff] %v2931
        %2942 = vst [vmem:[%s2920] sm:$0xff] %v2934
        %2943 = vst [vmem:[%s2922] sm:$0xff] %v2937
        %2944 = vst [vmem:[%s2924] sm:$0xff] %v2940
        %s2945 = smov [#allocation15]
        %s2946 = scalar_lea.vmem %s2945, 40
        %s2947 = smov [#allocation16]
        %s2948 = scalar_lea.vmem %s2947, 40
        %s2949 = smov [#allocation17]
        %s2950 = scalar_lea.vmem %s2949, 40
        %s2951 = smov [#allocation18]
        %s2952 = scalar_lea.vmem %s2951, 40
        %v2953 = vld [vmem:[%s2946] sm:$0xff]
        %v2954 = vld [vmem:[%s2948] sm:$0xff]
        %v2955 = vld [vmem:[%s2950] sm:$0xff]
        %v2956 = vld [vmem:[%s2952] sm:$0xff]
        %v2957 = vmul.f32 %v2806, %v2953
        %v2958 = vmul.f32 %v2808, %v2954
        %v2959 = vsub.f32 %v2957, %v2958
        %v2960 = vmul.f32 %v2808, %v2953
        %v2961 = vmul.f32 %v2806, %v2954
        %v2962 = vadd.f32 %v2960, %v2961
        %v2963 = vmul.f32 %v2806, %v2955
        %v2964 = vmul.f32 %v2808, %v2956
        %v2965 = vsub.f32 %v2963, %v2964
        %v2966 = vmul.f32 %v2808, %v2955
        %v2967 = vmul.f32 %v2806, %v2956
        %v2968 = vadd.f32 %v2966, %v2967
        %2969 = vst [vmem:[%s2946] sm:$0xff] %v2959
        %2970 = vst [vmem:[%s2948] sm:$0xff] %v2962
        %2971 = vst [vmem:[%s2950] sm:$0xff] %v2965
        %2972 = vst [vmem:[%s2952] sm:$0xff] %v2968
        %s2973 = smov [#allocation15]
        %s2974 = scalar_lea.vmem %s2973, 48
        %s2975 = smov [#allocation16]
        %s2976 = scalar_lea.vmem %s2975, 48
        %s2977 = smov [#allocation17]
        %s2978 = scalar_lea.vmem %s2977, 48
        %s2979 = smov [#allocation18]
        %s2980 = scalar_lea.vmem %s2979, 48
        %v2981 = vld [vmem:[%s2974] sm:$0xff]
        %v2982 = vld [vmem:[%s2976] sm:$0xff]
        %v2983 = vld [vmem:[%s2978] sm:$0xff]
        %v2984 = vld [vmem:[%s2980] sm:$0xff]
        %v2985 = vmul.f32 %v2806, %v2981
        %v2986 = vmul.f32 %v2808, %v2982
        %v2987 = vsub.f32 %v2985, %v2986
        %v2988 = vmul.f32 %v2808, %v2981
        %v2989 = vmul.f32 %v2806, %v2982
        %v2990 = vadd.f32 %v2988, %v2989
        %v2991 = vmul.f32 %v2806, %v2983
        %v2992 = vmul.f32 %v2808, %v2984
        %v2993 = vsub.f32 %v2991, %v2992
        %v2994 = vmul.f32 %v2808, %v2983
        %v2995 = vmul.f32 %v2806, %v2984
        %v2996 = vadd.f32 %v2994, %v2995
        %2997 = vst [vmem:[%s2974] sm:$0xff] %v2987
        %2998 = vst [vmem:[%s2976] sm:$0xff] %v2990
        %2999 = vst [vmem:[%s2978] sm:$0xff] %v2993
        %3000 = vst [vmem:[%s2980] sm:$0xff] %v2996
        %s3001 = smov [#allocation15]
        %s3002 = scalar_lea.vmem %s3001, 56
        %s3003 = smov [#allocation16]
        %s3004 = scalar_lea.vmem %s3003, 56
        %s3005 = smov [#allocation17]
        %s3006 = scalar_lea.vmem %s3005, 56
        %s3007 = smov [#allocation18]
        %s3008 = scalar_lea.vmem %s3007, 56
        %v3009 = vld [vmem:[%s3002] sm:$0xff]
        %v3010 = vld [vmem:[%s3004] sm:$0xff]
        %v3011 = vld [vmem:[%s3006] sm:$0xff]
        %v3012 = vld [vmem:[%s3008] sm:$0xff]
        %v3013 = vmul.f32 %v2806, %v3009
        %v3014 = vmul.f32 %v2808, %v3010
        %v3015 = vsub.f32 %v3013, %v3014
        %v3016 = vmul.f32 %v2808, %v3009
        %v3017 = vmul.f32 %v2806, %v3010
        %v3018 = vadd.f32 %v3016, %v3017
        %v3019 = vmul.f32 %v2806, %v3011
        %v3020 = vmul.f32 %v2808, %v3012
        %v3021 = vsub.f32 %v3019, %v3020
        %v3022 = vmul.f32 %v2808, %v3011
        %v3023 = vmul.f32 %v2806, %v3012
        %v3024 = vadd.f32 %v3022, %v3023
        %3025 = vst [vmem:[%s3002] sm:$0xff] %v3015
        %3026 = vst [vmem:[%s3004] sm:$0xff] %v3018
        %3027 = vst [vmem:[%s3006] sm:$0xff] %v3021
        %3028 = vst [vmem:[%s3008] sm:$0xff] %v3024
        %s3029 = smov [#allocation15]
        %s3030 = scalar_lea.vmem %s3029, 64
        %s3031 = smov [#allocation16]
        %s3032 = scalar_lea.vmem %s3031, 64
        %s3033 = smov [#allocation17]
        %s3034 = scalar_lea.vmem %s3033, 64
        %s3035 = smov [#allocation18]
        %s3036 = scalar_lea.vmem %s3035, 64
        %v3037 = vld [vmem:[%s3030] sm:$0xff]
        %v3038 = vld [vmem:[%s3032] sm:$0xff]
        %v3039 = vld [vmem:[%s3034] sm:$0xff]
        %v3040 = vld [vmem:[%s3036] sm:$0xff]
        %v3041 = vmul.f32 %v2806, %v3037
        %v3042 = vmul.f32 %v2808, %v3038
        %v3043 = vsub.f32 %v3041, %v3042
        %v3044 = vmul.f32 %v2808, %v3037
        %v3045 = vmul.f32 %v2806, %v3038
        %v3046 = vadd.f32 %v3044, %v3045
        %v3047 = vmul.f32 %v2806, %v3039
        %v3048 = vmul.f32 %v2808, %v3040
        %v3049 = vsub.f32 %v3047, %v3048
        %v3050 = vmul.f32 %v2808, %v3039
        %v3051 = vmul.f32 %v2806, %v3040
        %v3052 = vadd.f32 %v3050, %v3051
        %3053 = vst [vmem:[%s3030] sm:$0xff] %v3043
        %3054 = vst [vmem:[%s3032] sm:$0xff] %v3046
        %3055 = vst [vmem:[%s3034] sm:$0xff] %v3049
        %3056 = vst [vmem:[%s3036] sm:$0xff] %v3052
        %s3057 = smov [#allocation15]
        %s3058 = scalar_lea.vmem %s3057, 72
        %s3059 = smov [#allocation16]
        %s3060 = scalar_lea.vmem %s3059, 72
        %s3061 = smov [#allocation17]
        %s3062 = scalar_lea.vmem %s3061, 72
        %s3063 = smov [#allocation18]
        %s3064 = scalar_lea.vmem %s3063, 72
        %v3065 = vld [vmem:[%s3058] sm:$0xff]
        %v3066 = vld [vmem:[%s3060] sm:$0xff]
        %v3067 = vld [vmem:[%s3062] sm:$0xff]
        %v3068 = vld [vmem:[%s3064] sm:$0xff]
        %v3069 = vmul.f32 %v2806, %v3065
        %v3070 = vmul.f32 %v2808, %v3066
        %v3071 = vsub.f32 %v3069, %v3070
        %v3072 = vmul.f32 %v2808, %v3065
        %v3073 = vmul.f32 %v2806, %v3066
        %v3074 = vadd.f32 %v3072, %v3073
        %v3075 = vmul.f32 %v2806, %v3067
        %v3076 = vmul.f32 %v2808, %v3068
        %v3077 = vsub.f32 %v3075, %v3076
        %v3078 = vmul.f32 %v2808, %v3067
        %v3079 = vmul.f32 %v2806, %v3068
        %v3080 = vadd.f32 %v3078, %v3079
        %3081 = vst [vmem:[%s3058] sm:$0xff] %v3071
        %3082 = vst [vmem:[%s3060] sm:$0xff] %v3074
        %3083 = vst [vmem:[%s3062] sm:$0xff] %v3077
        %3084 = vst [vmem:[%s3064] sm:$0xff] %v3080
        %s3085 = smov [#allocation15]
        %s3086 = scalar_lea.vmem %s3085, 80
        %s3087 = smov [#allocation16]
        %s3088 = scalar_lea.vmem %s3087, 80
        %s3089 = smov [#allocation17]
        %s3090 = scalar_lea.vmem %s3089, 80
        %s3091 = smov [#allocation18]
        %s3092 = scalar_lea.vmem %s3091, 80
        %v3093 = vld [vmem:[%s3086] sm:$0xff]
        %v3094 = vld [vmem:[%s3088] sm:$0xff]
        %v3095 = vld [vmem:[%s3090] sm:$0xff]
        %v3096 = vld [vmem:[%s3092] sm:$0xff]
        %v3097 = vmul.f32 %v2806, %v3093
        %v3098 = vmul.f32 %v2808, %v3094
        %v3099 = vsub.f32 %v3097, %v3098
        %v3100 = vmul.f32 %v2808, %v3093
        %v3101 = vmul.f32 %v2806, %v3094
        %v3102 = vadd.f32 %v3100, %v3101
        %v3103 = vmul.f32 %v2806, %v3095
        %v3104 = vmul.f32 %v2808, %v3096
        %v3105 = vsub.f32 %v3103, %v3104
        %v3106 = vmul.f32 %v2808, %v3095
        %v3107 = vmul.f32 %v2806, %v3096
        %v3108 = vadd.f32 %v3106, %v3107
        %3109 = vst [vmem:[%s3086] sm:$0xff] %v3099
        %3110 = vst [vmem:[%s3088] sm:$0xff] %v3102
        %3111 = vst [vmem:[%s3090] sm:$0xff] %v3105
        %3112 = vst [vmem:[%s3092] sm:$0xff] %v3108
        %s3113 = smov [#allocation15]
        %s3114 = scalar_lea.vmem %s3113, 88
        %s3115 = smov [#allocation16]
        %s3116 = scalar_lea.vmem %s3115, 88
        %s3117 = smov [#allocation17]
        %s3118 = scalar_lea.vmem %s3117, 88
        %s3119 = smov [#allocation18]
        %s3120 = scalar_lea.vmem %s3119, 88
        %v3121 = vld [vmem:[%s3114] sm:$0xff]
        %v3122 = vld [vmem:[%s3116] sm:$0xff]
        %v3123 = vld [vmem:[%s3118] sm:$0xff]
        %v3124 = vld [vmem:[%s3120] sm:$0xff]
        %v3125 = vmul.f32 %v2806, %v3121
        %v3126 = vmul.f32 %v2808, %v3122
        %v3127 = vsub.f32 %v3125, %v3126
        %v3128 = vmul.f32 %v2808, %v3121
        %v3129 = vmul.f32 %v2806, %v3122
        %v3130 = vadd.f32 %v3128, %v3129
        %v3131 = vmul.f32 %v2806, %v3123
        %v3132 = vmul.f32 %v2808, %v3124
        %v3133 = vsub.f32 %v3131, %v3132
        %v3134 = vmul.f32 %v2808, %v3123
        %v3135 = vmul.f32 %v2806, %v3124
        %v3136 = vadd.f32 %v3134, %v3135
        %3137 = vst [vmem:[%s3114] sm:$0xff] %v3127
        %3138 = vst [vmem:[%s3116] sm:$0xff] %v3130
        %3139 = vst [vmem:[%s3118] sm:$0xff] %v3133
        %3140 = vst [vmem:[%s3120] sm:$0xff] %v3136
        %s3141 = smov [#allocation15]
        %s3142 = scalar_lea.vmem %s3141, 96
        %s3143 = smov [#allocation16]
        %s3144 = scalar_lea.vmem %s3143, 96
        %s3145 = smov [#allocation17]
        %s3146 = scalar_lea.vmem %s3145, 96
        %s3147 = smov [#allocation18]
        %s3148 = scalar_lea.vmem %s3147, 96
        %v3149 = vld [vmem:[%s3142] sm:$0xff]
        %v3150 = vld [vmem:[%s3144] sm:$0xff]
        %v3151 = vld [vmem:[%s3146] sm:$0xff]
        %v3152 = vld [vmem:[%s3148] sm:$0xff]
        %v3153 = vmul.f32 %v2806, %v3149
        %v3154 = vmul.f32 %v2808, %v3150
        %v3155 = vsub.f32 %v3153, %v3154
        %v3156 = vmul.f32 %v2808, %v3149
        %v3157 = vmul.f32 %v2806, %v3150
        %v3158 = vadd.f32 %v3156, %v3157
        %v3159 = vmul.f32 %v2806, %v3151
        %v3160 = vmul.f32 %v2808, %v3152
        %v3161 = vsub.f32 %v3159, %v3160
        %v3162 = vmul.f32 %v2808, %v3151
        %v3163 = vmul.f32 %v2806, %v3152
        %v3164 = vadd.f32 %v3162, %v3163
        %3165 = vst [vmem:[%s3142] sm:$0xff] %v3155
        %3166 = vst [vmem:[%s3144] sm:$0xff] %v3158
        %3167 = vst [vmem:[%s3146] sm:$0xff] %v3161
        %3168 = vst [vmem:[%s3148] sm:$0xff] %v3164
        %s3169 = smov [#allocation15]
        %s3170 = scalar_lea.vmem %s3169, 104
        %s3171 = smov [#allocation16]
        %s3172 = scalar_lea.vmem %s3171, 104
        %s3173 = smov [#allocation17]
        %s3174 = scalar_lea.vmem %s3173, 104
        %s3175 = smov [#allocation18]
        %s3176 = scalar_lea.vmem %s3175, 104
        %v3177 = vld [vmem:[%s3170] sm:$0xff]
        %v3178 = vld [vmem:[%s3172] sm:$0xff]
        %v3179 = vld [vmem:[%s3174] sm:$0xff]
        %v3180 = vld [vmem:[%s3176] sm:$0xff]
        %v3181 = vmul.f32 %v2806, %v3177
        %v3182 = vmul.f32 %v2808, %v3178
        %v3183 = vsub.f32 %v3181, %v3182
        %v3184 = vmul.f32 %v2808, %v3177
        %v3185 = vmul.f32 %v2806, %v3178
        %v3186 = vadd.f32 %v3184, %v3185
        %v3187 = vmul.f32 %v2806, %v3179
        %v3188 = vmul.f32 %v2808, %v3180
        %v3189 = vsub.f32 %v3187, %v3188
        %v3190 = vmul.f32 %v2808, %v3179
        %v3191 = vmul.f32 %v2806, %v3180
        %v3192 = vadd.f32 %v3190, %v3191
        %3193 = vst [vmem:[%s3170] sm:$0xff] %v3183
        %3194 = vst [vmem:[%s3172] sm:$0xff] %v3186
        %3195 = vst [vmem:[%s3174] sm:$0xff] %v3189
        %3196 = vst [vmem:[%s3176] sm:$0xff] %v3192
        %s3197 = smov [#allocation15]
        %s3198 = scalar_lea.vmem %s3197, 112
        %s3199 = smov [#allocation16]
        %s3200 = scalar_lea.vmem %s3199, 112
        %s3201 = smov [#allocation17]
        %s3202 = scalar_lea.vmem %s3201, 112
        %s3203 = smov [#allocation18]
        %s3204 = scalar_lea.vmem %s3203, 112
        %v3205 = vld [vmem:[%s3198] sm:$0xff]
        %v3206 = vld [vmem:[%s3200] sm:$0xff]
        %v3207 = vld [vmem:[%s3202] sm:$0xff]
        %v3208 = vld [vmem:[%s3204] sm:$0xff]
        %v3209 = vmul.f32 %v2806, %v3205
        %v3210 = vmul.f32 %v2808, %v3206
        %v3211 = vsub.f32 %v3209, %v3210
        %v3212 = vmul.f32 %v2808, %v3205
        %v3213 = vmul.f32 %v2806, %v3206
        %v3214 = vadd.f32 %v3212, %v3213
        %v3215 = vmul.f32 %v2806, %v3207
        %v3216 = vmul.f32 %v2808, %v3208
        %v3217 = vsub.f32 %v3215, %v3216
        %v3218 = vmul.f32 %v2808, %v3207
        %v3219 = vmul.f32 %v2806, %v3208
        %v3220 = vadd.f32 %v3218, %v3219
        %3221 = vst [vmem:[%s3198] sm:$0xff] %v3211
        %3222 = vst [vmem:[%s3200] sm:$0xff] %v3214
        %3223 = vst [vmem:[%s3202] sm:$0xff] %v3217
        %3224 = vst [vmem:[%s3204] sm:$0xff] %v3220
        %s3225 = smov [#allocation15]
        %s3226 = scalar_lea.vmem %s3225, 120
        %s3227 = smov [#allocation16]
        %s3228 = scalar_lea.vmem %s3227, 120
        %s3229 = smov [#allocation17]
        %s3230 = scalar_lea.vmem %s3229, 120
        %s3231 = smov [#allocation18]
        %s3232 = scalar_lea.vmem %s3231, 120
        %v3233 = vld [vmem:[%s3226] sm:$0xff]
        %v3234 = vld [vmem:[%s3228] sm:$0xff]
        %v3235 = vld [vmem:[%s3230] sm:$0xff]
        %v3236 = vld [vmem:[%s3232] sm:$0xff]
        %v3237 = vmul.f32 %v2806, %v3233
        %v3238 = vmul.f32 %v2808, %v3234
        %v3239 = vsub.f32 %v3237, %v3238
        %v3240 = vmul.f32 %v2808, %v3233
        %v3241 = vmul.f32 %v2806, %v3234
        %v3242 = vadd.f32 %v3240, %v3241
        %v3243 = vmul.f32 %v2806, %v3235
        %v3244 = vmul.f32 %v2808, %v3236
        %v3245 = vsub.f32 %v3243, %v3244
        %v3246 = vmul.f32 %v2808, %v3235
        %v3247 = vmul.f32 %v2806, %v3236
        %v3248 = vadd.f32 %v3246, %v3247
        %3249 = vst [vmem:[%s3226] sm:$0xff] %v3239
        %3250 = vst [vmem:[%s3228] sm:$0xff] %v3242
        %3251 = vst [vmem:[%s3230] sm:$0xff] %v3245
        %3252 = vst [vmem:[%s3232] sm:$0xff] %v3248
        %s3253 = smov [#allocation15]
        %s3254 = smov [#allocation22]
        %v3255 = vlaneseq
        %v3256 = vand.u32 %v3255, 127
        %v3257 = vmov %v3256
        %v3258 = vlaneseq
        %v3259 = vshrl.u32 %v3258, 7
        %v3260 = vmov %v3259
        %v3261 = vld [vmem:[%s3254] ss:$0 sm:$0xff]
        %v3262 = vld [vmem:[%s3253] sm:$0xff]
        %vm3265 = vcmp.eq.s32.totalorder %v3260, %v3257
        %v3266 = vsel %vm3265, %v3261, %v3262
        %3267 = vst [vmem:[%s3253] sm:$0xff] %v3266
        %v3268 = vld [vmem:[%s3254] ss:$0 sm:$0xff]
        %s3269 = scalar_lea.vmem %s3253, 8
        %v3270 = vld [vmem:[%s3269] sm:$0xff]
        %v3272 = vadd.s32 %v3260, 8
        %vm3273 = vcmp.eq.s32.totalorder %v3272, %v3257
        %v3274 = vsel %vm3273, %v3268, %v3270
        %3275 = vst [vmem:[%s3269] sm:$0xff] %v3274
        %v3276 = vld [vmem:[%s3254] ss:$0 sm:$0xff]
        %s3277 = scalar_lea.vmem %s3253, 16
        %v3278 = vld [vmem:[%s3277] sm:$0xff]
        %v3280 = vadd.s32 %v3260, 16
        %vm3281 = vcmp.eq.s32.totalorder %v3280, %v3257
        %v3282 = vsel %vm3281, %v3276, %v3278
        %3283 = vst [vmem:[%s3277] sm:$0xff] %v3282
        %v3284 = vld [vmem:[%s3254] ss:$0 sm:$0xff]
        %s3285 = scalar_lea.vmem %s3253, 24
        %v3286 = vld [vmem:[%s3285] sm:$0xff]
        %v3288 = vadd.s32 %v3260, 24
        %vm3289 = vcmp.eq.s32.totalorder %v3288, %v3257
        %v3290 = vsel %vm3289, %v3284, %v3286
        %3291 = vst [vmem:[%s3285] sm:$0xff] %v3290
        %v3292 = vld [vmem:[%s3254] ss:$0 sm:$0xff]
        %s3293 = scalar_lea.vmem %s3253, 32
        %v3294 = vld [vmem:[%s3293] sm:$0xff]
        %v3296 = vadd.s32 %v3260, 32
        %vm3297 = vcmp.eq.s32.totalorder %v3296, %v3257
        %v3298 = vsel %vm3297, %v3292, %v3294
        %3299 = vst [vmem:[%s3293] sm:$0xff] %v3298
        %v3300 = vld [vmem:[%s3254] ss:$0 sm:$0xff]
        %s3301 = scalar_lea.vmem %s3253, 40
        %v3302 = vld [vmem:[%s3301] sm:$0xff]
        %v3304 = vadd.s32 %v3260, 40
        %vm3305 = vcmp.eq.s32.totalorder %v3304, %v3257
        %v3306 = vsel %vm3305, %v3300, %v3302
        %3307 = vst [vmem:[%s3301] sm:$0xff] %v3306
        %v3308 = vld [vmem:[%s3254] ss:$0 sm:$0xff]
        %s3309 = scalar_lea.vmem %s3253, 48
        %v3310 = vld [vmem:[%s3309] sm:$0xff]
        %v3312 = vadd.s32 %v3260, 48
        %vm3313 = vcmp.eq.s32.totalorder %v3312, %v3257
        %v3314 = vsel %vm3313, %v3308, %v3310
        %3315 = vst [vmem:[%s3309] sm:$0xff] %v3314
        %v3316 = vld [vmem:[%s3254] ss:$0 sm:$0xff]
        %s3317 = scalar_lea.vmem %s3253, 56
        %v3318 = vld [vmem:[%s3317] sm:$0xff]
        %v3320 = vadd.s32 %v3260, 56
        %vm3321 = vcmp.eq.s32.totalorder %v3320, %v3257
        %v3322 = vsel %vm3321, %v3316, %v3318
        %3323 = vst [vmem:[%s3317] sm:$0xff] %v3322
        %v3324 = vld [vmem:[%s3254] ss:$0 sm:$0xff]
        %s3325 = scalar_lea.vmem %s3253, 64
        %v3326 = vld [vmem:[%s3325] sm:$0xff]
        %v3328 = vadd.s32 %v3260, 64
        %vm3329 = vcmp.eq.s32.totalorder %v3328, %v3257
        %v3330 = vsel %vm3329, %v3324, %v3326
        %3331 = vst [vmem:[%s3325] sm:$0xff] %v3330
        %v3332 = vld [vmem:[%s3254] ss:$0 sm:$0xff]
        %s3333 = scalar_lea.vmem %s3253, 72
        %v3334 = vld [vmem:[%s3333] sm:$0xff]
        %v3336 = vadd.s32 %v3260, 72
        %vm3337 = vcmp.eq.s32.totalorder %v3336, %v3257
        %v3338 = vsel %vm3337, %v3332, %v3334
        %3339 = vst [vmem:[%s3333] sm:$0xff] %v3338
        %v3340 = vld [vmem:[%s3254] ss:$0 sm:$0xff]
        %s3341 = scalar_lea.vmem %s3253, 80
        %v3342 = vld [vmem:[%s3341] sm:$0xff]
        %v3344 = vadd.s32 %v3260, 80
        %vm3345 = vcmp.eq.s32.totalorder %v3344, %v3257
        %v3346 = vsel %vm3345, %v3340, %v3342
        %3347 = vst [vmem:[%s3341] sm:$0xff] %v3346
        %v3348 = vld [vmem:[%s3254] ss:$0 sm:$0xff]
        %s3349 = scalar_lea.vmem %s3253, 88
        %v3350 = vld [vmem:[%s3349] sm:$0xff]
        %v3352 = vadd.s32 %v3260, 88
        %vm3353 = vcmp.eq.s32.totalorder %v3352, %v3257
        %v3354 = vsel %vm3353, %v3348, %v3350
        %3355 = vst [vmem:[%s3349] sm:$0xff] %v3354
        %v3356 = vld [vmem:[%s3254] ss:$0 sm:$0xff]
        %s3357 = scalar_lea.vmem %s3253, 96
        %v3358 = vld [vmem:[%s3357] sm:$0xff]
        %v3360 = vadd.s32 %v3260, 96
        %vm3361 = vcmp.eq.s32.totalorder %v3360, %v3257
        %v3362 = vsel %vm3361, %v3356, %v3358
        %3363 = vst [vmem:[%s3357] sm:$0xff] %v3362
        %v3364 = vld [vmem:[%s3254] ss:$0 sm:$0xff]
        %s3365 = scalar_lea.vmem %s3253, 104
        %v3366 = vld [vmem:[%s3365] sm:$0xff]
        %v3368 = vadd.s32 %v3260, 104
        %vm3369 = vcmp.eq.s32.totalorder %v3368, %v3257
        %v3370 = vsel %vm3369, %v3364, %v3366
        %3371 = vst [vmem:[%s3365] sm:$0xff] %v3370
        %v3372 = vld [vmem:[%s3254] ss:$0 sm:$0xff]
        %s3373 = scalar_lea.vmem %s3253, 112
        %v3374 = vld [vmem:[%s3373] sm:$0xff]
        %v3376 = vadd.s32 %v3260, 112
        %vm3377 = vcmp.eq.s32.totalorder %v3376, %v3257
        %v3378 = vsel %vm3377, %v3372, %v3374
        %3379 = vst [vmem:[%s3373] sm:$0xff] %v3378
        %v3380 = vld [vmem:[%s3254] ss:$0 sm:$0xff]
        %s3381 = scalar_lea.vmem %s3253, 120
        %v3382 = vld [vmem:[%s3381] sm:$0xff]
        %v3384 = vadd.s32 %v3260, 120
        %vm3385 = vcmp.eq.s32.totalorder %v3384, %v3257
        %v3386 = vsel %vm3385, %v3380, %v3382
        %3387 = vst [vmem:[%s3381] sm:$0xff] %v3386
        %s3388 = smov [#allocation16]
        %v3389 = vlaneseq
        %v3390 = vand.u32 %v3389, 127
        %v3391 = vmov %v3390
        %v3392 = vlaneseq
        %v3393 = vshrl.u32 %v3392, 7
        %v3394 = vmov %v3393
        %v3395 = vld [vmem:[%s3388] sm:$0xff]
        %vm3398 = vcmp.eq.s32.totalorder %v3394, %v3391
        %v3399 = vsel %vm3398, 0.0, %v3395
        %3400 = vst [vmem:[%s3388] sm:$0xff] %v3399
        %s3401 = scalar_lea.vmem %s3388, 8
        %v3402 = vld [vmem:[%s3401] sm:$0xff]
        %v3404 = vadd.s32 %v3394, 8
        %vm3405 = vcmp.eq.s32.totalorder %v3404, %v3391
        %v3406 = vsel %vm3405, 0.0, %v3402
        %3407 = vst [vmem:[%s3401] sm:$0xff] %v3406
        %s3408 = scalar_lea.vmem %s3388, 16
        %v3409 = vld [vmem:[%s3408] sm:$0xff]
        %v3411 = vadd.s32 %v3394, 16
        %vm3412 = vcmp.eq.s32.totalorder %v3411, %v3391
        %v3413 = vsel %vm3412, 0.0, %v3409
        %3414 = vst [vmem:[%s3408] sm:$0xff] %v3413
        %s3415 = scalar_lea.vmem %s3388, 24
        %v3416 = vld [vmem:[%s3415] sm:$0xff]
        %v3418 = vadd.s32 %v3394, 24
        %vm3419 = vcmp.eq.s32.totalorder %v3418, %v3391
        %v3420 = vsel %vm3419, 0.0, %v3416
        %3421 = vst [vmem:[%s3415] sm:$0xff] %v3420
        %s3422 = scalar_lea.vmem %s3388, 32
        %v3423 = vld [vmem:[%s3422] sm:$0xff]
        %v3425 = vadd.s32 %v3394, 32
        %vm3426 = vcmp.eq.s32.totalorder %v3425, %v3391
        %v3427 = vsel %vm3426, 0.0, %v3423
        %3428 = vst [vmem:[%s3422] sm:$0xff] %v3427
        %s3429 = scalar_lea.vmem %s3388, 40
        %v3430 = vld [vmem:[%s3429] sm:$0xff]
        %v3432 = vadd.s32 %v3394, 40
        %vm3433 = vcmp.eq.s32.totalorder %v3432, %v3391
        %v3434 = vsel %vm3433, 0.0, %v3430
        %3435 = vst [vmem:[%s3429] sm:$0xff] %v3434
        %s3436 = scalar_lea.vmem %s3388, 48
        %v3437 = vld [vmem:[%s3436] sm:$0xff]
        %v3439 = vadd.s32 %v3394, 48
        %vm3440 = vcmp.eq.s32.totalorder %v3439, %v3391
        %v3441 = vsel %vm3440, 0.0, %v3437
        %3442 = vst [vmem:[%s3436] sm:$0xff] %v3441
        %s3443 = scalar_lea.vmem %s3388, 56
        %v3444 = vld [vmem:[%s3443] sm:$0xff]
        %v3446 = vadd.s32 %v3394, 56
        %vm3447 = vcmp.eq.s32.totalorder %v3446, %v3391
        %v3448 = vsel %vm3447, 0.0, %v3444
        %3449 = vst [vmem:[%s3443] sm:$0xff] %v3448
        %s3450 = scalar_lea.vmem %s3388, 64
        %v3451 = vld [vmem:[%s3450] sm:$0xff]
        %v3453 = vadd.s32 %v3394, 64
        %vm3454 = vcmp.eq.s32.totalorder %v3453, %v3391
        %v3455 = vsel %vm3454, 0.0, %v3451
        %3456 = vst [vmem:[%s3450] sm:$0xff] %v3455
        %s3457 = scalar_lea.vmem %s3388, 72
        %v3458 = vld [vmem:[%s3457] sm:$0xff]
        %v3460 = vadd.s32 %v3394, 72
        %vm3461 = vcmp.eq.s32.totalorder %v3460, %v3391
        %v3462 = vsel %vm3461, 0.0, %v3458
        %3463 = vst [vmem:[%s3457] sm:$0xff] %v3462
        %s3464 = scalar_lea.vmem %s3388, 80
        %v3465 = vld [vmem:[%s3464] sm:$0xff]
        %v3467 = vadd.s32 %v3394, 80
        %vm3468 = vcmp.eq.s32.totalorder %v3467, %v3391
        %v3469 = vsel %vm3468, 0.0, %v3465
        %3470 = vst [vmem:[%s3464] sm:$0xff] %v3469
        %s3471 = scalar_lea.vmem %s3388, 88
        %v3472 = vld [vmem:[%s3471] sm:$0xff]
        %v3474 = vadd.s32 %v3394, 88
        %vm3475 = vcmp.eq.s32.totalorder %v3474, %v3391
        %v3476 = vsel %vm3475, 0.0, %v3472
        %3477 = vst [vmem:[%s3471] sm:$0xff] %v3476
        %s3478 = scalar_lea.vmem %s3388, 96
        %v3479 = vld [vmem:[%s3478] sm:$0xff]
        %v3481 = vadd.s32 %v3394, 96
        %vm3482 = vcmp.eq.s32.totalorder %v3481, %v3391
        %v3483 = vsel %vm3482, 0.0, %v3479
        %3484 = vst [vmem:[%s3478] sm:$0xff] %v3483
        %s3485 = scalar_lea.vmem %s3388, 104
        %v3486 = vld [vmem:[%s3485] sm:$0xff]
        %v3488 = vadd.s32 %v3394, 104
        %vm3489 = vcmp.eq.s32.totalorder %v3488, %v3391
        %v3490 = vsel %vm3489, 0.0, %v3486
        %3491 = vst [vmem:[%s3485] sm:$0xff] %v3490
        %s3492 = scalar_lea.vmem %s3388, 112
        %v3493 = vld [vmem:[%s3492] sm:$0xff]
        %v3495 = vadd.s32 %v3394, 112
        %vm3496 = vcmp.eq.s32.totalorder %v3495, %v3391
        %v3497 = vsel %vm3496, 0.0, %v3493
        %3498 = vst [vmem:[%s3492] sm:$0xff] %v3497
        %s3499 = scalar_lea.vmem %s3388, 120
        %v3500 = vld [vmem:[%s3499] sm:$0xff]
        %v3502 = vadd.s32 %v3394, 120
        %vm3503 = vcmp.eq.s32.totalorder %v3502, %v3391
        %v3504 = vsel %vm3503, 0.0, %v3500
        %3505 = vst [vmem:[%s3499] sm:$0xff] %v3504
        %s3506 = smov [#allocation17]
        %v3507 = vlaneseq
        %v3508 = vand.u32 %v3507, 127
        %v3509 = vmov %v3508
        %v3510 = vlaneseq
        %v3511 = vshrl.u32 %v3510, 7
        %v3512 = vmov %v3511
        %v3513 = vld [vmem:[%s3506] sm:$0xff]
        %vm3516 = vcmp.eq.s32.totalorder %v3512, %v3509
        %v3517 = vsel %vm3516, 0.0, %v3513
        %3518 = vst [vmem:[%s3506] sm:$0xff] %v3517
        %s3519 = scalar_lea.vmem %s3506, 8
        %v3520 = vld [vmem:[%s3519] sm:$0xff]
        %v3522 = vadd.s32 %v3512, 8
        %vm3523 = vcmp.eq.s32.totalorder %v3522, %v3509
        %v3524 = vsel %vm3523, 0.0, %v3520
        %3525 = vst [vmem:[%s3519] sm:$0xff] %v3524
        %s3526 = scalar_lea.vmem %s3506, 16
        %v3527 = vld [vmem:[%s3526] sm:$0xff]
        %v3529 = vadd.s32 %v3512, 16
        %vm3530 = vcmp.eq.s32.totalorder %v3529, %v3509
        %v3531 = vsel %vm3530, 0.0, %v3527
        %3532 = vst [vmem:[%s3526] sm:$0xff] %v3531
        %s3533 = scalar_lea.vmem %s3506, 24
        %v3534 = vld [vmem:[%s3533] sm:$0xff]
        %v3536 = vadd.s32 %v3512, 24
        %vm3537 = vcmp.eq.s32.totalorder %v3536, %v3509
        %v3538 = vsel %vm3537, 0.0, %v3534
        %3539 = vst [vmem:[%s3533] sm:$0xff] %v3538
        %s3540 = scalar_lea.vmem %s3506, 32
        %v3541 = vld [vmem:[%s3540] sm:$0xff]
        %v3543 = vadd.s32 %v3512, 32
        %vm3544 = vcmp.eq.s32.totalorder %v3543, %v3509
        %v3545 = vsel %vm3544, 0.0, %v3541
        %3546 = vst [vmem:[%s3540] sm:$0xff] %v3545
        %s3547 = scalar_lea.vmem %s3506, 40
        %v3548 = vld [vmem:[%s3547] sm:$0xff]
        %v3550 = vadd.s32 %v3512, 40
        %vm3551 = vcmp.eq.s32.totalorder %v3550, %v3509
        %v3552 = vsel %vm3551, 0.0, %v3548
        %3553 = vst [vmem:[%s3547] sm:$0xff] %v3552
        %s3554 = scalar_lea.vmem %s3506, 48
        %v3555 = vld [vmem:[%s3554] sm:$0xff]
        %v3557 = vadd.s32 %v3512, 48
        %vm3558 = vcmp.eq.s32.totalorder %v3557, %v3509
        %v3559 = vsel %vm3558, 0.0, %v3555
        %3560 = vst [vmem:[%s3554] sm:$0xff] %v3559
        %s3561 = scalar_lea.vmem %s3506, 56
        %v3562 = vld [vmem:[%s3561] sm:$0xff]
        %v3564 = vadd.s32 %v3512, 56
        %vm3565 = vcmp.eq.s32.totalorder %v3564, %v3509
        %v3566 = vsel %vm3565, 0.0, %v3562
        %3567 = vst [vmem:[%s3561] sm:$0xff] %v3566
        %s3568 = scalar_lea.vmem %s3506, 64
        %v3569 = vld [vmem:[%s3568] sm:$0xff]
        %v3571 = vadd.s32 %v3512, 64
        %vm3572 = vcmp.eq.s32.totalorder %v3571, %v3509
        %v3573 = vsel %vm3572, 0.0, %v3569
        %3574 = vst [vmem:[%s3568] sm:$0xff] %v3573
        %s3575 = scalar_lea.vmem %s3506, 72
        %v3576 = vld [vmem:[%s3575] sm:$0xff]
        %v3578 = vadd.s32 %v3512, 72
        %vm3579 = vcmp.eq.s32.totalorder %v3578, %v3509
        %v3580 = vsel %vm3579, 0.0, %v3576
        %3581 = vst [vmem:[%s3575] sm:$0xff] %v3580
        %s3582 = scalar_lea.vmem %s3506, 80
        %v3583 = vld [vmem:[%s3582] sm:$0xff]
        %v3585 = vadd.s32 %v3512, 80
        %vm3586 = vcmp.eq.s32.totalorder %v3585, %v3509
        %v3587 = vsel %vm3586, 0.0, %v3583
        %3588 = vst [vmem:[%s3582] sm:$0xff] %v3587
        %s3589 = scalar_lea.vmem %s3506, 88
        %v3590 = vld [vmem:[%s3589] sm:$0xff]
        %v3592 = vadd.s32 %v3512, 88
        %vm3593 = vcmp.eq.s32.totalorder %v3592, %v3509
        %v3594 = vsel %vm3593, 0.0, %v3590
        %3595 = vst [vmem:[%s3589] sm:$0xff] %v3594
        %s3596 = scalar_lea.vmem %s3506, 96
        %v3597 = vld [vmem:[%s3596] sm:$0xff]
        %v3599 = vadd.s32 %v3512, 96
        %vm3600 = vcmp.eq.s32.totalorder %v3599, %v3509
        %v3601 = vsel %vm3600, 0.0, %v3597
        %3602 = vst [vmem:[%s3596] sm:$0xff] %v3601
        %s3603 = scalar_lea.vmem %s3506, 104
        %v3604 = vld [vmem:[%s3603] sm:$0xff]
        %v3606 = vadd.s32 %v3512, 104
        %vm3607 = vcmp.eq.s32.totalorder %v3606, %v3509
        %v3608 = vsel %vm3607, 0.0, %v3604
        %3609 = vst [vmem:[%s3603] sm:$0xff] %v3608
        %s3610 = scalar_lea.vmem %s3506, 112
        %v3611 = vld [vmem:[%s3610] sm:$0xff]
        %v3613 = vadd.s32 %v3512, 112
        %vm3614 = vcmp.eq.s32.totalorder %v3613, %v3509
        %v3615 = vsel %vm3614, 0.0, %v3611
        %3616 = vst [vmem:[%s3610] sm:$0xff] %v3615
        %s3617 = scalar_lea.vmem %s3506, 120
        %v3618 = vld [vmem:[%s3617] sm:$0xff]
        %v3620 = vadd.s32 %v3512, 120
        %vm3621 = vcmp.eq.s32.totalorder %v3620, %v3509
        %v3622 = vsel %vm3621, 0.0, %v3618
        %3623 = vst [vmem:[%s3617] sm:$0xff] %v3622
        %s3624 = smov [#allocation18]
        %s3625 = smov [#allocation23]
        %v3626 = vlaneseq
        %v3627 = vand.u32 %v3626, 127
        %v3628 = vmov %v3627
        %v3629 = vlaneseq
        %v3630 = vshrl.u32 %v3629, 7
        %v3631 = vmov %v3630
        %v3632 = vld [vmem:[%s3625] ss:$0 sm:$0xff]
        %v3633 = vld [vmem:[%s3624] sm:$0xff]
        %vm3636 = vcmp.eq.s32.totalorder %v3631, %v3628
        %v3637 = vsel %vm3636, %v3632, %v3633
        %3638 = vst [vmem:[%s3624] sm:$0xff] %v3637
        %v3639 = vld [vmem:[%s3625] ss:$0 sm:$0xff]
        %s3640 = scalar_lea.vmem %s3624, 8
        %v3641 = vld [vmem:[%s3640] sm:$0xff]
        %v3643 = vadd.s32 %v3631, 8
        %vm3644 = vcmp.eq.s32.totalorder %v3643, %v3628
        %v3645 = vsel %vm3644, %v3639, %v3641
        %3646 = vst [vmem:[%s3640] sm:$0xff] %v3645
        %v3647 = vld [vmem:[%s3625] ss:$0 sm:$0xff]
        %s3648 = scalar_lea.vmem %s3624, 16
        %v3649 = vld [vmem:[%s3648] sm:$0xff]
        %v3651 = vadd.s32 %v3631, 16
        %vm3652 = vcmp.eq.s32.totalorder %v3651, %v3628
        %v3653 = vsel %vm3652, %v3647, %v3649
        %3654 = vst [vmem:[%s3648] sm:$0xff] %v3653
        %v3655 = vld [vmem:[%s3625] ss:$0 sm:$0xff]
        %s3656 = scalar_lea.vmem %s3624, 24
        %v3657 = vld [vmem:[%s3656] sm:$0xff]
        %v3659 = vadd.s32 %v3631, 24
        %vm3660 = vcmp.eq.s32.totalorder %v3659, %v3628
        %v3661 = vsel %vm3660, %v3655, %v3657
        %3662 = vst [vmem:[%s3656] sm:$0xff] %v3661
        %v3663 = vld [vmem:[%s3625] ss:$0 sm:$0xff]
        %s3664 = scalar_lea.vmem %s3624, 32
        %v3665 = vld [vmem:[%s3664] sm:$0xff]
        %v3667 = vadd.s32 %v3631, 32
        %vm3668 = vcmp.eq.s32.totalorder %v3667, %v3628
        %v3669 = vsel %vm3668, %v3663, %v3665
        %3670 = vst [vmem:[%s3664] sm:$0xff] %v3669
        %v3671 = vld [vmem:[%s3625] ss:$0 sm:$0xff]
        %s3672 = scalar_lea.vmem %s3624, 40
        %v3673 = vld [vmem:[%s3672] sm:$0xff]
        %v3675 = vadd.s32 %v3631, 40
        %vm3676 = vcmp.eq.s32.totalorder %v3675, %v3628
        %v3677 = vsel %vm3676, %v3671, %v3673
        %3678 = vst [vmem:[%s3672] sm:$0xff] %v3677
        %v3679 = vld [vmem:[%s3625] ss:$0 sm:$0xff]
        %s3680 = scalar_lea.vmem %s3624, 48
        %v3681 = vld [vmem:[%s3680] sm:$0xff]
        %v3683 = vadd.s32 %v3631, 48
        %vm3684 = vcmp.eq.s32.totalorder %v3683, %v3628
        %v3685 = vsel %vm3684, %v3679, %v3681
        %3686 = vst [vmem:[%s3680] sm:$0xff] %v3685
        %v3687 = vld [vmem:[%s3625] ss:$0 sm:$0xff]
        %s3688 = scalar_lea.vmem %s3624, 56
        %v3689 = vld [vmem:[%s3688] sm:$0xff]
        %v3691 = vadd.s32 %v3631, 56
        %vm3692 = vcmp.eq.s32.totalorder %v3691, %v3628
        %v3693 = vsel %vm3692, %v3687, %v3689
        %3694 = vst [vmem:[%s3688] sm:$0xff] %v3693
        %v3695 = vld [vmem:[%s3625] ss:$0 sm:$0xff]
        %s3696 = scalar_lea.vmem %s3624, 64
        %v3697 = vld [vmem:[%s3696] sm:$0xff]
        %v3699 = vadd.s32 %v3631, 64
        %vm3700 = vcmp.eq.s32.totalorder %v3699, %v3628
        %v3701 = vsel %vm3700, %v3695, %v3697
        %3702 = vst [vmem:[%s3696] sm:$0xff] %v3701
        %v3703 = vld [vmem:[%s3625] ss:$0 sm:$0xff]
        %s3704 = scalar_lea.vmem %s3624, 72
        %v3705 = vld [vmem:[%s3704] sm:$0xff]
        %v3707 = vadd.s32 %v3631, 72
        %vm3708 = vcmp.eq.s32.totalorder %v3707, %v3628
        %v3709 = vsel %vm3708, %v3703, %v3705
        %3710 = vst [vmem:[%s3704] sm:$0xff] %v3709
        %v3711 = vld [vmem:[%s3625] ss:$0 sm:$0xff]
        %s3712 = scalar_lea.vmem %s3624, 80
        %v3713 = vld [vmem:[%s3712] sm:$0xff]
        %v3715 = vadd.s32 %v3631, 80
        %vm3716 = vcmp.eq.s32.totalorder %v3715, %v3628
        %v3717 = vsel %vm3716, %v3711, %v3713
        %3718 = vst [vmem:[%s3712] sm:$0xff] %v3717
        %v3719 = vld [vmem:[%s3625] ss:$0 sm:$0xff]
        %s3720 = scalar_lea.vmem %s3624, 88
        %v3721 = vld [vmem:[%s3720] sm:$0xff]
        %v3723 = vadd.s32 %v3631, 88
        %vm3724 = vcmp.eq.s32.totalorder %v3723, %v3628
        %v3725 = vsel %vm3724, %v3719, %v3721
        %3726 = vst [vmem:[%s3720] sm:$0xff] %v3725
        %v3727 = vld [vmem:[%s3625] ss:$0 sm:$0xff]
        %s3728 = scalar_lea.vmem %s3624, 96
        %v3729 = vld [vmem:[%s3728] sm:$0xff]
        %v3731 = vadd.s32 %v3631, 96
        %vm3732 = vcmp.eq.s32.totalorder %v3731, %v3628
        %v3733 = vsel %vm3732, %v3727, %v3729
        %3734 = vst [vmem:[%s3728] sm:$0xff] %v3733
        %v3735 = vld [vmem:[%s3625] ss:$0 sm:$0xff]
        %s3736 = scalar_lea.vmem %s3624, 104
        %v3737 = vld [vmem:[%s3736] sm:$0xff]
        %v3739 = vadd.s32 %v3631, 104
        %vm3740 = vcmp.eq.s32.totalorder %v3739, %v3628
        %v3741 = vsel %vm3740, %v3735, %v3737
        %3742 = vst [vmem:[%s3736] sm:$0xff] %v3741
        %v3743 = vld [vmem:[%s3625] ss:$0 sm:$0xff]
        %s3744 = scalar_lea.vmem %s3624, 112
        %v3745 = vld [vmem:[%s3744] sm:$0xff]
        %v3747 = vadd.s32 %v3631, 112
        %vm3748 = vcmp.eq.s32.totalorder %v3747, %v3628
        %v3749 = vsel %vm3748, %v3743, %v3745
        %3750 = vst [vmem:[%s3744] sm:$0xff] %v3749
        %v3751 = vld [vmem:[%s3625] ss:$0 sm:$0xff]
        %s3752 = scalar_lea.vmem %s3624, 120
        %v3753 = vld [vmem:[%s3752] sm:$0xff]
        %v3755 = vadd.s32 %v3631, 120
        %vm3756 = vcmp.eq.s32.totalorder %v3755, %v3628
        %v3757 = vsel %vm3756, %v3751, %v3753
        %3758 = vst [vmem:[%s3752] sm:$0xff] %v3757
        %s3759 = smov [#allocation15]
        %s3760 = smov [#allocation16]
        %v3761 = vld [vmem:[%s3760] sm:$0xff]
        %3762 = vrot.lane.b32.xlu0 %v3761, 1
        %v3763 = vpop.permute.xlu0 %3762
        %v3764 = vld [vmem:[%s3759] sm:$0xff]
        %v3765 = vld [vmem:[%s3759] sm:$0xff]
        %3766 = vrot.lane.b32.xlu0 %v3765, 1
        %v3767 = vpop.permute.xlu0 %3766
        %v3768 = vlaneseq
        %v3769 = vand.u32 %v3768, 127
        %vm3770 = vcmp.eq.s32.totalorder %v3769, 0
        %v3771 = vsel %vm3770, %v3765, %v3767
        %v3772 = vlaneseq
        %v3773 = vand.u32 %v3772, 127
        %vm3774 = vcmp.eq.s32.totalorder %v3773, 1
        %v3775 = vsel %vm3774, %v3763, %v3771
        %v3776 = vlaneseq
        %v3777 = vand.u32 %v3776, 127
        %vm3778 = vcmp.ge.s32.totalorder %v3777, 0
        %vm3779 = vcmp.lt.s32.totalorder %v3777, 128
        %vm3780 = vmand %vm3778, %vm3779
        %v3781 = vsel %vm3780, %v3775, 0.0
        %v3782 = vld [vmem:[%s3760] sm:$0xff]
        %3783 = vrot.lane.b32.xlu0 %v3782, 127
        %v3784 = vpop.permute.xlu0 %3783
        %v3785 = vlaneseq
        %v3786 = vand.u32 %v3785, 127
        %vm3787 = vcmp.eq.s32.totalorder %v3786, 127
        %v3788 = vsel %vm3787, %v3764, %v3784
        %s3789 = smov [#allocation15]
        %s3790 = scalar_lea.vmem %s3789, 8
        %s3791 = smov [#allocation16]
        %s3792 = scalar_lea.vmem %s3791, 8
        %v3793 = vld [vmem:[%s3792] sm:$0xff]
        %3794 = vrot.lane.b32.xlu0 %v3793, 1
        %v3795 = vpop.permute.xlu0 %3794
        %v3796 = vld [vmem:[%s3790] sm:$0xff]
        %v3797 = vld [vmem:[%s3790] sm:$0xff]
        %3798 = vrot.lane.b32.xlu0 %v3797, 1
        %v3799 = vpop.permute.xlu0 %3798
        %v3800 = vlaneseq
        %v3801 = vand.u32 %v3800, 127
        %vm3802 = vcmp.eq.s32.totalorder %v3801, 0
        %v3803 = vsel %vm3802, %v3797, %v3799
        %v3804 = vlaneseq
        %v3805 = vand.u32 %v3804, 127
        %vm3806 = vcmp.eq.s32.totalorder %v3805, 1
        %v3807 = vsel %vm3806, %v3795, %v3803
        %v3808 = vlaneseq
        %v3809 = vand.u32 %v3808, 127
        %vm3810 = vcmp.ge.s32.totalorder %v3809, 0
        %vm3811 = vcmp.lt.s32.totalorder %v3809, 128
        %vm3812 = vmand %vm3810, %vm3811
        %v3813 = vsel %vm3812, %v3807, 0.0
        %v3814 = vld [vmem:[%s3792] sm:$0xff]
        %3815 = vrot.lane.b32.xlu0 %v3814, 127
        %v3816 = vpop.permute.xlu0 %3815
        %v3817 = vlaneseq
        %v3818 = vand.u32 %v3817, 127
        %vm3819 = vcmp.eq.s32.totalorder %v3818, 127
        %v3820 = vsel %vm3819, %v3796, %v3816
        %s3821 = smov [#allocation15]
        %s3822 = scalar_lea.vmem %s3821, 16
        %s3823 = smov [#allocation16]
        %s3824 = scalar_lea.vmem %s3823, 16
        %v3825 = vld [vmem:[%s3824] sm:$0xff]
        %3826 = vrot.lane.b32.xlu0 %v3825, 1
        %v3827 = vpop.permute.xlu0 %3826
        %v3828 = vld [vmem:[%s3822] sm:$0xff]
        %v3829 = vld [vmem:[%s3822] sm:$0xff]
        %3830 = vrot.lane.b32.xlu0 %v3829, 1
        %v3831 = vpop.permute.xlu0 %3830
        %v3832 = vlaneseq
        %v3833 = vand.u32 %v3832, 127
        %vm3834 = vcmp.eq.s32.totalorder %v3833, 0
        %v3835 = vsel %vm3834, %v3829, %v3831
        %v3836 = vlaneseq
        %v3837 = vand.u32 %v3836, 127
        %vm3838 = vcmp.eq.s32.totalorder %v3837, 1
        %v3839 = vsel %vm3838, %v3827, %v3835
        %v3840 = vlaneseq
        %v3841 = vand.u32 %v3840, 127
        %vm3842 = vcmp.ge.s32.totalorder %v3841, 0
        %vm3843 = vcmp.lt.s32.totalorder %v3841, 128
        %vm3844 = vmand %vm3842, %vm3843
        %v3845 = vsel %vm3844, %v3839, 0.0
        %v3846 = vld [vmem:[%s3824] sm:$0xff]
        %3847 = vrot.lane.b32.xlu0 %v3846, 127
        %v3848 = vpop.permute.xlu0 %3847
        %v3849 = vlaneseq
        %v3850 = vand.u32 %v3849, 127
        %vm3851 = vcmp.eq.s32.totalorder %v3850, 127
        %v3852 = vsel %vm3851, %v3828, %v3848
        %s3853 = smov [#allocation15]
        %s3854 = scalar_lea.vmem %s3853, 24
        %s3855 = smov [#allocation16]
        %s3856 = scalar_lea.vmem %s3855, 24
        %v3857 = vld [vmem:[%s3856] sm:$0xff]
        %3858 = vrot.lane.b32.xlu0 %v3857, 1
        %v3859 = vpop.permute.xlu0 %3858
        %v3860 = vld [vmem:[%s3854] sm:$0xff]
        %v3861 = vld [vmem:[%s3854] sm:$0xff]
        %3862 = vrot.lane.b32.xlu0 %v3861, 1
        %v3863 = vpop.permute.xlu0 %3862
        %v3864 = vlaneseq
        %v3865 = vand.u32 %v3864, 127
        %vm3866 = vcmp.eq.s32.totalorder %v3865, 0
        %v3867 = vsel %vm3866, %v3861, %v3863
        %v3868 = vlaneseq
        %v3869 = vand.u32 %v3868, 127
        %vm3870 = vcmp.eq.s32.totalorder %v3869, 1
        %v3871 = vsel %vm3870, %v3859, %v3867
        %v3872 = vlaneseq
        %v3873 = vand.u32 %v3872, 127
        %vm3874 = vcmp.ge.s32.totalorder %v3873, 0
        %vm3875 = vcmp.lt.s32.totalorder %v3873, 128
        %vm3876 = vmand %vm3874, %vm3875
        %v3877 = vsel %vm3876, %v3871, 0.0
        %v3878 = vld [vmem:[%s3856] sm:$0xff]
        %3879 = vrot.lane.b32.xlu0 %v3878, 127
        %v3880 = vpop.permute.xlu0 %3879
        %v3881 = vlaneseq
        %v3882 = vand.u32 %v3881, 127
        %vm3883 = vcmp.eq.s32.totalorder %v3882, 127
        %v3884 = vsel %vm3883, %v3860, %v3880
        %s3885 = smov [#allocation15]
        %s3886 = scalar_lea.vmem %s3885, 32
        %s3887 = smov [#allocation16]
        %s3888 = scalar_lea.vmem %s3887, 32
        %v3889 = vld [vmem:[%s3888] sm:$0xff]
        %3890 = vrot.lane.b32.xlu0 %v3889, 1
        %v3891 = vpop.permute.xlu0 %3890
        %v3892 = vld [vmem:[%s3886] sm:$0xff]
        %v3893 = vld [vmem:[%s3886] sm:$0xff]
        %3894 = vrot.lane.b32.xlu0 %v3893, 1
        %v3895 = vpop.permute.xlu0 %3894
        %v3896 = vlaneseq
        %v3897 = vand.u32 %v3896, 127
        %vm3898 = vcmp.eq.s32.totalorder %v3897, 0
        %v3899 = vsel %vm3898, %v3893, %v3895
        %v3900 = vlaneseq
        %v3901 = vand.u32 %v3900, 127
        %vm3902 = vcmp.eq.s32.totalorder %v3901, 1
        %v3903 = vsel %vm3902, %v3891, %v3899
        %v3904 = vlaneseq
        %v3905 = vand.u32 %v3904, 127
        %vm3906 = vcmp.ge.s32.totalorder %v3905, 0
        %vm3907 = vcmp.lt.s32.totalorder %v3905, 128
        %vm3908 = vmand %vm3906, %vm3907
        %v3909 = vsel %vm3908, %v3903, 0.0
        %v3910 = vld [vmem:[%s3888] sm:$0xff]
        %3911 = vrot.lane.b32.xlu0 %v3910, 127
        %v3912 = vpop.permute.xlu0 %3911
        %v3913 = vlaneseq
        %v3914 = vand.u32 %v3913, 127
        %vm3915 = vcmp.eq.s32.totalorder %v3914, 127
        %v3916 = vsel %vm3915, %v3892, %v3912
        %s3917 = smov [#allocation15]
        %s3918 = scalar_lea.vmem %s3917, 40
        %s3919 = smov [#allocation16]
        %s3920 = scalar_lea.vmem %s3919, 40
        %v3921 = vld [vmem:[%s3920] sm:$0xff]
        %3922 = vrot.lane.b32.xlu0 %v3921, 1
        %v3923 = vpop.permute.xlu0 %3922
        %v3924 = vld [vmem:[%s3918] sm:$0xff]
        %v3925 = vld [vmem:[%s3918] sm:$0xff]
        %3926 = vrot.lane.b32.xlu0 %v3925, 1
        %v3927 = vpop.permute.xlu0 %3926
        %v3928 = vlaneseq
        %v3929 = vand.u32 %v3928, 127
        %vm3930 = vcmp.eq.s32.totalorder %v3929, 0
        %v3931 = vsel %vm3930, %v3925, %v3927
        %v3932 = vlaneseq
        %v3933 = vand.u32 %v3932, 127
        %vm3934 = vcmp.eq.s32.totalorder %v3933, 1
        %v3935 = vsel %vm3934, %v3923, %v3931
        %v3936 = vlaneseq
        %v3937 = vand.u32 %v3936, 127
        %vm3938 = vcmp.ge.s32.totalorder %v3937, 0
        %vm3939 = vcmp.lt.s32.totalorder %v3937, 128
        %vm3940 = vmand %vm3938, %vm3939
        %v3941 = vsel %vm3940, %v3935, 0.0
        %v3942 = vld [vmem:[%s3920] sm:$0xff]
        %3943 = vrot.lane.b32.xlu0 %v3942, 127
        %v3944 = vpop.permute.xlu0 %3943
        %v3945 = vlaneseq
        %v3946 = vand.u32 %v3945, 127
        %vm3947 = vcmp.eq.s32.totalorder %v3946, 127
        %v3948 = vsel %vm3947, %v3924, %v3944
        %s3949 = smov [#allocation15]
        %s3950 = scalar_lea.vmem %s3949, 48
        %s3951 = smov [#allocation16]
        %s3952 = scalar_lea.vmem %s3951, 48
        %v3953 = vld [vmem:[%s3952] sm:$0xff]
        %3954 = vrot.lane.b32.xlu0 %v3953, 1
        %v3955 = vpop.permute.xlu0 %3954
        %v3956 = vld [vmem:[%s3950] sm:$0xff]
        %v3957 = vld [vmem:[%s3950] sm:$0xff]
        %3958 = vrot.lane.b32.xlu0 %v3957, 1
        %v3959 = vpop.permute.xlu0 %3958
        %v3960 = vlaneseq
        %v3961 = vand.u32 %v3960, 127
        %vm3962 = vcmp.eq.s32.totalorder %v3961, 0
        %v3963 = vsel %vm3962, %v3957, %v3959
        %v3964 = vlaneseq
        %v3965 = vand.u32 %v3964, 127
        %vm3966 = vcmp.eq.s32.totalorder %v3965, 1
        %v3967 = vsel %vm3966, %v3955, %v3963
        %v3968 = vlaneseq
        %v3969 = vand.u32 %v3968, 127
        %vm3970 = vcmp.ge.s32.totalorder %v3969, 0
        %vm3971 = vcmp.lt.s32.totalorder %v3969, 128
        %vm3972 = vmand %vm3970, %vm3971
        %v3973 = vsel %vm3972, %v3967, 0.0
        %v3974 = vld [vmem:[%s3952] sm:$0xff]
        %3975 = vrot.lane.b32.xlu0 %v3974, 127
        %v3976 = vpop.permute.xlu0 %3975
        %v3977 = vlaneseq
        %v3978 = vand.u32 %v3977, 127
        %vm3979 = vcmp.eq.s32.totalorder %v3978, 127
        %v3980 = vsel %vm3979, %v3956, %v3976
        %s3981 = smov [#allocation15]
        %s3982 = scalar_lea.vmem %s3981, 56
        %s3983 = smov [#allocation16]
        %s3984 = scalar_lea.vmem %s3983, 56
        %v3985 = vld [vmem:[%s3984] sm:$0xff]
        %3986 = vrot.lane.b32.xlu0 %v3985, 1
        %v3987 = vpop.permute.xlu0 %3986
        %v3988 = vld [vmem:[%s3982] sm:$0xff]
        %v3989 = vld [vmem:[%s3982] sm:$0xff]
        %3990 = vrot.lane.b32.xlu0 %v3989, 1
        %v3991 = vpop.permute.xlu0 %3990
        %v3992 = vlaneseq
        %v3993 = vand.u32 %v3992, 127
        %vm3994 = vcmp.eq.s32.totalorder %v3993, 0
        %v3995 = vsel %vm3994, %v3989, %v3991
        %v3996 = vlaneseq
        %v3997 = vand.u32 %v3996, 127
        %vm3998 = vcmp.eq.s32.totalorder %v3997, 1
        %v3999 = vsel %vm3998, %v3987, %v3995
        %v4000 = vlaneseq
        %v4001 = vand.u32 %v4000, 127
        %vm4002 = vcmp.ge.s32.totalorder %v4001, 0
        %vm4003 = vcmp.lt.s32.totalorder %v4001, 128
        %vm4004 = vmand %vm4002, %vm4003
        %v4005 = vsel %vm4004, %v3999, 0.0
        %v4006 = vld [vmem:[%s3984] sm:$0xff]
        %4007 = vrot.lane.b32.xlu0 %v4006, 127
        %v4008 = vpop.permute.xlu0 %4007
        %v4009 = vlaneseq
        %v4010 = vand.u32 %v4009, 127
        %vm4011 = vcmp.eq.s32.totalorder %v4010, 127
        %v4012 = vsel %vm4011, %v3988, %v4008
        %s4013 = smov [#allocation15]
        %s4014 = scalar_lea.vmem %s4013, 64
        %s4015 = smov [#allocation16]
        %s4016 = scalar_lea.vmem %s4015, 64
        %v4017 = vld [vmem:[%s4016] sm:$0xff]
        %4018 = vrot.lane.b32.xlu0 %v4017, 1
        %v4019 = vpop.permute.xlu0 %4018
        %v4020 = vld [vmem:[%s4014] sm:$0xff]
        %v4021 = vld [vmem:[%s4014] sm:$0xff]
        %4022 = vrot.lane.b32.xlu0 %v4021, 1
        %v4023 = vpop.permute.xlu0 %4022
        %v4024 = vlaneseq
        %v4025 = vand.u32 %v4024, 127
        %vm4026 = vcmp.eq.s32.totalorder %v4025, 0
        %v4027 = vsel %vm4026, %v4021, %v4023
        %v4028 = vlaneseq
        %v4029 = vand.u32 %v4028, 127
        %vm4030 = vcmp.eq.s32.totalorder %v4029, 1
        %v4031 = vsel %vm4030, %v4019, %v4027
        %v4032 = vlaneseq
        %v4033 = vand.u32 %v4032, 127
        %vm4034 = vcmp.ge.s32.totalorder %v4033, 0
        %vm4035 = vcmp.lt.s32.totalorder %v4033, 128
        %vm4036 = vmand %vm4034, %vm4035
        %v4037 = vsel %vm4036, %v4031, 0.0
        %v4038 = vld [vmem:[%s4016] sm:$0xff]
        %4039 = vrot.lane.b32.xlu0 %v4038, 127
        %v4040 = vpop.permute.xlu0 %4039
        %v4041 = vlaneseq
        %v4042 = vand.u32 %v4041, 127
        %vm4043 = vcmp.eq.s32.totalorder %v4042, 127
        %v4044 = vsel %vm4043, %v4020, %v4040
        %s4045 = smov [#allocation15]
        %s4046 = scalar_lea.vmem %s4045, 72
        %s4047 = smov [#allocation16]
        %s4048 = scalar_lea.vmem %s4047, 72
        %v4049 = vld [vmem:[%s4048] sm:$0xff]
        %4050 = vrot.lane.b32.xlu0 %v4049, 1
        %v4051 = vpop.permute.xlu0 %4050
        %v4052 = vld [vmem:[%s4046] sm:$0xff]
        %v4053 = vld [vmem:[%s4046] sm:$0xff]
        %4054 = vrot.lane.b32.xlu0 %v4053, 1
        %v4055 = vpop.permute.xlu0 %4054
        %v4056 = vlaneseq
        %v4057 = vand.u32 %v4056, 127
        %vm4058 = vcmp.eq.s32.totalorder %v4057, 0
        %v4059 = vsel %vm4058, %v4053, %v4055
        %v4060 = vlaneseq
        %v4061 = vand.u32 %v4060, 127
        %vm4062 = vcmp.eq.s32.totalorder %v4061, 1
        %v4063 = vsel %vm4062, %v4051, %v4059
        %v4064 = vlaneseq
        %v4065 = vand.u32 %v4064, 127
        %vm4066 = vcmp.ge.s32.totalorder %v4065, 0
        %vm4067 = vcmp.lt.s32.totalorder %v4065, 128
        %vm4068 = vmand %vm4066, %vm4067
        %v4069 = vsel %vm4068, %v4063, 0.0
        %v4070 = vld [vmem:[%s4048] sm:$0xff]
        %4071 = vrot.lane.b32.xlu0 %v4070, 127
        %v4072 = vpop.permute.xlu0 %4071
        %v4073 = vlaneseq
        %v4074 = vand.u32 %v4073, 127
        %vm4075 = vcmp.eq.s32.totalorder %v4074, 127
        %v4076 = vsel %vm4075, %v4052, %v4072
        %s4077 = smov [#allocation15]
        %s4078 = scalar_lea.vmem %s4077, 80
        %s4079 = smov [#allocation16]
        %s4080 = scalar_lea.vmem %s4079, 80
        %v4081 = vld [vmem:[%s4080] sm:$0xff]
        %4082 = vrot.lane.b32.xlu0 %v4081, 1
        %v4083 = vpop.permute.xlu0 %4082
        %v4084 = vld [vmem:[%s4078] sm:$0xff]
        %v4085 = vld [vmem:[%s4078] sm:$0xff]
        %4086 = vrot.lane.b32.xlu0 %v4085, 1
        %v4087 = vpop.permute.xlu0 %4086
        %v4088 = vlaneseq
        %v4089 = vand.u32 %v4088, 127
        %vm4090 = vcmp.eq.s32.totalorder %v4089, 0
        %v4091 = vsel %vm4090, %v4085, %v4087
        %v4092 = vlaneseq
        %v4093 = vand.u32 %v4092, 127
        %vm4094 = vcmp.eq.s32.totalorder %v4093, 1
        %v4095 = vsel %vm4094, %v4083, %v4091
        %v4096 = vlaneseq
        %v4097 = vand.u32 %v4096, 127
        %vm4098 = vcmp.ge.s32.totalorder %v4097, 0
        %vm4099 = vcmp.lt.s32.totalorder %v4097, 128
        %vm4100 = vmand %vm4098, %vm4099
        %v4101 = vsel %vm4100, %v4095, 0.0
        %v4102 = vld [vmem:[%s4080] sm:$0xff]
        %4103 = vrot.lane.b32.xlu0 %v4102, 127
        %v4104 = vpop.permute.xlu0 %4103
        %v4105 = vlaneseq
        %v4106 = vand.u32 %v4105, 127
        %vm4107 = vcmp.eq.s32.totalorder %v4106, 127
        %v4108 = vsel %vm4107, %v4084, %v4104
        %s4109 = smov [#allocation15]
        %s4110 = scalar_lea.vmem %s4109, 88
        %s4111 = smov [#allocation16]
        %s4112 = scalar_lea.vmem %s4111, 88
        %v4113 = vld [vmem:[%s4112] sm:$0xff]
        %4114 = vrot.lane.b32.xlu0 %v4113, 1
        %v4115 = vpop.permute.xlu0 %4114
        %v4116 = vld [vmem:[%s4110] sm:$0xff]
        %v4117 = vld [vmem:[%s4110] sm:$0xff]
        %4118 = vrot.lane.b32.xlu0 %v4117, 1
        %v4119 = vpop.permute.xlu0 %4118
        %v4120 = vlaneseq
        %v4121 = vand.u32 %v4120, 127
        %vm4122 = vcmp.eq.s32.totalorder %v4121, 0
        %v4123 = vsel %vm4122, %v4117, %v4119
        %v4124 = vlaneseq
        %v4125 = vand.u32 %v4124, 127
        %vm4126 = vcmp.eq.s32.totalorder %v4125, 1
        %v4127 = vsel %vm4126, %v4115, %v4123
        %v4128 = vlaneseq
        %v4129 = vand.u32 %v4128, 127
        %vm4130 = vcmp.ge.s32.totalorder %v4129, 0
        %vm4131 = vcmp.lt.s32.totalorder %v4129, 128
        %vm4132 = vmand %vm4130, %vm4131
        %v4133 = vsel %vm4132, %v4127, 0.0
        %v4134 = vld [vmem:[%s4112] sm:$0xff]
        %4135 = vrot.lane.b32.xlu0 %v4134, 127
        %v4136 = vpop.permute.xlu0 %4135
        %v4137 = vlaneseq
        %v4138 = vand.u32 %v4137, 127
        %vm4139 = vcmp.eq.s32.totalorder %v4138, 127
        %v4140 = vsel %vm4139, %v4116, %v4136
        %s4141 = smov [#allocation15]
        %s4142 = scalar_lea.vmem %s4141, 96
        %s4143 = smov [#allocation16]
        %s4144 = scalar_lea.vmem %s4143, 96
        %v4145 = vld [vmem:[%s4144] sm:$0xff]
        %4146 = vrot.lane.b32.xlu0 %v4145, 1
        %v4147 = vpop.permute.xlu0 %4146
        %v4148 = vld [vmem:[%s4142] sm:$0xff]
        %v4149 = vld [vmem:[%s4142] sm:$0xff]
        %4150 = vrot.lane.b32.xlu0 %v4149, 1
        %v4151 = vpop.permute.xlu0 %4150
        %v4152 = vlaneseq
        %v4153 = vand.u32 %v4152, 127
        %vm4154 = vcmp.eq.s32.totalorder %v4153, 0
        %v4155 = vsel %vm4154, %v4149, %v4151
        %v4156 = vlaneseq
        %v4157 = vand.u32 %v4156, 127
        %vm4158 = vcmp.eq.s32.totalorder %v4157, 1
        %v4159 = vsel %vm4158, %v4147, %v4155
        %v4160 = vlaneseq
        %v4161 = vand.u32 %v4160, 127
        %vm4162 = vcmp.ge.s32.totalorder %v4161, 0
        %vm4163 = vcmp.lt.s32.totalorder %v4161, 128
        %vm4164 = vmand %vm4162, %vm4163
        %v4165 = vsel %vm4164, %v4159, 0.0
        %v4166 = vld [vmem:[%s4144] sm:$0xff]
        %4167 = vrot.lane.b32.xlu0 %v4166, 127
        %v4168 = vpop.permute.xlu0 %4167
        %v4169 = vlaneseq
        %v4170 = vand.u32 %v4169, 127
        %vm4171 = vcmp.eq.s32.totalorder %v4170, 127
        %v4172 = vsel %vm4171, %v4148, %v4168
        %s4173 = smov [#allocation15]
        %s4174 = scalar_lea.vmem %s4173, 104
        %s4175 = smov [#allocation16]
        %s4176 = scalar_lea.vmem %s4175, 104
        %v4177 = vld [vmem:[%s4176] sm:$0xff]
        %4178 = vrot.lane.b32.xlu0 %v4177, 1
        %v4179 = vpop.permute.xlu0 %4178
        %v4180 = vld [vmem:[%s4174] sm:$0xff]
        %v4181 = vld [vmem:[%s4174] sm:$0xff]
        %4182 = vrot.lane.b32.xlu0 %v4181, 1
        %v4183 = vpop.permute.xlu0 %4182
        %v4184 = vlaneseq
        %v4185 = vand.u32 %v4184, 127
        %vm4186 = vcmp.eq.s32.totalorder %v4185, 0
        %v4187 = vsel %vm4186, %v4181, %v4183
        %v4188 = vlaneseq
        %v4189 = vand.u32 %v4188, 127
        %vm4190 = vcmp.eq.s32.totalorder %v4189, 1
        %v4191 = vsel %vm4190, %v4179, %v4187
        %v4192 = vlaneseq
        %v4193 = vand.u32 %v4192, 127
        %vm4194 = vcmp.ge.s32.totalorder %v4193, 0
        %vm4195 = vcmp.lt.s32.totalorder %v4193, 128
        %vm4196 = vmand %vm4194, %vm4195
        %v4197 = vsel %vm4196, %v4191, 0.0
        %v4198 = vld [vmem:[%s4176] sm:$0xff]
        %4199 = vrot.lane.b32.xlu0 %v4198, 127
        %v4200 = vpop.permute.xlu0 %4199
        %v4201 = vlaneseq
        %v4202 = vand.u32 %v4201, 127
        %vm4203 = vcmp.eq.s32.totalorder %v4202, 127
        %v4204 = vsel %vm4203, %v4180, %v4200
        %s4205 = smov [#allocation15]
        %s4206 = scalar_lea.vmem %s4205, 112
        %s4207 = smov [#allocation16]
        %s4208 = scalar_lea.vmem %s4207, 112
        %v4209 = vld [vmem:[%s4208] sm:$0xff]
        %4210 = vrot.lane.b32.xlu0 %v4209, 1
        %v4211 = vpop.permute.xlu0 %4210
        %v4212 = vld [vmem:[%s4206] sm:$0xff]
        %v4213 = vld [vmem:[%s4206] sm:$0xff]
        %4214 = vrot.lane.b32.xlu0 %v4213, 1
        %v4215 = vpop.permute.xlu0 %4214
        %v4216 = vlaneseq
        %v4217 = vand.u32 %v4216, 127
        %vm4218 = vcmp.eq.s32.totalorder %v4217, 0
        %v4219 = vsel %vm4218, %v4213, %v4215
        %v4220 = vlaneseq
        %v4221 = vand.u32 %v4220, 127
        %vm4222 = vcmp.eq.s32.totalorder %v4221, 1
        %v4223 = vsel %vm4222, %v4211, %v4219
        %v4224 = vlaneseq
        %v4225 = vand.u32 %v4224, 127
        %vm4226 = vcmp.ge.s32.totalorder %v4225, 0
        %vm4227 = vcmp.lt.s32.totalorder %v4225, 128
        %vm4228 = vmand %vm4226, %vm4227
        %v4229 = vsel %vm4228, %v4223, 0.0
        %v4230 = vld [vmem:[%s4208] sm:$0xff]
        %4231 = vrot.lane.b32.xlu0 %v4230, 127
        %v4232 = vpop.permute.xlu0 %4231
        %v4233 = vlaneseq
        %v4234 = vand.u32 %v4233, 127
        %vm4235 = vcmp.eq.s32.totalorder %v4234, 127
        %v4236 = vsel %vm4235, %v4212, %v4232
        %s4237 = smov [#allocation15]
        %s4238 = scalar_lea.vmem %s4237, 120
        %s4239 = smov [#allocation16]
        %s4240 = scalar_lea.vmem %s4239, 120
        %v4241 = vld [vmem:[%s4240] sm:$0xff]
        %4242 = vrot.lane.b32.xlu0 %v4241, 1
        %v4243 = vpop.permute.xlu0 %4242
        %v4244 = vld [vmem:[%s4238] sm:$0xff]
        %v4245 = vld [vmem:[%s4238] sm:$0xff]
        %4246 = vrot.lane.b32.xlu0 %v4245, 1
        %v4247 = vpop.permute.xlu0 %4246
        %v4248 = vlaneseq
        %v4249 = vand.u32 %v4248, 127
        %vm4250 = vcmp.eq.s32.totalorder %v4249, 0
        %v4251 = vsel %vm4250, %v4245, %v4247
        %v4252 = vlaneseq
        %v4253 = vand.u32 %v4252, 127
        %vm4254 = vcmp.eq.s32.totalorder %v4253, 1
        %v4255 = vsel %vm4254, %v4243, %v4251
        %v4256 = vlaneseq
        %v4257 = vand.u32 %v4256, 127
        %vm4258 = vcmp.ge.s32.totalorder %v4257, 0
        %vm4259 = vcmp.lt.s32.totalorder %v4257, 128
        %vm4260 = vmand %vm4258, %vm4259
        %v4261 = vsel %vm4260, %v4255, 0.0
        %v4262 = vld [vmem:[%s4240] sm:$0xff]
        %4263 = vrot.lane.b32.xlu0 %v4262, 127
        %v4264 = vpop.permute.xlu0 %4263
        %v4265 = vlaneseq
        %v4266 = vand.u32 %v4265, 127
        %vm4267 = vcmp.eq.s32.totalorder %v4266, 127
        %v4268 = vsel %vm4267, %v4244, %v4264
        %4269 = vst [vmem:[%s3759] sm:$0xff] %v3781
        %4270 = vst [vmem:[%s3760] sm:$0xff] %v3788
        %4271 = vst [vmem:[%s3790] sm:$0xff] %v3813
        %4272 = vst [vmem:[%s3792] sm:$0xff] %v3820
        %4273 = vst [vmem:[%s3822] sm:$0xff] %v3845
        %4274 = vst [vmem:[%s3824] sm:$0xff] %v3852
        %4275 = vst [vmem:[%s3854] sm:$0xff] %v3877
        %4276 = vst [vmem:[%s3856] sm:$0xff] %v3884
        %4277 = vst [vmem:[%s3886] sm:$0xff] %v3909
        %4278 = vst [vmem:[%s3888] sm:$0xff] %v3916
        %4279 = vst [vmem:[%s3918] sm:$0xff] %v3941
        %4280 = vst [vmem:[%s3920] sm:$0xff] %v3948
        %4281 = vst [vmem:[%s3950] sm:$0xff] %v3973
        %4282 = vst [vmem:[%s3952] sm:$0xff] %v3980
        %4283 = vst [vmem:[%s3982] sm:$0xff] %v4005
        %4284 = vst [vmem:[%s3984] sm:$0xff] %v4012
        %4285 = vst [vmem:[%s4014] sm:$0xff] %v4037
        %4286 = vst [vmem:[%s4016] sm:$0xff] %v4044
        %4287 = vst [vmem:[%s4046] sm:$0xff] %v4069
        %4288 = vst [vmem:[%s4048] sm:$0xff] %v4076
        %4289 = vst [vmem:[%s4078] sm:$0xff] %v4101
        %4290 = vst [vmem:[%s4080] sm:$0xff] %v4108
        %4291 = vst [vmem:[%s4110] sm:$0xff] %v4133
        %4292 = vst [vmem:[%s4112] sm:$0xff] %v4140
        %4293 = vst [vmem:[%s4142] sm:$0xff] %v4165
        %4294 = vst [vmem:[%s4144] sm:$0xff] %v4172
        %4295 = vst [vmem:[%s4174] sm:$0xff] %v4197
        %4296 = vst [vmem:[%s4176] sm:$0xff] %v4204
        %4297 = vst [vmem:[%s4206] sm:$0xff] %v4229
        %4298 = vst [vmem:[%s4208] sm:$0xff] %v4236
        %4299 = vst [vmem:[%s4238] sm:$0xff] %v4261
        %4300 = vst [vmem:[%s4240] sm:$0xff] %v4268
        %s4301 = smov [#allocation17]
        %s4302 = smov [#allocation18]
        %v4303 = vld [vmem:[%s4302] sm:$0xff]
        %4304 = vrot.lane.b32.xlu0 %v4303, 1
        %v4305 = vpop.permute.xlu0 %4304
        %v4306 = vld [vmem:[%s4301] sm:$0xff]
        %v4307 = vld [vmem:[%s4301] sm:$0xff]
        %4308 = vrot.lane.b32.xlu0 %v4307, 1
        %v4309 = vpop.permute.xlu0 %4308
        %v4310 = vlaneseq
        %v4311 = vand.u32 %v4310, 127
        %vm4312 = vcmp.eq.s32.totalorder %v4311, 0
        %v4313 = vsel %vm4312, %v4307, %v4309
        %v4314 = vlaneseq
        %v4315 = vand.u32 %v4314, 127
        %vm4316 = vcmp.eq.s32.totalorder %v4315, 1
        %v4317 = vsel %vm4316, %v4305, %v4313
        %v4318 = vlaneseq
        %v4319 = vand.u32 %v4318, 127
        %vm4320 = vcmp.ge.s32.totalorder %v4319, 0
        %vm4321 = vcmp.lt.s32.totalorder %v4319, 128
        %vm4322 = vmand %vm4320, %vm4321
        %v4323 = vsel %vm4322, %v4317, 0.0
        %v4324 = vld [vmem:[%s4302] sm:$0xff]
        %4325 = vrot.lane.b32.xlu0 %v4324, 127
        %v4326 = vpop.permute.xlu0 %4325
        %v4327 = vlaneseq
        %v4328 = vand.u32 %v4327, 127
        %vm4329 = vcmp.eq.s32.totalorder %v4328, 127
        %v4330 = vsel %vm4329, %v4306, %v4326
        %s4331 = smov [#allocation17]
        %s4332 = scalar_lea.vmem %s4331, 8
        %s4333 = smov [#allocation18]
        %s4334 = scalar_lea.vmem %s4333, 8
        %v4335 = vld [vmem:[%s4334] sm:$0xff]
        %4336 = vrot.lane.b32.xlu0 %v4335, 1
        %v4337 = vpop.permute.xlu0 %4336
        %v4338 = vld [vmem:[%s4332] sm:$0xff]
        %v4339 = vld [vmem:[%s4332] sm:$0xff]
        %4340 = vrot.lane.b32.xlu0 %v4339, 1
        %v4341 = vpop.permute.xlu0 %4340
        %v4342 = vlaneseq
        %v4343 = vand.u32 %v4342, 127
        %vm4344 = vcmp.eq.s32.totalorder %v4343, 0
        %v4345 = vsel %vm4344, %v4339, %v4341
        %v4346 = vlaneseq
        %v4347 = vand.u32 %v4346, 127
        %vm4348 = vcmp.eq.s32.totalorder %v4347, 1
        %v4349 = vsel %vm4348, %v4337, %v4345
        %v4350 = vlaneseq
        %v4351 = vand.u32 %v4350, 127
        %vm4352 = vcmp.ge.s32.totalorder %v4351, 0
        %vm4353 = vcmp.lt.s32.totalorder %v4351, 128
        %vm4354 = vmand %vm4352, %vm4353
        %v4355 = vsel %vm4354, %v4349, 0.0
        %v4356 = vld [vmem:[%s4334] sm:$0xff]
        %4357 = vrot.lane.b32.xlu0 %v4356, 127
        %v4358 = vpop.permute.xlu0 %4357
        %v4359 = vlaneseq
        %v4360 = vand.u32 %v4359, 127
        %vm4361 = vcmp.eq.s32.totalorder %v4360, 127
        %v4362 = vsel %vm4361, %v4338, %v4358
        %s4363 = smov [#allocation17]
        %s4364 = scalar_lea.vmem %s4363, 16
        %s4365 = smov [#allocation18]
        %s4366 = scalar_lea.vmem %s4365, 16
        %v4367 = vld [vmem:[%s4366] sm:$0xff]
        %4368 = vrot.lane.b32.xlu0 %v4367, 1
        %v4369 = vpop.permute.xlu0 %4368
        %v4370 = vld [vmem:[%s4364] sm:$0xff]
        %v4371 = vld [vmem:[%s4364] sm:$0xff]
        %4372 = vrot.lane.b32.xlu0 %v4371, 1
        %v4373 = vpop.permute.xlu0 %4372
        %v4374 = vlaneseq
        %v4375 = vand.u32 %v4374, 127
        %vm4376 = vcmp.eq.s32.totalorder %v4375, 0
        %v4377 = vsel %vm4376, %v4371, %v4373
        %v4378 = vlaneseq
        %v4379 = vand.u32 %v4378, 127
        %vm4380 = vcmp.eq.s32.totalorder %v4379, 1
        %v4381 = vsel %vm4380, %v4369, %v4377
        %v4382 = vlaneseq
        %v4383 = vand.u32 %v4382, 127
        %vm4384 = vcmp.ge.s32.totalorder %v4383, 0
        %vm4385 = vcmp.lt.s32.totalorder %v4383, 128
        %vm4386 = vmand %vm4384, %vm4385
        %v4387 = vsel %vm4386, %v4381, 0.0
        %v4388 = vld [vmem:[%s4366] sm:$0xff]
        %4389 = vrot.lane.b32.xlu0 %v4388, 127
        %v4390 = vpop.permute.xlu0 %4389
        %v4391 = vlaneseq
        %v4392 = vand.u32 %v4391, 127
        %vm4393 = vcmp.eq.s32.totalorder %v4392, 127
        %v4394 = vsel %vm4393, %v4370, %v4390
        %s4395 = smov [#allocation17]
        %s4396 = scalar_lea.vmem %s4395, 24
        %s4397 = smov [#allocation18]
        %s4398 = scalar_lea.vmem %s4397, 24
        %v4399 = vld [vmem:[%s4398] sm:$0xff]
        %4400 = vrot.lane.b32.xlu0 %v4399, 1
        %v4401 = vpop.permute.xlu0 %4400
        %v4402 = vld [vmem:[%s4396] sm:$0xff]
        %v4403 = vld [vmem:[%s4396] sm:$0xff]
        %4404 = vrot.lane.b32.xlu0 %v4403, 1
        %v4405 = vpop.permute.xlu0 %4404
        %v4406 = vlaneseq
        %v4407 = vand.u32 %v4406, 127
        %vm4408 = vcmp.eq.s32.totalorder %v4407, 0
        %v4409 = vsel %vm4408, %v4403, %v4405
        %v4410 = vlaneseq
        %v4411 = vand.u32 %v4410, 127
        %vm4412 = vcmp.eq.s32.totalorder %v4411, 1
        %v4413 = vsel %vm4412, %v4401, %v4409
        %v4414 = vlaneseq
        %v4415 = vand.u32 %v4414, 127
        %vm4416 = vcmp.ge.s32.totalorder %v4415, 0
        %vm4417 = vcmp.lt.s32.totalorder %v4415, 128
        %vm4418 = vmand %vm4416, %vm4417
        %v4419 = vsel %vm4418, %v4413, 0.0
        %v4420 = vld [vmem:[%s4398] sm:$0xff]
        %4421 = vrot.lane.b32.xlu0 %v4420, 127
        %v4422 = vpop.permute.xlu0 %4421
        %v4423 = vlaneseq
        %v4424 = vand.u32 %v4423, 127
        %vm4425 = vcmp.eq.s32.totalorder %v4424, 127
        %v4426 = vsel %vm4425, %v4402, %v4422
        %s4427 = smov [#allocation17]
        %s4428 = scalar_lea.vmem %s4427, 32
        %s4429 = smov [#allocation18]
        %s4430 = scalar_lea.vmem %s4429, 32
        %v4431 = vld [vmem:[%s4430] sm:$0xff]
        %4432 = vrot.lane.b32.xlu0 %v4431, 1
        %v4433 = vpop.permute.xlu0 %4432
        %v4434 = vld [vmem:[%s4428] sm:$0xff]
        %v4435 = vld [vmem:[%s4428] sm:$0xff]
        %4436 = vrot.lane.b32.xlu0 %v4435, 1
        %v4437 = vpop.permute.xlu0 %4436
        %v4438 = vlaneseq
        %v4439 = vand.u32 %v4438, 127
        %vm4440 = vcmp.eq.s32.totalorder %v4439, 0
        %v4441 = vsel %vm4440, %v4435, %v4437
        %v4442 = vlaneseq
        %v4443 = vand.u32 %v4442, 127
        %vm4444 = vcmp.eq.s32.totalorder %v4443, 1
        %v4445 = vsel %vm4444, %v4433, %v4441
        %v4446 = vlaneseq
        %v4447 = vand.u32 %v4446, 127
        %vm4448 = vcmp.ge.s32.totalorder %v4447, 0
        %vm4449 = vcmp.lt.s32.totalorder %v4447, 128
        %vm4450 = vmand %vm4448, %vm4449
        %v4451 = vsel %vm4450, %v4445, 0.0
        %v4452 = vld [vmem:[%s4430] sm:$0xff]
        %4453 = vrot.lane.b32.xlu0 %v4452, 127
        %v4454 = vpop.permute.xlu0 %4453
        %v4455 = vlaneseq
        %v4456 = vand.u32 %v4455, 127
        %vm4457 = vcmp.eq.s32.totalorder %v4456, 127
        %v4458 = vsel %vm4457, %v4434, %v4454
        %s4459 = smov [#allocation17]
        %s4460 = scalar_lea.vmem %s4459, 40
        %s4461 = smov [#allocation18]
        %s4462 = scalar_lea.vmem %s4461, 40
        %v4463 = vld [vmem:[%s4462] sm:$0xff]
        %4464 = vrot.lane.b32.xlu0 %v4463, 1
        %v4465 = vpop.permute.xlu0 %4464
        %v4466 = vld [vmem:[%s4460] sm:$0xff]
        %v4467 = vld [vmem:[%s4460] sm:$0xff]
        %4468 = vrot.lane.b32.xlu0 %v4467, 1
        %v4469 = vpop.permute.xlu0 %4468
        %v4470 = vlaneseq
        %v4471 = vand.u32 %v4470, 127
        %vm4472 = vcmp.eq.s32.totalorder %v4471, 0
        %v4473 = vsel %vm4472, %v4467, %v4469
        %v4474 = vlaneseq
        %v4475 = vand.u32 %v4474, 127
        %vm4476 = vcmp.eq.s32.totalorder %v4475, 1
        %v4477 = vsel %vm4476, %v4465, %v4473
        %v4478 = vlaneseq
        %v4479 = vand.u32 %v4478, 127
        %vm4480 = vcmp.ge.s32.totalorder %v4479, 0
        %vm4481 = vcmp.lt.s32.totalorder %v4479, 128
        %vm4482 = vmand %vm4480, %vm4481
        %v4483 = vsel %vm4482, %v4477, 0.0
        %v4484 = vld [vmem:[%s4462] sm:$0xff]
        %4485 = vrot.lane.b32.xlu0 %v4484, 127
        %v4486 = vpop.permute.xlu0 %4485
        %v4487 = vlaneseq
        %v4488 = vand.u32 %v4487, 127
        %vm4489 = vcmp.eq.s32.totalorder %v4488, 127
        %v4490 = vsel %vm4489, %v4466, %v4486
        %s4491 = smov [#allocation17]
        %s4492 = scalar_lea.vmem %s4491, 48
        %s4493 = smov [#allocation18]
        %s4494 = scalar_lea.vmem %s4493, 48
        %v4495 = vld [vmem:[%s4494] sm:$0xff]
        %4496 = vrot.lane.b32.xlu0 %v4495, 1
        %v4497 = vpop.permute.xlu0 %4496
        %v4498 = vld [vmem:[%s4492] sm:$0xff]
        %v4499 = vld [vmem:[%s4492] sm:$0xff]
        %4500 = vrot.lane.b32.xlu0 %v4499, 1
        %v4501 = vpop.permute.xlu0 %4500
        %v4502 = vlaneseq
        %v4503 = vand.u32 %v4502, 127
        %vm4504 = vcmp.eq.s32.totalorder %v4503, 0
        %v4505 = vsel %vm4504, %v4499, %v4501
        %v4506 = vlaneseq
        %v4507 = vand.u32 %v4506, 127
        %vm4508 = vcmp.eq.s32.totalorder %v4507, 1
        %v4509 = vsel %vm4508, %v4497, %v4505
        %v4510 = vlaneseq
        %v4511 = vand.u32 %v4510, 127
        %vm4512 = vcmp.ge.s32.totalorder %v4511, 0
        %vm4513 = vcmp.lt.s32.totalorder %v4511, 128
        %vm4514 = vmand %vm4512, %vm4513
        %v4515 = vsel %vm4514, %v4509, 0.0
        %v4516 = vld [vmem:[%s4494] sm:$0xff]
        %4517 = vrot.lane.b32.xlu0 %v4516, 127
        %v4518 = vpop.permute.xlu0 %4517
        %v4519 = vlaneseq
        %v4520 = vand.u32 %v4519, 127
        %vm4521 = vcmp.eq.s32.totalorder %v4520, 127
        %v4522 = vsel %vm4521, %v4498, %v4518
        %s4523 = smov [#allocation17]
        %s4524 = scalar_lea.vmem %s4523, 56
        %s4525 = smov [#allocation18]
        %s4526 = scalar_lea.vmem %s4525, 56
        %v4527 = vld [vmem:[%s4526] sm:$0xff]
        %4528 = vrot.lane.b32.xlu0 %v4527, 1
        %v4529 = vpop.permute.xlu0 %4528
        %v4530 = vld [vmem:[%s4524] sm:$0xff]
        %v4531 = vld [vmem:[%s4524] sm:$0xff]
        %4532 = vrot.lane.b32.xlu0 %v4531, 1
        %v4533 = vpop.permute.xlu0 %4532
        %v4534 = vlaneseq
        %v4535 = vand.u32 %v4534, 127
        %vm4536 = vcmp.eq.s32.totalorder %v4535, 0
        %v4537 = vsel %vm4536, %v4531, %v4533
        %v4538 = vlaneseq
        %v4539 = vand.u32 %v4538, 127
        %vm4540 = vcmp.eq.s32.totalorder %v4539, 1
        %v4541 = vsel %vm4540, %v4529, %v4537
        %v4542 = vlaneseq
        %v4543 = vand.u32 %v4542, 127
        %vm4544 = vcmp.ge.s32.totalorder %v4543, 0
        %vm4545 = vcmp.lt.s32.totalorder %v4543, 128
        %vm4546 = vmand %vm4544, %vm4545
        %v4547 = vsel %vm4546, %v4541, 0.0
        %v4548 = vld [vmem:[%s4526] sm:$0xff]
        %4549 = vrot.lane.b32.xlu0 %v4548, 127
        %v4550 = vpop.permute.xlu0 %4549
        %v4551 = vlaneseq
        %v4552 = vand.u32 %v4551, 127
        %vm4553 = vcmp.eq.s32.totalorder %v4552, 127
        %v4554 = vsel %vm4553, %v4530, %v4550
        %s4555 = smov [#allocation17]
        %s4556 = scalar_lea.vmem %s4555, 64
        %s4557 = smov [#allocation18]
        %s4558 = scalar_lea.vmem %s4557, 64
        %v4559 = vld [vmem:[%s4558] sm:$0xff]
        %4560 = vrot.lane.b32.xlu0 %v4559, 1
        %v4561 = vpop.permute.xlu0 %4560
        %v4562 = vld [vmem:[%s4556] sm:$0xff]
        %v4563 = vld [vmem:[%s4556] sm:$0xff]
        %4564 = vrot.lane.b32.xlu0 %v4563, 1
        %v4565 = vpop.permute.xlu0 %4564
        %v4566 = vlaneseq
        %v4567 = vand.u32 %v4566, 127
        %vm4568 = vcmp.eq.s32.totalorder %v4567, 0
        %v4569 = vsel %vm4568, %v4563, %v4565
        %v4570 = vlaneseq
        %v4571 = vand.u32 %v4570, 127
        %vm4572 = vcmp.eq.s32.totalorder %v4571, 1
        %v4573 = vsel %vm4572, %v4561, %v4569
        %v4574 = vlaneseq
        %v4575 = vand.u32 %v4574, 127
        %vm4576 = vcmp.ge.s32.totalorder %v4575, 0
        %vm4577 = vcmp.lt.s32.totalorder %v4575, 128
        %vm4578 = vmand %vm4576, %vm4577
        %v4579 = vsel %vm4578, %v4573, 0.0
        %v4580 = vld [vmem:[%s4558] sm:$0xff]
        %4581 = vrot.lane.b32.xlu0 %v4580, 127
        %v4582 = vpop.permute.xlu0 %4581
        %v4583 = vlaneseq
        %v4584 = vand.u32 %v4583, 127
        %vm4585 = vcmp.eq.s32.totalorder %v4584, 127
        %v4586 = vsel %vm4585, %v4562, %v4582
        %s4587 = smov [#allocation17]
        %s4588 = scalar_lea.vmem %s4587, 72
        %s4589 = smov [#allocation18]
        %s4590 = scalar_lea.vmem %s4589, 72
        %v4591 = vld [vmem:[%s4590] sm:$0xff]
        %4592 = vrot.lane.b32.xlu0 %v4591, 1
        %v4593 = vpop.permute.xlu0 %4592
        %v4594 = vld [vmem:[%s4588] sm:$0xff]
        %v4595 = vld [vmem:[%s4588] sm:$0xff]
        %4596 = vrot.lane.b32.xlu0 %v4595, 1
        %v4597 = vpop.permute.xlu0 %4596
        %v4598 = vlaneseq
        %v4599 = vand.u32 %v4598, 127
        %vm4600 = vcmp.eq.s32.totalorder %v4599, 0
        %v4601 = vsel %vm4600, %v4595, %v4597
        %v4602 = vlaneseq
        %v4603 = vand.u32 %v4602, 127
        %vm4604 = vcmp.eq.s32.totalorder %v4603, 1
        %v4605 = vsel %vm4604, %v4593, %v4601
        %v4606 = vlaneseq
        %v4607 = vand.u32 %v4606, 127
        %vm4608 = vcmp.ge.s32.totalorder %v4607, 0
        %vm4609 = vcmp.lt.s32.totalorder %v4607, 128
        %vm4610 = vmand %vm4608, %vm4609
        %v4611 = vsel %vm4610, %v4605, 0.0
        %v4612 = vld [vmem:[%s4590] sm:$0xff]
        %4613 = vrot.lane.b32.xlu0 %v4612, 127
        %v4614 = vpop.permute.xlu0 %4613
        %v4615 = vlaneseq
        %v4616 = vand.u32 %v4615, 127
        %vm4617 = vcmp.eq.s32.totalorder %v4616, 127
        %v4618 = vsel %vm4617, %v4594, %v4614
        %s4619 = smov [#allocation17]
        %s4620 = scalar_lea.vmem %s4619, 80
        %s4621 = smov [#allocation18]
        %s4622 = scalar_lea.vmem %s4621, 80
        %v4623 = vld [vmem:[%s4622] sm:$0xff]
        %4624 = vrot.lane.b32.xlu0 %v4623, 1
        %v4625 = vpop.permute.xlu0 %4624
        %v4626 = vld [vmem:[%s4620] sm:$0xff]
        %v4627 = vld [vmem:[%s4620] sm:$0xff]
        %4628 = vrot.lane.b32.xlu0 %v4627, 1
        %v4629 = vpop.permute.xlu0 %4628
        %v4630 = vlaneseq
        %v4631 = vand.u32 %v4630, 127
        %vm4632 = vcmp.eq.s32.totalorder %v4631, 0
        %v4633 = vsel %vm4632, %v4627, %v4629
        %v4634 = vlaneseq
        %v4635 = vand.u32 %v4634, 127
        %vm4636 = vcmp.eq.s32.totalorder %v4635, 1
        %v4637 = vsel %vm4636, %v4625, %v4633
        %v4638 = vlaneseq
        %v4639 = vand.u32 %v4638, 127
        %vm4640 = vcmp.ge.s32.totalorder %v4639, 0
        %vm4641 = vcmp.lt.s32.totalorder %v4639, 128
        %vm4642 = vmand %vm4640, %vm4641
        %v4643 = vsel %vm4642, %v4637, 0.0
        %v4644 = vld [vmem:[%s4622] sm:$0xff]
        %4645 = vrot.lane.b32.xlu0 %v4644, 127
        %v4646 = vpop.permute.xlu0 %4645
        %v4647 = vlaneseq
        %v4648 = vand.u32 %v4647, 127
        %vm4649 = vcmp.eq.s32.totalorder %v4648, 127
        %v4650 = vsel %vm4649, %v4626, %v4646
        %s4651 = smov [#allocation17]
        %s4652 = scalar_lea.vmem %s4651, 88
        %s4653 = smov [#allocation18]
        %s4654 = scalar_lea.vmem %s4653, 88
        %v4655 = vld [vmem:[%s4654] sm:$0xff]
        %4656 = vrot.lane.b32.xlu0 %v4655, 1
        %v4657 = vpop.permute.xlu0 %4656
        %v4658 = vld [vmem:[%s4652] sm:$0xff]
        %v4659 = vld [vmem:[%s4652] sm:$0xff]
        %4660 = vrot.lane.b32.xlu0 %v4659, 1
        %v4661 = vpop.permute.xlu0 %4660
        %v4662 = vlaneseq
        %v4663 = vand.u32 %v4662, 127
        %vm4664 = vcmp.eq.s32.totalorder %v4663, 0
        %v4665 = vsel %vm4664, %v4659, %v4661
        %v4666 = vlaneseq
        %v4667 = vand.u32 %v4666, 127
        %vm4668 = vcmp.eq.s32.totalorder %v4667, 1
        %v4669 = vsel %vm4668, %v4657, %v4665
        %v4670 = vlaneseq
        %v4671 = vand.u32 %v4670, 127
        %vm4672 = vcmp.ge.s32.totalorder %v4671, 0
        %vm4673 = vcmp.lt.s32.totalorder %v4671, 128
        %vm4674 = vmand %vm4672, %vm4673
        %v4675 = vsel %vm4674, %v4669, 0.0
        %v4676 = vld [vmem:[%s4654] sm:$0xff]
        %4677 = vrot.lane.b32.xlu0 %v4676, 127
        %v4678 = vpop.permute.xlu0 %4677
        %v4679 = vlaneseq
        %v4680 = vand.u32 %v4679, 127
        %vm4681 = vcmp.eq.s32.totalorder %v4680, 127
        %v4682 = vsel %vm4681, %v4658, %v4678
        %s4683 = smov [#allocation17]
        %s4684 = scalar_lea.vmem %s4683, 96
        %s4685 = smov [#allocation18]
        %s4686 = scalar_lea.vmem %s4685, 96
        %v4687 = vld [vmem:[%s4686] sm:$0xff]
        %4688 = vrot.lane.b32.xlu0 %v4687, 1
        %v4689 = vpop.permute.xlu0 %4688
        %v4690 = vld [vmem:[%s4684] sm:$0xff]
        %v4691 = vld [vmem:[%s4684] sm:$0xff]
        %4692 = vrot.lane.b32.xlu0 %v4691, 1
        %v4693 = vpop.permute.xlu0 %4692
        %v4694 = vlaneseq
        %v4695 = vand.u32 %v4694, 127
        %vm4696 = vcmp.eq.s32.totalorder %v4695, 0
        %v4697 = vsel %vm4696, %v4691, %v4693
        %v4698 = vlaneseq
        %v4699 = vand.u32 %v4698, 127
        %vm4700 = vcmp.eq.s32.totalorder %v4699, 1
        %v4701 = vsel %vm4700, %v4689, %v4697
        %v4702 = vlaneseq
        %v4703 = vand.u32 %v4702, 127
        %vm4704 = vcmp.ge.s32.totalorder %v4703, 0
        %vm4705 = vcmp.lt.s32.totalorder %v4703, 128
        %vm4706 = vmand %vm4704, %vm4705
        %v4707 = vsel %vm4706, %v4701, 0.0
        %v4708 = vld [vmem:[%s4686] sm:$0xff]
        %4709 = vrot.lane.b32.xlu0 %v4708, 127
        %v4710 = vpop.permute.xlu0 %4709
        %v4711 = vlaneseq
        %v4712 = vand.u32 %v4711, 127
        %vm4713 = vcmp.eq.s32.totalorder %v4712, 127
        %v4714 = vsel %vm4713, %v4690, %v4710
        %s4715 = smov [#allocation17]
        %s4716 = scalar_lea.vmem %s4715, 104
        %s4717 = smov [#allocation18]
        %s4718 = scalar_lea.vmem %s4717, 104
        %v4719 = vld [vmem:[%s4718] sm:$0xff]
        %4720 = vrot.lane.b32.xlu0 %v4719, 1
        %v4721 = vpop.permute.xlu0 %4720
        %v4722 = vld [vmem:[%s4716] sm:$0xff]
        %v4723 = vld [vmem:[%s4716] sm:$0xff]
        %4724 = vrot.lane.b32.xlu0 %v4723, 1
        %v4725 = vpop.permute.xlu0 %4724
        %v4726 = vlaneseq
        %v4727 = vand.u32 %v4726, 127
        %vm4728 = vcmp.eq.s32.totalorder %v4727, 0
        %v4729 = vsel %vm4728, %v4723, %v4725
        %v4730 = vlaneseq
        %v4731 = vand.u32 %v4730, 127
        %vm4732 = vcmp.eq.s32.totalorder %v4731, 1
        %v4733 = vsel %vm4732, %v4721, %v4729
        %v4734 = vlaneseq
        %v4735 = vand.u32 %v4734, 127
        %vm4736 = vcmp.ge.s32.totalorder %v4735, 0
        %vm4737 = vcmp.lt.s32.totalorder %v4735, 128
        %vm4738 = vmand %vm4736, %vm4737
        %v4739 = vsel %vm4738, %v4733, 0.0
        %v4740 = vld [vmem:[%s4718] sm:$0xff]
        %4741 = vrot.lane.b32.xlu0 %v4740, 127
        %v4742 = vpop.permute.xlu0 %4741
        %v4743 = vlaneseq
        %v4744 = vand.u32 %v4743, 127
        %vm4745 = vcmp.eq.s32.totalorder %v4744, 127
        %v4746 = vsel %vm4745, %v4722, %v4742
        %s4747 = smov [#allocation17]
        %s4748 = scalar_lea.vmem %s4747, 112
        %s4749 = smov [#allocation18]
        %s4750 = scalar_lea.vmem %s4749, 112
        %v4751 = vld [vmem:[%s4750] sm:$0xff]
        %4752 = vrot.lane.b32.xlu0 %v4751, 1
        %v4753 = vpop.permute.xlu0 %4752
        %v4754 = vld [vmem:[%s4748] sm:$0xff]
        %v4755 = vld [vmem:[%s4748] sm:$0xff]
        %4756 = vrot.lane.b32.xlu0 %v4755, 1
        %v4757 = vpop.permute.xlu0 %4756
        %v4758 = vlaneseq
        %v4759 = vand.u32 %v4758, 127
        %vm4760 = vcmp.eq.s32.totalorder %v4759, 0
        %v4761 = vsel %vm4760, %v4755, %v4757
        %v4762 = vlaneseq
        %v4763 = vand.u32 %v4762, 127
        %vm4764 = vcmp.eq.s32.totalorder %v4763, 1
        %v4765 = vsel %vm4764, %v4753, %v4761
        %v4766 = vlaneseq
        %v4767 = vand.u32 %v4766, 127
        %vm4768 = vcmp.ge.s32.totalorder %v4767, 0
        %vm4769 = vcmp.lt.s32.totalorder %v4767, 128
        %vm4770 = vmand %vm4768, %vm4769
        %v4771 = vsel %vm4770, %v4765, 0.0
        %v4772 = vld [vmem:[%s4750] sm:$0xff]
        %4773 = vrot.lane.b32.xlu0 %v4772, 127
        %v4774 = vpop.permute.xlu0 %4773
        %v4775 = vlaneseq
        %v4776 = vand.u32 %v4775, 127
        %vm4777 = vcmp.eq.s32.totalorder %v4776, 127
        %v4778 = vsel %vm4777, %v4754, %v4774
        %s4779 = smov [#allocation17]
        %s4780 = scalar_lea.vmem %s4779, 120
        %s4781 = smov [#allocation18]
        %s4782 = scalar_lea.vmem %s4781, 120
        %v4783 = vld [vmem:[%s4782] sm:$0xff]
        %4784 = vrot.lane.b32.xlu0 %v4783, 1
        %v4785 = vpop.permute.xlu0 %4784
        %v4786 = vld [vmem:[%s4780] sm:$0xff]
        %v4787 = vld [vmem:[%s4780] sm:$0xff]
        %4788 = vrot.lane.b32.xlu0 %v4787, 1
        %v4789 = vpop.permute.xlu0 %4788
        %v4790 = vlaneseq
        %v4791 = vand.u32 %v4790, 127
        %vm4792 = vcmp.eq.s32.totalorder %v4791, 0
        %v4793 = vsel %vm4792, %v4787, %v4789
        %v4794 = vlaneseq
        %v4795 = vand.u32 %v4794, 127
        %vm4796 = vcmp.eq.s32.totalorder %v4795, 1
        %v4797 = vsel %vm4796, %v4785, %v4793
        %v4798 = vlaneseq
        %v4799 = vand.u32 %v4798, 127
        %vm4800 = vcmp.ge.s32.totalorder %v4799, 0
        %vm4801 = vcmp.lt.s32.totalorder %v4799, 128
        %vm4802 = vmand %vm4800, %vm4801
        %v4803 = vsel %vm4802, %v4797, 0.0
        %v4804 = vld [vmem:[%s4782] sm:$0xff]
        %4805 = vrot.lane.b32.xlu0 %v4804, 127
        %v4806 = vpop.permute.xlu0 %4805
        %v4807 = vlaneseq
        %v4808 = vand.u32 %v4807, 127
        %vm4809 = vcmp.eq.s32.totalorder %v4808, 127
        %v4810 = vsel %vm4809, %v4786, %v4806
        %4811 = vst [vmem:[%s4301] sm:$0xff] %v4323
        %4812 = vst [vmem:[%s4302] sm:$0xff] %v4330
        %4813 = vst [vmem:[%s4332] sm:$0xff] %v4355
        %4814 = vst [vmem:[%s4334] sm:$0xff] %v4362
        %4815 = vst [vmem:[%s4364] sm:$0xff] %v4387
        %4816 = vst [vmem:[%s4366] sm:$0xff] %v4394
        %4817 = vst [vmem:[%s4396] sm:$0xff] %v4419
        %4818 = vst [vmem:[%s4398] sm:$0xff] %v4426
        %4819 = vst [vmem:[%s4428] sm:$0xff] %v4451
        %4820 = vst [vmem:[%s4430] sm:$0xff] %v4458
        %4821 = vst [vmem:[%s4460] sm:$0xff] %v4483
        %4822 = vst [vmem:[%s4462] sm:$0xff] %v4490
        %4823 = vst [vmem:[%s4492] sm:$0xff] %v4515
        %4824 = vst [vmem:[%s4494] sm:$0xff] %v4522
        %4825 = vst [vmem:[%s4524] sm:$0xff] %v4547
        %4826 = vst [vmem:[%s4526] sm:$0xff] %v4554
        %4827 = vst [vmem:[%s4556] sm:$0xff] %v4579
        %4828 = vst [vmem:[%s4558] sm:$0xff] %v4586
        %4829 = vst [vmem:[%s4588] sm:$0xff] %v4611
        %4830 = vst [vmem:[%s4590] sm:$0xff] %v4618
        %4831 = vst [vmem:[%s4620] sm:$0xff] %v4643
        %4832 = vst [vmem:[%s4622] sm:$0xff] %v4650
        %4833 = vst [vmem:[%s4652] sm:$0xff] %v4675
        %4834 = vst [vmem:[%s4654] sm:$0xff] %v4682
        %4835 = vst [vmem:[%s4684] sm:$0xff] %v4707
        %4836 = vst [vmem:[%s4686] sm:$0xff] %v4714
        %4837 = vst [vmem:[%s4716] sm:$0xff] %v4739
        %4838 = vst [vmem:[%s4718] sm:$0xff] %v4746
        %4839 = vst [vmem:[%s4748] sm:$0xff] %v4771
        %4840 = vst [vmem:[%s4750] sm:$0xff] %v4778
        %4841 = vst [vmem:[%s4780] sm:$0xff] %v4803
        %4842 = vst [vmem:[%s4782] sm:$0xff] %v4810
        %s4843 = smov [#allocation15]
        %s4844 = smov [#allocation17]
        %v4845 = vld [vmem:[%s4843] ss:$0 sm:$0xff]
        %s4847 = scalar_lea.vmem %s4843, 4294967295
        %v4848 = vld [vmem:[%s4847] sm:$0xfe]
        %v4849 = vlaneseq
        %v4850 = vshrl.u32 %v4849, 7
        %vm4851 = vcmp.eq.s32.totalorder %v4850, 0
        %v4852 = vsel %vm4851, %v4845, %v4848
        %s4853 = scalar_lea.vmem %s4843, 7
        %v4854 = vld [vmem:[%s4853] ss:$0 sm:$0xff]
        %4855 = vst [vmem:[%s4843] sm:$0xff] %v4852
        %s4856 = scalar_lea.vmem %s4843, 8
        %s4858 = scalar_lea.vmem %s4856, 4294967295
        %v4859 = vld [vmem:[%s4858] sm:$0xfe]
        %v4860 = vlaneseq
        %v4861 = vshrl.u32 %v4860, 7
        %vm4862 = vcmp.eq.s32.totalorder %v4861, 0
        %v4863 = vsel %vm4862, %v4854, %v4859
        %s4864 = scalar_lea.vmem %s4856, 7
        %v4865 = vld [vmem:[%s4864] ss:$0 sm:$0xff]
        %4866 = vst [vmem:[%s4856] sm:$0xff] %v4863
        %s4867 = scalar_lea.vmem %s4843, 16
        %s4869 = scalar_lea.vmem %s4867, 4294967295
        %v4870 = vld [vmem:[%s4869] sm:$0xfe]
        %v4871 = vlaneseq
        %v4872 = vshrl.u32 %v4871, 7
        %vm4873 = vcmp.eq.s32.totalorder %v4872, 0
        %v4874 = vsel %vm4873, %v4865, %v4870
        %s4875 = scalar_lea.vmem %s4867, 7
        %v4876 = vld [vmem:[%s4875] ss:$0 sm:$0xff]
        %4877 = vst [vmem:[%s4867] sm:$0xff] %v4874
        %s4878 = scalar_lea.vmem %s4843, 24
        %s4880 = scalar_lea.vmem %s4878, 4294967295
        %v4881 = vld [vmem:[%s4880] sm:$0xfe]
        %v4882 = vlaneseq
        %v4883 = vshrl.u32 %v4882, 7
        %vm4884 = vcmp.eq.s32.totalorder %v4883, 0
        %v4885 = vsel %vm4884, %v4876, %v4881
        %s4886 = scalar_lea.vmem %s4878, 7
        %v4887 = vld [vmem:[%s4886] ss:$0 sm:$0xff]
        %4888 = vst [vmem:[%s4878] sm:$0xff] %v4885
        %s4889 = scalar_lea.vmem %s4843, 32
        %s4891 = scalar_lea.vmem %s4889, 4294967295
        %v4892 = vld [vmem:[%s4891] sm:$0xfe]
        %v4893 = vlaneseq
        %v4894 = vshrl.u32 %v4893, 7
        %vm4895 = vcmp.eq.s32.totalorder %v4894, 0
        %v4896 = vsel %vm4895, %v4887, %v4892
        %s4897 = scalar_lea.vmem %s4889, 7
        %v4898 = vld [vmem:[%s4897] ss:$0 sm:$0xff]
        %4899 = vst [vmem:[%s4889] sm:$0xff] %v4896
        %s4900 = scalar_lea.vmem %s4843, 40
        %s4902 = scalar_lea.vmem %s4900, 4294967295
        %v4903 = vld [vmem:[%s4902] sm:$0xfe]
        %v4904 = vlaneseq
        %v4905 = vshrl.u32 %v4904, 7
        %vm4906 = vcmp.eq.s32.totalorder %v4905, 0
        %v4907 = vsel %vm4906, %v4898, %v4903
        %s4908 = scalar_lea.vmem %s4900, 7
        %v4909 = vld [vmem:[%s4908] ss:$0 sm:$0xff]
        %4910 = vst [vmem:[%s4900] sm:$0xff] %v4907
        %s4911 = scalar_lea.vmem %s4843, 48
        %s4913 = scalar_lea.vmem %s4911, 4294967295
        %v4914 = vld [vmem:[%s4913] sm:$0xfe]
        %v4915 = vlaneseq
        %v4916 = vshrl.u32 %v4915, 7
        %vm4917 = vcmp.eq.s32.totalorder %v4916, 0
        %v4918 = vsel %vm4917, %v4909, %v4914
        %s4919 = scalar_lea.vmem %s4911, 7
        %v4920 = vld [vmem:[%s4919] ss:$0 sm:$0xff]
        %4921 = vst [vmem:[%s4911] sm:$0xff] %v4918
        %s4922 = scalar_lea.vmem %s4843, 56
        %s4924 = scalar_lea.vmem %s4922, 4294967295
        %v4925 = vld [vmem:[%s4924] sm:$0xfe]
        %v4926 = vlaneseq
        %v4927 = vshrl.u32 %v4926, 7
        %vm4928 = vcmp.eq.s32.totalorder %v4927, 0
        %v4929 = vsel %vm4928, %v4920, %v4925
        %s4930 = scalar_lea.vmem %s4922, 7
        %v4931 = vld [vmem:[%s4930] ss:$0 sm:$0xff]
        %4932 = vst [vmem:[%s4922] sm:$0xff] %v4929
        %s4933 = scalar_lea.vmem %s4843, 64
        %s4935 = scalar_lea.vmem %s4933, 4294967295
        %v4936 = vld [vmem:[%s4935] sm:$0xfe]
        %v4937 = vlaneseq
        %v4938 = vshrl.u32 %v4937, 7
        %vm4939 = vcmp.eq.s32.totalorder %v4938, 0
        %v4940 = vsel %vm4939, %v4931, %v4936
        %s4941 = scalar_lea.vmem %s4933, 7
        %v4942 = vld [vmem:[%s4941] ss:$0 sm:$0xff]
        %4943 = vst [vmem:[%s4933] sm:$0xff] %v4940
        %s4944 = scalar_lea.vmem %s4843, 72
        %s4946 = scalar_lea.vmem %s4944, 4294967295
        %v4947 = vld [vmem:[%s4946] sm:$0xfe]
        %v4948 = vlaneseq
        %v4949 = vshrl.u32 %v4948, 7
        %vm4950 = vcmp.eq.s32.totalorder %v4949, 0
        %v4951 = vsel %vm4950, %v4942, %v4947
        %s4952 = scalar_lea.vmem %s4944, 7
        %v4953 = vld [vmem:[%s4952] ss:$0 sm:$0xff]
        %4954 = vst [vmem:[%s4944] sm:$0xff] %v4951
        %s4955 = scalar_lea.vmem %s4843, 80
        %s4957 = scalar_lea.vmem %s4955, 4294967295
        %v4958 = vld [vmem:[%s4957] sm:$0xfe]
        %v4959 = vlaneseq
        %v4960 = vshrl.u32 %v4959, 7
        %vm4961 = vcmp.eq.s32.totalorder %v4960, 0
        %v4962 = vsel %vm4961, %v4953, %v4958
        %s4963 = scalar_lea.vmem %s4955, 7
        %v4964 = vld [vmem:[%s4963] ss:$0 sm:$0xff]
        %4965 = vst [vmem:[%s4955] sm:$0xff] %v4962
        %s4966 = scalar_lea.vmem %s4843, 88
        %s4968 = scalar_lea.vmem %s4966, 4294967295
        %v4969 = vld [vmem:[%s4968] sm:$0xfe]
        %v4970 = vlaneseq
        %v4971 = vshrl.u32 %v4970, 7
        %vm4972 = vcmp.eq.s32.totalorder %v4971, 0
        %v4973 = vsel %vm4972, %v4964, %v4969
        %s4974 = scalar_lea.vmem %s4966, 7
        %v4975 = vld [vmem:[%s4974] ss:$0 sm:$0xff]
        %4976 = vst [vmem:[%s4966] sm:$0xff] %v4973
        %s4977 = scalar_lea.vmem %s4843, 96
        %s4979 = scalar_lea.vmem %s4977, 4294967295
        %v4980 = vld [vmem:[%s4979] sm:$0xfe]
        %v4981 = vlaneseq
        %v4982 = vshrl.u32 %v4981, 7
        %vm4983 = vcmp.eq.s32.totalorder %v4982, 0
        %v4984 = vsel %vm4983, %v4975, %v4980
        %s4985 = scalar_lea.vmem %s4977, 7
        %v4986 = vld [vmem:[%s4985] ss:$0 sm:$0xff]
        %4987 = vst [vmem:[%s4977] sm:$0xff] %v4984
        %s4988 = scalar_lea.vmem %s4843, 104
        %s4990 = scalar_lea.vmem %s4988, 4294967295
        %v4991 = vld [vmem:[%s4990] sm:$0xfe]
        %v4992 = vlaneseq
        %v4993 = vshrl.u32 %v4992, 7
        %vm4994 = vcmp.eq.s32.totalorder %v4993, 0
        %v4995 = vsel %vm4994, %v4986, %v4991
        %s4996 = scalar_lea.vmem %s4988, 7
        %v4997 = vld [vmem:[%s4996] ss:$0 sm:$0xff]
        %4998 = vst [vmem:[%s4988] sm:$0xff] %v4995
        %s4999 = scalar_lea.vmem %s4843, 112
        %s5001 = scalar_lea.vmem %s4999, 4294967295
        %v5002 = vld [vmem:[%s5001] sm:$0xfe]
        %v5003 = vlaneseq
        %v5004 = vshrl.u32 %v5003, 7
        %vm5005 = vcmp.eq.s32.totalorder %v5004, 0
        %v5006 = vsel %vm5005, %v4997, %v5002
        %s5007 = scalar_lea.vmem %s4999, 7
        %v5008 = vld [vmem:[%s5007] ss:$0 sm:$0xff]
        %5009 = vst [vmem:[%s4999] sm:$0xff] %v5006
        %s5010 = scalar_lea.vmem %s4843, 120
        %s5012 = scalar_lea.vmem %s5010, 4294967295
        %v5013 = vld [vmem:[%s5012] sm:$0xfe]
        %v5014 = vlaneseq
        %v5015 = vshrl.u32 %v5014, 7
        %vm5016 = vcmp.eq.s32.totalorder %v5015, 0
        %v5017 = vsel %vm5016, %v5008, %v5013
        %s5018 = scalar_lea.vmem %s5010, 7
        %v5019 = vld [vmem:[%s5018] ss:$0 sm:$0xff]
        %5020 = vst [vmem:[%s5010] sm:$0xff] %v5017
        %v5021 = vld [vmem:[%s4844] ss:$0 sm:$0xff]
        %s5022 = scalar_lea.vmem %s4843, 1
        %5023 = vst [vmem:[%s5022] sm:$0x1] %v5021
        %s5024 = scalar_lea.vmem %s4844, 120
        %s5025 = scalar_lea.vmem %s5024, 1
        %v5026 = vld [vmem:[%s5025] sm:$0x7f]
        %v5027 = vlaneseq
        %v5028 = vshrl.u32 %v5027, 7
        %vm5029 = vcmp.eq.s32.totalorder %v5028, 7
        %v5030 = vsel %vm5029, %v5019, %v5026
        %v5031 = vld [vmem:[%s5024] ss:$0 sm:$0xff]
        %5032 = vst [vmem:[%s5024] sm:$0xff] %v5030
        %s5033 = scalar_lea.vmem %s4844, 112
        %s5034 = scalar_lea.vmem %s5033, 1
        %v5035 = vld [vmem:[%s5034] sm:$0x7f]
        %v5036 = vlaneseq
        %v5037 = vshrl.u32 %v5036, 7
        %vm5038 = vcmp.eq.s32.totalorder %v5037, 7
        %v5039 = vsel %vm5038, %v5031, %v5035
        %v5040 = vld [vmem:[%s5033] ss:$0 sm:$0xff]
        %5041 = vst [vmem:[%s5033] sm:$0xff] %v5039
        %s5042 = scalar_lea.vmem %s4844, 104
        %s5043 = scalar_lea.vmem %s5042, 1
        %v5044 = vld [vmem:[%s5043] sm:$0x7f]
        %v5045 = vlaneseq
        %v5046 = vshrl.u32 %v5045, 7
        %vm5047 = vcmp.eq.s32.totalorder %v5046, 7
        %v5048 = vsel %vm5047, %v5040, %v5044
        %v5049 = vld [vmem:[%s5042] ss:$0 sm:$0xff]
        %5050 = vst [vmem:[%s5042] sm:$0xff] %v5048
        %s5051 = scalar_lea.vmem %s4844, 96
        %s5052 = scalar_lea.vmem %s5051, 1
        %v5053 = vld [vmem:[%s5052] sm:$0x7f]
        %v5054 = vlaneseq
        %v5055 = vshrl.u32 %v5054, 7
        %vm5056 = vcmp.eq.s32.totalorder %v5055, 7
        %v5057 = vsel %vm5056, %v5049, %v5053
        %v5058 = vld [vmem:[%s5051] ss:$0 sm:$0xff]
        %5059 = vst [vmem:[%s5051] sm:$0xff] %v5057
        %s5060 = scalar_lea.vmem %s4844, 88
        %s5061 = scalar_lea.vmem %s5060, 1
        %v5062 = vld [vmem:[%s5061] sm:$0x7f]
        %v5063 = vlaneseq
        %v5064 = vshrl.u32 %v5063, 7
        %vm5065 = vcmp.eq.s32.totalorder %v5064, 7
        %v5066 = vsel %vm5065, %v5058, %v5062
        %v5067 = vld [vmem:[%s5060] ss:$0 sm:$0xff]
        %5068 = vst [vmem:[%s5060] sm:$0xff] %v5066
        %s5069 = scalar_lea.vmem %s4844, 80
        %s5070 = scalar_lea.vmem %s5069, 1
        %v5071 = vld [vmem:[%s5070] sm:$0x7f]
        %v5072 = vlaneseq
        %v5073 = vshrl.u32 %v5072, 7
        %vm5074 = vcmp.eq.s32.totalorder %v5073, 7
        %v5075 = vsel %vm5074, %v5067, %v5071
        %v5076 = vld [vmem:[%s5069] ss:$0 sm:$0xff]
        %5077 = vst [vmem:[%s5069] sm:$0xff] %v5075
        %s5078 = scalar_lea.vmem %s4844, 72
        %s5079 = scalar_lea.vmem %s5078, 1
        %v5080 = vld [vmem:[%s5079] sm:$0x7f]
        %v5081 = vlaneseq
        %v5082 = vshrl.u32 %v5081, 7
        %vm5083 = vcmp.eq.s32.totalorder %v5082, 7
        %v5084 = vsel %vm5083, %v5076, %v5080
        %v5085 = vld [vmem:[%s5078] ss:$0 sm:$0xff]
        %5086 = vst [vmem:[%s5078] sm:$0xff] %v5084
        %s5087 = scalar_lea.vmem %s4844, 64
        %s5088 = scalar_lea.vmem %s5087, 1
        %v5089 = vld [vmem:[%s5088] sm:$0x7f]
        %v5090 = vlaneseq
        %v5091 = vshrl.u32 %v5090, 7
        %vm5092 = vcmp.eq.s32.totalorder %v5091, 7
        %v5093 = vsel %vm5092, %v5085, %v5089
        %v5094 = vld [vmem:[%s5087] ss:$0 sm:$0xff]
        %5095 = vst [vmem:[%s5087] sm:$0xff] %v5093
        %s5096 = scalar_lea.vmem %s4844, 56
        %s5097 = scalar_lea.vmem %s5096, 1
        %v5098 = vld [vmem:[%s5097] sm:$0x7f]
        %v5099 = vlaneseq
        %v5100 = vshrl.u32 %v5099, 7
        %vm5101 = vcmp.eq.s32.totalorder %v5100, 7
        %v5102 = vsel %vm5101, %v5094, %v5098
        %v5103 = vld [vmem:[%s5096] ss:$0 sm:$0xff]
        %5104 = vst [vmem:[%s5096] sm:$0xff] %v5102
        %s5105 = scalar_lea.vmem %s4844, 48
        %s5106 = scalar_lea.vmem %s5105, 1
        %v5107 = vld [vmem:[%s5106] sm:$0x7f]
        %v5108 = vlaneseq
        %v5109 = vshrl.u32 %v5108, 7
        %vm5110 = vcmp.eq.s32.totalorder %v5109, 7
        %v5111 = vsel %vm5110, %v5103, %v5107
        %v5112 = vld [vmem:[%s5105] ss:$0 sm:$0xff]
        %5113 = vst [vmem:[%s5105] sm:$0xff] %v5111
        %s5114 = scalar_lea.vmem %s4844, 40
        %s5115 = scalar_lea.vmem %s5114, 1
        %v5116 = vld [vmem:[%s5115] sm:$0x7f]
        %v5117 = vlaneseq
        %v5118 = vshrl.u32 %v5117, 7
        %vm5119 = vcmp.eq.s32.totalorder %v5118, 7
        %v5120 = vsel %vm5119, %v5112, %v5116
        %v5121 = vld [vmem:[%s5114] ss:$0 sm:$0xff]
        %5122 = vst [vmem:[%s5114] sm:$0xff] %v5120
        %s5123 = scalar_lea.vmem %s4844, 32
        %s5124 = scalar_lea.vmem %s5123, 1
        %v5125 = vld [vmem:[%s5124] sm:$0x7f]
        %v5126 = vlaneseq
        %v5127 = vshrl.u32 %v5126, 7
        %vm5128 = vcmp.eq.s32.totalorder %v5127, 7
        %v5129 = vsel %vm5128, %v5121, %v5125
        %v5130 = vld [vmem:[%s5123] ss:$0 sm:$0xff]
        %5131 = vst [vmem:[%s5123] sm:$0xff] %v5129
        %s5132 = scalar_lea.vmem %s4844, 24
        %s5133 = scalar_lea.vmem %s5132, 1
        %v5134 = vld [vmem:[%s5133] sm:$0x7f]
        %v5135 = vlaneseq
        %v5136 = vshrl.u32 %v5135, 7
        %vm5137 = vcmp.eq.s32.totalorder %v5136, 7
        %v5138 = vsel %vm5137, %v5130, %v5134
        %v5139 = vld [vmem:[%s5132] ss:$0 sm:$0xff]
        %5140 = vst [vmem:[%s5132] sm:$0xff] %v5138
        %s5141 = scalar_lea.vmem %s4844, 16
        %s5142 = scalar_lea.vmem %s5141, 1
        %v5143 = vld [vmem:[%s5142] sm:$0x7f]
        %v5144 = vlaneseq
        %v5145 = vshrl.u32 %v5144, 7
        %vm5146 = vcmp.eq.s32.totalorder %v5145, 7
        %v5147 = vsel %vm5146, %v5139, %v5143
        %v5148 = vld [vmem:[%s5141] ss:$0 sm:$0xff]
        %5149 = vst [vmem:[%s5141] sm:$0xff] %v5147
        %s5150 = scalar_lea.vmem %s4844, 8
        %s5151 = scalar_lea.vmem %s5150, 1
        %v5152 = vld [vmem:[%s5151] sm:$0x7f]
        %v5153 = vlaneseq
        %v5154 = vshrl.u32 %v5153, 7
        %vm5155 = vcmp.eq.s32.totalorder %v5154, 7
        %v5156 = vsel %vm5155, %v5148, %v5152
        %v5157 = vld [vmem:[%s5150] ss:$0 sm:$0xff]
        %5158 = vst [vmem:[%s5150] sm:$0xff] %v5156
        %s5159 = scalar_lea.vmem %s4844, 1
        %v5160 = vld [vmem:[%s5159] sm:$0x7f]
        %v5161 = vlaneseq
        %v5162 = vshrl.u32 %v5161, 7
        %vm5163 = vcmp.eq.s32.totalorder %v5162, 7
        %v5164 = vsel %vm5163, %v5157, %v5160
        %v5165 = vld [vmem:[%s4844] ss:$0 sm:$0xff]
        %5166 = vst [vmem:[%s4844] sm:$0xff] %v5164
        %s5167 = smov [#allocation16]
        %s5168 = smov [#allocation18]
        %v5169 = vld [vmem:[%s5167] ss:$0 sm:$0xff]
        %s5171 = scalar_lea.vmem %s5167, 4294967295
        %v5172 = vld [vmem:[%s5171] sm:$0xfe]
        %v5173 = vlaneseq
        %v5174 = vshrl.u32 %v5173, 7
        %vm5175 = vcmp.eq.s32.totalorder %v5174, 0
        %v5176 = vsel %vm5175, %v5169, %v5172
        %s5177 = scalar_lea.vmem %s5167, 7
        %v5178 = vld [vmem:[%s5177] ss:$0 sm:$0xff]
        %5179 = vst [vmem:[%s5167] sm:$0xff] %v5176
        %s5180 = scalar_lea.vmem %s5167, 8
        %s5182 = scalar_lea.vmem %s5180, 4294967295
        %v5183 = vld [vmem:[%s5182] sm:$0xfe]
        %v5184 = vlaneseq
        %v5185 = vshrl.u32 %v5184, 7
        %vm5186 = vcmp.eq.s32.totalorder %v5185, 0
        %v5187 = vsel %vm5186, %v5178, %v5183
        %s5188 = scalar_lea.vmem %s5180, 7
        %v5189 = vld [vmem:[%s5188] ss:$0 sm:$0xff]
        %5190 = vst [vmem:[%s5180] sm:$0xff] %v5187
        %s5191 = scalar_lea.vmem %s5167, 16
        %s5193 = scalar_lea.vmem %s5191, 4294967295
        %v5194 = vld [vmem:[%s5193] sm:$0xfe]
        %v5195 = vlaneseq
        %v5196 = vshrl.u32 %v5195, 7
        %vm5197 = vcmp.eq.s32.totalorder %v5196, 0
        %v5198 = vsel %vm5197, %v5189, %v5194
        %s5199 = scalar_lea.vmem %s5191, 7
        %v5200 = vld [vmem:[%s5199] ss:$0 sm:$0xff]
        %5201 = vst [vmem:[%s5191] sm:$0xff] %v5198
        %s5202 = scalar_lea.vmem %s5167, 24
        %s5204 = scalar_lea.vmem %s5202, 4294967295
        %v5205 = vld [vmem:[%s5204] sm:$0xfe]
        %v5206 = vlaneseq
        %v5207 = vshrl.u32 %v5206, 7
        %vm5208 = vcmp.eq.s32.totalorder %v5207, 0
        %v5209 = vsel %vm5208, %v5200, %v5205
        %s5210 = scalar_lea.vmem %s5202, 7
        %v5211 = vld [vmem:[%s5210] ss:$0 sm:$0xff]
        %5212 = vst [vmem:[%s5202] sm:$0xff] %v5209
        %s5213 = scalar_lea.vmem %s5167, 32
        %s5215 = scalar_lea.vmem %s5213, 4294967295
        %v5216 = vld [vmem:[%s5215] sm:$0xfe]
        %v5217 = vlaneseq
        %v5218 = vshrl.u32 %v5217, 7
        %vm5219 = vcmp.eq.s32.totalorder %v5218, 0
        %v5220 = vsel %vm5219, %v5211, %v5216
        %s5221 = scalar_lea.vmem %s5213, 7
        %v5222 = vld [vmem:[%s5221] ss:$0 sm:$0xff]
        %5223 = vst [vmem:[%s5213] sm:$0xff] %v5220
        %s5224 = scalar_lea.vmem %s5167, 40
        %s5226 = scalar_lea.vmem %s5224, 4294967295
        %v5227 = vld [vmem:[%s5226] sm:$0xfe]
        %v5228 = vlaneseq
        %v5229 = vshrl.u32 %v5228, 7
        %vm5230 = vcmp.eq.s32.totalorder %v5229, 0
        %v5231 = vsel %vm5230, %v5222, %v5227
        %s5232 = scalar_lea.vmem %s5224, 7
        %v5233 = vld [vmem:[%s5232] ss:$0 sm:$0xff]
        %5234 = vst [vmem:[%s5224] sm:$0xff] %v5231
        %s5235 = scalar_lea.vmem %s5167, 48
        %s5237 = scalar_lea.vmem %s5235, 4294967295
        %v5238 = vld [vmem:[%s5237] sm:$0xfe]
        %v5239 = vlaneseq
        %v5240 = vshrl.u32 %v5239, 7
        %vm5241 = vcmp.eq.s32.totalorder %v5240, 0
        %v5242 = vsel %vm5241, %v5233, %v5238
        %s5243 = scalar_lea.vmem %s5235, 7
        %v5244 = vld [vmem:[%s5243] ss:$0 sm:$0xff]
        %5245 = vst [vmem:[%s5235] sm:$0xff] %v5242
        %s5246 = scalar_lea.vmem %s5167, 56
        %s5248 = scalar_lea.vmem %s5246, 4294967295
        %v5249 = vld [vmem:[%s5248] sm:$0xfe]
        %v5250 = vlaneseq
        %v5251 = vshrl.u32 %v5250, 7
        %vm5252 = vcmp.eq.s32.totalorder %v5251, 0
        %v5253 = vsel %vm5252, %v5244, %v5249
        %s5254 = scalar_lea.vmem %s5246, 7
        %v5255 = vld [vmem:[%s5254] ss:$0 sm:$0xff]
        %5256 = vst [vmem:[%s5246] sm:$0xff] %v5253
        %s5257 = scalar_lea.vmem %s5167, 64
        %s5259 = scalar_lea.vmem %s5257, 4294967295
        %v5260 = vld [vmem:[%s5259] sm:$0xfe]
        %v5261 = vlaneseq
        %v5262 = vshrl.u32 %v5261, 7
        %vm5263 = vcmp.eq.s32.totalorder %v5262, 0
        %v5264 = vsel %vm5263, %v5255, %v5260
        %s5265 = scalar_lea.vmem %s5257, 7
        %v5266 = vld [vmem:[%s5265] ss:$0 sm:$0xff]
        %5267 = vst [vmem:[%s5257] sm:$0xff] %v5264
        %s5268 = scalar_lea.vmem %s5167, 72
        %s5270 = scalar_lea.vmem %s5268, 4294967295
        %v5271 = vld [vmem:[%s5270] sm:$0xfe]
        %v5272 = vlaneseq
        %v5273 = vshrl.u32 %v5272, 7
        %vm5274 = vcmp.eq.s32.totalorder %v5273, 0
        %v5275 = vsel %vm5274, %v5266, %v5271
        %s5276 = scalar_lea.vmem %s5268, 7
        %v5277 = vld [vmem:[%s5276] ss:$0 sm:$0xff]
        %5278 = vst [vmem:[%s5268] sm:$0xff] %v5275
        %s5279 = scalar_lea.vmem %s5167, 80
        %s5281 = scalar_lea.vmem %s5279, 4294967295
        %v5282 = vld [vmem:[%s5281] sm:$0xfe]
        %v5283 = vlaneseq
        %v5284 = vshrl.u32 %v5283, 7
        %vm5285 = vcmp.eq.s32.totalorder %v5284, 0
        %v5286 = vsel %vm5285, %v5277, %v5282
        %s5287 = scalar_lea.vmem %s5279, 7
        %v5288 = vld [vmem:[%s5287] ss:$0 sm:$0xff]
        %5289 = vst [vmem:[%s5279] sm:$0xff] %v5286
        %s5290 = scalar_lea.vmem %s5167, 88
        %s5292 = scalar_lea.vmem %s5290, 4294967295
        %v5293 = vld [vmem:[%s5292] sm:$0xfe]
        %v5294 = vlaneseq
        %v5295 = vshrl.u32 %v5294, 7
        %vm5296 = vcmp.eq.s32.totalorder %v5295, 0
        %v5297 = vsel %vm5296, %v5288, %v5293
        %s5298 = scalar_lea.vmem %s5290, 7
        %v5299 = vld [vmem:[%s5298] ss:$0 sm:$0xff]
        %5300 = vst [vmem:[%s5290] sm:$0xff] %v5297
        %s5301 = scalar_lea.vmem %s5167, 96
        %s5303 = scalar_lea.vmem %s5301, 4294967295
        %v5304 = vld [vmem:[%s5303] sm:$0xfe]
        %v5305 = vlaneseq
        %v5306 = vshrl.u32 %v5305, 7
        %vm5307 = vcmp.eq.s32.totalorder %v5306, 0
        %v5308 = vsel %vm5307, %v5299, %v5304
        %s5309 = scalar_lea.vmem %s5301, 7
        %v5310 = vld [vmem:[%s5309] ss:$0 sm:$0xff]
        %5311 = vst [vmem:[%s5301] sm:$0xff] %v5308
        %s5312 = scalar_lea.vmem %s5167, 104
        %s5314 = scalar_lea.vmem %s5312, 4294967295
        %v5315 = vld [vmem:[%s5314] sm:$0xfe]
        %v5316 = vlaneseq
        %v5317 = vshrl.u32 %v5316, 7
        %vm5318 = vcmp.eq.s32.totalorder %v5317, 0
        %v5319 = vsel %vm5318, %v5310, %v5315
        %s5320 = scalar_lea.vmem %s5312, 7
        %v5321 = vld [vmem:[%s5320] ss:$0 sm:$0xff]
        %5322 = vst [vmem:[%s5312] sm:$0xff] %v5319
        %s5323 = scalar_lea.vmem %s5167, 112
        %s5325 = scalar_lea.vmem %s5323, 4294967295
        %v5326 = vld [vmem:[%s5325] sm:$0xfe]
        %v5327 = vlaneseq
        %v5328 = vshrl.u32 %v5327, 7
        %vm5329 = vcmp.eq.s32.totalorder %v5328, 0
        %v5330 = vsel %vm5329, %v5321, %v5326
        %s5331 = scalar_lea.vmem %s5323, 7
        %v5332 = vld [vmem:[%s5331] ss:$0 sm:$0xff]
        %5333 = vst [vmem:[%s5323] sm:$0xff] %v5330
        %s5334 = scalar_lea.vmem %s5167, 120
        %s5336 = scalar_lea.vmem %s5334, 4294967295
        %v5337 = vld [vmem:[%s5336] sm:$0xfe]
        %v5338 = vlaneseq
        %v5339 = vshrl.u32 %v5338, 7
        %vm5340 = vcmp.eq.s32.totalorder %v5339, 0
        %v5341 = vsel %vm5340, %v5332, %v5337
        %s5342 = scalar_lea.vmem %s5334, 7
        %v5343 = vld [vmem:[%s5342] ss:$0 sm:$0xff]
        %5344 = vst [vmem:[%s5334] sm:$0xff] %v5341
        %v5345 = vld [vmem:[%s5168] ss:$0 sm:$0xff]
        %s5346 = scalar_lea.vmem %s5167, 1
        %5347 = vst [vmem:[%s5346] sm:$0x1] %v5345
        %s5348 = scalar_lea.vmem %s5168, 120
        %s5349 = scalar_lea.vmem %s5348, 1
        %v5350 = vld [vmem:[%s5349] sm:$0x7f]
        %v5351 = vlaneseq
        %v5352 = vshrl.u32 %v5351, 7
        %vm5353 = vcmp.eq.s32.totalorder %v5352, 7
        %v5354 = vsel %vm5353, %v5343, %v5350
        %v5355 = vld [vmem:[%s5348] ss:$0 sm:$0xff]
        %5356 = vst [vmem:[%s5348] sm:$0xff] %v5354
        %s5357 = scalar_lea.vmem %s5168, 112
        %s5358 = scalar_lea.vmem %s5357, 1
        %v5359 = vld [vmem:[%s5358] sm:$0x7f]
        %v5360 = vlaneseq
        %v5361 = vshrl.u32 %v5360, 7
        %vm5362 = vcmp.eq.s32.totalorder %v5361, 7
        %v5363 = vsel %vm5362, %v5355, %v5359
        %v5364 = vld [vmem:[%s5357] ss:$0 sm:$0xff]
        %5365 = vst [vmem:[%s5357] sm:$0xff] %v5363
        %s5366 = scalar_lea.vmem %s5168, 104
        %s5367 = scalar_lea.vmem %s5366, 1
        %v5368 = vld [vmem:[%s5367] sm:$0x7f]
        %v5369 = vlaneseq
        %v5370 = vshrl.u32 %v5369, 7
        %vm5371 = vcmp.eq.s32.totalorder %v5370, 7
        %v5372 = vsel %vm5371, %v5364, %v5368
        %v5373 = vld [vmem:[%s5366] ss:$0 sm:$0xff]
        %5374 = vst [vmem:[%s5366] sm:$0xff] %v5372
        %s5375 = scalar_lea.vmem %s5168, 96
        %s5376 = scalar_lea.vmem %s5375, 1
        %v5377 = vld [vmem:[%s5376] sm:$0x7f]
        %v5378 = vlaneseq
        %v5379 = vshrl.u32 %v5378, 7
        %vm5380 = vcmp.eq.s32.totalorder %v5379, 7
        %v5381 = vsel %vm5380, %v5373, %v5377
        %v5382 = vld [vmem:[%s5375] ss:$0 sm:$0xff]
        %5383 = vst [vmem:[%s5375] sm:$0xff] %v5381
        %s5384 = scalar_lea.vmem %s5168, 88
        %s5385 = scalar_lea.vmem %s5384, 1
        %v5386 = vld [vmem:[%s5385] sm:$0x7f]
        %v5387 = vlaneseq
        %v5388 = vshrl.u32 %v5387, 7
        %vm5389 = vcmp.eq.s32.totalorder %v5388, 7
        %v5390 = vsel %vm5389, %v5382, %v5386
        %v5391 = vld [vmem:[%s5384] ss:$0 sm:$0xff]
        %5392 = vst [vmem:[%s5384] sm:$0xff] %v5390
        %s5393 = scalar_lea.vmem %s5168, 80
        %s5394 = scalar_lea.vmem %s5393, 1
        %v5395 = vld [vmem:[%s5394] sm:$0x7f]
        %v5396 = vlaneseq
        %v5397 = vshrl.u32 %v5396, 7
        %vm5398 = vcmp.eq.s32.totalorder %v5397, 7
        %v5399 = vsel %vm5398, %v5391, %v5395
        %v5400 = vld [vmem:[%s5393] ss:$0 sm:$0xff]
        %5401 = vst [vmem:[%s5393] sm:$0xff] %v5399
        %s5402 = scalar_lea.vmem %s5168, 72
        %s5403 = scalar_lea.vmem %s5402, 1
        %v5404 = vld [vmem:[%s5403] sm:$0x7f]
        %v5405 = vlaneseq
        %v5406 = vshrl.u32 %v5405, 7
        %vm5407 = vcmp.eq.s32.totalorder %v5406, 7
        %v5408 = vsel %vm5407, %v5400, %v5404
        %v5409 = vld [vmem:[%s5402] ss:$0 sm:$0xff]
        %5410 = vst [vmem:[%s5402] sm:$0xff] %v5408
        %s5411 = scalar_lea.vmem %s5168, 64
        %s5412 = scalar_lea.vmem %s5411, 1
        %v5413 = vld [vmem:[%s5412] sm:$0x7f]
        %v5414 = vlaneseq
        %v5415 = vshrl.u32 %v5414, 7
        %vm5416 = vcmp.eq.s32.totalorder %v5415, 7
        %v5417 = vsel %vm5416, %v5409, %v5413
        %v5418 = vld [vmem:[%s5411] ss:$0 sm:$0xff]
        %5419 = vst [vmem:[%s5411] sm:$0xff] %v5417
        %s5420 = scalar_lea.vmem %s5168, 56
        %s5421 = scalar_lea.vmem %s5420, 1
        %v5422 = vld [vmem:[%s5421] sm:$0x7f]
        %v5423 = vlaneseq
        %v5424 = vshrl.u32 %v5423, 7
        %vm5425 = vcmp.eq.s32.totalorder %v5424, 7
        %v5426 = vsel %vm5425, %v5418, %v5422
        %v5427 = vld [vmem:[%s5420] ss:$0 sm:$0xff]
        %5428 = vst [vmem:[%s5420] sm:$0xff] %v5426
        %s5429 = scalar_lea.vmem %s5168, 48
        %s5430 = scalar_lea.vmem %s5429, 1
        %v5431 = vld [vmem:[%s5430] sm:$0x7f]
        %v5432 = vlaneseq
        %v5433 = vshrl.u32 %v5432, 7
        %vm5434 = vcmp.eq.s32.totalorder %v5433, 7
        %v5435 = vsel %vm5434, %v5427, %v5431
        %v5436 = vld [vmem:[%s5429] ss:$0 sm:$0xff]
        %5437 = vst [vmem:[%s5429] sm:$0xff] %v5435
        %s5438 = scalar_lea.vmem %s5168, 40
        %s5439 = scalar_lea.vmem %s5438, 1
        %v5440 = vld [vmem:[%s5439] sm:$0x7f]
        %v5441 = vlaneseq
        %v5442 = vshrl.u32 %v5441, 7
        %vm5443 = vcmp.eq.s32.totalorder %v5442, 7
        %v5444 = vsel %vm5443, %v5436, %v5440
        %v5445 = vld [vmem:[%s5438] ss:$0 sm:$0xff]
        %5446 = vst [vmem:[%s5438] sm:$0xff] %v5444
        %s5447 = scalar_lea.vmem %s5168, 32
        %s5448 = scalar_lea.vmem %s5447, 1
        %v5449 = vld [vmem:[%s5448] sm:$0x7f]
        %v5450 = vlaneseq
        %v5451 = vshrl.u32 %v5450, 7
        %vm5452 = vcmp.eq.s32.totalorder %v5451, 7
        %v5453 = vsel %vm5452, %v5445, %v5449
        %v5454 = vld [vmem:[%s5447] ss:$0 sm:$0xff]
        %5455 = vst [vmem:[%s5447] sm:$0xff] %v5453
        %s5456 = scalar_lea.vmem %s5168, 24
        %s5457 = scalar_lea.vmem %s5456, 1
        %v5458 = vld [vmem:[%s5457] sm:$0x7f]
        %v5459 = vlaneseq
        %v5460 = vshrl.u32 %v5459, 7
        %vm5461 = vcmp.eq.s32.totalorder %v5460, 7
        %v5462 = vsel %vm5461, %v5454, %v5458
        %v5463 = vld [vmem:[%s5456] ss:$0 sm:$0xff]
        %5464 = vst [vmem:[%s5456] sm:$0xff] %v5462
        %s5465 = scalar_lea.vmem %s5168, 16
        %s5466 = scalar_lea.vmem %s5465, 1
        %v5467 = vld [vmem:[%s5466] sm:$0x7f]
        %v5468 = vlaneseq
        %v5469 = vshrl.u32 %v5468, 7
        %vm5470 = vcmp.eq.s32.totalorder %v5469, 7
        %v5471 = vsel %vm5470, %v5463, %v5467
        %v5472 = vld [vmem:[%s5465] ss:$0 sm:$0xff]
        %5473 = vst [vmem:[%s5465] sm:$0xff] %v5471
        %s5474 = scalar_lea.vmem %s5168, 8
        %s5475 = scalar_lea.vmem %s5474, 1
        %v5476 = vld [vmem:[%s5475] sm:$0x7f]
        %v5477 = vlaneseq
        %v5478 = vshrl.u32 %v5477, 7
        %vm5479 = vcmp.eq.s32.totalorder %v5478, 7
        %v5480 = vsel %vm5479, %v5472, %v5476
        %v5481 = vld [vmem:[%s5474] ss:$0 sm:$0xff]
        %5482 = vst [vmem:[%s5474] sm:$0xff] %v5480
        %s5483 = scalar_lea.vmem %s5168, 1
        %v5484 = vld [vmem:[%s5483] sm:$0x7f]
        %v5485 = vlaneseq
        %v5486 = vshrl.u32 %v5485, 7
        %vm5487 = vcmp.eq.s32.totalorder %v5486, 7
        %v5488 = vsel %vm5487, %v5481, %v5484
        %v5489 = vld [vmem:[%s5168] ss:$0 sm:$0xff]
        %5490 = vst [vmem:[%s5168] sm:$0xff] %v5488
        %s5491 = smov [#allocation26]
        %v5492 = vld [vmem:[%s5491] sm:$0xff]
        %s5493 = smov [#allocation27]
        %v5494 = vld [vmem:[%s5493] sm:$0xff]
        %s5495 = smov [#allocation8]
        %s5496 = smov [#allocation10]
        %s5497 = smov [#allocation12]
        %s5498 = smov [#allocation13]
        %v5499 = vld [vmem:[%s5495] sm:$0xff]
        %v5500 = vld [vmem:[%s5496] sm:$0xff]
        %v5501 = vld [vmem:[%s5497] sm:$0xff]
        %v5502 = vld [vmem:[%s5498] sm:$0xff]
        %v5503 = vmul.f32 %v5492, %v5499
        %v5504 = vmul.f32 %v5494, %v5501
        %v5505 = vsub.f32 %v5503, %v5504
        %v5506 = vmul.f32 %v5492, %v5500
        %v5507 = vmul.f32 %v5494, %v5502
        %v5508 = vsub.f32 %v5506, %v5507
        %v5509 = vmul.f32 %v5494, %v5499
        %v5510 = vmul.f32 %v5492, %v5501
        %v5511 = vadd.f32 %v5509, %v5510
        %v5512 = vmul.f32 %v5494, %v5500
        %v5513 = vmul.f32 %v5492, %v5502
        %v5514 = vadd.f32 %v5512, %v5513
        %5515 = vst [vmem:[%s5495] sm:$0xff] %v5505
        %5516 = vst [vmem:[%s5496] sm:$0xff] %v5508
        %5517 = vst [vmem:[%s5497] sm:$0xff] %v5511
        %5518 = vst [vmem:[%s5498] sm:$0xff] %v5514
        %s5519 = smov [#allocation26]
        %s5520 = scalar_lea.vmem %s5519, 8
        %v5521 = vld [vmem:[%s5520] sm:$0xff]
        %s5522 = smov [#allocation27]
        %s5523 = scalar_lea.vmem %s5522, 8
        %v5524 = vld [vmem:[%s5523] sm:$0xff]
        %s5525 = smov [#allocation8]
        %s5526 = scalar_lea.vmem %s5525, 8
        %s5527 = smov [#allocation10]
        %s5528 = scalar_lea.vmem %s5527, 8
        %s5529 = smov [#allocation12]
        %s5530 = scalar_lea.vmem %s5529, 8
        %s5531 = smov [#allocation13]
        %s5532 = scalar_lea.vmem %s5531, 8
        %v5533 = vld [vmem:[%s5526] sm:$0xff]
        %v5534 = vld [vmem:[%s5528] sm:$0xff]
        %v5535 = vld [vmem:[%s5530] sm:$0xff]
        %v5536 = vld [vmem:[%s5532] sm:$0xff]
        %v5537 = vmul.f32 %v5521, %v5533
        %v5538 = vmul.f32 %v5524, %v5535
        %v5539 = vsub.f32 %v5537, %v5538
        %v5540 = vmul.f32 %v5521, %v5534
        %v5541 = vmul.f32 %v5524, %v5536
        %v5542 = vsub.f32 %v5540, %v5541
        %v5543 = vmul.f32 %v5524, %v5533
        %v5544 = vmul.f32 %v5521, %v5535
        %v5545 = vadd.f32 %v5543, %v5544
        %v5546 = vmul.f32 %v5524, %v5534
        %v5547 = vmul.f32 %v5521, %v5536
        %v5548 = vadd.f32 %v5546, %v5547
        %5549 = vst [vmem:[%s5526] sm:$0xff] %v5539
        %5550 = vst [vmem:[%s5528] sm:$0xff] %v5542
        %5551 = vst [vmem:[%s5530] sm:$0xff] %v5545
        %5552 = vst [vmem:[%s5532] sm:$0xff] %v5548
        %s5553 = smov [#allocation26]
        %s5554 = scalar_lea.vmem %s5553, 16
        %v5555 = vld [vmem:[%s5554] sm:$0xff]
        %s5556 = smov [#allocation27]
        %s5557 = scalar_lea.vmem %s5556, 16
        %v5558 = vld [vmem:[%s5557] sm:$0xff]
        %s5559 = smov [#allocation8]
        %s5560 = scalar_lea.vmem %s5559, 16
        %s5561 = smov [#allocation10]
        %s5562 = scalar_lea.vmem %s5561, 16
        %s5563 = smov [#allocation12]
        %s5564 = scalar_lea.vmem %s5563, 16
        %s5565 = smov [#allocation13]
        %s5566 = scalar_lea.vmem %s5565, 16
        %v5567 = vld [vmem:[%s5560] sm:$0xff]
        %v5568 = vld [vmem:[%s5562] sm:$0xff]
        %v5569 = vld [vmem:[%s5564] sm:$0xff]
        %v5570 = vld [vmem:[%s5566] sm:$0xff]
        %v5571 = vmul.f32 %v5555, %v5567
        %v5572 = vmul.f32 %v5558, %v5569
        %v5573 = vsub.f32 %v5571, %v5572
        %v5574 = vmul.f32 %v5555, %v5568
        %v5575 = vmul.f32 %v5558, %v5570
        %v5576 = vsub.f32 %v5574, %v5575
        %v5577 = vmul.f32 %v5558, %v5567
        %v5578 = vmul.f32 %v5555, %v5569
        %v5579 = vadd.f32 %v5577, %v5578
        %v5580 = vmul.f32 %v5558, %v5568
        %v5581 = vmul.f32 %v5555, %v5570
        %v5582 = vadd.f32 %v5580, %v5581
        %5583 = vst [vmem:[%s5560] sm:$0xff] %v5573
        %5584 = vst [vmem:[%s5562] sm:$0xff] %v5576
        %5585 = vst [vmem:[%s5564] sm:$0xff] %v5579
        %5586 = vst [vmem:[%s5566] sm:$0xff] %v5582
        %s5587 = smov [#allocation26]
        %s5588 = scalar_lea.vmem %s5587, 24
        %v5589 = vld [vmem:[%s5588] sm:$0xff]
        %s5590 = smov [#allocation27]
        %s5591 = scalar_lea.vmem %s5590, 24
        %v5592 = vld [vmem:[%s5591] sm:$0xff]
        %s5593 = smov [#allocation8]
        %s5594 = scalar_lea.vmem %s5593, 24
        %s5595 = smov [#allocation10]
        %s5596 = scalar_lea.vmem %s5595, 24
        %s5597 = smov [#allocation12]
        %s5598 = scalar_lea.vmem %s5597, 24
        %s5599 = smov [#allocation13]
        %s5600 = scalar_lea.vmem %s5599, 24
        %v5601 = vld [vmem:[%s5594] sm:$0xff]
        %v5602 = vld [vmem:[%s5596] sm:$0xff]
        %v5603 = vld [vmem:[%s5598] sm:$0xff]
        %v5604 = vld [vmem:[%s5600] sm:$0xff]
        %v5605 = vmul.f32 %v5589, %v5601
        %v5606 = vmul.f32 %v5592, %v5603
        %v5607 = vsub.f32 %v5605, %v5606
        %v5608 = vmul.f32 %v5589, %v5602
        %v5609 = vmul.f32 %v5592, %v5604
        %v5610 = vsub.f32 %v5608, %v5609
        %v5611 = vmul.f32 %v5592, %v5601
        %v5612 = vmul.f32 %v5589, %v5603
        %v5613 = vadd.f32 %v5611, %v5612
        %v5614 = vmul.f32 %v5592, %v5602
        %v5615 = vmul.f32 %v5589, %v5604
        %v5616 = vadd.f32 %v5614, %v5615
        %5617 = vst [vmem:[%s5594] sm:$0xff] %v5607
        %5618 = vst [vmem:[%s5596] sm:$0xff] %v5610
        %5619 = vst [vmem:[%s5598] sm:$0xff] %v5613
        %5620 = vst [vmem:[%s5600] sm:$0xff] %v5616
        %s5621 = smov [#allocation26]
        %s5622 = scalar_lea.vmem %s5621, 32
        %v5623 = vld [vmem:[%s5622] sm:$0xff]
        %s5624 = smov [#allocation27]
        %s5625 = scalar_lea.vmem %s5624, 32
        %v5626 = vld [vmem:[%s5625] sm:$0xff]
        %s5627 = smov [#allocation8]
        %s5628 = scalar_lea.vmem %s5627, 32
        %s5629 = smov [#allocation10]
        %s5630 = scalar_lea.vmem %s5629, 32
        %s5631 = smov [#allocation12]
        %s5632 = scalar_lea.vmem %s5631, 32
        %s5633 = smov [#allocation13]
        %s5634 = scalar_lea.vmem %s5633, 32
        %v5635 = vld [vmem:[%s5628] sm:$0xff]
        %v5636 = vld [vmem:[%s5630] sm:$0xff]
        %v5637 = vld [vmem:[%s5632] sm:$0xff]
        %v5638 = vld [vmem:[%s5634] sm:$0xff]
        %v5639 = vmul.f32 %v5623, %v5635
        %v5640 = vmul.f32 %v5626, %v5637
        %v5641 = vsub.f32 %v5639, %v5640
        %v5642 = vmul.f32 %v5623, %v5636
        %v5643 = vmul.f32 %v5626, %v5638
        %v5644 = vsub.f32 %v5642, %v5643
        %v5645 = vmul.f32 %v5626, %v5635
        %v5646 = vmul.f32 %v5623, %v5637
        %v5647 = vadd.f32 %v5645, %v5646
        %v5648 = vmul.f32 %v5626, %v5636
        %v5649 = vmul.f32 %v5623, %v5638
        %v5650 = vadd.f32 %v5648, %v5649
        %5651 = vst [vmem:[%s5628] sm:$0xff] %v5641
        %5652 = vst [vmem:[%s5630] sm:$0xff] %v5644
        %5653 = vst [vmem:[%s5632] sm:$0xff] %v5647
        %5654 = vst [vmem:[%s5634] sm:$0xff] %v5650
        %s5655 = smov [#allocation26]
        %s5656 = scalar_lea.vmem %s5655, 40
        %v5657 = vld [vmem:[%s5656] sm:$0xff]
        %s5658 = smov [#allocation27]
        %s5659 = scalar_lea.vmem %s5658, 40
        %v5660 = vld [vmem:[%s5659] sm:$0xff]
        %s5661 = smov [#allocation8]
        %s5662 = scalar_lea.vmem %s5661, 40
        %s5663 = smov [#allocation10]
        %s5664 = scalar_lea.vmem %s5663, 40
        %s5665 = smov [#allocation12]
        %s5666 = scalar_lea.vmem %s5665, 40
        %s5667 = smov [#allocation13]
        %s5668 = scalar_lea.vmem %s5667, 40
        %v5669 = vld [vmem:[%s5662] sm:$0xff]
        %v5670 = vld [vmem:[%s5664] sm:$0xff]
        %v5671 = vld [vmem:[%s5666] sm:$0xff]
        %v5672 = vld [vmem:[%s5668] sm:$0xff]
        %v5673 = vmul.f32 %v5657, %v5669
        %v5674 = vmul.f32 %v5660, %v5671
        %v5675 = vsub.f32 %v5673, %v5674
        %v5676 = vmul.f32 %v5657, %v5670
        %v5677 = vmul.f32 %v5660, %v5672
        %v5678 = vsub.f32 %v5676, %v5677
        %v5679 = vmul.f32 %v5660, %v5669
        %v5680 = vmul.f32 %v5657, %v5671
        %v5681 = vadd.f32 %v5679, %v5680
        %v5682 = vmul.f32 %v5660, %v5670
        %v5683 = vmul.f32 %v5657, %v5672
        %v5684 = vadd.f32 %v5682, %v5683
        %5685 = vst [vmem:[%s5662] sm:$0xff] %v5675
        %5686 = vst [vmem:[%s5664] sm:$0xff] %v5678
        %5687 = vst [vmem:[%s5666] sm:$0xff] %v5681
        %5688 = vst [vmem:[%s5668] sm:$0xff] %v5684
        %s5689 = smov [#allocation26]
        %s5690 = scalar_lea.vmem %s5689, 48
        %v5691 = vld [vmem:[%s5690] sm:$0xff]
        %s5692 = smov [#allocation27]
        %s5693 = scalar_lea.vmem %s5692, 48
        %v5694 = vld [vmem:[%s5693] sm:$0xff]
        %s5695 = smov [#allocation8]
        %s5696 = scalar_lea.vmem %s5695, 48
        %s5697 = smov [#allocation10]
        %s5698 = scalar_lea.vmem %s5697, 48
        %s5699 = smov [#allocation12]
        %s5700 = scalar_lea.vmem %s5699, 48
        %s5701 = smov [#allocation13]
        %s5702 = scalar_lea.vmem %s5701, 48
        %v5703 = vld [vmem:[%s5696] sm:$0xff]
        %v5704 = vld [vmem:[%s5698] sm:$0xff]
        %v5705 = vld [vmem:[%s5700] sm:$0xff]
        %v5706 = vld [vmem:[%s5702] sm:$0xff]
        %v5707 = vmul.f32 %v5691, %v5703
        %v5708 = vmul.f32 %v5694, %v5705
        %v5709 = vsub.f32 %v5707, %v5708
        %v5710 = vmul.f32 %v5691, %v5704
        %v5711 = vmul.f32 %v5694, %v5706
        %v5712 = vsub.f32 %v5710, %v5711
        %v5713 = vmul.f32 %v5694, %v5703
        %v5714 = vmul.f32 %v5691, %v5705
        %v5715 = vadd.f32 %v5713, %v5714
        %v5716 = vmul.f32 %v5694, %v5704
        %v5717 = vmul.f32 %v5691, %v5706
        %v5718 = vadd.f32 %v5716, %v5717
        %5719 = vst [vmem:[%s5696] sm:$0xff] %v5709
        %5720 = vst [vmem:[%s5698] sm:$0xff] %v5712
        %5721 = vst [vmem:[%s5700] sm:$0xff] %v5715
        %5722 = vst [vmem:[%s5702] sm:$0xff] %v5718
        %s5723 = smov [#allocation26]
        %s5724 = scalar_lea.vmem %s5723, 56
        %v5725 = vld [vmem:[%s5724] sm:$0xff]
        %s5726 = smov [#allocation27]
        %s5727 = scalar_lea.vmem %s5726, 56
        %v5728 = vld [vmem:[%s5727] sm:$0xff]
        %s5729 = smov [#allocation8]
        %s5730 = scalar_lea.vmem %s5729, 56
        %s5731 = smov [#allocation10]
        %s5732 = scalar_lea.vmem %s5731, 56
        %s5733 = smov [#allocation12]
        %s5734 = scalar_lea.vmem %s5733, 56
        %s5735 = smov [#allocation13]
        %s5736 = scalar_lea.vmem %s5735, 56
        %v5737 = vld [vmem:[%s5730] sm:$0xff]
        %v5738 = vld [vmem:[%s5732] sm:$0xff]
        %v5739 = vld [vmem:[%s5734] sm:$0xff]
        %v5740 = vld [vmem:[%s5736] sm:$0xff]
        %v5741 = vmul.f32 %v5725, %v5737
        %v5742 = vmul.f32 %v5728, %v5739
        %v5743 = vsub.f32 %v5741, %v5742
        %v5744 = vmul.f32 %v5725, %v5738
        %v5745 = vmul.f32 %v5728, %v5740
        %v5746 = vsub.f32 %v5744, %v5745
        %v5747 = vmul.f32 %v5728, %v5737
        %v5748 = vmul.f32 %v5725, %v5739
        %v5749 = vadd.f32 %v5747, %v5748
        %v5750 = vmul.f32 %v5728, %v5738
        %v5751 = vmul.f32 %v5725, %v5740
        %v5752 = vadd.f32 %v5750, %v5751
        %5753 = vst [vmem:[%s5730] sm:$0xff] %v5743
        %5754 = vst [vmem:[%s5732] sm:$0xff] %v5746
        %5755 = vst [vmem:[%s5734] sm:$0xff] %v5749
        %5756 = vst [vmem:[%s5736] sm:$0xff] %v5752
        %s5757 = smov [#allocation26]
        %s5758 = scalar_lea.vmem %s5757, 64
        %v5759 = vld [vmem:[%s5758] sm:$0xff]
        %s5760 = smov [#allocation27]
        %s5761 = scalar_lea.vmem %s5760, 64
        %v5762 = vld [vmem:[%s5761] sm:$0xff]
        %s5763 = smov [#allocation8]
        %s5764 = scalar_lea.vmem %s5763, 64
        %s5765 = smov [#allocation10]
        %s5766 = scalar_lea.vmem %s5765, 64
        %s5767 = smov [#allocation12]
        %s5768 = scalar_lea.vmem %s5767, 64
        %s5769 = smov [#allocation13]
        %s5770 = scalar_lea.vmem %s5769, 64
        %v5771 = vld [vmem:[%s5764] sm:$0xff]
        %v5772 = vld [vmem:[%s5766] sm:$0xff]
        %v5773 = vld [vmem:[%s5768] sm:$0xff]
        %v5774 = vld [vmem:[%s5770] sm:$0xff]
        %v5775 = vmul.f32 %v5759, %v5771
        %v5776 = vmul.f32 %v5762, %v5773
        %v5777 = vsub.f32 %v5775, %v5776
        %v5778 = vmul.f32 %v5759, %v5772
        %v5779 = vmul.f32 %v5762, %v5774
        %v5780 = vsub.f32 %v5778, %v5779
        %v5781 = vmul.f32 %v5762, %v5771
        %v5782 = vmul.f32 %v5759, %v5773
        %v5783 = vadd.f32 %v5781, %v5782
        %v5784 = vmul.f32 %v5762, %v5772
        %v5785 = vmul.f32 %v5759, %v5774
        %v5786 = vadd.f32 %v5784, %v5785
        %5787 = vst [vmem:[%s5764] sm:$0xff] %v5777
        %5788 = vst [vmem:[%s5766] sm:$0xff] %v5780
        %5789 = vst [vmem:[%s5768] sm:$0xff] %v5783
        %5790 = vst [vmem:[%s5770] sm:$0xff] %v5786
        %s5791 = smov [#allocation26]
        %s5792 = scalar_lea.vmem %s5791, 72
        %v5793 = vld [vmem:[%s5792] sm:$0xff]
        %s5794 = smov [#allocation27]
        %s5795 = scalar_lea.vmem %s5794, 72
        %v5796 = vld [vmem:[%s5795] sm:$0xff]
        %s5797 = smov [#allocation8]
        %s5798 = scalar_lea.vmem %s5797, 72
        %s5799 = smov [#allocation10]
        %s5800 = scalar_lea.vmem %s5799, 72
        %s5801 = smov [#allocation12]
        %s5802 = scalar_lea.vmem %s5801, 72
        %s5803 = smov [#allocation13]
        %s5804 = scalar_lea.vmem %s5803, 72
        %v5805 = vld [vmem:[%s5798] sm:$0xff]
        %v5806 = vld [vmem:[%s5800] sm:$0xff]
        %v5807 = vld [vmem:[%s5802] sm:$0xff]
        %v5808 = vld [vmem:[%s5804] sm:$0xff]
        %v5809 = vmul.f32 %v5793, %v5805
        %v5810 = vmul.f32 %v5796, %v5807
        %v5811 = vsub.f32 %v5809, %v5810
        %v5812 = vmul.f32 %v5793, %v5806
        %v5813 = vmul.f32 %v5796, %v5808
        %v5814 = vsub.f32 %v5812, %v5813
        %v5815 = vmul.f32 %v5796, %v5805
        %v5816 = vmul.f32 %v5793, %v5807
        %v5817 = vadd.f32 %v5815, %v5816
        %v5818 = vmul.f32 %v5796, %v5806
        %v5819 = vmul.f32 %v5793, %v5808
        %v5820 = vadd.f32 %v5818, %v5819
        %5821 = vst [vmem:[%s5798] sm:$0xff] %v5811
        %5822 = vst [vmem:[%s5800] sm:$0xff] %v5814
        %5823 = vst [vmem:[%s5802] sm:$0xff] %v5817
        %5824 = vst [vmem:[%s5804] sm:$0xff] %v5820
        %s5825 = smov [#allocation26]
        %s5826 = scalar_lea.vmem %s5825, 80
        %v5827 = vld [vmem:[%s5826] sm:$0xff]
        %s5828 = smov [#allocation27]
        %s5829 = scalar_lea.vmem %s5828, 80
        %v5830 = vld [vmem:[%s5829] sm:$0xff]
        %s5831 = smov [#allocation8]
        %s5832 = scalar_lea.vmem %s5831, 80
        %s5833 = smov [#allocation10]
        %s5834 = scalar_lea.vmem %s5833, 80
        %s5835 = smov [#allocation12]
        %s5836 = scalar_lea.vmem %s5835, 80
        %s5837 = smov [#allocation13]
        %s5838 = scalar_lea.vmem %s5837, 80
        %v5839 = vld [vmem:[%s5832] sm:$0xff]
        %v5840 = vld [vmem:[%s5834] sm:$0xff]
        %v5841 = vld [vmem:[%s5836] sm:$0xff]
        %v5842 = vld [vmem:[%s5838] sm:$0xff]
        %v5843 = vmul.f32 %v5827, %v5839
        %v5844 = vmul.f32 %v5830, %v5841
        %v5845 = vsub.f32 %v5843, %v5844
        %v5846 = vmul.f32 %v5827, %v5840
        %v5847 = vmul.f32 %v5830, %v5842
        %v5848 = vsub.f32 %v5846, %v5847
        %v5849 = vmul.f32 %v5830, %v5839
        %v5850 = vmul.f32 %v5827, %v5841
        %v5851 = vadd.f32 %v5849, %v5850
        %v5852 = vmul.f32 %v5830, %v5840
        %v5853 = vmul.f32 %v5827, %v5842
        %v5854 = vadd.f32 %v5852, %v5853
        %5855 = vst [vmem:[%s5832] sm:$0xff] %v5845
        %5856 = vst [vmem:[%s5834] sm:$0xff] %v5848
        %5857 = vst [vmem:[%s5836] sm:$0xff] %v5851
        %5858 = vst [vmem:[%s5838] sm:$0xff] %v5854
        %s5859 = smov [#allocation26]
        %s5860 = scalar_lea.vmem %s5859, 88
        %v5861 = vld [vmem:[%s5860] sm:$0xff]
        %s5862 = smov [#allocation27]
        %s5863 = scalar_lea.vmem %s5862, 88
        %v5864 = vld [vmem:[%s5863] sm:$0xff]
        %s5865 = smov [#allocation8]
        %s5866 = scalar_lea.vmem %s5865, 88
        %s5867 = smov [#allocation10]
        %s5868 = scalar_lea.vmem %s5867, 88
        %s5869 = smov [#allocation12]
        %s5870 = scalar_lea.vmem %s5869, 88
        %s5871 = smov [#allocation13]
        %s5872 = scalar_lea.vmem %s5871, 88
        %v5873 = vld [vmem:[%s5866] sm:$0xff]
        %v5874 = vld [vmem:[%s5868] sm:$0xff]
        %v5875 = vld [vmem:[%s5870] sm:$0xff]
        %v5876 = vld [vmem:[%s5872] sm:$0xff]
        %v5877 = vmul.f32 %v5861, %v5873
        %v5878 = vmul.f32 %v5864, %v5875
        %v5879 = vsub.f32 %v5877, %v5878
        %v5880 = vmul.f32 %v5861, %v5874
        %v5881 = vmul.f32 %v5864, %v5876
        %v5882 = vsub.f32 %v5880, %v5881
        %v5883 = vmul.f32 %v5864, %v5873
        %v5884 = vmul.f32 %v5861, %v5875
        %v5885 = vadd.f32 %v5883, %v5884
        %v5886 = vmul.f32 %v5864, %v5874
        %v5887 = vmul.f32 %v5861, %v5876
        %v5888 = vadd.f32 %v5886, %v5887
        %5889 = vst [vmem:[%s5866] sm:$0xff] %v5879
        %5890 = vst [vmem:[%s5868] sm:$0xff] %v5882
        %5891 = vst [vmem:[%s5870] sm:$0xff] %v5885
        %5892 = vst [vmem:[%s5872] sm:$0xff] %v5888
        %s5893 = smov [#allocation26]
        %s5894 = scalar_lea.vmem %s5893, 96
        %v5895 = vld [vmem:[%s5894] sm:$0xff]
        %s5896 = smov [#allocation27]
        %s5897 = scalar_lea.vmem %s5896, 96
        %v5898 = vld [vmem:[%s5897] sm:$0xff]
        %s5899 = smov [#allocation8]
        %s5900 = scalar_lea.vmem %s5899, 96
        %s5901 = smov [#allocation10]
        %s5902 = scalar_lea.vmem %s5901, 96
        %s5903 = smov [#allocation12]
        %s5904 = scalar_lea.vmem %s5903, 96
        %s5905 = smov [#allocation13]
        %s5906 = scalar_lea.vmem %s5905, 96
        %v5907 = vld [vmem:[%s5900] sm:$0xff]
        %v5908 = vld [vmem:[%s5902] sm:$0xff]
        %v5909 = vld [vmem:[%s5904] sm:$0xff]
        %v5910 = vld [vmem:[%s5906] sm:$0xff]
        %v5911 = vmul.f32 %v5895, %v5907
        %v5912 = vmul.f32 %v5898, %v5909
        %v5913 = vsub.f32 %v5911, %v5912
        %v5914 = vmul.f32 %v5895, %v5908
        %v5915 = vmul.f32 %v5898, %v5910
        %v5916 = vsub.f32 %v5914, %v5915
        %v5917 = vmul.f32 %v5898, %v5907
        %v5918 = vmul.f32 %v5895, %v5909
        %v5919 = vadd.f32 %v5917, %v5918
        %v5920 = vmul.f32 %v5898, %v5908
        %v5921 = vmul.f32 %v5895, %v5910
        %v5922 = vadd.f32 %v5920, %v5921
        %5923 = vst [vmem:[%s5900] sm:$0xff] %v5913
        %5924 = vst [vmem:[%s5902] sm:$0xff] %v5916
        %5925 = vst [vmem:[%s5904] sm:$0xff] %v5919
        %5926 = vst [vmem:[%s5906] sm:$0xff] %v5922
        %s5927 = smov [#allocation26]
        %s5928 = scalar_lea.vmem %s5927, 104
        %v5929 = vld [vmem:[%s5928] sm:$0xff]
        %s5930 = smov [#allocation27]
        %s5931 = scalar_lea.vmem %s5930, 104
        %v5932 = vld [vmem:[%s5931] sm:$0xff]
        %s5933 = smov [#allocation8]
        %s5934 = scalar_lea.vmem %s5933, 104
        %s5935 = smov [#allocation10]
        %s5936 = scalar_lea.vmem %s5935, 104
        %s5937 = smov [#allocation12]
        %s5938 = scalar_lea.vmem %s5937, 104
        %s5939 = smov [#allocation13]
        %s5940 = scalar_lea.vmem %s5939, 104
        %v5941 = vld [vmem:[%s5934] sm:$0xff]
        %v5942 = vld [vmem:[%s5936] sm:$0xff]
        %v5943 = vld [vmem:[%s5938] sm:$0xff]
        %v5944 = vld [vmem:[%s5940] sm:$0xff]
        %v5945 = vmul.f32 %v5929, %v5941
        %v5946 = vmul.f32 %v5932, %v5943
        %v5947 = vsub.f32 %v5945, %v5946
        %v5948 = vmul.f32 %v5929, %v5942
        %v5949 = vmul.f32 %v5932, %v5944
        %v5950 = vsub.f32 %v5948, %v5949
        %v5951 = vmul.f32 %v5932, %v5941
        %v5952 = vmul.f32 %v5929, %v5943
        %v5953 = vadd.f32 %v5951, %v5952
        %v5954 = vmul.f32 %v5932, %v5942
        %v5955 = vmul.f32 %v5929, %v5944
        %v5956 = vadd.f32 %v5954, %v5955
        %5957 = vst [vmem:[%s5934] sm:$0xff] %v5947
        %5958 = vst [vmem:[%s5936] sm:$0xff] %v5950
        %5959 = vst [vmem:[%s5938] sm:$0xff] %v5953
        %5960 = vst [vmem:[%s5940] sm:$0xff] %v5956
        %s5961 = smov [#allocation26]
        %s5962 = scalar_lea.vmem %s5961, 112
        %v5963 = vld [vmem:[%s5962] sm:$0xff]
        %s5964 = smov [#allocation27]
        %s5965 = scalar_lea.vmem %s5964, 112
        %v5966 = vld [vmem:[%s5965] sm:$0xff]
        %s5967 = smov [#allocation8]
        %s5968 = scalar_lea.vmem %s5967, 112
        %s5969 = smov [#allocation10]
        %s5970 = scalar_lea.vmem %s5969, 112
        %s5971 = smov [#allocation12]
        %s5972 = scalar_lea.vmem %s5971, 112
        %s5973 = smov [#allocation13]
        %s5974 = scalar_lea.vmem %s5973, 112
        %v5975 = vld [vmem:[%s5968] sm:$0xff]
        %v5976 = vld [vmem:[%s5970] sm:$0xff]
        %v5977 = vld [vmem:[%s5972] sm:$0xff]
        %v5978 = vld [vmem:[%s5974] sm:$0xff]
        %v5979 = vmul.f32 %v5963, %v5975
        %v5980 = vmul.f32 %v5966, %v5977
        %v5981 = vsub.f32 %v5979, %v5980
        %v5982 = vmul.f32 %v5963, %v5976
        %v5983 = vmul.f32 %v5966, %v5978
        %v5984 = vsub.f32 %v5982, %v5983
        %v5985 = vmul.f32 %v5966, %v5975
        %v5986 = vmul.f32 %v5963, %v5977
        %v5987 = vadd.f32 %v5985, %v5986
        %v5988 = vmul.f32 %v5966, %v5976
        %v5989 = vmul.f32 %v5963, %v5978
        %v5990 = vadd.f32 %v5988, %v5989
        %5991 = vst [vmem:[%s5968] sm:$0xff] %v5981
        %5992 = vst [vmem:[%s5970] sm:$0xff] %v5984
        %5993 = vst [vmem:[%s5972] sm:$0xff] %v5987
        %5994 = vst [vmem:[%s5974] sm:$0xff] %v5990
        %s5995 = smov [#allocation26]
        %s5996 = scalar_lea.vmem %s5995, 120
        %v5997 = vld [vmem:[%s5996] sm:$0xff]
        %s5998 = smov [#allocation27]
        %s5999 = scalar_lea.vmem %s5998, 120
        %v6000 = vld [vmem:[%s5999] sm:$0xff]
        %s6001 = smov [#allocation8]
        %s6002 = scalar_lea.vmem %s6001, 120
        %s6003 = smov [#allocation10]
        %s6004 = scalar_lea.vmem %s6003, 120
        %s6005 = smov [#allocation12]
        %s6006 = scalar_lea.vmem %s6005, 120
        %s6007 = smov [#allocation13]
        %s6008 = scalar_lea.vmem %s6007, 120
        %v6009 = vld [vmem:[%s6002] sm:$0xff]
        %v6010 = vld [vmem:[%s6004] sm:$0xff]
        %v6011 = vld [vmem:[%s6006] sm:$0xff]
        %v6012 = vld [vmem:[%s6008] sm:$0xff]
        %v6013 = vmul.f32 %v5997, %v6009
        %v6014 = vmul.f32 %v6000, %v6011
        %v6015 = vsub.f32 %v6013, %v6014
        %v6016 = vmul.f32 %v5997, %v6010
        %v6017 = vmul.f32 %v6000, %v6012
        %v6018 = vsub.f32 %v6016, %v6017
        %v6019 = vmul.f32 %v6000, %v6009
        %v6020 = vmul.f32 %v5997, %v6011
        %v6021 = vadd.f32 %v6019, %v6020
        %v6022 = vmul.f32 %v6000, %v6010
        %v6023 = vmul.f32 %v5997, %v6012
        %v6024 = vadd.f32 %v6022, %v6023
        %6025 = vst [vmem:[%s6002] sm:$0xff] %v6015
        %6026 = vst [vmem:[%s6004] sm:$0xff] %v6018
        %6027 = vst [vmem:[%s6006] sm:$0xff] %v6021
        %6028 = vst [vmem:[%s6008] sm:$0xff] %v6024
        %s6029 = smov [#allocation8]
        %s6030 = smov [#allocation12]
        %v6031 = vld [vmem:[%s6029] ss:$0 sm:$0xff]
        %s6033 = scalar_lea.vmem %s6029, 4294967295
        %v6034 = vld [vmem:[%s6033] sm:$0xfe]
        %v6035 = vlaneseq
        %v6036 = vshrl.u32 %v6035, 7
        %vm6037 = vcmp.eq.s32.totalorder %v6036, 0
        %v6038 = vsel %vm6037, %v6031, %v6034
        %s6039 = scalar_lea.vmem %s6029, 7
        %v6040 = vld [vmem:[%s6039] ss:$0 sm:$0xff]
        %6041 = vst [vmem:[%s6029] sm:$0xff] %v6038
        %s6042 = scalar_lea.vmem %s6029, 8
        %s6044 = scalar_lea.vmem %s6042, 4294967295
        %v6045 = vld [vmem:[%s6044] sm:$0xfe]
        %v6046 = vlaneseq
        %v6047 = vshrl.u32 %v6046, 7
        %vm6048 = vcmp.eq.s32.totalorder %v6047, 0
        %v6049 = vsel %vm6048, %v6040, %v6045
        %s6050 = scalar_lea.vmem %s6042, 7
        %v6051 = vld [vmem:[%s6050] ss:$0 sm:$0xff]
        %6052 = vst [vmem:[%s6042] sm:$0xff] %v6049
        %s6053 = scalar_lea.vmem %s6029, 16
        %s6055 = scalar_lea.vmem %s6053, 4294967295
        %v6056 = vld [vmem:[%s6055] sm:$0xfe]
        %v6057 = vlaneseq
        %v6058 = vshrl.u32 %v6057, 7
        %vm6059 = vcmp.eq.s32.totalorder %v6058, 0
        %v6060 = vsel %vm6059, %v6051, %v6056
        %s6061 = scalar_lea.vmem %s6053, 7
        %v6062 = vld [vmem:[%s6061] ss:$0 sm:$0xff]
        %6063 = vst [vmem:[%s6053] sm:$0xff] %v6060
        %s6064 = scalar_lea.vmem %s6029, 24
        %s6066 = scalar_lea.vmem %s6064, 4294967295
        %v6067 = vld [vmem:[%s6066] sm:$0xfe]
        %v6068 = vlaneseq
        %v6069 = vshrl.u32 %v6068, 7
        %vm6070 = vcmp.eq.s32.totalorder %v6069, 0
        %v6071 = vsel %vm6070, %v6062, %v6067
        %s6072 = scalar_lea.vmem %s6064, 7
        %v6073 = vld [vmem:[%s6072] ss:$0 sm:$0xff]
        %6074 = vst [vmem:[%s6064] sm:$0xff] %v6071
        %s6075 = scalar_lea.vmem %s6029, 32
        %s6077 = scalar_lea.vmem %s6075, 4294967295
        %v6078 = vld [vmem:[%s6077] sm:$0xfe]
        %v6079 = vlaneseq
        %v6080 = vshrl.u32 %v6079, 7
        %vm6081 = vcmp.eq.s32.totalorder %v6080, 0
        %v6082 = vsel %vm6081, %v6073, %v6078
        %s6083 = scalar_lea.vmem %s6075, 7
        %v6084 = vld [vmem:[%s6083] ss:$0 sm:$0xff]
        %6085 = vst [vmem:[%s6075] sm:$0xff] %v6082
        %s6086 = scalar_lea.vmem %s6029, 40
        %s6088 = scalar_lea.vmem %s6086, 4294967295
        %v6089 = vld [vmem:[%s6088] sm:$0xfe]
        %v6090 = vlaneseq
        %v6091 = vshrl.u32 %v6090, 7
        %vm6092 = vcmp.eq.s32.totalorder %v6091, 0
        %v6093 = vsel %vm6092, %v6084, %v6089
        %s6094 = scalar_lea.vmem %s6086, 7
        %v6095 = vld [vmem:[%s6094] ss:$0 sm:$0xff]
        %6096 = vst [vmem:[%s6086] sm:$0xff] %v6093
        %s6097 = scalar_lea.vmem %s6029, 48
        %s6099 = scalar_lea.vmem %s6097, 4294967295
        %v6100 = vld [vmem:[%s6099] sm:$0xfe]
        %v6101 = vlaneseq
        %v6102 = vshrl.u32 %v6101, 7
        %vm6103 = vcmp.eq.s32.totalorder %v6102, 0
        %v6104 = vsel %vm6103, %v6095, %v6100
        %s6105 = scalar_lea.vmem %s6097, 7
        %v6106 = vld [vmem:[%s6105] ss:$0 sm:$0xff]
        %6107 = vst [vmem:[%s6097] sm:$0xff] %v6104
        %s6108 = scalar_lea.vmem %s6029, 56
        %s6110 = scalar_lea.vmem %s6108, 4294967295
        %v6111 = vld [vmem:[%s6110] sm:$0xfe]
        %v6112 = vlaneseq
        %v6113 = vshrl.u32 %v6112, 7
        %vm6114 = vcmp.eq.s32.totalorder %v6113, 0
        %v6115 = vsel %vm6114, %v6106, %v6111
        %s6116 = scalar_lea.vmem %s6108, 7
        %v6117 = vld [vmem:[%s6116] ss:$0 sm:$0xff]
        %6118 = vst [vmem:[%s6108] sm:$0xff] %v6115
        %s6119 = scalar_lea.vmem %s6029, 64
        %s6121 = scalar_lea.vmem %s6119, 4294967295
        %v6122 = vld [vmem:[%s6121] sm:$0xfe]
        %v6123 = vlaneseq
        %v6124 = vshrl.u32 %v6123, 7
        %vm6125 = vcmp.eq.s32.totalorder %v6124, 0
        %v6126 = vsel %vm6125, %v6117, %v6122
        %s6127 = scalar_lea.vmem %s6119, 7
        %v6128 = vld [vmem:[%s6127] ss:$0 sm:$0xff]
        %6129 = vst [vmem:[%s6119] sm:$0xff] %v6126
        %s6130 = scalar_lea.vmem %s6029, 72
        %s6132 = scalar_lea.vmem %s6130, 4294967295
        %v6133 = vld [vmem:[%s6132] sm:$0xfe]
        %v6134 = vlaneseq
        %v6135 = vshrl.u32 %v6134, 7
        %vm6136 = vcmp.eq.s32.totalorder %v6135, 0
        %v6137 = vsel %vm6136, %v6128, %v6133
        %s6138 = scalar_lea.vmem %s6130, 7
        %v6139 = vld [vmem:[%s6138] ss:$0 sm:$0xff]
        %6140 = vst [vmem:[%s6130] sm:$0xff] %v6137
        %s6141 = scalar_lea.vmem %s6029, 80
        %s6143 = scalar_lea.vmem %s6141, 4294967295
        %v6144 = vld [vmem:[%s6143] sm:$0xfe]
        %v6145 = vlaneseq
        %v6146 = vshrl.u32 %v6145, 7
        %vm6147 = vcmp.eq.s32.totalorder %v6146, 0
        %v6148 = vsel %vm6147, %v6139, %v6144
        %s6149 = scalar_lea.vmem %s6141, 7
        %v6150 = vld [vmem:[%s6149] ss:$0 sm:$0xff]
        %6151 = vst [vmem:[%s6141] sm:$0xff] %v6148
        %s6152 = scalar_lea.vmem %s6029, 88
        %s6154 = scalar_lea.vmem %s6152, 4294967295
        %v6155 = vld [vmem:[%s6154] sm:$0xfe]
        %v6156 = vlaneseq
        %v6157 = vshrl.u32 %v6156, 7
        %vm6158 = vcmp.eq.s32.totalorder %v6157, 0
        %v6159 = vsel %vm6158, %v6150, %v6155
        %s6160 = scalar_lea.vmem %s6152, 7
        %v6161 = vld [vmem:[%s6160] ss:$0 sm:$0xff]
        %6162 = vst [vmem:[%s6152] sm:$0xff] %v6159
        %s6163 = scalar_lea.vmem %s6029, 96
        %s6165 = scalar_lea.vmem %s6163, 4294967295
        %v6166 = vld [vmem:[%s6165] sm:$0xfe]
        %v6167 = vlaneseq
        %v6168 = vshrl.u32 %v6167, 7
        %vm6169 = vcmp.eq.s32.totalorder %v6168, 0
        %v6170 = vsel %vm6169, %v6161, %v6166
        %s6171 = scalar_lea.vmem %s6163, 7
        %v6172 = vld [vmem:[%s6171] ss:$0 sm:$0xff]
        %6173 = vst [vmem:[%s6163] sm:$0xff] %v6170
        %s6174 = scalar_lea.vmem %s6029, 104
        %s6176 = scalar_lea.vmem %s6174, 4294967295
        %v6177 = vld [vmem:[%s6176] sm:$0xfe]
        %v6178 = vlaneseq
        %v6179 = vshrl.u32 %v6178, 7
        %vm6180 = vcmp.eq.s32.totalorder %v6179, 0
        %v6181 = vsel %vm6180, %v6172, %v6177
        %s6182 = scalar_lea.vmem %s6174, 7
        %v6183 = vld [vmem:[%s6182] ss:$0 sm:$0xff]
        %6184 = vst [vmem:[%s6174] sm:$0xff] %v6181
        %s6185 = scalar_lea.vmem %s6029, 112
        %s6187 = scalar_lea.vmem %s6185, 4294967295
        %v6188 = vld [vmem:[%s6187] sm:$0xfe]
        %v6189 = vlaneseq
        %v6190 = vshrl.u32 %v6189, 7
        %vm6191 = vcmp.eq.s32.totalorder %v6190, 0
        %v6192 = vsel %vm6191, %v6183, %v6188
        %s6193 = scalar_lea.vmem %s6185, 7
        %v6194 = vld [vmem:[%s6193] ss:$0 sm:$0xff]
        %6195 = vst [vmem:[%s6185] sm:$0xff] %v6192
        %s6196 = scalar_lea.vmem %s6029, 120
        %s6198 = scalar_lea.vmem %s6196, 4294967295
        %v6199 = vld [vmem:[%s6198] sm:$0xfe]
        %v6200 = vlaneseq
        %v6201 = vshrl.u32 %v6200, 7
        %vm6202 = vcmp.eq.s32.totalorder %v6201, 0
        %v6203 = vsel %vm6202, %v6194, %v6199
        %s6204 = scalar_lea.vmem %s6196, 7
        %v6205 = vld [vmem:[%s6204] ss:$0 sm:$0xff]
        %6206 = vst [vmem:[%s6196] sm:$0xff] %v6203
        %v6207 = vld [vmem:[%s6030] ss:$0 sm:$0xff]
        %s6208 = scalar_lea.vmem %s6029, 1
        %6209 = vst [vmem:[%s6208] sm:$0x1] %v6207
        %s6210 = scalar_lea.vmem %s6030, 120
        %s6211 = scalar_lea.vmem %s6210, 1
        %v6212 = vld [vmem:[%s6211] sm:$0x7f]
        %v6213 = vlaneseq
        %v6214 = vshrl.u32 %v6213, 7
        %vm6215 = vcmp.eq.s32.totalorder %v6214, 7
        %v6216 = vsel %vm6215, %v6205, %v6212
        %v6217 = vld [vmem:[%s6210] ss:$0 sm:$0xff]
        %6218 = vst [vmem:[%s6210] sm:$0xff] %v6216
        %s6219 = scalar_lea.vmem %s6030, 112
        %s6220 = scalar_lea.vmem %s6219, 1
        %v6221 = vld [vmem:[%s6220] sm:$0x7f]
        %v6222 = vlaneseq
        %v6223 = vshrl.u32 %v6222, 7
        %vm6224 = vcmp.eq.s32.totalorder %v6223, 7
        %v6225 = vsel %vm6224, %v6217, %v6221
        %v6226 = vld [vmem:[%s6219] ss:$0 sm:$0xff]
        %6227 = vst [vmem:[%s6219] sm:$0xff] %v6225
        %s6228 = scalar_lea.vmem %s6030, 104
        %s6229 = scalar_lea.vmem %s6228, 1
        %v6230 = vld [vmem:[%s6229] sm:$0x7f]
        %v6231 = vlaneseq
        %v6232 = vshrl.u32 %v6231, 7
        %vm6233 = vcmp.eq.s32.totalorder %v6232, 7
        %v6234 = vsel %vm6233, %v6226, %v6230
        %v6235 = vld [vmem:[%s6228] ss:$0 sm:$0xff]
        %6236 = vst [vmem:[%s6228] sm:$0xff] %v6234
        %s6237 = scalar_lea.vmem %s6030, 96
        %s6238 = scalar_lea.vmem %s6237, 1
        %v6239 = vld [vmem:[%s6238] sm:$0x7f]
        %v6240 = vlaneseq
        %v6241 = vshrl.u32 %v6240, 7
        %vm6242 = vcmp.eq.s32.totalorder %v6241, 7
        %v6243 = vsel %vm6242, %v6235, %v6239
        %v6244 = vld [vmem:[%s6237] ss:$0 sm:$0xff]
        %6245 = vst [vmem:[%s6237] sm:$0xff] %v6243
        %s6246 = scalar_lea.vmem %s6030, 88
        %s6247 = scalar_lea.vmem %s6246, 1
        %v6248 = vld [vmem:[%s6247] sm:$0x7f]
        %v6249 = vlaneseq
        %v6250 = vshrl.u32 %v6249, 7
        %vm6251 = vcmp.eq.s32.totalorder %v6250, 7
        %v6252 = vsel %vm6251, %v6244, %v6248
        %v6253 = vld [vmem:[%s6246] ss:$0 sm:$0xff]
        %6254 = vst [vmem:[%s6246] sm:$0xff] %v6252
        %s6255 = scalar_lea.vmem %s6030, 80
        %s6256 = scalar_lea.vmem %s6255, 1
        %v6257 = vld [vmem:[%s6256] sm:$0x7f]
        %v6258 = vlaneseq
        %v6259 = vshrl.u32 %v6258, 7
        %vm6260 = vcmp.eq.s32.totalorder %v6259, 7
        %v6261 = vsel %vm6260, %v6253, %v6257
        %v6262 = vld [vmem:[%s6255] ss:$0 sm:$0xff]
        %6263 = vst [vmem:[%s6255] sm:$0xff] %v6261
        %s6264 = scalar_lea.vmem %s6030, 72
        %s6265 = scalar_lea.vmem %s6264, 1
        %v6266 = vld [vmem:[%s6265] sm:$0x7f]
        %v6267 = vlaneseq
        %v6268 = vshrl.u32 %v6267, 7
        %vm6269 = vcmp.eq.s32.totalorder %v6268, 7
        %v6270 = vsel %vm6269, %v6262, %v6266
        %v6271 = vld [vmem:[%s6264] ss:$0 sm:$0xff]
        %6272 = vst [vmem:[%s6264] sm:$0xff] %v6270
        %s6273 = scalar_lea.vmem %s6030, 64
        %s6274 = scalar_lea.vmem %s6273, 1
        %v6275 = vld [vmem:[%s6274] sm:$0x7f]
        %v6276 = vlaneseq
        %v6277 = vshrl.u32 %v6276, 7
        %vm6278 = vcmp.eq.s32.totalorder %v6277, 7
        %v6279 = vsel %vm6278, %v6271, %v6275
        %v6280 = vld [vmem:[%s6273] ss:$0 sm:$0xff]
        %6281 = vst [vmem:[%s6273] sm:$0xff] %v6279
        %s6282 = scalar_lea.vmem %s6030, 56
        %s6283 = scalar_lea.vmem %s6282, 1
        %v6284 = vld [vmem:[%s6283] sm:$0x7f]
        %v6285 = vlaneseq
        %v6286 = vshrl.u32 %v6285, 7
        %vm6287 = vcmp.eq.s32.totalorder %v6286, 7
        %v6288 = vsel %vm6287, %v6280, %v6284
        %v6289 = vld [vmem:[%s6282] ss:$0 sm:$0xff]
        %6290 = vst [vmem:[%s6282] sm:$0xff] %v6288
        %s6291 = scalar_lea.vmem %s6030, 48
        %s6292 = scalar_lea.vmem %s6291, 1
        %v6293 = vld [vmem:[%s6292] sm:$0x7f]
        %v6294 = vlaneseq
        %v6295 = vshrl.u32 %v6294, 7
        %vm6296 = vcmp.eq.s32.totalorder %v6295, 7
        %v6297 = vsel %vm6296, %v6289, %v6293
        %v6298 = vld [vmem:[%s6291] ss:$0 sm:$0xff]
        %6299 = vst [vmem:[%s6291] sm:$0xff] %v6297
        %s6300 = scalar_lea.vmem %s6030, 40
        %s6301 = scalar_lea.vmem %s6300, 1
        %v6302 = vld [vmem:[%s6301] sm:$0x7f]
        %v6303 = vlaneseq
        %v6304 = vshrl.u32 %v6303, 7
        %vm6305 = vcmp.eq.s32.totalorder %v6304, 7
        %v6306 = vsel %vm6305, %v6298, %v6302
        %v6307 = vld [vmem:[%s6300] ss:$0 sm:$0xff]
        %6308 = vst [vmem:[%s6300] sm:$0xff] %v6306
        %s6309 = scalar_lea.vmem %s6030, 32
        %s6310 = scalar_lea.vmem %s6309, 1
        %v6311 = vld [vmem:[%s6310] sm:$0x7f]
        %v6312 = vlaneseq
        %v6313 = vshrl.u32 %v6312, 7
        %vm6314 = vcmp.eq.s32.totalorder %v6313, 7
        %v6315 = vsel %vm6314, %v6307, %v6311
        %v6316 = vld [vmem:[%s6309] ss:$0 sm:$0xff]
        %6317 = vst [vmem:[%s6309] sm:$0xff] %v6315
        %s6318 = scalar_lea.vmem %s6030, 24
        %s6319 = scalar_lea.vmem %s6318, 1
        %v6320 = vld [vmem:[%s6319] sm:$0x7f]
        %v6321 = vlaneseq
        %v6322 = vshrl.u32 %v6321, 7
        %vm6323 = vcmp.eq.s32.totalorder %v6322, 7
        %v6324 = vsel %vm6323, %v6316, %v6320
        %v6325 = vld [vmem:[%s6318] ss:$0 sm:$0xff]
        %6326 = vst [vmem:[%s6318] sm:$0xff] %v6324
        %s6327 = scalar_lea.vmem %s6030, 16
        %s6328 = scalar_lea.vmem %s6327, 1
        %v6329 = vld [vmem:[%s6328] sm:$0x7f]
        %v6330 = vlaneseq
        %v6331 = vshrl.u32 %v6330, 7
        %vm6332 = vcmp.eq.s32.totalorder %v6331, 7
        %v6333 = vsel %vm6332, %v6325, %v6329
        %v6334 = vld [vmem:[%s6327] ss:$0 sm:$0xff]
        %6335 = vst [vmem:[%s6327] sm:$0xff] %v6333
        %s6336 = scalar_lea.vmem %s6030, 8
        %s6337 = scalar_lea.vmem %s6336, 1
        %v6338 = vld [vmem:[%s6337] sm:$0x7f]
        %v6339 = vlaneseq
        %v6340 = vshrl.u32 %v6339, 7
        %vm6341 = vcmp.eq.s32.totalorder %v6340, 7
        %v6342 = vsel %vm6341, %v6334, %v6338
        %v6343 = vld [vmem:[%s6336] ss:$0 sm:$0xff]
        %6344 = vst [vmem:[%s6336] sm:$0xff] %v6342
        %s6345 = scalar_lea.vmem %s6030, 1
        %v6346 = vld [vmem:[%s6345] sm:$0x7f]
        %v6347 = vlaneseq
        %v6348 = vshrl.u32 %v6347, 7
        %vm6349 = vcmp.eq.s32.totalorder %v6348, 7
        %v6350 = vsel %vm6349, %v6343, %v6346
        %v6351 = vld [vmem:[%s6030] ss:$0 sm:$0xff]
        %6352 = vst [vmem:[%s6030] sm:$0xff] %v6350
        %s6353 = smov [#allocation10]
        %s6354 = smov [#allocation13]
        %v6355 = vld [vmem:[%s6353] ss:$0 sm:$0xff]
        %s6357 = scalar_lea.vmem %s6353, 4294967295
        %v6358 = vld [vmem:[%s6357] sm:$0xfe]
        %v6359 = vlaneseq
        %v6360 = vshrl.u32 %v6359, 7
        %vm6361 = vcmp.eq.s32.totalorder %v6360, 0
        %v6362 = vsel %vm6361, %v6355, %v6358
        %s6363 = scalar_lea.vmem %s6353, 7
        %v6364 = vld [vmem:[%s6363] ss:$0 sm:$0xff]
        %6365 = vst [vmem:[%s6353] sm:$0xff] %v6362
        %s6366 = scalar_lea.vmem %s6353, 8
        %s6368 = scalar_lea.vmem %s6366, 4294967295
        %v6369 = vld [vmem:[%s6368] sm:$0xfe]
        %v6370 = vlaneseq
        %v6371 = vshrl.u32 %v6370, 7
        %vm6372 = vcmp.eq.s32.totalorder %v6371, 0
        %v6373 = vsel %vm6372, %v6364, %v6369
        %s6374 = scalar_lea.vmem %s6366, 7
        %v6375 = vld [vmem:[%s6374] ss:$0 sm:$0xff]
        %6376 = vst [vmem:[%s6366] sm:$0xff] %v6373
        %s6377 = scalar_lea.vmem %s6353, 16
        %s6379 = scalar_lea.vmem %s6377, 4294967295
        %v6380 = vld [vmem:[%s6379] sm:$0xfe]
        %v6381 = vlaneseq
        %v6382 = vshrl.u32 %v6381, 7
        %vm6383 = vcmp.eq.s32.totalorder %v6382, 0
        %v6384 = vsel %vm6383, %v6375, %v6380
        %s6385 = scalar_lea.vmem %s6377, 7
        %v6386 = vld [vmem:[%s6385] ss:$0 sm:$0xff]
        %6387 = vst [vmem:[%s6377] sm:$0xff] %v6384
        %s6388 = scalar_lea.vmem %s6353, 24
        %s6390 = scalar_lea.vmem %s6388, 4294967295
        %v6391 = vld [vmem:[%s6390] sm:$0xfe]
        %v6392 = vlaneseq
        %v6393 = vshrl.u32 %v6392, 7
        %vm6394 = vcmp.eq.s32.totalorder %v6393, 0
        %v6395 = vsel %vm6394, %v6386, %v6391
        %s6396 = scalar_lea.vmem %s6388, 7
        %v6397 = vld [vmem:[%s6396] ss:$0 sm:$0xff]
        %6398 = vst [vmem:[%s6388] sm:$0xff] %v6395
        %s6399 = scalar_lea.vmem %s6353, 32
        %s6401 = scalar_lea.vmem %s6399, 4294967295
        %v6402 = vld [vmem:[%s6401] sm:$0xfe]
        %v6403 = vlaneseq
        %v6404 = vshrl.u32 %v6403, 7
        %vm6405 = vcmp.eq.s32.totalorder %v6404, 0
        %v6406 = vsel %vm6405, %v6397, %v6402
        %s6407 = scalar_lea.vmem %s6399, 7
        %v6408 = vld [vmem:[%s6407] ss:$0 sm:$0xff]
        %6409 = vst [vmem:[%s6399] sm:$0xff] %v6406
        %s6410 = scalar_lea.vmem %s6353, 40
        %s6412 = scalar_lea.vmem %s6410, 4294967295
        %v6413 = vld [vmem:[%s6412] sm:$0xfe]
        %v6414 = vlaneseq
        %v6415 = vshrl.u32 %v6414, 7
        %vm6416 = vcmp.eq.s32.totalorder %v6415, 0
        %v6417 = vsel %vm6416, %v6408, %v6413
        %s6418 = scalar_lea.vmem %s6410, 7
        %v6419 = vld [vmem:[%s6418] ss:$0 sm:$0xff]
        %6420 = vst [vmem:[%s6410] sm:$0xff] %v6417
        %s6421 = scalar_lea.vmem %s6353, 48
        %s6423 = scalar_lea.vmem %s6421, 4294967295
        %v6424 = vld [vmem:[%s6423] sm:$0xfe]
        %v6425 = vlaneseq
        %v6426 = vshrl.u32 %v6425, 7
        %vm6427 = vcmp.eq.s32.totalorder %v6426, 0
        %v6428 = vsel %vm6427, %v6419, %v6424
        %s6429 = scalar_lea.vmem %s6421, 7
        %v6430 = vld [vmem:[%s6429] ss:$0 sm:$0xff]
        %6431 = vst [vmem:[%s6421] sm:$0xff] %v6428
        %s6432 = scalar_lea.vmem %s6353, 56
        %s6434 = scalar_lea.vmem %s6432, 4294967295
        %v6435 = vld [vmem:[%s6434] sm:$0xfe]
        %v6436 = vlaneseq
        %v6437 = vshrl.u32 %v6436, 7
        %vm6438 = vcmp.eq.s32.totalorder %v6437, 0
        %v6439 = vsel %vm6438, %v6430, %v6435
        %s6440 = scalar_lea.vmem %s6432, 7
        %v6441 = vld [vmem:[%s6440] ss:$0 sm:$0xff]
        %6442 = vst [vmem:[%s6432] sm:$0xff] %v6439
        %s6443 = scalar_lea.vmem %s6353, 64
        %s6445 = scalar_lea.vmem %s6443, 4294967295
        %v6446 = vld [vmem:[%s6445] sm:$0xfe]
        %v6447 = vlaneseq
        %v6448 = vshrl.u32 %v6447, 7
        %vm6449 = vcmp.eq.s32.totalorder %v6448, 0
        %v6450 = vsel %vm6449, %v6441, %v6446
        %s6451 = scalar_lea.vmem %s6443, 7
        %v6452 = vld [vmem:[%s6451] ss:$0 sm:$0xff]
        %6453 = vst [vmem:[%s6443] sm:$0xff] %v6450
        %s6454 = scalar_lea.vmem %s6353, 72
        %s6456 = scalar_lea.vmem %s6454, 4294967295
        %v6457 = vld [vmem:[%s6456] sm:$0xfe]
        %v6458 = vlaneseq
        %v6459 = vshrl.u32 %v6458, 7
        %vm6460 = vcmp.eq.s32.totalorder %v6459, 0
        %v6461 = vsel %vm6460, %v6452, %v6457
        %s6462 = scalar_lea.vmem %s6454, 7
        %v6463 = vld [vmem:[%s6462] ss:$0 sm:$0xff]
        %6464 = vst [vmem:[%s6454] sm:$0xff] %v6461
        %s6465 = scalar_lea.vmem %s6353, 80
        %s6467 = scalar_lea.vmem %s6465, 4294967295
        %v6468 = vld [vmem:[%s6467] sm:$0xfe]
        %v6469 = vlaneseq
        %v6470 = vshrl.u32 %v6469, 7
        %vm6471 = vcmp.eq.s32.totalorder %v6470, 0
        %v6472 = vsel %vm6471, %v6463, %v6468
        %s6473 = scalar_lea.vmem %s6465, 7
        %v6474 = vld [vmem:[%s6473] ss:$0 sm:$0xff]
        %6475 = vst [vmem:[%s6465] sm:$0xff] %v6472
        %s6476 = scalar_lea.vmem %s6353, 88
        %s6478 = scalar_lea.vmem %s6476, 4294967295
        %v6479 = vld [vmem:[%s6478] sm:$0xfe]
        %v6480 = vlaneseq
        %v6481 = vshrl.u32 %v6480, 7
        %vm6482 = vcmp.eq.s32.totalorder %v6481, 0
        %v6483 = vsel %vm6482, %v6474, %v6479
        %s6484 = scalar_lea.vmem %s6476, 7
        %v6485 = vld [vmem:[%s6484] ss:$0 sm:$0xff]
        %6486 = vst [vmem:[%s6476] sm:$0xff] %v6483
        %s6487 = scalar_lea.vmem %s6353, 96
        %s6489 = scalar_lea.vmem %s6487, 4294967295
        %v6490 = vld [vmem:[%s6489] sm:$0xfe]
        %v6491 = vlaneseq
        %v6492 = vshrl.u32 %v6491, 7
        %vm6493 = vcmp.eq.s32.totalorder %v6492, 0
        %v6494 = vsel %vm6493, %v6485, %v6490
        %s6495 = scalar_lea.vmem %s6487, 7
        %v6496 = vld [vmem:[%s6495] ss:$0 sm:$0xff]
        %6497 = vst [vmem:[%s6487] sm:$0xff] %v6494
        %s6498 = scalar_lea.vmem %s6353, 104
        %s6500 = scalar_lea.vmem %s6498, 4294967295
        %v6501 = vld [vmem:[%s6500] sm:$0xfe]
        %v6502 = vlaneseq
        %v6503 = vshrl.u32 %v6502, 7
        %vm6504 = vcmp.eq.s32.totalorder %v6503, 0
        %v6505 = vsel %vm6504, %v6496, %v6501
        %s6506 = scalar_lea.vmem %s6498, 7
        %v6507 = vld [vmem:[%s6506] ss:$0 sm:$0xff]
        %6508 = vst [vmem:[%s6498] sm:$0xff] %v6505
        %s6509 = scalar_lea.vmem %s6353, 112
        %s6511 = scalar_lea.vmem %s6509, 4294967295
        %v6512 = vld [vmem:[%s6511] sm:$0xfe]
        %v6513 = vlaneseq
        %v6514 = vshrl.u32 %v6513, 7
        %vm6515 = vcmp.eq.s32.totalorder %v6514, 0
        %v6516 = vsel %vm6515, %v6507, %v6512
        %s6517 = scalar_lea.vmem %s6509, 7
        %v6518 = vld [vmem:[%s6517] ss:$0 sm:$0xff]
        %6519 = vst [vmem:[%s6509] sm:$0xff] %v6516
        %s6520 = scalar_lea.vmem %s6353, 120
        %s6522 = scalar_lea.vmem %s6520, 4294967295
        %v6523 = vld [vmem:[%s6522] sm:$0xfe]
        %v6524 = vlaneseq
        %v6525 = vshrl.u32 %v6524, 7
        %vm6526 = vcmp.eq.s32.totalorder %v6525, 0
        %v6527 = vsel %vm6526, %v6518, %v6523
        %s6528 = scalar_lea.vmem %s6520, 7
        %v6529 = vld [vmem:[%s6528] ss:$0 sm:$0xff]
        %6530 = vst [vmem:[%s6520] sm:$0xff] %v6527
        %v6531 = vld [vmem:[%s6354] ss:$0 sm:$0xff]
        %s6532 = scalar_lea.vmem %s6353, 1
        %6533 = vst [vmem:[%s6532] sm:$0x1] %v6531
        %s6534 = scalar_lea.vmem %s6354, 120
        %s6535 = scalar_lea.vmem %s6534, 1
        %v6536 = vld [vmem:[%s6535] sm:$0x7f]
        %v6537 = vlaneseq
        %v6538 = vshrl.u32 %v6537, 7
        %vm6539 = vcmp.eq.s32.totalorder %v6538, 7
        %v6540 = vsel %vm6539, %v6529, %v6536
        %v6541 = vld [vmem:[%s6534] ss:$0 sm:$0xff]
        %6542 = vst [vmem:[%s6534] sm:$0xff] %v6540
        %s6543 = scalar_lea.vmem %s6354, 112
        %s6544 = scalar_lea.vmem %s6543, 1
        %v6545 = vld [vmem:[%s6544] sm:$0x7f]
        %v6546 = vlaneseq
        %v6547 = vshrl.u32 %v6546, 7
        %vm6548 = vcmp.eq.s32.totalorder %v6547, 7
        %v6549 = vsel %vm6548, %v6541, %v6545
        %v6550 = vld [vmem:[%s6543] ss:$0 sm:$0xff]
        %6551 = vst [vmem:[%s6543] sm:$0xff] %v6549
        %s6552 = scalar_lea.vmem %s6354, 104
        %s6553 = scalar_lea.vmem %s6552, 1
        %v6554 = vld [vmem:[%s6553] sm:$0x7f]
        %v6555 = vlaneseq
        %v6556 = vshrl.u32 %v6555, 7
        %vm6557 = vcmp.eq.s32.totalorder %v6556, 7
        %v6558 = vsel %vm6557, %v6550, %v6554
        %v6559 = vld [vmem:[%s6552] ss:$0 sm:$0xff]
        %6560 = vst [vmem:[%s6552] sm:$0xff] %v6558
        %s6561 = scalar_lea.vmem %s6354, 96
        %s6562 = scalar_lea.vmem %s6561, 1
        %v6563 = vld [vmem:[%s6562] sm:$0x7f]
        %v6564 = vlaneseq
        %v6565 = vshrl.u32 %v6564, 7
        %vm6566 = vcmp.eq.s32.totalorder %v6565, 7
        %v6567 = vsel %vm6566, %v6559, %v6563
        %v6568 = vld [vmem:[%s6561] ss:$0 sm:$0xff]
        %6569 = vst [vmem:[%s6561] sm:$0xff] %v6567
        %s6570 = scalar_lea.vmem %s6354, 88
        %s6571 = scalar_lea.vmem %s6570, 1
        %v6572 = vld [vmem:[%s6571] sm:$0x7f]
        %v6573 = vlaneseq
        %v6574 = vshrl.u32 %v6573, 7
        %vm6575 = vcmp.eq.s32.totalorder %v6574, 7
        %v6576 = vsel %vm6575, %v6568, %v6572
        %v6577 = vld [vmem:[%s6570] ss:$0 sm:$0xff]
        %6578 = vst [vmem:[%s6570] sm:$0xff] %v6576
        %s6579 = scalar_lea.vmem %s6354, 80
        %s6580 = scalar_lea.vmem %s6579, 1
        %v6581 = vld [vmem:[%s6580] sm:$0x7f]
        %v6582 = vlaneseq
        %v6583 = vshrl.u32 %v6582, 7
        %vm6584 = vcmp.eq.s32.totalorder %v6583, 7
        %v6585 = vsel %vm6584, %v6577, %v6581
        %v6586 = vld [vmem:[%s6579] ss:$0 sm:$0xff]
        %6587 = vst [vmem:[%s6579] sm:$0xff] %v6585
        %s6588 = scalar_lea.vmem %s6354, 72
        %s6589 = scalar_lea.vmem %s6588, 1
        %v6590 = vld [vmem:[%s6589] sm:$0x7f]
        %v6591 = vlaneseq
        %v6592 = vshrl.u32 %v6591, 7
        %vm6593 = vcmp.eq.s32.totalorder %v6592, 7
        %v6594 = vsel %vm6593, %v6586, %v6590
        %v6595 = vld [vmem:[%s6588] ss:$0 sm:$0xff]
        %6596 = vst [vmem:[%s6588] sm:$0xff] %v6594
        %s6597 = scalar_lea.vmem %s6354, 64
        %s6598 = scalar_lea.vmem %s6597, 1
        %v6599 = vld [vmem:[%s6598] sm:$0x7f]
        %v6600 = vlaneseq
        %v6601 = vshrl.u32 %v6600, 7
        %vm6602 = vcmp.eq.s32.totalorder %v6601, 7
        %v6603 = vsel %vm6602, %v6595, %v6599
        %v6604 = vld [vmem:[%s6597] ss:$0 sm:$0xff]
        %6605 = vst [vmem:[%s6597] sm:$0xff] %v6603
        %s6606 = scalar_lea.vmem %s6354, 56
        %s6607 = scalar_lea.vmem %s6606, 1
        %v6608 = vld [vmem:[%s6607] sm:$0x7f]
        %v6609 = vlaneseq
        %v6610 = vshrl.u32 %v6609, 7
        %vm6611 = vcmp.eq.s32.totalorder %v6610, 7
        %v6612 = vsel %vm6611, %v6604, %v6608
        %v6613 = vld [vmem:[%s6606] ss:$0 sm:$0xff]
        %6614 = vst [vmem:[%s6606] sm:$0xff] %v6612
        %s6615 = scalar_lea.vmem %s6354, 48
        %s6616 = scalar_lea.vmem %s6615, 1
        %v6617 = vld [vmem:[%s6616] sm:$0x7f]
        %v6618 = vlaneseq
        %v6619 = vshrl.u32 %v6618, 7
        %vm6620 = vcmp.eq.s32.totalorder %v6619, 7
        %v6621 = vsel %vm6620, %v6613, %v6617
        %v6622 = vld [vmem:[%s6615] ss:$0 sm:$0xff]
        %6623 = vst [vmem:[%s6615] sm:$0xff] %v6621
        %s6624 = scalar_lea.vmem %s6354, 40
        %s6625 = scalar_lea.vmem %s6624, 1
        %v6626 = vld [vmem:[%s6625] sm:$0x7f]
        %v6627 = vlaneseq
        %v6628 = vshrl.u32 %v6627, 7
        %vm6629 = vcmp.eq.s32.totalorder %v6628, 7
        %v6630 = vsel %vm6629, %v6622, %v6626
        %v6631 = vld [vmem:[%s6624] ss:$0 sm:$0xff]
        %6632 = vst [vmem:[%s6624] sm:$0xff] %v6630
        %s6633 = scalar_lea.vmem %s6354, 32
        %s6634 = scalar_lea.vmem %s6633, 1
        %v6635 = vld [vmem:[%s6634] sm:$0x7f]
        %v6636 = vlaneseq
        %v6637 = vshrl.u32 %v6636, 7
        %vm6638 = vcmp.eq.s32.totalorder %v6637, 7
        %v6639 = vsel %vm6638, %v6631, %v6635
        %v6640 = vld [vmem:[%s6633] ss:$0 sm:$0xff]
        %6641 = vst [vmem:[%s6633] sm:$0xff] %v6639
        %s6642 = scalar_lea.vmem %s6354, 24
        %s6643 = scalar_lea.vmem %s6642, 1
        %v6644 = vld [vmem:[%s6643] sm:$0x7f]
        %v6645 = vlaneseq
        %v6646 = vshrl.u32 %v6645, 7
        %vm6647 = vcmp.eq.s32.totalorder %v6646, 7
        %v6648 = vsel %vm6647, %v6640, %v6644
        %v6649 = vld [vmem:[%s6642] ss:$0 sm:$0xff]
        %6650 = vst [vmem:[%s6642] sm:$0xff] %v6648
        %s6651 = scalar_lea.vmem %s6354, 16
        %s6652 = scalar_lea.vmem %s6651, 1
        %v6653 = vld [vmem:[%s6652] sm:$0x7f]
        %v6654 = vlaneseq
        %v6655 = vshrl.u32 %v6654, 7
        %vm6656 = vcmp.eq.s32.totalorder %v6655, 7
        %v6657 = vsel %vm6656, %v6649, %v6653
        %v6658 = vld [vmem:[%s6651] ss:$0 sm:$0xff]
        %6659 = vst [vmem:[%s6651] sm:$0xff] %v6657
        %s6660 = scalar_lea.vmem %s6354, 8
        %s6661 = scalar_lea.vmem %s6660, 1
        %v6662 = vld [vmem:[%s6661] sm:$0x7f]
        %v6663 = vlaneseq
        %v6664 = vshrl.u32 %v6663, 7
        %vm6665 = vcmp.eq.s32.totalorder %v6664, 7
        %v6666 = vsel %vm6665, %v6658, %v6662
        %v6667 = vld [vmem:[%s6660] ss:$0 sm:$0xff]
        %6668 = vst [vmem:[%s6660] sm:$0xff] %v6666
        %s6669 = scalar_lea.vmem %s6354, 1
        %v6670 = vld [vmem:[%s6669] sm:$0x7f]
        %v6671 = vlaneseq
        %v6672 = vshrl.u32 %v6671, 7
        %vm6673 = vcmp.eq.s32.totalorder %v6672, 7
        %v6674 = vsel %vm6673, %v6667, %v6670
        %v6675 = vld [vmem:[%s6354] ss:$0 sm:$0xff]
        %6676 = vst [vmem:[%s6354] sm:$0xff] %v6674
      $region101: #{custom-call.3} parent=93 // loop_footer
        %s1377 = sadd.s32 1, %s1373
      $region102: #{custom-call.3} parent=93 // loop_footer_branch
        %1372 = sbr.rel target = $region98
      $region103: #{custom-call.3} parent=93 // loop_exit
        _
      %s6677 = sadd.s32 %s879, 1
    $region94: #{custom-call.3} parent=1 // loop_footer
      _
    $region95: #{custom-call.3} parent=1 // loop_footer_branch
      %878 = sbr.rel target = $region91
    $region96: #{custom-call.3} parent=1 // loop_exit
      _
    %s6680 = smov [#allocation15]
    %s6681 = smov [#allocation4]
    %v6682 = vlaneseq
    %v6683 = vand.u32 %v6682, 127
    %v6684 = vmov %v6683
    %v6685 = vlaneseq
    %v6686 = vshrl.u32 %v6685, 7
    %v6687 = vmov %v6686
    %v6688 = vld [vmem:[%s6680] sm:$0xff]
    %vm6691 = vcmp.eq.s32.totalorder %v6687, %v6684
    %v6692 = vsel %vm6691, %v6688, 0.0
    %s6693 = scalar_lea.vmem %s6680, 8
    %v6694 = vld [vmem:[%s6693] sm:$0xff]
    %v6696 = vadd.s32 %v6687, 8
    %vm6697 = vcmp.eq.s32.totalorder %v6696, %v6684
    %v6698 = vsel %vm6697, %v6694, %v6692
    %s6699 = scalar_lea.vmem %s6680, 16
    %v6700 = vld [vmem:[%s6699] sm:$0xff]
    %v6702 = vadd.s32 %v6687, 16
    %vm6703 = vcmp.eq.s32.totalorder %v6702, %v6684
    %v6704 = vsel %vm6703, %v6700, %v6698
    %s6705 = scalar_lea.vmem %s6680, 24
    %v6706 = vld [vmem:[%s6705] sm:$0xff]
    %v6708 = vadd.s32 %v6687, 24
    %vm6709 = vcmp.eq.s32.totalorder %v6708, %v6684
    %v6710 = vsel %vm6709, %v6706, %v6704
    %s6711 = scalar_lea.vmem %s6680, 32
    %v6712 = vld [vmem:[%s6711] sm:$0xff]
    %v6714 = vadd.s32 %v6687, 32
    %vm6715 = vcmp.eq.s32.totalorder %v6714, %v6684
    %v6716 = vsel %vm6715, %v6712, %v6710
    %s6717 = scalar_lea.vmem %s6680, 40
    %v6718 = vld [vmem:[%s6717] sm:$0xff]
    %v6720 = vadd.s32 %v6687, 40
    %vm6721 = vcmp.eq.s32.totalorder %v6720, %v6684
    %v6722 = vsel %vm6721, %v6718, %v6716
    %s6723 = scalar_lea.vmem %s6680, 48
    %v6724 = vld [vmem:[%s6723] sm:$0xff]
    %v6726 = vadd.s32 %v6687, 48
    %vm6727 = vcmp.eq.s32.totalorder %v6726, %v6684
    %v6728 = vsel %vm6727, %v6724, %v6722
    %s6729 = scalar_lea.vmem %s6680, 56
    %v6730 = vld [vmem:[%s6729] sm:$0xff]
    %v6732 = vadd.s32 %v6687, 56
    %vm6733 = vcmp.eq.s32.totalorder %v6732, %v6684
    %v6734 = vsel %vm6733, %v6730, %v6728
    %s6735 = scalar_lea.vmem %s6680, 64
    %v6736 = vld [vmem:[%s6735] sm:$0xff]
    %v6738 = vadd.s32 %v6687, 64
    %vm6739 = vcmp.eq.s32.totalorder %v6738, %v6684
    %v6740 = vsel %vm6739, %v6736, %v6734
    %s6741 = scalar_lea.vmem %s6680, 72
    %v6742 = vld [vmem:[%s6741] sm:$0xff]
    %v6744 = vadd.s32 %v6687, 72
    %vm6745 = vcmp.eq.s32.totalorder %v6744, %v6684
    %v6746 = vsel %vm6745, %v6742, %v6740
    %s6747 = scalar_lea.vmem %s6680, 80
    %v6748 = vld [vmem:[%s6747] sm:$0xff]
    %v6750 = vadd.s32 %v6687, 80
    %vm6751 = vcmp.eq.s32.totalorder %v6750, %v6684
    %v6752 = vsel %vm6751, %v6748, %v6746
    %s6753 = scalar_lea.vmem %s6680, 88
    %v6754 = vld [vmem:[%s6753] sm:$0xff]
    %v6756 = vadd.s32 %v6687, 88
    %vm6757 = vcmp.eq.s32.totalorder %v6756, %v6684
    %v6758 = vsel %vm6757, %v6754, %v6752
    %s6759 = scalar_lea.vmem %s6680, 96
    %v6760 = vld [vmem:[%s6759] sm:$0xff]
    %v6762 = vadd.s32 %v6687, 96
    %vm6763 = vcmp.eq.s32.totalorder %v6762, %v6684
    %v6764 = vsel %vm6763, %v6760, %v6758
    %s6765 = scalar_lea.vmem %s6680, 104
    %v6766 = vld [vmem:[%s6765] sm:$0xff]
    %v6768 = vadd.s32 %v6687, 104
    %vm6769 = vcmp.eq.s32.totalorder %v6768, %v6684
    %v6770 = vsel %vm6769, %v6766, %v6764
    %s6771 = scalar_lea.vmem %s6680, 112
    %v6772 = vld [vmem:[%s6771] sm:$0xff]
    %v6774 = vadd.s32 %v6687, 112
    %vm6775 = vcmp.eq.s32.totalorder %v6774, %v6684
    %v6776 = vsel %vm6775, %v6772, %v6770
    %s6777 = scalar_lea.vmem %s6680, 120
    %v6778 = vld [vmem:[%s6777] sm:$0xff]
    %v6780 = vadd.s32 %v6687, 120
    %vm6781 = vcmp.eq.s32.totalorder %v6780, %v6684
    %v6782 = vsel %vm6781, %v6778, %v6776
    %v6783 = vrot.slane %v6782, 4
    %v6784 = vadd.f32 %v6782, %v6783
    %v6785 = vrot.slane %v6784, 2
    %v6786 = vadd.f32 %v6784, %v6785
    %v6787 = vrot.slane %v6786, 1
    %v6788 = vadd.f32 %v6786, %v6787
    %6789 = vst [vmem:[%s6681] sm:$0x1] %v6788
    %s6790 = smov [#allocation18]
    %s6791 = smov [#allocation6]
    %v6792 = vlaneseq
    %v6793 = vand.u32 %v6792, 127
    %v6794 = vmov %v6793
    %v6795 = vlaneseq
    %v6796 = vshrl.u32 %v6795, 7
    %v6797 = vmov %v6796
    %v6798 = vld [vmem:[%s6790] sm:$0xff]
    %vm6801 = vcmp.eq.s32.totalorder %v6797, %v6794
    %v6802 = vsel %vm6801, %v6798, 0.0
    %s6803 = scalar_lea.vmem %s6790, 8
    %v6804 = vld [vmem:[%s6803] sm:$0xff]
    %v6806 = vadd.s32 %v6797, 8
    %vm6807 = vcmp.eq.s32.totalorder %v6806, %v6794
    %v6808 = vsel %vm6807, %v6804, %v6802
    %s6809 = scalar_lea.vmem %s6790, 16
    %v6810 = vld [vmem:[%s6809] sm:$0xff]
    %v6812 = vadd.s32 %v6797, 16
    %vm6813 = vcmp.eq.s32.totalorder %v6812, %v6794
    %v6814 = vsel %vm6813, %v6810, %v6808
    %s6815 = scalar_lea.vmem %s6790, 24
    %v6816 = vld [vmem:[%s6815] sm:$0xff]
    %v6818 = vadd.s32 %v6797, 24
    %vm6819 = vcmp.eq.s32.totalorder %v6818, %v6794
    %v6820 = vsel %vm6819, %v6816, %v6814
    %s6821 = scalar_lea.vmem %s6790, 32
    %v6822 = vld [vmem:[%s6821] sm:$0xff]
    %v6824 = vadd.s32 %v6797, 32
    %vm6825 = vcmp.eq.s32.totalorder %v6824, %v6794
    %v6826 = vsel %vm6825, %v6822, %v6820
    %s6827 = scalar_lea.vmem %s6790, 40
    %v6828 = vld [vmem:[%s6827] sm:$0xff]
    %v6830 = vadd.s32 %v6797, 40
    %vm6831 = vcmp.eq.s32.totalorder %v6830, %v6794
    %v6832 = vsel %vm6831, %v6828, %v6826
    %s6833 = scalar_lea.vmem %s6790, 48
    %v6834 = vld [vmem:[%s6833] sm:$0xff]
    %v6836 = vadd.s32 %v6797, 48
    %vm6837 = vcmp.eq.s32.totalorder %v6836, %v6794
    %v6838 = vsel %vm6837, %v6834, %v6832
    %s6839 = scalar_lea.vmem %s6790, 56
    %v6840 = vld [vmem:[%s6839] sm:$0xff]
    %v6842 = vadd.s32 %v6797, 56
    %vm6843 = vcmp.eq.s32.totalorder %v6842, %v6794
    %v6844 = vsel %vm6843, %v6840, %v6838
    %s6845 = scalar_lea.vmem %s6790, 64
    %v6846 = vld [vmem:[%s6845] sm:$0xff]
    %v6848 = vadd.s32 %v6797, 64
    %vm6849 = vcmp.eq.s32.totalorder %v6848, %v6794
    %v6850 = vsel %vm6849, %v6846, %v6844
    %s6851 = scalar_lea.vmem %s6790, 72
    %v6852 = vld [vmem:[%s6851] sm:$0xff]
    %v6854 = vadd.s32 %v6797, 72
    %vm6855 = vcmp.eq.s32.totalorder %v6854, %v6794
    %v6856 = vsel %vm6855, %v6852, %v6850
    %s6857 = scalar_lea.vmem %s6790, 80
    %v6858 = vld [vmem:[%s6857] sm:$0xff]
    %v6860 = vadd.s32 %v6797, 80
    %vm6861 = vcmp.eq.s32.totalorder %v6860, %v6794
    %v6862 = vsel %vm6861, %v6858, %v6856
    %s6863 = scalar_lea.vmem %s6790, 88
    %v6864 = vld [vmem:[%s6863] sm:$0xff]
    %v6866 = vadd.s32 %v6797, 88
    %vm6867 = vcmp.eq.s32.totalorder %v6866, %v6794
    %v6868 = vsel %vm6867, %v6864, %v6862
    %s6869 = scalar_lea.vmem %s6790, 96
    %v6870 = vld [vmem:[%s6869] sm:$0xff]
    %v6872 = vadd.s32 %v6797, 96
    %vm6873 = vcmp.eq.s32.totalorder %v6872, %v6794
    %v6874 = vsel %vm6873, %v6870, %v6868
    %s6875 = scalar_lea.vmem %s6790, 104
    %v6876 = vld [vmem:[%s6875] sm:$0xff]
    %v6878 = vadd.s32 %v6797, 104
    %vm6879 = vcmp.eq.s32.totalorder %v6878, %v6794
    %v6880 = vsel %vm6879, %v6876, %v6874
    %s6881 = scalar_lea.vmem %s6790, 112
    %v6882 = vld [vmem:[%s6881] sm:$0xff]
    %v6884 = vadd.s32 %v6797, 112
    %vm6885 = vcmp.eq.s32.totalorder %v6884, %v6794
    %v6886 = vsel %vm6885, %v6882, %v6880
    %s6887 = scalar_lea.vmem %s6790, 120
    %v6888 = vld [vmem:[%s6887] sm:$0xff]
    %v6890 = vadd.s32 %v6797, 120
    %vm6891 = vcmp.eq.s32.totalorder %v6890, %v6794
    %v6892 = vsel %vm6891, %v6888, %v6886
    %v6893 = vrot.slane %v6892, 4
    %v6894 = vadd.f32 %v6892, %v6893
    %v6895 = vrot.slane %v6894, 2
    %v6896 = vadd.f32 %v6894, %v6895
    %v6897 = vrot.slane %v6896, 1
    %v6898 = vadd.f32 %v6896, %v6897
    %6899 = vst [vmem:[%s6791] sm:$0x1] %v6898
    %s6901 = sshll.u32 1, 1
    %s6902 = ssub.s32 %s6901, 1
    %v6904 = vld [vmem:[#allocation4] sm:%s6902]
    %s6905 = sshll.u32 1, 1
    %s6906 = ssub.s32 %s6905, 1
    %6907 = vst [vmem:[#allocation5] sm:%s6906] %v6904
    %s6909 = sshll.u32 1, 1
    %s6910 = ssub.s32 %s6909, 1
    %v6912 = vld [vmem:[#allocation6] sm:%s6910]
    %s6913 = sshll.u32 1, 1
    %s6914 = ssub.s32 %s6913, 1
    %6915 = vst [vmem:[#allocation7] sm:%s6914] %v6912
    // Predicated region
    $region104: #{custom-call.3} parent=1 // pred_check
      _
    $region105: #{custom-call.3} parent=1 // pred_check_branch
      %6917 = sbr.rel (0) target = $region107
    $region106: #{custom-call.3} parent=1 // pred_region
      %p6919 = scmp.gt.s32.totalorder 1, 0
      // Predicated region
      $region108: #{custom-call.3} parent=106 // pred_check
        %p6920 = pneg %p6919
      $region109: #{custom-call.3} parent=106 // pred_check_branch
        %6922 = sbr.rel (%p6920) target = $region111
      $region110: #{custom-call.3} parent=106 // pred_region
        %s6923 = sshra.s32 1, 3
        %p6924 = scmp.gt.s32.totalorder %s6923, 0
        // Predicated region
        $region112: #{custom-call.3} parent=110 // pred_check
          %p6925 = pneg %p6924
        $region113: #{custom-call.3} parent=110 // pred_check_branch
          %6927 = sbr.rel (%p6925) target = $region115
        $region114: #{custom-call.3} parent=110 // pred_region
          %s6928 = ssub.s32 %s6923, 1
          %s6929 = smul.u32 %s6928, 128
          %s6930 = sshra.s32 %s6929, 4
          %s6931 = scalar_lea.vmem [#allocation5], %s6930
          %v6932 = vld [vmem:[#allocation5] sm:$0xff]
          // While loop
          $region116: #{custom-call.3} parent=114 // loop_pre_header
            _
          $region117: #{custom-call.3} parent=114 // loop_header
            %s6933 = sphi [#allocation5], %s6955
            %s6934 = sphi %s4, %s6956
            %v6935 = vphi %v6932, %v6957
            %s6936 = ssub.s32 %s6931, 64
            %p6937 = scmp.gt.s32.totalorder %s6933, %s6936
          $region118: #{custom-call.3} parent=114 // loop_header_branch
            %6939 = sbr.rel (%p6937) target = $region122
          $region119: #{custom-call.3} parent=114 // loop_body
            %6940 = vst [vmem:[%s6934] sm:$0xff] %v6935
            %v6941 = vld [vmem:[%s6933 + $0x8] sm:$0xff]
            %6942 = vst [vmem:[%s6934 + $0x8] sm:$0xff] %v6941
            %v6943 = vld [vmem:[%s6933 + $0x10] sm:$0xff]
            %6944 = vst [vmem:[%s6934 + $0x10] sm:$0xff] %v6943
            %v6945 = vld [vmem:[%s6933 + $0x18] sm:$0xff]
            %6946 = vst [vmem:[%s6934 + $0x18] sm:$0xff] %v6945
            %v6947 = vld [vmem:[%s6933 + $0x20] sm:$0xff]
            %6948 = vst [vmem:[%s6934 + $0x20] sm:$0xff] %v6947
            %v6949 = vld [vmem:[%s6933 + $0x28] sm:$0xff]
            %6950 = vst [vmem:[%s6934 + $0x28] sm:$0xff] %v6949
            %v6951 = vld [vmem:[%s6933 + $0x30] sm:$0xff]
            %6952 = vst [vmem:[%s6934 + $0x30] sm:$0xff] %v6951
            %v6953 = vld [vmem:[%s6933 + $0x38] sm:$0xff]
            %6954 = vst [vmem:[%s6934 + $0x38] sm:$0xff] %v6953
          $region120: #{custom-call.3} parent=114 // loop_footer
            %s6955 = scalar_lea.vmem %s6933, 64
            %s6956 = scalar_lea.vmem %s6934, 64
            %v6957 = vld [vmem:[%s6933 + $0x40] sm:$0xff]
          $region121: #{custom-call.3} parent=114 // loop_footer_branch
            %6958 = sbr.rel target = $region117
          $region122: #{custom-call.3} parent=114 // loop_exit
            _
          // While loop
          $region123: #{custom-call.3} parent=114 // loop_pre_header
            _
          $region124: #{custom-call.3} parent=114 // loop_header
            %s6959 = sphi %s6933, %s6967
            %s6960 = sphi %s6934, %s6968
            %v6961 = vphi %v6935, %v6961
            %p6962 = scmp.gt.s32.totalorder %s6959, %s6931
          $region125: #{custom-call.3} parent=114 // loop_header_branch
            %6964 = sbr.rel (%p6962) target = $region129
          $region126: #{custom-call.3} parent=114 // loop_body
            %v6965 = vld [vmem:[%s6959] sm:$0xff]
            %6966 = vst [vmem:[%s6960] sm:$0xff] %v6965
          $region127: #{custom-call.3} parent=114 // loop_footer
            %s6967 = scalar_lea.vmem %s6959, 8
            %s6968 = scalar_lea.vmem %s6960, 8
          $region128: #{custom-call.3} parent=114 // loop_footer_branch
            %6969 = sbr.rel target = $region124
          $region129: #{custom-call.3} parent=114 // loop_exit
            _
        $region115: #{custom-call.3} parent=110 // pred_fallthru
          _
        %s6970 = sand.u32 1, 7
        %s6971 = sshll.u32 1, %s6970
        %s6972 = ssub.s32 %s6971, 1
        %s6973 = smul.u32 %s6923, 128
        %s6974 = sshra.s32 %s6973, 4
        %s6975 = scalar_lea.vmem %s4, %s6974
        %s6976 = smul.u32 %s6923, 128
        %s6977 = sshra.s32 %s6976, 4
        %s6978 = scalar_lea.vmem [#allocation5], %s6977
        %v6979 = vld [vmem:[%s6978] sm:%s6972]
        %6980 = vst [vmem:[%s6975] sm:%s6972] %v6979
      $region111: #{custom-call.3} parent=106 // pred_fallthru
        _
    $region107: #{custom-call.3} parent=1 // pred_fallthru
      _
    // Predicated region
    $region130: #{custom-call.3} parent=1 // pred_check
      _
    $region131: #{custom-call.3} parent=1 // pred_check_branch
      %6982 = sbr.rel (0) target = $region133
    $region132: #{custom-call.3} parent=1 // pred_region
      %p6984 = scmp.gt.s32.totalorder 1, 0
      // Predicated region
      $region134: #{custom-call.3} parent=132 // pred_check
        %p6985 = pneg %p6984
      $region135: #{custom-call.3} parent=132 // pred_check_branch
        %6987 = sbr.rel (%p6985) target = $region137
      $region136: #{custom-call.3} parent=132 // pred_region
        %s6988 = sshra.s32 1, 3
        %p6989 = scmp.gt.s32.totalorder %s6988, 0
        // Predicated region
        $region138: #{custom-call.3} parent=136 // pred_check
          %p6990 = pneg %p6989
        $region139: #{custom-call.3} parent=136 // pred_check_branch
          %6992 = sbr.rel (%p6990) target = $region141
        $region140: #{custom-call.3} parent=136 // pred_region
          %s6993 = ssub.s32 %s6988, 1
          %s6994 = smul.u32 %s6993, 128
          %s6995 = sshra.s32 %s6994, 4
          %s6996 = scalar_lea.vmem [#allocation7], %s6995
          %v6997 = vld [vmem:[#allocation7] sm:$0xff]
          // While loop
          $region142: #{custom-call.3} parent=140 // loop_pre_header
            _
          $region143: #{custom-call.3} parent=140 // loop_header
            %s6998 = sphi [#allocation7], %s7020
            %s6999 = sphi %s5, %s7021
            %v7000 = vphi %v6997, %v7022
            %s7001 = ssub.s32 %s6996, 64
            %p7002 = scmp.gt.s32.totalorder %s6998, %s7001
          $region144: #{custom-call.3} parent=140 // loop_header_branch
            %7004 = sbr.rel (%p7002) target = $region148
          $region145: #{custom-call.3} parent=140 // loop_body
            %7005 = vst [vmem:[%s6999] sm:$0xff] %v7000
            %v7006 = vld [vmem:[%s6998 + $0x8] sm:$0xff]
            %7007 = vst [vmem:[%s6999 + $0x8] sm:$0xff] %v7006
            %v7008 = vld [vmem:[%s6998 + $0x10] sm:$0xff]
            %7009 = vst [vmem:[%s6999 + $0x10] sm:$0xff] %v7008
            %v7010 = vld [vmem:[%s6998 + $0x18] sm:$0xff]
            %7011 = vst [vmem:[%s6999 + $0x18] sm:$0xff] %v7010
            %v7012 = vld [vmem:[%s6998 + $0x20] sm:$0xff]
            %7013 = vst [vmem:[%s6999 + $0x20] sm:$0xff] %v7012
            %v7014 = vld [vmem:[%s6998 + $0x28] sm:$0xff]
            %7015 = vst [vmem:[%s6999 + $0x28] sm:$0xff] %v7014
            %v7016 = vld [vmem:[%s6998 + $0x30] sm:$0xff]
            %7017 = vst [vmem:[%s6999 + $0x30] sm:$0xff] %v7016
            %v7018 = vld [vmem:[%s6998 + $0x38] sm:$0xff]
            %7019 = vst [vmem:[%s6999 + $0x38] sm:$0xff] %v7018
          $region146: #{custom-call.3} parent=140 // loop_footer
            %s7020 = scalar_lea.vmem %s6998, 64
            %s7021 = scalar_lea.vmem %s6999, 64
            %v7022 = vld [vmem:[%s6998 + $0x40] sm:$0xff]
          $region147: #{custom-call.3} parent=140 // loop_footer_branch
            %7023 = sbr.rel target = $region143
          $region148: #{custom-call.3} parent=140 // loop_exit
            _
          // While loop
          $region149: #{custom-call.3} parent=140 // loop_pre_header
            _
          $region150: #{custom-call.3} parent=140 // loop_header
            %s7024 = sphi %s6998, %s7032
            %s7025 = sphi %s6999, %s7033
            %v7026 = vphi %v7000, %v7026
            %p7027 = scmp.gt.s32.totalorder %s7024, %s6996
          $region151: #{custom-call.3} parent=140 // loop_header_branch
            %7029 = sbr.rel (%p7027) target = $region155
          $region152: #{custom-call.3} parent=140 // loop_body
            %v7030 = vld [vmem:[%s7024] sm:$0xff]
            %7031 = vst [vmem:[%s7025] sm:$0xff] %v7030
          $region153: #{custom-call.3} parent=140 // loop_footer
            %s7032 = scalar_lea.vmem %s7024, 8
            %s7033 = scalar_lea.vmem %s7025, 8
          $region154: #{custom-call.3} parent=140 // loop_footer_branch
            %7034 = sbr.rel target = $region150
          $region155: #{custom-call.3} parent=140 // loop_exit
            _
        $region141: #{custom-call.3} parent=136 // pred_fallthru
          _
        %s7035 = sand.u32 1, 7
        %s7036 = sshll.u32 1, %s7035
        %s7037 = ssub.s32 %s7036, 1
        %s7038 = smul.u32 %s6988, 128
        %s7039 = sshra.s32 %s7038, 4
        %s7040 = scalar_lea.vmem %s5, %s7039
        %s7041 = smul.u32 %s6988, 128
        %s7042 = sshra.s32 %s7041, 4
        %s7043 = scalar_lea.vmem [#allocation7], %s7042
        %v7044 = vld [vmem:[%s7043] sm:%s7037]
        %7045 = vst [vmem:[%s7040] sm:%s7037] %v7044
      $region137: #{custom-call.3} parent=132 // pred_fallthru
        _
    $region133: #{custom-call.3} parent=1 // pred_fallthru
      _
    %s7047 = ssub.s32 2048, 2048
    %7048 = vsyncadd [#allocation9], %s7047
    %s7049 = sshll.u32 [#allocation8], 4
    %s7050 = int_to_ptr.vmem [resolvable:$true] %s7049
    %7052 = dma.vmem_to_hbm [thread:$0]  %s7050, 2048, %s6, [#allocation9]
    %s7054 = ssub.s32 2048, 2048
    %7055 = vsyncadd [#allocation11], %s7054
    %s7056 = sshll.u32 [#allocation10], 4
    %s7057 = int_to_ptr.vmem [resolvable:$true] %s7056
    %7059 = dma.vmem_to_hbm [thread:$0]  %s7057, 2048, %s7, [#allocation11]
    %s7061 = ssub.s32 2048, 2048
    %7062 = vsyncadd [#allocation11], %s7061
    %s7063 = sshll.u32 [#allocation12], 4
    %s7064 = int_to_ptr.vmem [resolvable:$true] %s7063
    %7066 = dma.vmem_to_hbm [thread:$0]  %s7064, 2048, %s8, [#allocation11]
    %s7068 = ssub.s32 2048, 2048
    %7069 = vsyncadd [#allocation14], %s7068
    %s7070 = sshll.u32 [#allocation13], 4
    %s7071 = int_to_ptr.vmem [resolvable:$true] %s7070
    %7073 = dma.vmem_to_hbm [thread:$0]  %s7071, 2048, %s9, [#allocation14]
    // Predicated region
    $region156: #{custom-call.3} parent=1 // pred_check
      _
    $region157: #{custom-call.3} parent=1 // pred_check_branch
      %7075 = sbr.rel (0) target = $region159
    $region158: #{custom-call.3} parent=1 // pred_region
      _
    $region159: #{custom-call.3} parent=1 // pred_fallthru
      _
    // Predicated region
    $region160: #{custom-call.3} parent=1 // pred_check
      _
    $region161: #{custom-call.3} parent=1 // pred_check_branch
      %7077 = sbr.rel (0) target = $region163
    $region162: #{custom-call.3} parent=1 // pred_region
      _
    $region163: #{custom-call.3} parent=1 // pred_fallthru
      _
    %7078 = dma.done [#allocation9], 2048
    %7079 = dma.done [#allocation11], 2048
    %7080 = dma.done [#allocation11], 2048
    %7081 = dma.done [#allocation14], 2048
    %7082 = vsyncpa [#allocation9], 1
    %7083 = vsyncpa [#allocation11], 1
    %7084 = vsyncpa [#allocation14], 1

// kernel: mvr_loss_forward.1
$region0: #{mvr_loss_forward.1}
  #allocation0 [shape = 'u32[]', space=smem, size = 0x4, offset = 0x4, fixed_abs, tag = 'smem constant byte address 0x4 - core index']
  #allocation1 [shape = 'u32[144,128]{1,0:T(1,128)}', space=vmem, size = 0x12000, scoped, tag = 'internal scratch']
  #allocation2 [shape = 'f32[2,128,128]{2,1,0:T(8,128)}', space=vmem, size = 0x20000, scoped, tag = 'scratch operand']
  %s0 = inlined_call_operand.vmem [shape: f32[256,256], index: 0, kind: input, shape index: {}, may-alias: {0,2}]
  %s1 = inlined_call_operand.vmem [shape: f32[256,256], index: 1, kind: input, shape index: {}]
  %s2 = inlined_call_operand.vmem [shape: f32[256,256], index: 2, kind: input, shape index: {}, may-alias: {0,2}]
  %s3 = inlined_call_operand.vmem [shape: f32[256,256], index: 3, kind: input, shape index: {}]
  %s4 = inlined_call_operand.vmem [shape: f32[256,256], index: 4, kind: output, shape index: {}]
  %s5 = sld [smem:[#allocation0]]
  $region209: #{mvr_loss_forward.1} parent=0
    _
  %s7 = ssub.s32 1, %s5
  %s8 = scalar_select 0, %s7, %s5
  $region1: #{mvr_loss_forward.1} parent=0
    #allocation3 [shape = 'u8[262144]{0}', space=vmem, size = 0x40000, scoped, tag = 'input window, operand 1']
    #allocation4 [shape = 'u8[131072]{0}', space=vmem, size = 0x20000, scoped, tag = 'input window, operand 2']
    #allocation5 [shape = 'u8[131072]{0}', space=vmem, size = 0x20000, scoped, tag = 'input window, operand 3']
    #allocation6 [shape = 'u8[131072]{0}', space=vmem, size = 0x20000, scoped, tag = 'output window, operand 0']
    loop: start=0, step=1, limit=10
    $region2: #{mvr_loss_forward.1} parent=1 // loop_pre_header
      _
    $region3: #{mvr_loss_forward.1} parent=1 // loop_header
      %s10 = sphi 0, %s14
      %p11 = scmp.ge.s32.totalorder %s10, 10
      %s17 = sphi 0, %s36
      %s18 = sphi 0, %s32
      %s19 = sphi 0, %s28
      %s20 = sphi 0, %s17
      %s21 = sphi 0, %s18
      %s22 = sphi 0, %s19
      %s23 = sphi 0, %s20
      %s24 = sphi 0, %s21
      %s25 = sphi 0, %s22
      %s39 = sphi 0, %s41
      %s42 = sphi 0, %s39
      %s43 = sphi 0, %s42
      %s59 = sphi 0, %s43
      %s69 = sphi 0, %s71
      %s72 = sphi 0, %s69
      %s73 = sphi 0, %s72
      %s89 = sphi 0, %s73
      %s97 = sphi 0, %s99
      %s100 = sphi 0, %s97
      %s101 = sphi 0, %s100
      %s117 = sphi 0, %s101
      %s125 = sphi 0, %s127
      %s128 = sphi 0, %s125
      %s129 = sphi 0, %s128
      %s145 = sphi 0, %s129
      %s153 = sphi 0, %s155
      %s156 = sphi 0, %s153
      %s157 = sphi 0, %s156
      %s173 = sphi 0, %s157
    $region4: #{mvr_loss_forward.1} parent=1 // loop_header_branch
      %13 = sbr.rel (%p11) target = $region8
    $region5: #{mvr_loss_forward.1} parent=1 // loop_body
      %s15 = ssub.s32 %s10, 1
      %s16 = ssub.s32 %s10, 2
      %s26 = sadd.s32 1, %s19
      %p27 = scmp.ge.s32.totalorder %s26, 2
      %s28 = scalar_select %p27, 0, %s26
      %s29 = sadd.s32 1, %s18
      %s30 = scalar_select %p27, %s29, %s18
      %p31 = scmp.ge.s32.totalorder %s30, 2
      %s32 = scalar_select %p31, 0, %s30
      %s33 = sadd.s32 1, %s17
      %s34 = scalar_select %p31, %s33, %s17
      %p35 = scmp.ge.s32.totalorder %s34, 2
      %s36 = scalar_select %p35, 0, %s34
      %s37 = ssub.s32 %s17, %s36
      %p38 = scmp.eq.s32.totalorder %s37, 0
      %s40 = sadd.s32 %s39, 1
      %s41 = scalar_select %p38, %s39, %s40
      %p44 = pneg %p38
      %p45 = scmp.eq.s32.totalorder %s10, 7
      %p46 = por %p44, %p45
      %p47 = scmp.ne.s32.totalorder %s39, %s42
      %p48 = scmp.eq.s32.totalorder %s10, 0
      %p49 = por %p47, %p48
      %p50 = scmp.ne.s32.totalorder %s39, %s42
      %p51 = scmp.eq.s32.totalorder %s15, 7
      %p52 = por %p50, %p51
      %p53 = scmp.ne.s32.totalorder %s42, %s43
      %p54 = scmp.eq.s32.totalorder %s15, 0
      %p55 = por %p53, %p54
      %p56 = scmp.ne.s32.totalorder %s42, %s43
      %p57 = scmp.eq.s32.totalorder %s16, 7
      %p58 = por %p56, %p57
      %p60 = scmp.ne.s32.totalorder %s43, %s59
      %p61 = scmp.eq.s32.totalorder %s16, 0
      %p62 = por %p60, %p61
      %p63 = scmp.eq.s32.totalorder %s18, 0
      %s64 = scalar_select %p63, %s19, 1
      %p65 = scmp.eq.s32.totalorder %s32, 0
      %s66 = scalar_select %p65, %s28, 1
      %s67 = ssub.s32 %s64, %s66
      %p68 = scmp.eq.s32.totalorder %s67, 0
      %s70 = sadd.s32 %s69, 1
      %s71 = scalar_select %p68, %s69, %s70
      %p74 = pneg %p68
      %p75 = scmp.eq.s32.totalorder %s10, 7
      %p76 = por %p74, %p75
      %p77 = scmp.ne.s32.totalorder %s69, %s72
      %p78 = scmp.eq.s32.totalorder %s10, 0
      %p79 = por %p77, %p78
      %p80 = scmp.ne.s32.totalorder %s69, %s72
      %p81 = scmp.eq.s32.totalorder %s15, 7
      %p82 = por %p80, %p81
      %p83 = scmp.ne.s32.totalorder %s72, %s73
      %p84 = scmp.eq.s32.totalorder %s15, 0
      %p85 = por %p83, %p84
      %p86 = scmp.ne.s32.totalorder %s72, %s73
      %p87 = scmp.eq.s32.totalorder %s16, 7
      %p88 = por %p86, %p87
      %p90 = scmp.ne.s32.totalorder %s73, %s89
      %p91 = scmp.eq.s32.totalorder %s16, 0
      %p92 = por %p90, %p91
      %s93 = ssub.s32 %s19, %s28
      %s94 = ssub.s32 %s18, %s32
      %s95 = sor.u32 %s93, %s94
      %p96 = scmp.eq.s32.totalorder %s95, 0
      %s98 = sadd.s32 %s97, 1
      %s99 = scalar_select %p96, %s97, %s98
      %p102 = pneg %p96
      %p103 = scmp.eq.s32.totalorder %s10, 7
      %p104 = por %p102, %p103
      %p105 = scmp.ne.s32.totalorder %s97, %s100
      %p106 = scmp.eq.s32.totalorder %s10, 0
      %p107 = por %p105, %p106
      %p108 = scmp.ne.s32.totalorder %s97, %s100
      %p109 = scmp.eq.s32.totalorder %s15, 7
      %p110 = por %p108, %p109
      %p111 = scmp.ne.s32.totalorder %s100, %s101
      %p112 = scmp.eq.s32.totalorder %s15, 0
      %p113 = por %p111, %p112
      %p114 = scmp.ne.s32.totalorder %s100, %s101
      %p115 = scmp.eq.s32.totalorder %s16, 7
      %p116 = por %p114, %p115
      %p118 = scmp.ne.s32.totalorder %s101, %s117
      %p119 = scmp.eq.s32.totalorder %s16, 0
      %p120 = por %p118, %p119
      %s121 = ssub.s32 %s17, %s36
      %s122 = ssub.s32 %s18, %s32
      %s123 = sor.u32 %s121, %s122
      %p124 = scmp.eq.s32.totalorder %s123, 0
      %s126 = sadd.s32 %s125, 1
      %s127 = scalar_select %p124, %s125, %s126
      %p130 = pneg %p124
      %p131 = scmp.eq.s32.totalorder %s10, 7
      %p132 = por %p130, %p131
      %p133 = scmp.ne.s32.totalorder %s125, %s128
      %p134 = scmp.eq.s32.totalorder %s10, 0
      %p135 = por %p133, %p134
      %p136 = scmp.ne.s32.totalorder %s125, %s128
      %p137 = scmp.eq.s32.totalorder %s15, 7
      %p138 = por %p136, %p137
      %p139 = scmp.ne.s32.totalorder %s128, %s129
      %p140 = scmp.eq.s32.totalorder %s15, 0
      %p141 = por %p139, %p140
      %p142 = scmp.ne.s32.totalorder %s128, %s129
      %p143 = scmp.eq.s32.totalorder %s16, 7
      %p144 = por %p142, %p143
      %p146 = scmp.ne.s32.totalorder %s129, %s145
      %p147 = scmp.eq.s32.totalorder %s16, 0
      %p148 = por %p146, %p147
      %s149 = ssub.s32 %s17, %s36
      %s150 = ssub.s32 %s18, %s32
      %s151 = sor.u32 %s149, %s150
      %p152 = scmp.eq.s32.totalorder %s151, 0
      %s154 = sadd.s32 %s153, 1
      %s155 = scalar_select %p152, %s153, %s154
      %p158 = pneg %p152
      %p159 = scmp.eq.s32.totalorder %s10, 7
      %p160 = por %p158, %p159
      %p161 = scmp.ne.s32.totalorder %s153, %s156
      %p162 = scmp.eq.s32.totalorder %s10, 0
      %p163 = por %p161, %p162
      %p164 = scmp.ne.s32.totalorder %s153, %s156
      %p165 = scmp.eq.s32.totalorder %s15, 7
      %p166 = por %p164, %p165
      %p167 = scmp.ne.s32.totalorder %s156, %s157
      %p168 = scmp.eq.s32.totalorder %s15, 0
      %p169 = por %p167, %p168
      %p170 = scmp.ne.s32.totalorder %s156, %s157
      %p171 = scmp.eq.s32.totalorder %s16, 7
      %p172 = por %p170, %p171
      %p174 = scmp.ne.s32.totalorder %s157, %s173
      %p175 = scmp.eq.s32.totalorder %s16, 0
      %p176 = por %p174, %p175
      %p177 = scmp.le.s32.totalorder 1, %s10
      %p178 = scmp.lt.s32.totalorder %s10, 9
      %p179 = pnand %p177, %p178
      %p180 = pneg %p179
      // Predicated region
      $region9: #{mvr_loss_forward.1} parent=5 // pred_check
        _
      $region10: #{mvr_loss_forward.1} parent=5 // pred_check_branch
        %182 = sbr.rel (%p179) target = $region12
      $region11: #{mvr_loss_forward.1} parent=5 // pred_region
        %s183 = ssub.s32 %s10, 1
      $region12: #{mvr_loss_forward.1} parent=5 // pred_fallthru
        _
      %p184 = scmp.lt.s32.totalorder %s10, 8
      // Predicated region
      $region13: #{mvr_loss_forward.1} parent=5 // pred_check
        %p185 = pneg %p184
      $region14: #{mvr_loss_forward.1} parent=5 // pred_check_branch
        %187 = sbr.rel (%p185) target = $region16
      $region15: #{mvr_loss_forward.1} parent=5 // pred_region
        // Predicated region
        $region17: #{mvr_loss_forward.1} parent=15 // pred_check
          %p188 = pneg %p49
        $region18: #{mvr_loss_forward.1} parent=15 // pred_check_branch
          %190 = sbr.rel (%p188) target = $region20
        $region19: #{mvr_loss_forward.1} parent=15 // pred_region
          %s191 = smul.u32 16, %s17
          %p192 = scmp.lt.s32.totalorder %s191, 31
          %s193 = scalar_select %p192, %s191, 31
          %s194 = smul.addr %s193, 2
          %s195 = smul.addr %s194, 8
          %s196 = scalar_lea.vmem %s0, %s195
          %s197 = smul.u32 16, %s17
        $region20: #{mvr_loss_forward.1} parent=15 // pred_fallthru
          _
        // Predicated region
        $region21: #{mvr_loss_forward.1} parent=15 // pred_check
          %p198 = pneg %p79
        $region22: #{mvr_loss_forward.1} parent=15 // pred_check_branch
          %200 = sbr.rel (%p198) target = $region24
        $region23: #{mvr_loss_forward.1} parent=15 // pred_region
          %s201 = sand.u32 %s69, 1
          %s202 = sand.u32 %s69, 1
          %s203 = smul.addr %s202, 256
          %s204 = scalar_lea.vmem [#allocation3], %s203
          %p205 = scmp.eq.s32.totalorder %s18, 0
          %s206 = scalar_select %p205, %s19, 1
          %s207 = smul.addr %s206, 8
          %s208 = scalar_lea.vmem %s1, %s207
          // Predicated region
          $region25: #{mvr_loss_forward.1} parent=23 // pred_check
            _
          $region26: #{mvr_loss_forward.1} parent=23 // pred_check_branch
            %210 = sbr.rel (0) target = $region28
          $region27: #{mvr_loss_forward.1} parent=23 // pred_region
            // Predicated region
            $region29: #{mvr_loss_forward.1} parent=27 // pred_check
              _
            $region30: #{mvr_loss_forward.1} parent=27 // pred_check_branch
              %212 = sbr.rel (0) target = $region32
            $region31: #{mvr_loss_forward.1} parent=27 // pred_region
              // Predicated region
              $region44: #{mvr_loss_forward.1} parent=31 // pred_check
                _
              $region45: #{mvr_loss_forward.1} parent=31 // pred_check_branch
                %290 = sbr.rel (0) target = $region47
              $region46: #{mvr_loss_forward.1} parent=31 // pred_region
                loop: start=0, step=1, limit=1
                $region48: #{mvr_loss_forward.1} parent=46 // loop_pre_header
                  _
                $region49: #{mvr_loss_forward.1} parent=46 // loop_header
                  %s292 = sphi 0, %s296
                  %p293 = scmp.ge.s32.totalorder %s292, 1
                  %s297 = sphi %s208, %s208
                  %s298 = sphi %s204, %s204
                $region50: #{mvr_loss_forward.1} parent=46 // loop_header_branch
                  %295 = sbr.rel (%p293) target = $region54
                $region51: #{mvr_loss_forward.1} parent=46 // loop_body
                  %v299 = vld [vmem:[%s297] sm:$0xff]
                  %300 = vst [vmem:[%s298] sm:$0xff] %v299
                  %v301 = vld [vmem:[%s297 + $0x10] sm:$0xff]
                  %302 = vst [vmem:[%s298 + $0x8] sm:$0xff] %v301
                  %v303 = vld [vmem:[%s297 + $0x20] sm:$0xff]
                  %304 = vst [vmem:[%s298 + $0x10] sm:$0xff] %v303
                  %v305 = vld [vmem:[%s297 + $0x30] sm:$0xff]
                  %306 = vst [vmem:[%s298 + $0x18] sm:$0xff] %v305
                  %v307 = vld [vmem:[%s297 + $0x40] sm:$0xff]
                  %308 = vst [vmem:[%s298 + $0x20] sm:$0xff] %v307
                  %v309 = vld [vmem:[%s297 + $0x50] sm:$0xff]
                  %310 = vst [vmem:[%s298 + $0x28] sm:$0xff] %v309
                  %v311 = vld [vmem:[%s297 + $0x60] sm:$0xff]
                  %312 = vst [vmem:[%s298 + $0x30] sm:$0xff] %v311
                  %v313 = vld [vmem:[%s297 + $0x70] sm:$0xff]
                  %314 = vst [vmem:[%s298 + $0x38] sm:$0xff] %v313
                  %v315 = vld [vmem:[%s297 + $0x80] sm:$0xff]
                  %316 = vst [vmem:[%s298 + $0x40] sm:$0xff] %v315
                  %v317 = vld [vmem:[%s297 + $0x90] sm:$0xff]
                  %318 = vst [vmem:[%s298 + $0x48] sm:$0xff] %v317
                  %v319 = vld [vmem:[%s297 + $0xa0] sm:$0xff]
                  %320 = vst [vmem:[%s298 + $0x50] sm:$0xff] %v319
                  %v321 = vld [vmem:[%s297 + $0xb0] sm:$0xff]
                  %322 = vst [vmem:[%s298 + $0x58] sm:$0xff] %v321
                  %v323 = vld [vmem:[%s297 + $0xc0] sm:$0xff]
                  %324 = vst [vmem:[%s298 + $0x60] sm:$0xff] %v323
                  %v325 = vld [vmem:[%s297 + $0xd0] sm:$0xff]
                  %326 = vst [vmem:[%s298 + $0x68] sm:$0xff] %v325
                  %v327 = vld [vmem:[%s297 + $0xe0] sm:$0xff]
                  %328 = vst [vmem:[%s298 + $0x70] sm:$0xff] %v327
                  %v329 = vld [vmem:[%s297 + $0xf0] sm:$0xff]
                  %330 = vst [vmem:[%s298 + $0x78] sm:$0xff] %v329
                  %v331 = vld [vmem:[%s297 + $0x100] sm:$0xff]
                  %332 = vst [vmem:[%s298 + $0x80] sm:$0xff] %v331
                  %v333 = vld [vmem:[%s297 + $0x110] sm:$0xff]
                  %334 = vst [vmem:[%s298 + $0x88] sm:$0xff] %v333
                  %v335 = vld [vmem:[%s297 + $0x120] sm:$0xff]
                  %336 = vst [vmem:[%s298 + $0x90] sm:$0xff] %v335
                  %v337 = vld [vmem:[%s297 + $0x130] sm:$0xff]
                  %338 = vst [vmem:[%s298 + $0x98] sm:$0xff] %v337
                  %v339 = vld [vmem:[%s297 + $0x140] sm:$0xff]
                  %340 = vst [vmem:[%s298 + $0xa0] sm:$0xff] %v339
                  %v341 = vld [vmem:[%s297 + $0x150] sm:$0xff]
                  %342 = vst [vmem:[%s298 + $0xa8] sm:$0xff] %v341
                  %v343 = vld [vmem:[%s297 + $0x160] sm:$0xff]
                  %344 = vst [vmem:[%s298 + $0xb0] sm:$0xff] %v343
                  %v345 = vld [vmem:[%s297 + $0x170] sm:$0xff]
                  %346 = vst [vmem:[%s298 + $0xb8] sm:$0xff] %v345
                  %v347 = vld [vmem:[%s297 + $0x180] sm:$0xff]
                  %348 = vst [vmem:[%s298 + $0xc0] sm:$0xff] %v347
                  %v349 = vld [vmem:[%s297 + $0x190] sm:$0xff]
                  %350 = vst [vmem:[%s298 + $0xc8] sm:$0xff] %v349
                  %v351 = vld [vmem:[%s297 + $0x1a0] sm:$0xff]
                  %352 = vst [vmem:[%s298 + $0xd0] sm:$0xff] %v351
                  %v353 = vld [vmem:[%s297 + $0x1b0] sm:$0xff]
                  %354 = vst [vmem:[%s298 + $0xd8] sm:$0xff] %v353
                  %v355 = vld [vmem:[%s297 + $0x1c0] sm:$0xff]
                  %356 = vst [vmem:[%s298 + $0xe0] sm:$0xff] %v355
                  %v357 = vld [vmem:[%s297 + $0x1d0] sm:$0xff]
                  %358 = vst [vmem:[%s298 + $0xe8] sm:$0xff] %v357
                  %v359 = vld [vmem:[%s297 + $0x1e0] sm:$0xff]
                  %360 = vst [vmem:[%s298 + $0xf0] sm:$0xff] %v359
                  %v361 = vld [vmem:[%s297 + $0x1f0] sm:$0xff]
                  %362 = vst [vmem:[%s298 + $0xf8] sm:$0xff] %v361
                $region52: #{mvr_loss_forward.1} parent=46 // loop_footer
                  %s296 = sadd.s32 1, %s292
                $region53: #{mvr_loss_forward.1} parent=46 // loop_footer_branch
                  %291 = sbr.rel target = $region49
                $region54: #{mvr_loss_forward.1} parent=46 // loop_exit
                  _
              $region47: #{mvr_loss_forward.1} parent=31 // pred_fallthru
                _
              // Predicated region
              $region55: #{mvr_loss_forward.1} parent=31 // pred_check
                _
              $region56: #{mvr_loss_forward.1} parent=31 // pred_check_branch
                %364 = sbr.rel target = $region58
              $region57: #{mvr_loss_forward.1} parent=31 // pred_region
                _
              $region58: #{mvr_loss_forward.1} parent=31 // pred_fallthru
                _
            $region32: #{mvr_loss_forward.1} parent=27 // pred_fallthru
              _
            // Predicated region
            $region33: #{mvr_loss_forward.1} parent=27 // pred_check
              _
            $region34: #{mvr_loss_forward.1} parent=27 // pred_check_branch
              %214 = sbr.rel target = $region36
            $region35: #{mvr_loss_forward.1} parent=27 // pred_region
              %s216 = ssub.s32 256, 1
              loop: start=0, step=1, limit=1
              $region37: #{mvr_loss_forward.1} parent=35 // loop_pre_header
                _
              $region38: #{mvr_loss_forward.1} parent=35 // loop_header
                %s218 = sphi 0, %s222
                %p219 = scmp.ge.s32.totalorder %s218, 1
                %s223 = sphi %s208, %s208
                %s224 = sphi %s204, %s204
              $region39: #{mvr_loss_forward.1} parent=35 // loop_header_branch
                %221 = sbr.rel (%p219) target = $region43
              $region40: #{mvr_loss_forward.1} parent=35 // loop_body
                %v225 = vld [vmem:[%s223] sm:%s216]
                %226 = vst [vmem:[%s224] sm:%s216] %v225
                %v227 = vld [vmem:[%s223 + $0x10] sm:%s216]
                %228 = vst [vmem:[%s224 + $0x8] sm:%s216] %v227
                %v229 = vld [vmem:[%s223 + $0x20] sm:%s216]
                %230 = vst [vmem:[%s224 + $0x10] sm:%s216] %v229
                %v231 = vld [vmem:[%s223 + $0x30] sm:%s216]
                %232 = vst [vmem:[%s224 + $0x18] sm:%s216] %v231
                %v233 = vld [vmem:[%s223 + $0x40] sm:%s216]
                %234 = vst [vmem:[%s224 + $0x20] sm:%s216] %v233
                %v235 = vld [vmem:[%s223 + $0x50] sm:%s216]
                %236 = vst [vmem:[%s224 + $0x28] sm:%s216] %v235
                %v237 = vld [vmem:[%s223 + $0x60] sm:%s216]
                %238 = vst [vmem:[%s224 + $0x30] sm:%s216] %v237
                %v239 = vld [vmem:[%s223 + $0x70] sm:%s216]
                %240 = vst [vmem:[%s224 + $0x38] sm:%s216] %v239
                %v241 = vld [vmem:[%s223 + $0x80] sm:%s216]
                %242 = vst [vmem:[%s224 + $0x40] sm:%s216] %v241
                %v243 = vld [vmem:[%s223 + $0x90] sm:%s216]
                %244 = vst [vmem:[%s224 + $0x48] sm:%s216] %v243
                %v245 = vld [vmem:[%s223 + $0xa0] sm:%s216]
                %246 = vst [vmem:[%s224 + $0x50] sm:%s216] %v245
                %v247 = vld [vmem:[%s223 + $0xb0] sm:%s216]
                %248 = vst [vmem:[%s224 + $0x58] sm:%s216] %v247
                %v249 = vld [vmem:[%s223 + $0xc0] sm:%s216]
                %250 = vst [vmem:[%s224 + $0x60] sm:%s216] %v249
                %v251 = vld [vmem:[%s223 + $0xd0] sm:%s216]
                %252 = vst [vmem:[%s224 + $0x68] sm:%s216] %v251
                %v253 = vld [vmem:[%s223 + $0xe0] sm:%s216]
                %254 = vst [vmem:[%s224 + $0x70] sm:%s216] %v253
                %v255 = vld [vmem:[%s223 + $0xf0] sm:%s216]
                %256 = vst [vmem:[%s224 + $0x78] sm:%s216] %v255
                %v257 = vld [vmem:[%s223 + $0x100] sm:%s216]
                %258 = vst [vmem:[%s224 + $0x80] sm:%s216] %v257
                %v259 = vld [vmem:[%s223 + $0x110] sm:%s216]
                %260 = vst [vmem:[%s224 + $0x88] sm:%s216] %v259
                %v261 = vld [vmem:[%s223 + $0x120] sm:%s216]
                %262 = vst [vmem:[%s224 + $0x90] sm:%s216] %v261
                %v263 = vld [vmem:[%s223 + $0x130] sm:%s216]
                %264 = vst [vmem:[%s224 + $0x98] sm:%s216] %v263
                %v265 = vld [vmem:[%s223 + $0x140] sm:%s216]
                %266 = vst [vmem:[%s224 + $0xa0] sm:%s216] %v265
                %v267 = vld [vmem:[%s223 + $0x150] sm:%s216]
                %268 = vst [vmem:[%s224 + $0xa8] sm:%s216] %v267
                %v269 = vld [vmem:[%s223 + $0x160] sm:%s216]
                %270 = vst [vmem:[%s224 + $0xb0] sm:%s216] %v269
                %v271 = vld [vmem:[%s223 + $0x170] sm:%s216]
                %272 = vst [vmem:[%s224 + $0xb8] sm:%s216] %v271
                %v273 = vld [vmem:[%s223 + $0x180] sm:%s216]
                %274 = vst [vmem:[%s224 + $0xc0] sm:%s216] %v273
                %v275 = vld [vmem:[%s223 + $0x190] sm:%s216]
                %276 = vst [vmem:[%s224 + $0xc8] sm:%s216] %v275
                %v277 = vld [vmem:[%s223 + $0x1a0] sm:%s216]
                %278 = vst [vmem:[%s224 + $0xd0] sm:%s216] %v277
                %v279 = vld [vmem:[%s223 + $0x1b0] sm:%s216]
                %280 = vst [vmem:[%s224 + $0xd8] sm:%s216] %v279
                %v281 = vld [vmem:[%s223 + $0x1c0] sm:%s216]
                %282 = vst [vmem:[%s224 + $0xe0] sm:%s216] %v281
                %v283 = vld [vmem:[%s223 + $0x1d0] sm:%s216]
                %284 = vst [vmem:[%s224 + $0xe8] sm:%s216] %v283
                %v285 = vld [vmem:[%s223 + $0x1e0] sm:%s216]
                %286 = vst [vmem:[%s224 + $0xf0] sm:%s216] %v285
                %v287 = vld [vmem:[%s223 + $0x1f0] sm:%s216]
                %288 = vst [vmem:[%s224 + $0xf8] sm:%s216] %v287
              $region41: #{mvr_loss_forward.1} parent=35 // loop_footer
                %s222 = sadd.s32 1, %s218
              $region42: #{mvr_loss_forward.1} parent=35 // loop_footer_branch
                %217 = sbr.rel target = $region38
              $region43: #{mvr_loss_forward.1} parent=35 // loop_exit
                _
            $region36: #{mvr_loss_forward.1} parent=27 // pred_fallthru
              _
          $region28: #{mvr_loss_forward.1} parent=23 // pred_fallthru
            _
          %365 = vnop
        $region24: #{mvr_loss_forward.1} parent=15 // pred_fallthru
          _
        // Predicated region
        $region59: #{mvr_loss_forward.1} parent=15 // pred_check
          %p366 = pneg %p107
        $region60: #{mvr_loss_forward.1} parent=15 // pred_check_branch
          %368 = sbr.rel (%p366) target = $region62
        $region61: #{mvr_loss_forward.1} parent=15 // pred_region
          %s369 = sand.u32 %s97, 1
          %s370 = sand.u32 %s97, 1
          %s371 = smul.addr %s370, 128
          %s372 = scalar_lea.vmem [#allocation4], %s371
          %s373 = smul.u32 16, %s19
          %s374 = smul.addr %s373, 2
          %s375 = sadd.s32 %s18, %s374
          %s376 = smul.addr %s375, 8
          %s377 = scalar_lea.vmem %s2, %s376
          // Predicated region
          $region63: #{mvr_loss_forward.1} parent=61 // pred_check
            _
          $region64: #{mvr_loss_forward.1} parent=61 // pred_check_branch
            %379 = sbr.rel (0) target = $region66
          $region65: #{mvr_loss_forward.1} parent=61 // pred_region
            // Predicated region
            $region67: #{mvr_loss_forward.1} parent=65 // pred_check
              _
            $region68: #{mvr_loss_forward.1} parent=65 // pred_check_branch
              %381 = sbr.rel (0) target = $region70
            $region69: #{mvr_loss_forward.1} parent=65 // pred_region
              // Predicated region
              $region82: #{mvr_loss_forward.1} parent=69 // pred_check
                _
              $region83: #{mvr_loss_forward.1} parent=69 // pred_check_branch
                %427 = sbr.rel (0) target = $region85
              $region84: #{mvr_loss_forward.1} parent=69 // pred_region
                loop: start=0, step=1, limit=1
                $region86: #{mvr_loss_forward.1} parent=84 // loop_pre_header
                  _
                $region87: #{mvr_loss_forward.1} parent=84 // loop_header
                  %s429 = sphi 0, %s433
                  %p430 = scmp.ge.s32.totalorder %s429, 1
                  %s434 = sphi %s377, %s377
                  %s435 = sphi %s372, %s372
                $region88: #{mvr_loss_forward.1} parent=84 // loop_header_branch
                  %432 = sbr.rel (%p430) target = $region92
                $region89: #{mvr_loss_forward.1} parent=84 // loop_body
                  %v436 = vld [vmem:[%s434] sm:$0xff]
                  %437 = vst [vmem:[%s435] sm:$0xff] %v436
                  %v438 = vld [vmem:[%s434 + $0x10] sm:$0xff]
                  %439 = vst [vmem:[%s435 + $0x8] sm:$0xff] %v438
                  %v440 = vld [vmem:[%s434 + $0x20] sm:$0xff]
                  %441 = vst [vmem:[%s435 + $0x10] sm:$0xff] %v440
                  %v442 = vld [vmem:[%s434 + $0x30] sm:$0xff]
                  %443 = vst [vmem:[%s435 + $0x18] sm:$0xff] %v442
                  %v444 = vld [vmem:[%s434 + $0x40] sm:$0xff]
                  %445 = vst [vmem:[%s435 + $0x20] sm:$0xff] %v444
                  %v446 = vld [vmem:[%s434 + $0x50] sm:$0xff]
                  %447 = vst [vmem:[%s435 + $0x28] sm:$0xff] %v446
                  %v448 = vld [vmem:[%s434 + $0x60] sm:$0xff]
                  %449 = vst [vmem:[%s435 + $0x30] sm:$0xff] %v448
                  %v450 = vld [vmem:[%s434 + $0x70] sm:$0xff]
                  %451 = vst [vmem:[%s435 + $0x38] sm:$0xff] %v450
                  %v452 = vld [vmem:[%s434 + $0x80] sm:$0xff]
                  %453 = vst [vmem:[%s435 + $0x40] sm:$0xff] %v452
                  %v454 = vld [vmem:[%s434 + $0x90] sm:$0xff]
                  %455 = vst [vmem:[%s435 + $0x48] sm:$0xff] %v454
                  %v456 = vld [vmem:[%s434 + $0xa0] sm:$0xff]
                  %457 = vst [vmem:[%s435 + $0x50] sm:$0xff] %v456
                  %v458 = vld [vmem:[%s434 + $0xb0] sm:$0xff]
                  %459 = vst [vmem:[%s435 + $0x58] sm:$0xff] %v458
                  %v460 = vld [vmem:[%s434 + $0xc0] sm:$0xff]
                  %461 = vst [vmem:[%s435 + $0x60] sm:$0xff] %v460
                  %v462 = vld [vmem:[%s434 + $0xd0] sm:$0xff]
                  %463 = vst [vmem:[%s435 + $0x68] sm:$0xff] %v462
                  %v464 = vld [vmem:[%s434 + $0xe0] sm:$0xff]
                  %465 = vst [vmem:[%s435 + $0x70] sm:$0xff] %v464
                  %v466 = vld [vmem:[%s434 + $0xf0] sm:$0xff]
                  %467 = vst [vmem:[%s435 + $0x78] sm:$0xff] %v466
                $region90: #{mvr_loss_forward.1} parent=84 // loop_footer
                  %s433 = sadd.s32 1, %s429
                $region91: #{mvr_loss_forward.1} parent=84 // loop_footer_branch
                  %428 = sbr.rel target = $region87
                $region92: #{mvr_loss_forward.1} parent=84 // loop_exit
                  _
              $region85: #{mvr_loss_forward.1} parent=69 // pred_fallthru
                _
              // Predicated region
              $region93: #{mvr_loss_forward.1} parent=69 // pred_check
                _
              $region94: #{mvr_loss_forward.1} parent=69 // pred_check_branch
                %469 = sbr.rel target = $region96
              $region95: #{mvr_loss_forward.1} parent=69 // pred_region
                _
              $region96: #{mvr_loss_forward.1} parent=69 // pred_fallthru
                _
            $region70: #{mvr_loss_forward.1} parent=65 // pred_fallthru
              _
            // Predicated region
            $region71: #{mvr_loss_forward.1} parent=65 // pred_check
              _
            $region72: #{mvr_loss_forward.1} parent=65 // pred_check_branch
              %383 = sbr.rel target = $region74
            $region73: #{mvr_loss_forward.1} parent=65 // pred_region
              %s385 = ssub.s32 256, 1
              loop: start=0, step=1, limit=1
              $region75: #{mvr_loss_forward.1} parent=73 // loop_pre_header
                _
              $region76: #{mvr_loss_forward.1} parent=73 // loop_header
                %s387 = sphi 0, %s391
                %p388 = scmp.ge.s32.totalorder %s387, 1
                %s392 = sphi %s377, %s377
                %s393 = sphi %s372, %s372
              $region77: #{mvr_loss_forward.1} parent=73 // loop_header_branch
                %390 = sbr.rel (%p388) target = $region81
              $region78: #{mvr_loss_forward.1} parent=73 // loop_body
                %v394 = vld [vmem:[%s392] sm:%s385]
                %395 = vst [vmem:[%s393] sm:%s385] %v394
                %v396 = vld [vmem:[%s392 + $0x10] sm:%s385]
                %397 = vst [vmem:[%s393 + $0x8] sm:%s385] %v396
                %v398 = vld [vmem:[%s392 + $0x20] sm:%s385]
                %399 = vst [vmem:[%s393 + $0x10] sm:%s385] %v398
                %v400 = vld [vmem:[%s392 + $0x30] sm:%s385]
                %401 = vst [vmem:[%s393 + $0x18] sm:%s385] %v400
                %v402 = vld [vmem:[%s392 + $0x40] sm:%s385]
                %403 = vst [vmem:[%s393 + $0x20] sm:%s385] %v402
                %v404 = vld [vmem:[%s392 + $0x50] sm:%s385]
                %405 = vst [vmem:[%s393 + $0x28] sm:%s385] %v404
                %v406 = vld [vmem:[%s392 + $0x60] sm:%s385]
                %407 = vst [vmem:[%s393 + $0x30] sm:%s385] %v406
                %v408 = vld [vmem:[%s392 + $0x70] sm:%s385]
                %409 = vst [vmem:[%s393 + $0x38] sm:%s385] %v408
                %v410 = vld [vmem:[%s392 + $0x80] sm:%s385]
                %411 = vst [vmem:[%s393 + $0x40] sm:%s385] %v410
                %v412 = vld [vmem:[%s392 + $0x90] sm:%s385]
                %413 = vst [vmem:[%s393 + $0x48] sm:%s385] %v412
                %v414 = vld [vmem:[%s392 + $0xa0] sm:%s385]
                %415 = vst [vmem:[%s393 + $0x50] sm:%s385] %v414
                %v416 = vld [vmem:[%s392 + $0xb0] sm:%s385]
                %417 = vst [vmem:[%s393 + $0x58] sm:%s385] %v416
                %v418 = vld [vmem:[%s392 + $0xc0] sm:%s385]
                %419 = vst [vmem:[%s393 + $0x60] sm:%s385] %v418
                %v420 = vld [vmem:[%s392 + $0xd0] sm:%s385]
                %421 = vst [vmem:[%s393 + $0x68] sm:%s385] %v420
                %v422 = vld [vmem:[%s392 + $0xe0] sm:%s385]
                %423 = vst [vmem:[%s393 + $0x70] sm:%s385] %v422
                %v424 = vld [vmem:[%s392 + $0xf0] sm:%s385]
                %425 = vst [vmem:[%s393 + $0x78] sm:%s385] %v424
              $region79: #{mvr_loss_forward.1} parent=73 // loop_footer
                %s391 = sadd.s32 1, %s387
              $region80: #{mvr_loss_forward.1} parent=73 // loop_footer_branch
                %386 = sbr.rel target = $region76
              $region81: #{mvr_loss_forward.1} parent=73 // loop_exit
                _
            $region74: #{mvr_loss_forward.1} parent=65 // pred_fallthru
              _
          $region66: #{mvr_loss_forward.1} parent=61 // pred_fallthru
            _
          %470 = vnop
        $region62: #{mvr_loss_forward.1} parent=15 // pred_fallthru
          _
        // Predicated region
        $region97: #{mvr_loss_forward.1} parent=15 // pred_check
          %p471 = pneg %p135
        $region98: #{mvr_loss_forward.1} parent=15 // pred_check_branch
          %473 = sbr.rel (%p471) target = $region100
        $region99: #{mvr_loss_forward.1} parent=15 // pred_region
          %s474 = sand.u32 %s125, 1
          %s475 = sand.u32 %s125, 1
          %s476 = smul.addr %s475, 128
          %s477 = scalar_lea.vmem [#allocation5], %s476
          %s478 = smul.u32 16, %s17
          %s479 = smul.addr %s478, 2
          %s480 = sadd.s32 %s18, %s479
          %s481 = smul.addr %s480, 8
          %s482 = scalar_lea.vmem %s3, %s481
          // Predicated region
          $region101: #{mvr_loss_forward.1} parent=99 // pred_check
            _
          $region102: #{mvr_loss_forward.1} parent=99 // pred_check_branch
            %484 = sbr.rel (0) target = $region104
          $region103: #{mvr_loss_forward.1} parent=99 // pred_region
            // Predicated region
            $region105: #{mvr_loss_forward.1} parent=103 // pred_check
              _
            $region106: #{mvr_loss_forward.1} parent=103 // pred_check_branch
              %486 = sbr.rel (0) target = $region108
            $region107: #{mvr_loss_forward.1} parent=103 // pred_region
              // Predicated region
              $region120: #{mvr_loss_forward.1} parent=107 // pred_check
                _
              $region121: #{mvr_loss_forward.1} parent=107 // pred_check_branch
                %532 = sbr.rel (0) target = $region123
              $region122: #{mvr_loss_forward.1} parent=107 // pred_region
                loop: start=0, step=1, limit=1
                $region124: #{mvr_loss_forward.1} parent=122 // loop_pre_header
                  _
                $region125: #{mvr_loss_forward.1} parent=122 // loop_header
                  %s534 = sphi 0, %s538
                  %p535 = scmp.ge.s32.totalorder %s534, 1
                  %s539 = sphi %s482, %s482
                  %s540 = sphi %s477, %s477
                $region126: #{mvr_loss_forward.1} parent=122 // loop_header_branch
                  %537 = sbr.rel (%p535) target = $region130
                $region127: #{mvr_loss_forward.1} parent=122 // loop_body
                  %v541 = vld [vmem:[%s539] sm:$0xff]
                  %542 = vst [vmem:[%s540] sm:$0xff] %v541
                  %v543 = vld [vmem:[%s539 + $0x10] sm:$0xff]
                  %544 = vst [vmem:[%s540 + $0x8] sm:$0xff] %v543
                  %v545 = vld [vmem:[%s539 + $0x20] sm:$0xff]
                  %546 = vst [vmem:[%s540 + $0x10] sm:$0xff] %v545
                  %v547 = vld [vmem:[%s539 + $0x30] sm:$0xff]
                  %548 = vst [vmem:[%s540 + $0x18] sm:$0xff] %v547
                  %v549 = vld [vmem:[%s539 + $0x40] sm:$0xff]
                  %550 = vst [vmem:[%s540 + $0x20] sm:$0xff] %v549
                  %v551 = vld [vmem:[%s539 + $0x50] sm:$0xff]
                  %552 = vst [vmem:[%s540 + $0x28] sm:$0xff] %v551
                  %v553 = vld [vmem:[%s539 + $0x60] sm:$0xff]
                  %554 = vst [vmem:[%s540 + $0x30] sm:$0xff] %v553
                  %v555 = vld [vmem:[%s539 + $0x70] sm:$0xff]
                  %556 = vst [vmem:[%s540 + $0x38] sm:$0xff] %v555
                  %v557 = vld [vmem:[%s539 + $0x80] sm:$0xff]
                  %558 = vst [vmem:[%s540 + $0x40] sm:$0xff] %v557
                  %v559 = vld [vmem:[%s539 + $0x90] sm:$0xff]
                  %560 = vst [vmem:[%s540 + $0x48] sm:$0xff] %v559
                  %v561 = vld [vmem:[%s539 + $0xa0] sm:$0xff]
                  %562 = vst [vmem:[%s540 + $0x50] sm:$0xff] %v561
                  %v563 = vld [vmem:[%s539 + $0xb0] sm:$0xff]
                  %564 = vst [vmem:[%s540 + $0x58] sm:$0xff] %v563
                  %v565 = vld [vmem:[%s539 + $0xc0] sm:$0xff]
                  %566 = vst [vmem:[%s540 + $0x60] sm:$0xff] %v565
                  %v567 = vld [vmem:[%s539 + $0xd0] sm:$0xff]
                  %568 = vst [vmem:[%s540 + $0x68] sm:$0xff] %v567
                  %v569 = vld [vmem:[%s539 + $0xe0] sm:$0xff]
                  %570 = vst [vmem:[%s540 + $0x70] sm:$0xff] %v569
                  %v571 = vld [vmem:[%s539 + $0xf0] sm:$0xff]
                  %572 = vst [vmem:[%s540 + $0x78] sm:$0xff] %v571
                $region128: #{mvr_loss_forward.1} parent=122 // loop_footer
                  %s538 = sadd.s32 1, %s534
                $region129: #{mvr_loss_forward.1} parent=122 // loop_footer_branch
                  %533 = sbr.rel target = $region125
                $region130: #{mvr_loss_forward.1} parent=122 // loop_exit
                  _
              $region123: #{mvr_loss_forward.1} parent=107 // pred_fallthru
                _
              // Predicated region
              $region131: #{mvr_loss_forward.1} parent=107 // pred_check
                _
              $region132: #{mvr_loss_forward.1} parent=107 // pred_check_branch
                %574 = sbr.rel target = $region134
              $region133: #{mvr_loss_forward.1} parent=107 // pred_region
                _
              $region134: #{mvr_loss_forward.1} parent=107 // pred_fallthru
                _
            $region108: #{mvr_loss_forward.1} parent=103 // pred_fallthru
              _
            // Predicated region
            $region109: #{mvr_loss_forward.1} parent=103 // pred_check
              _
            $region110: #{mvr_loss_forward.1} parent=103 // pred_check_branch
              %488 = sbr.rel target = $region112
            $region111: #{mvr_loss_forward.1} parent=103 // pred_region
              %s490 = ssub.s32 256, 1
              loop: start=0, step=1, limit=1
              $region113: #{mvr_loss_forward.1} parent=111 // loop_pre_header
                _
              $region114: #{mvr_loss_forward.1} parent=111 // loop_header
                %s492 = sphi 0, %s496
                %p493 = scmp.ge.s32.totalorder %s492, 1
                %s497 = sphi %s482, %s482
                %s498 = sphi %s477, %s477
              $region115: #{mvr_loss_forward.1} parent=111 // loop_header_branch
                %495 = sbr.rel (%p493) target = $region119
              $region116: #{mvr_loss_forward.1} parent=111 // loop_body
                %v499 = vld [vmem:[%s497] sm:%s490]
                %500 = vst [vmem:[%s498] sm:%s490] %v499
                %v501 = vld [vmem:[%s497 + $0x10] sm:%s490]
                %502 = vst [vmem:[%s498 + $0x8] sm:%s490] %v501
                %v503 = vld [vmem:[%s497 + $0x20] sm:%s490]
                %504 = vst [vmem:[%s498 + $0x10] sm:%s490] %v503
                %v505 = vld [vmem:[%s497 + $0x30] sm:%s490]
                %506 = vst [vmem:[%s498 + $0x18] sm:%s490] %v505
                %v507 = vld [vmem:[%s497 + $0x40] sm:%s490]
                %508 = vst [vmem:[%s498 + $0x20] sm:%s490] %v507
                %v509 = vld [vmem:[%s497 + $0x50] sm:%s490]
                %510 = vst [vmem:[%s498 + $0x28] sm:%s490] %v509
                %v511 = vld [vmem:[%s497 + $0x60] sm:%s490]
                %512 = vst [vmem:[%s498 + $0x30] sm:%s490] %v511
                %v513 = vld [vmem:[%s497 + $0x70] sm:%s490]
                %514 = vst [vmem:[%s498 + $0x38] sm:%s490] %v513
                %v515 = vld [vmem:[%s497 + $0x80] sm:%s490]
                %516 = vst [vmem:[%s498 + $0x40] sm:%s490] %v515
                %v517 = vld [vmem:[%s497 + $0x90] sm:%s490]
                %518 = vst [vmem:[%s498 + $0x48] sm:%s490] %v517
                %v519 = vld [vmem:[%s497 + $0xa0] sm:%s490]
                %520 = vst [vmem:[%s498 + $0x50] sm:%s490] %v519
                %v521 = vld [vmem:[%s497 + $0xb0] sm:%s490]
                %522 = vst [vmem:[%s498 + $0x58] sm:%s490] %v521
                %v523 = vld [vmem:[%s497 + $0xc0] sm:%s490]
                %524 = vst [vmem:[%s498 + $0x60] sm:%s490] %v523
                %v525 = vld [vmem:[%s497 + $0xd0] sm:%s490]
                %526 = vst [vmem:[%s498 + $0x68] sm:%s490] %v525
                %v527 = vld [vmem:[%s497 + $0xe0] sm:%s490]
                %528 = vst [vmem:[%s498 + $0x70] sm:%s490] %v527
                %v529 = vld [vmem:[%s497 + $0xf0] sm:%s490]
                %530 = vst [vmem:[%s498 + $0x78] sm:%s490] %v529
              $region117: #{mvr_loss_forward.1} parent=111 // loop_footer
                %s496 = sadd.s32 1, %s492
              $region118: #{mvr_loss_forward.1} parent=111 // loop_footer_branch
                %491 = sbr.rel target = $region114
              $region119: #{mvr_loss_forward.1} parent=111 // loop_exit
                _
            $region112: #{mvr_loss_forward.1} parent=103 // pred_fallthru
              _
          $region104: #{mvr_loss_forward.1} parent=99 // pred_fallthru
            _
          %575 = vnop
        $region100: #{mvr_loss_forward.1} parent=15 // pred_fallthru
          _
      $region16: #{mvr_loss_forward.1} parent=5 // pred_fallthru
        _
      %p576 = scmp.le.s32.totalorder 1, %s10
      %p577 = scmp.lt.s32.totalorder %s10, 9
      %p578 = pnand %p576, %p577
      %p579 = pneg %p578
      // Predicated region
      $region135: #{mvr_loss_forward.1} parent=5 // pred_check
        _
      $region136: #{mvr_loss_forward.1} parent=5 // pred_check_branch
        %581 = sbr.rel (%p578) target = $region138
      $region137: #{mvr_loss_forward.1} parent=5 // pred_region
        %s582 = ssub.s32 %s10, 1
        %s583 = sand.u32 %s72, 1
        %s584 = sand.u32 %s72, 1
        %s585 = smul.addr %s584, 256
        %s586 = scalar_lea.vmem [#allocation3], %s585
        // Predicated region
        $region139: #{mvr_loss_forward.1} parent=137 // pred_check
          %p587 = pneg %p85
        $region140: #{mvr_loss_forward.1} parent=137 // pred_check_branch
          %589 = sbr.rel (%p587) target = $region142
        $region141: #{mvr_loss_forward.1} parent=137 // pred_region
          _
        $region142: #{mvr_loss_forward.1} parent=137 // pred_fallthru
          _
        %s590 = sand.u32 %s100, 1
        %s591 = sand.u32 %s100, 1
        %s592 = smul.addr %s591, 128
        %s593 = scalar_lea.vmem [#allocation4], %s592
        // Predicated region
        $region143: #{mvr_loss_forward.1} parent=137 // pred_check
          %p594 = pneg %p113
        $region144: #{mvr_loss_forward.1} parent=137 // pred_check_branch
          %596 = sbr.rel (%p594) target = $region146
        $region145: #{mvr_loss_forward.1} parent=137 // pred_region
          _
        $region146: #{mvr_loss_forward.1} parent=137 // pred_fallthru
          _
        %s597 = sand.u32 %s128, 1
        %s598 = sand.u32 %s128, 1
        %s599 = smul.addr %s598, 128
        %s600 = scalar_lea.vmem [#allocation5], %s599
        // Predicated region
        $region147: #{mvr_loss_forward.1} parent=137 // pred_check
          %p601 = pneg %p141
        $region148: #{mvr_loss_forward.1} parent=137 // pred_check_branch
          %603 = sbr.rel (%p601) target = $region150
        $region149: #{mvr_loss_forward.1} parent=137 // pred_region
          _
        $region150: #{mvr_loss_forward.1} parent=137 // pred_fallthru
          _
        %s604 = smul.u32 16, %s20
        %p605 = scmp.lt.s32.totalorder %s604, 31
        %s606 = scalar_select %p605, %s604, 31
        %s607 = smul.addr %s606, 2
        %s608 = smul.addr %s607, 8
        %s609 = scalar_lea.vmem %s0, %s608
        %p610 = pneg %p55
        %p611 = pneg %p52
        %s612 = sand.u32 %s72, 1
        %s613 = sand.u32 %s72, 1
        %s614 = smul.addr %s613, 256
        %s615 = scalar_lea.vmem [#allocation3], %s614
        %p616 = pneg %p85
        %p617 = pneg %p82
        %s618 = sand.u32 %s100, 1
        %s619 = sand.u32 %s100, 1
        %s620 = smul.addr %s619, 128
        %s621 = scalar_lea.vmem [#allocation4], %s620
        %p622 = pneg %p113
        %p623 = pneg %p110
        %s624 = sand.u32 %s128, 1
        %s625 = sand.u32 %s128, 1
        %s626 = smul.addr %s625, 128
        %s627 = scalar_lea.vmem [#allocation5], %s626
        %p628 = pneg %p141
        %p629 = pneg %p138
        %p630 = pneg %p169
        %p631 = pneg %p166
        %s632 = sand.u32 %s156, 1
        %s633 = sand.u32 %s156, 1
        %s634 = smul.addr %s633, 128
        %s635 = scalar_lea.vmem [#allocation6], %s634
        %s636 = smul.u32 16, %s20
        %p637 = scmp.lt.s32.totalorder %s636, 31
        %s638 = scalar_select %p637, %s636, 31
        %s639 = smul.addr %s638, 2
        %s640 = smul.addr %s639, 8
        %s641 = scalar_lea.vmem %s0, %s640
        %s642 = smul.u32 16, %s20
        %p643 = scmp.eq.s32.totalorder %s21, 0
        %s644 = scalar_select %p643, %s22, 1
        %s645 = smul.u32 16, %s22
        %s646 = smul.u32 16, %s20
        %s647 = smul.u32 16, %s20
        %p648 = scmp.eq.s32.totalorder %s21, 0
        // Predicated region
        $region151: #{mvr_loss_forward.1} parent=137 // pred_check
          %p649 = pneg %p648
        $region152: #{mvr_loss_forward.1} parent=137 // pred_check_branch
          %651 = sbr.rel (%p649) target = $region154
        $region153: #{mvr_loss_forward.1} parent=137 // pred_region
          %v652 = vld [vmem:[%s641] sm:$0xff]
          %v653 = vld [vmem:[%s641 + $0x8] sm:$0xff]
          %v654 = vld [vmem:[%s641 + $0x10] sm:$0xff]
          %v655 = vld [vmem:[%s641 + $0x18] sm:$0xff]
          %v656 = vld [vmem:[%s641 + $0x20] sm:$0xff]
          %v657 = vld [vmem:[%s641 + $0x28] sm:$0xff]
          %v658 = vld [vmem:[%s641 + $0x30] sm:$0xff]
          %v659 = vld [vmem:[%s641 + $0x38] sm:$0xff]
          %v660 = vld [vmem:[%s641 + $0x40] sm:$0xff]
          %v661 = vld [vmem:[%s641 + $0x48] sm:$0xff]
          %v662 = vld [vmem:[%s641 + $0x50] sm:$0xff]
          %v663 = vld [vmem:[%s641 + $0x58] sm:$0xff]
          %v664 = vld [vmem:[%s641 + $0x60] sm:$0xff]
          %v665 = vld [vmem:[%s641 + $0x68] sm:$0xff]
          %v666 = vld [vmem:[%s641 + $0x70] sm:$0xff]
          %v667 = vld [vmem:[%s641 + $0x78] sm:$0xff]
          %v668 = vld [vmem:[%s641 + $0x80] sm:$0xff]
          %v669 = vld [vmem:[%s641 + $0x88] sm:$0xff]
          %v670 = vld [vmem:[%s641 + $0x90] sm:$0xff]
          %v671 = vld [vmem:[%s641 + $0x98] sm:$0xff]
          %v672 = vld [vmem:[%s641 + $0xa0] sm:$0xff]
          %v673 = vld [vmem:[%s641 + $0xa8] sm:$0xff]
          %v674 = vld [vmem:[%s641 + $0xb0] sm:$0xff]
          %v675 = vld [vmem:[%s641 + $0xb8] sm:$0xff]
          %v676 = vld [vmem:[%s641 + $0xc0] sm:$0xff]
          %v677 = vld [vmem:[%s641 + $0xc8] sm:$0xff]
          %v678 = vld [vmem:[%s641 + $0xd0] sm:$0xff]
          %v679 = vld [vmem:[%s641 + $0xd8] sm:$0xff]
          %v680 = vld [vmem:[%s641 + $0xe0] sm:$0xff]
          %v681 = vld [vmem:[%s641 + $0xe8] sm:$0xff]
          %v682 = vld [vmem:[%s641 + $0xf0] sm:$0xff]
          %v683 = vld [vmem:[%s641 + $0xf8] sm:$0xff]
          %v684 = vld [vmem:[%s586] sm:$0xff]
          %v685 = vld [vmem:[%s586 + $0x8] sm:$0xff]
          %v686 = vld [vmem:[%s586 + $0x10] sm:$0xff]
          %v687 = vld [vmem:[%s586 + $0x18] sm:$0xff]
          %v688 = vld [vmem:[%s586 + $0x20] sm:$0xff]
          %v689 = vld [vmem:[%s586 + $0x28] sm:$0xff]
          %v690 = vld [vmem:[%s586 + $0x30] sm:$0xff]
          %v691 = vld [vmem:[%s586 + $0x38] sm:$0xff]
          %v692 = vld [vmem:[%s586 + $0x40] sm:$0xff]
          %v693 = vld [vmem:[%s586 + $0x48] sm:$0xff]
          %v694 = vld [vmem:[%s586 + $0x50] sm:$0xff]
          %v695 = vld [vmem:[%s586 + $0x58] sm:$0xff]
          %v696 = vld [vmem:[%s586 + $0x60] sm:$0xff]
          %v697 = vld [vmem:[%s586 + $0x68] sm:$0xff]
          %v698 = vld [vmem:[%s586 + $0x70] sm:$0xff]
          %v699 = vld [vmem:[%s586 + $0x78] sm:$0xff]
          %v700 = vld [vmem:[%s586 + $0x80] sm:$0xff]
          %v701 = vld [vmem:[%s586 + $0x88] sm:$0xff]
          %v702 = vld [vmem:[%s586 + $0x90] sm:$0xff]
          %v703 = vld [vmem:[%s586 + $0x98] sm:$0xff]
          %v704 = vld [vmem:[%s586 + $0xa0] sm:$0xff]
          %v705 = vld [vmem:[%s586 + $0xa8] sm:$0xff]
          %v706 = vld [vmem:[%s586 + $0xb0] sm:$0xff]
          %v707 = vld [vmem:[%s586 + $0xb8] sm:$0xff]
          %v708 = vld [vmem:[%s586 + $0xc0] sm:$0xff]
          %v709 = vld [vmem:[%s586 + $0xc8] sm:$0xff]
          %v710 = vld [vmem:[%s586 + $0xd0] sm:$0xff]
          %v711 = vld [vmem:[%s586 + $0xd8] sm:$0xff]
          %v712 = vld [vmem:[%s586 + $0xe0] sm:$0xff]
          %v713 = vld [vmem:[%s586 + $0xe8] sm:$0xff]
          %v714 = vld [vmem:[%s586 + $0xf0] sm:$0xff]
          %v715 = vld [vmem:[%s586 + $0xf8] sm:$0xff]
          %716 = vmatprep.subr.mxu0 0.0
          %717 = vmatpush1.msra.mxu0 %v699
          %718 = vmatprep.subr.mxu0 0.0
          %719 = vmatpush1.msra.mxu0 %v698
          %720 = vmatprep.subr.mxu0 0.0
          %721 = vmatpush1.msra.mxu0 %v697
          %722 = vmatprep.subr.mxu0 0.0
          %723 = vmatpush1.msra.mxu0 %v696
          %724 = vmatprep.subr.mxu0 0.0
          %725 = vmatpush1.msra.mxu0 %v695
          %726 = vmatprep.subr.mxu0 0.0
          %727 = vmatpush1.msra.mxu0 %v694
          %728 = vmatprep.subr.mxu0 0.0
          %729 = vmatpush1.msra.mxu0 %v693
          %730 = vmatprep.subr.mxu0 0.0
          %731 = vmatpush1.msra.mxu0 %v692
          %732 = vmatprep.subr.mxu0 0.0
          %733 = vmatpush1.msra.mxu0 %v691
          %734 = vmatprep.subr.mxu0 0.0
          %735 = vmatpush1.msra.mxu0 %v690
          %736 = vmatprep.subr.mxu0 0.0
          %737 = vmatpush1.msra.mxu0 %v689
          %738 = vmatprep.subr.mxu0 0.0
          %739 = vmatpush1.msra.mxu0 %v688
          %740 = vmatprep.subr.mxu0 0.0
          %741 = vmatpush1.msra.mxu0 %v687
          %742 = vmatprep.subr.mxu0 0.0
          %743 = vmatpush1.msra.mxu0 %v686
          %744 = vmatprep.subr.mxu0 0.0
          %745 = vmatpush1.msra.mxu0 %v685
          %746 = vmatprep.subr.mxu0 0.0
          %747 = vmatpush1.msra.mxu0 %v684
          %748 = vmatprep.subr.mxu0 0.0
          %749 = vmatpush2.msra.mxu0 %v715
          %750 = vmatprep.subr.mxu0 0.0
          %751 = vmatpush2.msra.mxu0 %v714
          %752 = vmatprep.subr.mxu0 0.0
          %753 = vmatpush2.msra.mxu0 %v713
          %754 = vmatprep.subr.mxu0 0.0
          %755 = vmatpush2.msra.mxu0 %v712
          %756 = vmatprep.subr.mxu0 0.0
          %757 = vmatpush2.msra.mxu0 %v711
          %758 = vmatprep.subr.mxu0 0.0
          %759 = vmatpush2.msra.mxu0 %v710
          %760 = vmatprep.subr.mxu0 0.0
          %761 = vmatpush2.msra.mxu0 %v709
          %762 = vmatprep.subr.mxu0 0.0
          %763 = vmatpush2.msra.mxu0 %v708
          %764 = vmatprep.subr.mxu0 0.0
          %765 = vmatpush2.msra.mxu0 %v707
          %766 = vmatprep.subr.mxu0 0.0
          %767 = vmatpush2.msra.mxu0 %v706
          %768 = vmatprep.subr.mxu0 0.0
          %769 = vmatpush2.msra.mxu0 %v705
          %770 = vmatprep.subr.mxu0 0.0
          %771 = vmatpush2.msra.mxu0 %v704
          %772 = vmatprep.subr.mxu0 0.0
          %773 = vmatpush2.msra.mxu0 %v703
          %774 = vmatprep.subr.mxu0 0.0
          %775 = vmatpush2.msra.mxu0 %v702
          %776 = vmatprep.subr.mxu0 0.0
          %777 = vmatpush2.msra.mxu0 %v701
          %778 = vmatprep.subr.mxu0 0.0
          %779 = vmatpush2.msra.mxu0 %v700
          %780 = vmatprep.mubr.f32.mxu0 %v653
          %781 = vmatmul.mubr.f32.gmra.mxu0 %v652
          %v782 = vpop.f32.mrf.mxu0
          %v783 = vadd.f32 0.0, %v782
          %v784 = vpop.f32.mrf.mxu0
          %785 = vmatprep.mubr.f32.mxu0 %v655
          %786 = vmatmul.mubr.f32.gmra.mxu0 %v654
          %v787 = vpop.f32.mrf.mxu0
          %v788 = vadd.f32 0.0, %v787
          %v789 = vpop.f32.mrf.mxu0
          %790 = vmatprep.mubr.f32.mxu0 %v657
          %791 = vmatmul.mubr.f32.gmra.mxu0 %v656
          %v792 = vpop.f32.mrf.mxu0
          %v793 = vadd.f32 0.0, %v792
          %v794 = vpop.f32.mrf.mxu0
          %795 = vmatprep.mubr.f32.mxu0 %v659
          %796 = vmatmul.mubr.f32.gmra.mxu0 %v658
          %v797 = vpop.f32.mrf.mxu0
          %v798 = vadd.f32 0.0, %v797
          %v799 = vpop.f32.mrf.mxu0
          %800 = vmatprep.mubr.f32.mxu0 %v661
          %801 = vmatmul.mubr.f32.gmra.mxu0 %v660
          %v802 = vpop.f32.mrf.mxu0
          %v803 = vadd.f32 0.0, %v802
          %v804 = vpop.f32.mrf.mxu0
          %805 = vmatprep.mubr.f32.mxu0 %v663
          %806 = vmatmul.mubr.f32.gmra.mxu0 %v662
          %v807 = vpop.f32.mrf.mxu0
          %v808 = vadd.f32 0.0, %v807
          %v809 = vpop.f32.mrf.mxu0
          %810 = vmatprep.mubr.f32.mxu0 %v665
          %811 = vmatmul.mubr.f32.gmra.mxu0 %v664
          %v812 = vpop.f32.mrf.mxu0
          %v813 = vadd.f32 0.0, %v812
          %v814 = vpop.f32.mrf.mxu0
          %815 = vmatprep.mubr.f32.mxu0 %v667
          %816 = vmatmul.mubr.f32.gmra.mxu0 %v666
          %v817 = vpop.f32.mrf.mxu0
          %v818 = vadd.f32 0.0, %v817
          %v819 = vpop.f32.mrf.mxu0
          %820 = vmatprep.mubr.f32.mxu0 %v669
          %821 = vmatmul.mubr.f32.gmra.mxu0 %v668
          %v822 = vpop.f32.mrf.mxu0
          %v823 = vadd.f32 0.0, %v822
          %v824 = vpop.f32.mrf.mxu0
          %825 = vmatprep.mubr.f32.mxu0 %v671
          %826 = vmatmul.mubr.f32.gmra.mxu0 %v670
          %v827 = vpop.f32.mrf.mxu0
          %v828 = vadd.f32 0.0, %v827
          %v829 = vpop.f32.mrf.mxu0
          %830 = vmatprep.mubr.f32.mxu0 %v673
          %831 = vmatmul.mubr.f32.gmra.mxu0 %v672
          %v832 = vpop.f32.mrf.mxu0
          %v833 = vadd.f32 0.0, %v832
          %v834 = vpop.f32.mrf.mxu0
          %835 = vmatprep.mubr.f32.mxu0 %v675
          %836 = vmatmul.mubr.f32.gmra.mxu0 %v674
          %v837 = vpop.f32.mrf.mxu0
          %v838 = vadd.f32 0.0, %v837
          %v839 = vpop.f32.mrf.mxu0
          %840 = vmatprep.mubr.f32.mxu0 %v677
          %841 = vmatmul.mubr.f32.gmra.mxu0 %v676
          %v842 = vpop.f32.mrf.mxu0
          %v843 = vadd.f32 0.0, %v842
          %v844 = vpop.f32.mrf.mxu0
          %845 = vmatprep.mubr.f32.mxu0 %v679
          %846 = vmatmul.mubr.f32.gmra.mxu0 %v678
          %v847 = vpop.f32.mrf.mxu0
          %v848 = vadd.f32 0.0, %v847
          %v849 = vpop.f32.mrf.mxu0
          %850 = vmatprep.mubr.f32.mxu0 %v681
          %851 = vmatmul.mubr.f32.gmra.mxu0 %v680
          %v852 = vpop.f32.mrf.mxu0
          %v853 = vadd.f32 0.0, %v852
          %v854 = vpop.f32.mrf.mxu0
          %855 = vmatprep.mubr.f32.mxu0 %v683
          %856 = vmatmul.mubr.f32.gmra.mxu0 %v682
          %v857 = vpop.f32.mrf.mxu0
          %v858 = vadd.f32 0.0, %v857
          %v859 = vpop.f32.mrf.mxu0
          %860 = vdwg.mxu0
          %s861 = smul.u32 %s22, 128
          %s862 = scalar_lea.vmem [#allocation2], %s861
          %863 = vst [vmem:[%s862] sm:$0xff] %v783
          %864 = vst [vmem:[%s862 + $0x8] sm:$0xff] %v788
          %865 = vst [vmem:[%s862 + $0x10] sm:$0xff] %v793
          %866 = vst [vmem:[%s862 + $0x18] sm:$0xff] %v798
          %867 = vst [vmem:[%s862 + $0x20] sm:$0xff] %v803
          %868 = vst [vmem:[%s862 + $0x28] sm:$0xff] %v808
          %869 = vst [vmem:[%s862 + $0x30] sm:$0xff] %v813
          %870 = vst [vmem:[%s862 + $0x38] sm:$0xff] %v818
          %871 = vst [vmem:[%s862 + $0x40] sm:$0xff] %v823
          %872 = vst [vmem:[%s862 + $0x48] sm:$0xff] %v828
          %873 = vst [vmem:[%s862 + $0x50] sm:$0xff] %v833
          %874 = vst [vmem:[%s862 + $0x58] sm:$0xff] %v838
          %875 = vst [vmem:[%s862 + $0x60] sm:$0xff] %v843
          %876 = vst [vmem:[%s862 + $0x68] sm:$0xff] %v848
          %877 = vst [vmem:[%s862 + $0x70] sm:$0xff] %v853
          %878 = vst [vmem:[%s862 + $0x78] sm:$0xff] %v858
        $region154: #{mvr_loss_forward.1} parent=137 // pred_fallthru
          _
        %s879 = smul.u32 %s22, 128
        %s880 = scalar_lea.vmem [#allocation2], %s879
        %v881 = vld [vmem:[%s880] sm:$0xff]
        %v882 = vld [vmem:[%s880 + $0x8] sm:$0xff]
        %v883 = vld [vmem:[%s880 + $0x10] sm:$0xff]
        %v884 = vld [vmem:[%s880 + $0x18] sm:$0xff]
        %v885 = vld [vmem:[%s880 + $0x20] sm:$0xff]
        %v886 = vld [vmem:[%s880 + $0x28] sm:$0xff]
        %v887 = vld [vmem:[%s880 + $0x30] sm:$0xff]
        %v888 = vld [vmem:[%s880 + $0x38] sm:$0xff]
        %v889 = vld [vmem:[%s880 + $0x40] sm:$0xff]
        %v890 = vld [vmem:[%s880 + $0x48] sm:$0xff]
        %v891 = vld [vmem:[%s880 + $0x50] sm:$0xff]
        %v892 = vld [vmem:[%s880 + $0x58] sm:$0xff]
        %v893 = vld [vmem:[%s880 + $0x60] sm:$0xff]
        %v894 = vld [vmem:[%s880 + $0x68] sm:$0xff]
        %v895 = vld [vmem:[%s880 + $0x70] sm:$0xff]
        %v896 = vld [vmem:[%s880 + $0x78] sm:$0xff]
        %v897 = vld [vmem:[%s593] sm:$0xff]
        %v898 = vld [vmem:[%s593 + $0x8] sm:$0xff]
        %v899 = vld [vmem:[%s593 + $0x10] sm:$0xff]
        %v900 = vld [vmem:[%s593 + $0x18] sm:$0xff]
        %v901 = vld [vmem:[%s593 + $0x20] sm:$0xff]
        %v902 = vld [vmem:[%s593 + $0x28] sm:$0xff]
        %v903 = vld [vmem:[%s593 + $0x30] sm:$0xff]
        %v904 = vld [vmem:[%s593 + $0x38] sm:$0xff]
        %v905 = vld [vmem:[%s593 + $0x40] sm:$0xff]
        %v906 = vld [vmem:[%s593 + $0x48] sm:$0xff]
        %v907 = vld [vmem:[%s593 + $0x50] sm:$0xff]
        %v908 = vld [vmem:[%s593 + $0x58] sm:$0xff]
        %v909 = vld [vmem:[%s593 + $0x60] sm:$0xff]
        %v910 = vld [vmem:[%s593 + $0x68] sm:$0xff]
        %v911 = vld [vmem:[%s593 + $0x70] sm:$0xff]
        %v912 = vld [vmem:[%s593 + $0x78] sm:$0xff]
        %913 = vmatprep.subr.mxu0 0.0
        %914 = vmatpush1.msra.mxu0 %v912
        %915 = vmatprep.subr.mxu0 0.0
        %916 = vmatpush1.msra.mxu0 %v911
        %917 = vmatprep.subr.mxu0 0.0
        %918 = vmatpush1.msra.mxu0 %v910
        %919 = vmatprep.subr.mxu0 0.0
        %920 = vmatpush1.msra.mxu0 %v909
        %921 = vmatprep.subr.mxu0 0.0
        %922 = vmatpush1.msra.mxu0 %v908
        %923 = vmatprep.subr.mxu0 0.0
        %924 = vmatpush1.msra.mxu0 %v907
        %925 = vmatprep.subr.mxu0 0.0
        %926 = vmatpush1.msra.mxu0 %v906
        %927 = vmatprep.subr.mxu0 0.0
        %928 = vmatpush1.msra.mxu0 %v905
        %929 = vmatprep.subr.mxu0 0.0
        %930 = vmatpush1.msra.mxu0 %v904
        %931 = vmatprep.subr.mxu0 0.0
        %932 = vmatpush1.msra.mxu0 %v903
        %933 = vmatprep.subr.mxu0 0.0
        %934 = vmatpush1.msra.mxu0 %v902
        %935 = vmatprep.subr.mxu0 0.0
        %936 = vmatpush1.msra.mxu0 %v901
        %937 = vmatprep.subr.mxu0 0.0
        %938 = vmatpush1.msra.mxu0 %v900
        %939 = vmatprep.subr.mxu0 0.0
        %940 = vmatpush1.msra.mxu0 %v899
        %941 = vmatprep.subr.mxu0 0.0
        %942 = vmatpush1.msra.mxu0 %v898
        %943 = vmatprep.subr.mxu0 0.0
        %944 = vmatpush1.msra.mxu0 %v897
        %945 = vmatprep.subr.mxu0 0.0
        %946 = vmatpush2.msra.mxu0 0.0
        %947 = vmatprep.subr.mxu0 0.0
        %948 = vmatpush2.msra.mxu0 0.0
        %949 = vmatprep.subr.mxu0 0.0
        %950 = vmatpush2.msra.mxu0 0.0
        %951 = vmatprep.subr.mxu0 0.0
        %952 = vmatpush2.msra.mxu0 0.0
        %953 = vmatprep.subr.mxu0 0.0
        %954 = vmatpush2.msra.mxu0 0.0
        %955 = vmatprep.subr.mxu0 0.0
        %956 = vmatpush2.msra.mxu0 0.0
        %957 = vmatprep.subr.mxu0 0.0
        %958 = vmatpush2.msra.mxu0 0.0
        %959 = vmatprep.subr.mxu0 0.0
        %960 = vmatpush2.msra.mxu0 0.0
        %961 = vmatprep.subr.mxu0 0.0
        %962 = vmatpush2.msra.mxu0 0.0
        %963 = vmatprep.subr.mxu0 0.0
        %964 = vmatpush2.msra.mxu0 0.0
        %965 = vmatprep.subr.mxu0 0.0
        %966 = vmatpush2.msra.mxu0 0.0
        %967 = vmatprep.subr.mxu0 0.0
        %968 = vmatpush2.msra.mxu0 0.0
        %969 = vmatprep.subr.mxu0 0.0
        %970 = vmatpush2.msra.mxu0 0.0
        %971 = vmatprep.subr.mxu0 0.0
        %972 = vmatpush2.msra.mxu0 0.0
        %973 = vmatprep.subr.mxu0 0.0
        %974 = vmatpush2.msra.mxu0 0.0
        %975 = vmatprep.subr.mxu0 0.0
        %976 = vmatpush2.msra.mxu0 0.0
        %977 = vmatprep.mubr.f32.mxu0 0.0
        %978 = vmatmul.mubr.f32.gmra.mxu0 %v881
        %v979 = vpop.f32.mrf.mxu0
        %v980 = vadd.f32 0.0, %v979
        %v981 = vpop.f32.mrf.mxu0
        %982 = vmatprep.mubr.f32.mxu0 0.0
        %983 = vmatmul.mubr.f32.gmra.mxu0 %v882
        %v984 = vpop.f32.mrf.mxu0
        %v985 = vadd.f32 0.0, %v984
        %v986 = vpop.f32.mrf.mxu0
        %987 = vmatprep.mubr.f32.mxu0 0.0
        %988 = vmatmul.mubr.f32.gmra.mxu0 %v883
        %v989 = vpop.f32.mrf.mxu0
        %v990 = vadd.f32 0.0, %v989
        %v991 = vpop.f32.mrf.mxu0
        %992 = vmatprep.mubr.f32.mxu0 0.0
        %993 = vmatmul.mubr.f32.gmra.mxu0 %v884
        %v994 = vpop.f32.mrf.mxu0
        %v995 = vadd.f32 0.0, %v994
        %v996 = vpop.f32.mrf.mxu0
        %997 = vmatprep.mubr.f32.mxu0 0.0
        %998 = vmatmul.mubr.f32.gmra.mxu0 %v885
        %v999 = vpop.f32.mrf.mxu0
        %v1000 = vadd.f32 0.0, %v999
        %v1001 = vpop.f32.mrf.mxu0
        %1002 = vmatprep.mubr.f32.mxu0 0.0
        %1003 = vmatmul.mubr.f32.gmra.mxu0 %v886
        %v1004 = vpop.f32.mrf.mxu0
        %v1005 = vadd.f32 0.0, %v1004
        %v1006 = vpop.f32.mrf.mxu0
        %1007 = vmatprep.mubr.f32.mxu0 0.0
        %1008 = vmatmul.mubr.f32.gmra.mxu0 %v887
        %v1009 = vpop.f32.mrf.mxu0
        %v1010 = vadd.f32 0.0, %v1009
        %v1011 = vpop.f32.mrf.mxu0
        %1012 = vmatprep.mubr.f32.mxu0 0.0
        %1013 = vmatmul.mubr.f32.gmra.mxu0 %v888
        %v1014 = vpop.f32.mrf.mxu0
        %v1015 = vadd.f32 0.0, %v1014
        %v1016 = vpop.f32.mrf.mxu0
        %1017 = vmatprep.mubr.f32.mxu0 0.0
        %1018 = vmatmul.mubr.f32.gmra.mxu0 %v889
        %v1019 = vpop.f32.mrf.mxu0
        %v1020 = vadd.f32 0.0, %v1019
        %v1021 = vpop.f32.mrf.mxu0
        %1022 = vmatprep.mubr.f32.mxu0 0.0
        %1023 = vmatmul.mubr.f32.gmra.mxu0 %v890
        %v1024 = vpop.f32.mrf.mxu0
        %v1025 = vadd.f32 0.0, %v1024
        %v1026 = vpop.f32.mrf.mxu0
        %1027 = vmatprep.mubr.f32.mxu0 0.0
        %1028 = vmatmul.mubr.f32.gmra.mxu0 %v891
        %v1029 = vpop.f32.mrf.mxu0
        %v1030 = vadd.f32 0.0, %v1029
        %v1031 = vpop.f32.mrf.mxu0
        %1032 = vmatprep.mubr.f32.mxu0 0.0
        %1033 = vmatmul.mubr.f32.gmra.mxu0 %v892
        %v1034 = vpop.f32.mrf.mxu0
        %v1035 = vadd.f32 0.0, %v1034
        %v1036 = vpop.f32.mrf.mxu0
        %1037 = vmatprep.mubr.f32.mxu0 0.0
        %1038 = vmatmul.mubr.f32.gmra.mxu0 %v893
        %v1039 = vpop.f32.mrf.mxu0
        %v1040 = vadd.f32 0.0, %v1039
        %v1041 = vpop.f32.mrf.mxu0
        %1042 = vmatprep.mubr.f32.mxu0 0.0
        %1043 = vmatmul.mubr.f32.gmra.mxu0 %v894
        %v1044 = vpop.f32.mrf.mxu0
        %v1045 = vadd.f32 0.0, %v1044
        %v1046 = vpop.f32.mrf.mxu0
        %1047 = vmatprep.mubr.f32.mxu0 0.0
        %1048 = vmatmul.mubr.f32.gmra.mxu0 %v895
        %v1049 = vpop.f32.mrf.mxu0
        %v1050 = vadd.f32 0.0, %v1049
        %v1051 = vpop.f32.mrf.mxu0
        %1052 = vmatprep.mubr.f32.mxu0 0.0
        %1053 = vmatmul.mubr.f32.gmra.mxu0 %v896
        %v1054 = vpop.f32.mrf.mxu0
        %v1055 = vadd.f32 0.0, %v1054
        %v1056 = vpop.f32.mrf.mxu0
        %1057 = vdwg.mxu0
        %p1058 = scmp.eq.s32.totalorder %s22, 0
        // Predicated region
        $region155: #{mvr_loss_forward.1} parent=137 // pred_check
          %p1059 = pneg %p1058
        $region156: #{mvr_loss_forward.1} parent=137 // pred_check_branch
          %1061 = sbr.rel (%p1059) target = $region158
        $region157: #{mvr_loss_forward.1} parent=137 // pred_region
          %v1062 = vld [vmem:[%s600] sm:$0xff]
          %v1063 = vld [vmem:[%s600 + $0x8] sm:$0xff]
          %v1064 = vld [vmem:[%s600 + $0x10] sm:$0xff]
          %v1065 = vld [vmem:[%s600 + $0x18] sm:$0xff]
          %v1066 = vld [vmem:[%s600 + $0x20] sm:$0xff]
          %v1067 = vld [vmem:[%s600 + $0x28] sm:$0xff]
          %v1068 = vld [vmem:[%s600 + $0x30] sm:$0xff]
          %v1069 = vld [vmem:[%s600 + $0x38] sm:$0xff]
          %v1070 = vld [vmem:[%s600 + $0x40] sm:$0xff]
          %v1071 = vld [vmem:[%s600 + $0x48] sm:$0xff]
          %v1072 = vld [vmem:[%s600 + $0x50] sm:$0xff]
          %v1073 = vld [vmem:[%s600 + $0x58] sm:$0xff]
          %v1074 = vld [vmem:[%s600 + $0x60] sm:$0xff]
          %v1075 = vld [vmem:[%s600 + $0x68] sm:$0xff]
          %v1076 = vld [vmem:[%s600 + $0x70] sm:$0xff]
          %v1077 = vld [vmem:[%s600 + $0x78] sm:$0xff]
          %v1078 = vsub.f32 %v1062, %v980
          %v1079 = vsub.f32 %v1063, %v985
          %v1080 = vsub.f32 %v1064, %v990
          %v1081 = vsub.f32 %v1065, %v995
          %v1082 = vsub.f32 %v1066, %v1000
          %v1083 = vsub.f32 %v1067, %v1005
          %v1084 = vsub.f32 %v1068, %v1010
          %v1085 = vsub.f32 %v1069, %v1015
          %v1086 = vsub.f32 %v1070, %v1020
          %v1087 = vsub.f32 %v1071, %v1025
          %v1088 = vsub.f32 %v1072, %v1030
          %v1089 = vsub.f32 %v1073, %v1035
          %v1090 = vsub.f32 %v1074, %v1040
          %v1091 = vsub.f32 %v1075, %v1045
          %v1092 = vsub.f32 %v1076, %v1050
          %v1093 = vsub.f32 %v1077, %v1055
          %1094 = vst [vmem:[%s635] sm:$0xff] %v1078
          %1095 = vst [vmem:[%s635 + $0x8] sm:$0xff] %v1079
          %1096 = vst [vmem:[%s635 + $0x10] sm:$0xff] %v1080
          %1097 = vst [vmem:[%s635 + $0x18] sm:$0xff] %v1081
          %1098 = vst [vmem:[%s635 + $0x20] sm:$0xff] %v1082
          %1099 = vst [vmem:[%s635 + $0x28] sm:$0xff] %v1083
          %1100 = vst [vmem:[%s635 + $0x30] sm:$0xff] %v1084
          %1101 = vst [vmem:[%s635 + $0x38] sm:$0xff] %v1085
          %1102 = vst [vmem:[%s635 + $0x40] sm:$0xff] %v1086
          %1103 = vst [vmem:[%s635 + $0x48] sm:$0xff] %v1087
          %1104 = vst [vmem:[%s635 + $0x50] sm:$0xff] %v1088
          %1105 = vst [vmem:[%s635 + $0x58] sm:$0xff] %v1089
          %1106 = vst [vmem:[%s635 + $0x60] sm:$0xff] %v1090
          %1107 = vst [vmem:[%s635 + $0x68] sm:$0xff] %v1091
          %1108 = vst [vmem:[%s635 + $0x70] sm:$0xff] %v1092
          %1109 = vst [vmem:[%s635 + $0x78] sm:$0xff] %v1093
        $region158: #{mvr_loss_forward.1} parent=137 // pred_fallthru
          _
        %p1110 = scmp.gt.s32.totalorder %s22, 0
        // Predicated region
        $region159: #{mvr_loss_forward.1} parent=137 // pred_check
          %p1111 = pneg %p1110
        $region160: #{mvr_loss_forward.1} parent=137 // pred_check_branch
          %1113 = sbr.rel (%p1111) target = $region162
        $region161: #{mvr_loss_forward.1} parent=137 // pred_region
          %v1114 = vld [vmem:[%s635] sm:$0xff]
          %v1115 = vld [vmem:[%s635 + $0x8] sm:$0xff]
          %v1116 = vld [vmem:[%s635 + $0x10] sm:$0xff]
          %v1117 = vld [vmem:[%s635 + $0x18] sm:$0xff]
          %v1118 = vld [vmem:[%s635 + $0x20] sm:$0xff]
          %v1119 = vld [vmem:[%s635 + $0x28] sm:$0xff]
          %v1120 = vld [vmem:[%s635 + $0x30] sm:$0xff]
          %v1121 = vld [vmem:[%s635 + $0x38] sm:$0xff]
          %v1122 = vld [vmem:[%s635 + $0x40] sm:$0xff]
          %v1123 = vld [vmem:[%s635 + $0x48] sm:$0xff]
          %v1124 = vld [vmem:[%s635 + $0x50] sm:$0xff]
          %v1125 = vld [vmem:[%s635 + $0x58] sm:$0xff]
          %v1126 = vld [vmem:[%s635 + $0x60] sm:$0xff]
          %v1127 = vld [vmem:[%s635 + $0x68] sm:$0xff]
          %v1128 = vld [vmem:[%s635 + $0x70] sm:$0xff]
          %v1129 = vld [vmem:[%s635 + $0x78] sm:$0xff]
          %v1130 = vsub.f32 %v1114, %v980
          %v1131 = vsub.f32 %v1115, %v985
          %v1132 = vsub.f32 %v1116, %v990
          %v1133 = vsub.f32 %v1117, %v995
          %v1134 = vsub.f32 %v1118, %v1000
          %v1135 = vsub.f32 %v1119, %v1005
          %v1136 = vsub.f32 %v1120, %v1010
          %v1137 = vsub.f32 %v1121, %v1015
          %v1138 = vsub.f32 %v1122, %v1020
          %v1139 = vsub.f32 %v1123, %v1025
          %v1140 = vsub.f32 %v1124, %v1030
          %v1141 = vsub.f32 %v1125, %v1035
          %v1142 = vsub.f32 %v1126, %v1040
          %v1143 = vsub.f32 %v1127, %v1045
          %v1144 = vsub.f32 %v1128, %v1050
          %v1145 = vsub.f32 %v1129, %v1055
          %1146 = vst [vmem:[%s635] sm:$0xff] %v1130
          %1147 = vst [vmem:[%s635 + $0x8] sm:$0xff] %v1131
          %1148 = vst [vmem:[%s635 + $0x10] sm:$0xff] %v1132
          %1149 = vst [vmem:[%s635 + $0x18] sm:$0xff] %v1133
          %1150 = vst [vmem:[%s635 + $0x20] sm:$0xff] %v1134
          %1151 = vst [vmem:[%s635 + $0x28] sm:$0xff] %v1135
          %1152 = vst [vmem:[%s635 + $0x30] sm:$0xff] %v1136
          %1153 = vst [vmem:[%s635 + $0x38] sm:$0xff] %v1137
          %1154 = vst [vmem:[%s635 + $0x40] sm:$0xff] %v1138
          %1155 = vst [vmem:[%s635 + $0x48] sm:$0xff] %v1139
          %1156 = vst [vmem:[%s635 + $0x50] sm:$0xff] %v1140
          %1157 = vst [vmem:[%s635 + $0x58] sm:$0xff] %v1141
          %1158 = vst [vmem:[%s635 + $0x60] sm:$0xff] %v1142
          %1159 = vst [vmem:[%s635 + $0x68] sm:$0xff] %v1143
          %1160 = vst [vmem:[%s635 + $0x70] sm:$0xff] %v1144
          %1161 = vst [vmem:[%s635 + $0x78] sm:$0xff] %v1145
        $region162: #{mvr_loss_forward.1} parent=137 // pred_fallthru
          _
        %s1162 = sand.u32 %s156, 1
        %s1163 = sand.u32 %s156, 1
        %s1164 = smul.addr %s1163, 128
        %s1165 = scalar_lea.vmem [#allocation6], %s1164
        // Predicated region
        $region163: #{mvr_loss_forward.1} parent=137 // pred_check
          %p1166 = pneg %p166
        $region164: #{mvr_loss_forward.1} parent=137 // pred_check_branch
          %1168 = sbr.rel (%p1166) target = $region166
        $region165: #{mvr_loss_forward.1} parent=137 // pred_region
          %s1169 = smul.u32 16, %s20
          %s1170 = smul.addr %s1169, 2
          %s1171 = sadd.s32 %s21, %s1170
          %s1172 = smul.addr %s1171, 8
          %s1173 = scalar_lea.vmem %s4, %s1172
          // Predicated region
          $region167: #{mvr_loss_forward.1} parent=165 // pred_check
            _
          $region168: #{mvr_loss_forward.1} parent=165 // pred_check_branch
            %1175 = sbr.rel (0) target = $region170
          $region169: #{mvr_loss_forward.1} parent=165 // pred_region
            // Predicated region
            $region171: #{mvr_loss_forward.1} parent=169 // pred_check
              _
            $region172: #{mvr_loss_forward.1} parent=169 // pred_check_branch
              %1177 = sbr.rel (0) target = $region174
            $region173: #{mvr_loss_forward.1} parent=169 // pred_region
              // Predicated region
              $region186: #{mvr_loss_forward.1} parent=173 // pred_check
                _
              $region187: #{mvr_loss_forward.1} parent=173 // pred_check_branch
                %1223 = sbr.rel (0) target = $region189
              $region188: #{mvr_loss_forward.1} parent=173 // pred_region
                loop: start=0, step=1, limit=1
                $region190: #{mvr_loss_forward.1} parent=188 // loop_pre_header
                  _
                $region191: #{mvr_loss_forward.1} parent=188 // loop_header
                  %s1225 = sphi 0, %s1229
                  %p1226 = scmp.ge.s32.totalorder %s1225, 1
                  %s1230 = sphi %s1165, %s1165
                  %s1231 = sphi %s1173, %s1173
                $region192: #{mvr_loss_forward.1} parent=188 // loop_header_branch
                  %1228 = sbr.rel (%p1226) target = $region196
                $region193: #{mvr_loss_forward.1} parent=188 // loop_body
                  %v1232 = vld [vmem:[%s1230] sm:$0xff]
                  %1233 = vst [vmem:[%s1231] sm:$0xff] %v1232
                  %v1234 = vld [vmem:[%s1230 + $0x8] sm:$0xff]
                  %1235 = vst [vmem:[%s1231 + $0x10] sm:$0xff] %v1234
                  %v1236 = vld [vmem:[%s1230 + $0x10] sm:$0xff]
                  %1237 = vst [vmem:[%s1231 + $0x20] sm:$0xff] %v1236
                  %v1238 = vld [vmem:[%s1230 + $0x18] sm:$0xff]
                  %1239 = vst [vmem:[%s1231 + $0x30] sm:$0xff] %v1238
                  %v1240 = vld [vmem:[%s1230 + $0x20] sm:$0xff]
                  %1241 = vst [vmem:[%s1231 + $0x40] sm:$0xff] %v1240
                  %v1242 = vld [vmem:[%s1230 + $0x28] sm:$0xff]
                  %1243 = vst [vmem:[%s1231 + $0x50] sm:$0xff] %v1242
                  %v1244 = vld [vmem:[%s1230 + $0x30] sm:$0xff]
                  %1245 = vst [vmem:[%s1231 + $0x60] sm:$0xff] %v1244
                  %v1246 = vld [vmem:[%s1230 + $0x38] sm:$0xff]
                  %1247 = vst [vmem:[%s1231 + $0x70] sm:$0xff] %v1246
                  %v1248 = vld [vmem:[%s1230 + $0x40] sm:$0xff]
                  %1249 = vst [vmem:[%s1231 + $0x80] sm:$0xff] %v1248
                  %v1250 = vld [vmem:[%s1230 + $0x48] sm:$0xff]
                  %1251 = vst [vmem:[%s1231 + $0x90] sm:$0xff] %v1250
                  %v1252 = vld [vmem:[%s1230 + $0x50] sm:$0xff]
                  %1253 = vst [vmem:[%s1231 + $0xa0] sm:$0xff] %v1252
                  %v1254 = vld [vmem:[%s1230 + $0x58] sm:$0xff]
                  %1255 = vst [vmem:[%s1231 + $0xb0] sm:$0xff] %v1254
                  %v1256 = vld [vmem:[%s1230 + $0x60] sm:$0xff]
                  %1257 = vst [vmem:[%s1231 + $0xc0] sm:$0xff] %v1256
                  %v1258 = vld [vmem:[%s1230 + $0x68] sm:$0xff]
                  %1259 = vst [vmem:[%s1231 + $0xd0] sm:$0xff] %v1258
                  %v1260 = vld [vmem:[%s1230 + $0x70] sm:$0xff]
                  %1261 = vst [vmem:[%s1231 + $0xe0] sm:$0xff] %v1260
                  %v1262 = vld [vmem:[%s1230 + $0x78] sm:$0xff]
                  %1263 = vst [vmem:[%s1231 + $0xf0] sm:$0xff] %v1262
                $region194: #{mvr_loss_forward.1} parent=188 // loop_footer
                  %s1229 = sadd.s32 1, %s1225
                $region195: #{mvr_loss_forward.1} parent=188 // loop_footer_branch
                  %1224 = sbr.rel target = $region191
                $region196: #{mvr_loss_forward.1} parent=188 // loop_exit
                  _
              $region189: #{mvr_loss_forward.1} parent=173 // pred_fallthru
                _
              // Predicated region
              $region197: #{mvr_loss_forward.1} parent=173 // pred_check
                _
              $region198: #{mvr_loss_forward.1} parent=173 // pred_check_branch
                %1265 = sbr.rel target = $region200
              $region199: #{mvr_loss_forward.1} parent=173 // pred_region
                _
              $region200: #{mvr_loss_forward.1} parent=173 // pred_fallthru
                _
            $region174: #{mvr_loss_forward.1} parent=169 // pred_fallthru
              _
            // Predicated region
            $region175: #{mvr_loss_forward.1} parent=169 // pred_check
              _
            $region176: #{mvr_loss_forward.1} parent=169 // pred_check_branch
              %1179 = sbr.rel target = $region178
            $region177: #{mvr_loss_forward.1} parent=169 // pred_region
              %s1181 = ssub.s32 256, 1
              loop: start=0, step=1, limit=1
              $region179: #{mvr_loss_forward.1} parent=177 // loop_pre_header
                _
              $region180: #{mvr_loss_forward.1} parent=177 // loop_header
                %s1183 = sphi 0, %s1187
                %p1184 = scmp.ge.s32.totalorder %s1183, 1
                %s1188 = sphi %s1165, %s1165
                %s1189 = sphi %s1173, %s1173
              $region181: #{mvr_loss_forward.1} parent=177 // loop_header_branch
                %1186 = sbr.rel (%p1184) target = $region185
              $region182: #{mvr_loss_forward.1} parent=177 // loop_body
                %v1190 = vld [vmem:[%s1188] sm:%s1181]
                %1191 = vst [vmem:[%s1189] sm:%s1181] %v1190
                %v1192 = vld [vmem:[%s1188 + $0x8] sm:%s1181]
                %1193 = vst [vmem:[%s1189 + $0x10] sm:%s1181] %v1192
                %v1194 = vld [vmem:[%s1188 + $0x10] sm:%s1181]
                %1195 = vst [vmem:[%s1189 + $0x20] sm:%s1181] %v1194
                %v1196 = vld [vmem:[%s1188 + $0x18] sm:%s1181]
                %1197 = vst [vmem:[%s1189 + $0x30] sm:%s1181] %v1196
                %v1198 = vld [vmem:[%s1188 + $0x20] sm:%s1181]
                %1199 = vst [vmem:[%s1189 + $0x40] sm:%s1181] %v1198
                %v1200 = vld [vmem:[%s1188 + $0x28] sm:%s1181]
                %1201 = vst [vmem:[%s1189 + $0x50] sm:%s1181] %v1200
                %v1202 = vld [vmem:[%s1188 + $0x30] sm:%s1181]
                %1203 = vst [vmem:[%s1189 + $0x60] sm:%s1181] %v1202
                %v1204 = vld [vmem:[%s1188 + $0x38] sm:%s1181]
                %1205 = vst [vmem:[%s1189 + $0x70] sm:%s1181] %v1204
                %v1206 = vld [vmem:[%s1188 + $0x40] sm:%s1181]
                %1207 = vst [vmem:[%s1189 + $0x80] sm:%s1181] %v1206
                %v1208 = vld [vmem:[%s1188 + $0x48] sm:%s1181]
                %1209 = vst [vmem:[%s1189 + $0x90] sm:%s1181] %v1208
                %v1210 = vld [vmem:[%s1188 + $0x50] sm:%s1181]
                %1211 = vst [vmem:[%s1189 + $0xa0] sm:%s1181] %v1210
                %v1212 = vld [vmem:[%s1188 + $0x58] sm:%s1181]
                %1213 = vst [vmem:[%s1189 + $0xb0] sm:%s1181] %v1212
                %v1214 = vld [vmem:[%s1188 + $0x60] sm:%s1181]
                %1215 = vst [vmem:[%s1189 + $0xc0] sm:%s1181] %v1214
                %v1216 = vld [vmem:[%s1188 + $0x68] sm:%s1181]
                %1217 = vst [vmem:[%s1189 + $0xd0] sm:%s1181] %v1216
                %v1218 = vld [vmem:[%s1188 + $0x70] sm:%s1181]
                %1219 = vst [vmem:[%s1189 + $0xe0] sm:%s1181] %v1218
                %v1220 = vld [vmem:[%s1188 + $0x78] sm:%s1181]
                %1221 = vst [vmem:[%s1189 + $0xf0] sm:%s1181] %v1220
              $region183: #{mvr_loss_forward.1} parent=177 // loop_footer
                %s1187 = sadd.s32 1, %s1183
              $region184: #{mvr_loss_forward.1} parent=177 // loop_footer_branch
                %1182 = sbr.rel target = $region180
              $region185: #{mvr_loss_forward.1} parent=177 // loop_exit
                _
            $region178: #{mvr_loss_forward.1} parent=169 // pred_fallthru
              _
          $region170: #{mvr_loss_forward.1} parent=165 // pred_fallthru
            _
          %1266 = vnop
        $region166: #{mvr_loss_forward.1} parent=137 // pred_fallthru
          _
      $region138: #{mvr_loss_forward.1} parent=5 // pred_fallthru
        _
      %p1267 = scmp.le.s32.totalorder 2, %s10
      // Predicated region
      $region201: #{mvr_loss_forward.1} parent=5 // pred_check
        %p1268 = pneg %p1267
      $region202: #{mvr_loss_forward.1} parent=5 // pred_check_branch
        %1270 = sbr.rel (%p1268) target = $region204
      $region203: #{mvr_loss_forward.1} parent=5 // pred_region
        %s1271 = ssub.s32 %s10, 2
        // Predicated region
        $region205: #{mvr_loss_forward.1} parent=203 // pred_check
          %p1272 = pneg %p172
        $region206: #{mvr_loss_forward.1} parent=203 // pred_check_branch
          %1274 = sbr.rel (%p1272) target = $region208
        $region207: #{mvr_loss_forward.1} parent=203 // pred_region
          %s1275 = sand.u32 %s157, 1
          %s1276 = sand.u32 %s157, 1
          %s1277 = smul.addr %s1276, 128
          %s1278 = scalar_lea.vmem [#allocation6], %s1277
        $region208: #{mvr_loss_forward.1} parent=203 // pred_fallthru
          _
      $region204: #{mvr_loss_forward.1} parent=5 // pred_fallthru
        _
    $region6: #{mvr_loss_forward.1} parent=1 // loop_footer
      %s14 = sadd.s32 1, %s10
    $region7: #{mvr_loss_forward.1} parent=1 // loop_footer_branch
      %9 = sbr.rel target = $region3
    $region8: #{mvr_loss_forward.1} parent=1 // loop_exit
      _

</llo_original>
